<compile_context>
chip_gen: v7x
topology: tpu7x:2x2x1
jax: 0.10.0
libtpu: 0.0.40
codegen_flags: <defaults>
</compile_context>

<pallas_src>
import math
import functools

import jax
import jax.numpy as jnp
from jax.experimental import pallas as pl
from jax.experimental.pallas import tpu as pltpu

# ---- small, module-consistent shapes for the demo -------------------------------
SEQ_LEN = 8        # decoder query length  (141 in the original module)
EMBED_DIM = 32     # d_model               (256 in the original module)
NUM_HEADS = 4
NUM_LAYERS = 2     # (6 in the original module)
FFN_DIM = 64       # dim_feedforward       (2048 default in the original module)
MEM_LEN = 8        # encoder latent sequence length
BATCH = 2
LN_EPS = 1e-5

PER_LAYER = 20     # flattened parameter arrays per decoder layer


# ---------------------------------------------------------------------------------
# BlockSpec helpers
# ---------------------------------------------------------------------------------
def _const_spec(a):
    """Whole-array block with a constant index map (weights stay VMEM-resident)."""
    nd = a.ndim
    return pl.BlockSpec(tuple(a.shape), lambda b, _n=nd: (0,) * _n)


def _batched_spec(a):
    """Per-batch block: (1, *rest), gridded over the batch axis."""
    rest = tuple(a.shape[1:])
    return pl.BlockSpec((1,) + rest, lambda b, _n=len(rest): (b,) + (0,) * _n)


# ---------------------------------------------------------------------------------
# In-kernel helpers
# ---------------------------------------------------------------------------------
def _split_heads(t, num_heads):
    """(S, E) f32 -> (H, S, dh) bf16, head-major for batched MXU einsums."""
    s, e = t.shape
    dh = e // num_heads
    return pltpu.einshape("shd->hsd", t.reshape(s, num_heads, dh)).astype(jnp.bfloat16)


def _attention(q, k, v, num_heads):
    """Multi-head attention core; the 1/sqrt(dh) scale is already folded into q."""
    sq, e = q.shape
    qh = _split_heads(q, num_heads)                       # (H, Sq, dh)  bf16
    kh = _split_heads(k, num_heads)                       # (H, Skv, dh) bf16
    vh = _split_heads(v, num_heads)                       # (H, Skv, dh) bf16
    scores = jnp.einsum("hqd,hkd->hqk", qh, kh,
                        preferred_element_type=jnp.float32)
    scores = scores - jnp.max(scores, axis=-1, keepdims=True)
    p = jnp.exp(scores)
    p = p * pl.reciprocal(jnp.sum(p, axis=-1, keepdims=True), approx=True)
    ctx = jnp.einsum("hqk,hkd->hqd", p.astype(jnp.bfloat16), vh,
                     preferred_element_type=jnp.float32)  # (H, Sq, dh) f32
    return pltpu.einshape("hsd->shd", ctx).reshape(sq, e)  # (Sq, E) f32


def _add_layernorm(y, x, gamma, beta):
    """Residual add + LayerNorm (f32)."""
    t = x + y
    mean = jnp.mean(t, axis=-1, keepdims=True)
    c = t - mean
    var = jnp.mean(c * c, axis=-1, keepdims=True)
    return c * jax.lax.rsqrt(var + LN_EPS) * gamma + beta


# ---------------------------------------------------------------------------------
# Fused decoder-stack kernel (one grid step = one batch row, full stack)
# ---------------------------------------------------------------------------------
def _decoder_stack_kernel(*refs, num_layers, num_heads):
    n_in = 2 + PER_LAYER * num_layers + 2
    in_refs = refs[:n_in]
    out_ref = refs[n_in]

    q0_ref, enc_ref = in_refs[0], in_refs[1]
    layer_refs = in_refs[2:2 + PER_LAYER * num_layers]
    wh_ref = in_refs[2 + PER_LAYER * num_layers]
    bh_ref = in_refs[3 + PER_LAYER * num_layers]

    e = q0_ref.shape[-1]
    x = q0_ref[...]                              # (S, E) f32: decoder query + pos enc
    kv_bf = enc_ref[0].astype(jnp.bfloat16)      # (Skv, E): this batch row's encoder latent

    for l in range(num_layers):                  # static unroll; weights stay VMEM-resident
        (sa_wqkv, sa_bqkv, sa_wo, sa_bo, ln1_g, ln1_b,
         ca_wq, ca_bq, ca_wkv, ca_bkv, ca_wo, ca_bo, ln2_g, ln2_b,
         w1, b1, w2, b2, ln3_g, ln3_b) = layer_refs[l * PER_LAYER:(l + 1) * PER_LAYER]

        # ---- self-attention (fused QKV projection) -------------------------------
        xb = x.astype(jnp.bfloat16)
        qkv = jnp.dot(xb, sa_wqkv[...], preferred_element_type=jnp.float32) + sa_bqkv[...]
        attn = _attention(qkv[:, :e], qkv[:, e:2 * e], qkv[:, 2 * e:], num_heads)
        y = jnp.dot(attn.astype(jnp.bfloat16), sa_wo[...],
                    preferred_element_type=jnp.float32) + sa_bo[...]
        x = _add_layernorm(y, x, ln1_g[...], ln1_b[...])

        # ---- cross-attention (fused K/V projection of encoder latent) ------------
        xb = x.astype(jnp.bfloat16)
        q = jnp.dot(xb, ca_wq[...], preferred_element_type=jnp.float32) + ca_bq[...]
        kvp = jnp.dot(kv_bf, ca_wkv[...], preferred_element_type=jnp.float32) + ca_bkv[...]
        attn = _attention(q, kvp[:, :e], kvp[:, e:], num_heads)
        y = jnp.dot(attn.astype(jnp.bfloat16), ca_wo[...],
                    preferred_element_type=jnp.float32) + ca_bo[...]
        x = _add_layernorm(y, x, ln2_g[...], ln2_b[...])

        # ---- feed-forward ---------------------------------------------------------
        xb = x.astype(jnp.bfloat16)
        h = jnp.dot(xb, w1[...], preferred_element_type=jnp.float32) + b1[...]
        h = jnp.maximum(h, 0.0).astype(jnp.bfloat16)
        y = jnp.dot(h, w2[...], preferred_element_type=jnp.float32) + b2[...]
        x = _add_layernorm(y, x, ln3_g[...], ln3_b[...])

    # ---- fused classification / regression heads: single (E, 2) matmul -----------
    hr = jnp.dot(x.astype(jnp.bfloat16), wh_ref[...],
                 preferred_element_type=jnp.float32) + bh_ref[...]
    out_ref[0] = hr                              # (S, 2): [:, 0]=cls, [:, 1]=reg


# ---------------------------------------------------------------------------------
# Parameters (deterministic synthetic init) + positional encoding
# ---------------------------------------------------------------------------------
def sinusoidal_encoding(seq_len, embed_dim):
    pos = jnp.arange(seq_len, dtype=jnp.float32)[:, None]
    div = jnp.exp(jnp.arange(0, embed_dim, 2, dtype=jnp.float32)
                  * (-math.log(10000.0) / embed_dim))
    pe = jnp.zeros((seq_len, embed_dim), dtype=jnp.float32)
    pe = pe.at[:, 0::2].set(jnp.sin(pos * div))
    pe = pe.at[:, 1::2].set(jnp.cos(pos * div))
    return pe


def init_params(key):
    E, F = EMBED_DIM, FFN_DIM
    keys = iter(jax.random.split(key, NUM_LAYERS * 20 + 8))

    def rand(shape, scale=0.05):
        return (scale * jax.random.normal(next(keys), shape)).astype(jnp.float32)

    def attn_params():
        return dict(wq=rand((E, E)), wk=rand((E, E)), wv=rand((E, E)),
                    bq=rand((1, E)), bk=rand((1, E)), bv=rand((1, E)),
                    wo=rand((E, E)), bo=rand((1, E)))

    def ln_params():
        return dict(g=jnp.ones((1, E), jnp.float32), b=jnp.zeros((1, E), jnp.float32))

    layers = []
    for _ in range(NUM_LAYERS):
        layers.append(dict(
            sa=attn_params(), ln1=ln_params(),
            ca=attn_params(), ln2=ln_params(),
            ffn=dict(w1t=rand((E, F)), b1=rand((1, F)),
                     w2t=rand((F, E)), b2=rand((1, E))),
            ln3=ln_params()))

    return dict(
        decoder_query=rand((1, SEQ_LEN, E), scale=1.0),
        layers=layers,
        cls=dict(w=rand((1, E)), b=rand((1, 1))),
        reg=dict(w=rand((1, E)), b=rand((1, 1))),
    )


def prepare_kernel_params(params):
    """Kernel-layout params: fused QKV/KV weights, folded 1/sqrt(dh), bf16 matmul weights."""
    E = EMBED_DIM
    scale = 1.0 / math.sqrt(E // NUM_HEADS)
    bf16 = jnp.bfloat16

    layer_flat = []
    for layer in params["layers"]:
        sa, ca, f = layer["sa"], layer["ca"], layer["ffn"]
        layer_flat += [
            jnp.concatenate([sa["wq"] * scale, sa["wk"], sa["wv"]], axis=1).astype(bf16),
            jnp.concatenate([sa["bq"] * scale, sa["bk"], sa["bv"]], axis=1),
            sa["wo"].astype(bf16), sa["bo"],
            layer["ln1"]["g"], layer["ln1"]["b"],
            (ca["wq"] * scale).astype(bf16), ca["bq"] * scale,
            jnp.concatenate([ca["wk"], ca["wv"]], axis=1).astype(bf16),
            jnp.concatenate([ca["bk"], ca["bv"]], axis=1),
            ca["wo"].astype(bf16), ca["bo"],
            layer["ln2"]["g"], layer["ln2"]["b"],
            f["w1t"].astype(bf16), f["b1"],
            f["w2t"].astype(bf16), f["b2"],
            layer["ln3"]["g"], layer["ln3"]["b"],
        ]

    query_init = (params["decoder_query"][0]
                  + sinusoidal_encoding(SEQ_LEN, EMBED_DIM)).astype(jnp.float32)
    w_heads = jnp.concatenate([params["cls"]["w"], params["reg"]["w"]], axis=0).T.astype(bf16)
    b_heads = jnp.concatenate([params["cls"]["b"], params["reg"]["b"]], axis=1)

    return dict(query_init=query_init, layer_flat=layer_flat,
                w_heads=w_heads, b_heads=b_heads)


# ---------------------------------------------------------------------------------
# Forward pass (single fused pallas_call) — mirrors MultiTaskTranslationDecoder.forward
# ---------------------------------------------------------------------------------
def forward(params, encoder_latent):
    kp = prepare_kernel_params(params)
    B = encoder_latent.shape[0]
    S = SEQ_LEN

    args = ([kp["query_init"], encoder_latent] + kp["layer_flat"]
            + [kp["w_heads"], kp["b_heads"]])
    in_specs = ([_const_spec(kp["query_init"]), _batched_spec(encoder_latent)]
                + [_const_spec(a) for a in kp["layer_flat"]]
                + [_const_spec(kp["w_heads"]), _const_spec(kp["b_heads"])])

    heads_out = pl.pallas_call(
        functools.partial(_decoder_stack_kernel,
                          num_layers=NUM_LAYERS, num_heads=NUM_HEADS),
        out_shape=jax.ShapeDtypeStruct((B, S, 2), jnp.float32),
        grid=(B,),
        in_specs=in_specs,
        out_specs=pl.BlockSpec((1, S, 2), lambda b: (b, 0, 0)),
        compiler_params=pltpu.CompilerParams(
            dimension_semantics=("parallel",),          # lets v7x split the batch over 2 TCs
            vmem_limit_bytes=48 * 1024 * 1024),         # headroom for weight-resident prod sizes
    )(*args)

    return heads_out[..., 0], heads_out[..., 1]         # (B, S) each: cls, reg


# ---------------------------------------------------------------------------------
# Pure-JAX reference (module-faithful f32 math) for correctness check
# ---------------------------------------------------------------------------------
def _ref_mha(x, kv, p, H):
    q = x @ p["wq"] + p["bq"]
    k = kv @ p["wk"] + p["bk"]
    v = kv @ p["wv"] + p["bv"]
    B, S, E = q.shape
    Sk = k.shape[1]
    dh = E // H
    qh = q.reshape(B, S, H, dh).transpose(0, 2, 1, 3)
    kh = k.reshape(B, Sk, H, dh).transpose(0, 2, 1, 3)
    vh = v.reshape(B, Sk, H, dh).transpose(0, 2, 1, 3)
    s = jnp.einsum("bhqd,bhkd->bhqk", qh, kh) / math.sqrt(dh)
    a = jax.nn.softmax(s, axis=-1)
    ctx = jnp.einsum("bhqk,bhkd->bhqd", a, vh).transpose(0, 2, 1, 3).reshape(B, S, E)
    return ctx @ p["wo"] + p["bo"]


def _ref_ln(x, p):
    mean = jnp.mean(x, axis=-1, keepdims=True)
    var = jnp.mean((x - mean) ** 2, axis=-1, keepdims=True)
    return (x - mean) * jax.lax.rsqrt(var + LN_EPS) * p["g"] + p["b"]


def ref_forward(params, mem):
    B = mem.shape[0]
    pos = sinusoidal_encoding(SEQ_LEN, EMBED_DIM)[None]
    x = jnp.broadcast_to(params["decoder_query"] + pos, (B, SEQ_LEN, EMBED_DIM))
    for layer in params["layers"]:
        x = _ref_ln(x + _ref_mha(x, x, layer["sa"], NUM_HEADS), layer["ln1"])
        x = _ref_ln(x + _ref_mha(x, mem, layer["ca"], NUM_HEADS), layer["ln2"])
        f = layer["ffn"]
        h = jnp.maximum(x @ f["w1t"] + f["b1"], 0.0)
        x = _ref_ln(x + (h @ f["w2t"] + f["b2"]), layer["ln3"])
    cls = jnp.sum(x * params["cls"]["w"][None], axis=-1) + params["cls"]["b"][0, 0]
    reg = jnp.sum(x * params["reg"]["w"][None], axis=-1) + params["reg"]["b"][0, 0]
    return cls, reg


# ---------------------------------------------------------------------------------
if __name__ == "__main__":
    key = jax.random.PRNGKey(0)
    k_params, k_input = jax.random.split(key)
    params = init_params(k_params)
    encoder_latent = jax.random.normal(
        k_input, (BATCH, MEM_LEN, EMBED_DIM), dtype=jnp.float32)

    cls_out, reg_out = forward(params, encoder_latent)
    jax.block_until_ready((cls_out, reg_out))

    # sanity: compare against a pure-f32 JAX reference of the module's math.
    # tolerance accounts for bf16 MXU operands + approx softmax reciprocal in the kernel.
    cls_ref, reg_ref = ref_forward(params, encoder_latent)
    assert cls_out.shape == (BATCH, SEQ_LEN) and reg_out.shape == (BATCH, SEQ_LEN)
    assert jnp.allclose(cls_out, cls_ref, atol=2e-2, rtol=2e-2)
    assert jnp.allclose(reg_out, reg_ref, atol=2e-2, rtol=2e-2)

    # TODO(synk): dropout layers are treated as identity (inference/eval semantics);
    #             no tgt_mask is applied, matching the original module's forward().
    print("KERNEL_OK")
</pallas_src>

<mosaic_0001>
module attributes {stable_mosaic.version = 11 : i64} {
  func.func @_decoder_stack_kernel(%arg0: i32, %arg1: memref<8x32xf32, #tpu.memory_space<vmem>>, %arg2: memref<1x8x32xf32, #tpu.memory_space<vmem>>, %arg3: memref<32x96xbf16, #tpu.memory_space<vmem>>, %arg4: memref<1x96xf32, #tpu.memory_space<vmem>>, %arg5: memref<32x32xbf16, #tpu.memory_space<vmem>>, %arg6: memref<1x32xf32, #tpu.memory_space<vmem>>, %arg7: memref<1x32xf32, #tpu.memory_space<vmem>>, %arg8: memref<1x32xf32, #tpu.memory_space<vmem>>, %arg9: memref<32x32xbf16, #tpu.memory_space<vmem>>, %arg10: memref<1x32xf32, #tpu.memory_space<vmem>>, %arg11: memref<32x64xbf16, #tpu.memory_space<vmem>>, %arg12: memref<1x64xf32, #tpu.memory_space<vmem>>, %arg13: memref<32x32xbf16, #tpu.memory_space<vmem>>, %arg14: memref<1x32xf32, #tpu.memory_space<vmem>>, %arg15: memref<1x32xf32, #tpu.memory_space<vmem>>, %arg16: memref<1x32xf32, #tpu.memory_space<vmem>>, %arg17: memref<32x64xbf16, #tpu.memory_space<vmem>>, %arg18: memref<1x64xf32, #tpu.memory_space<vmem>>, %arg19: memref<64x32xbf16, #tpu.memory_space<vmem>>, %arg20: memref<1x32xf32, #tpu.memory_space<vmem>>, %arg21: memref<1x32xf32, #tpu.memory_space<vmem>>, %arg22: memref<1x32xf32, #tpu.memory_space<vmem>>, %arg23: memref<32x96xbf16, #tpu.memory_space<vmem>>, %arg24: memref<1x96xf32, #tpu.memory_space<vmem>>, %arg25: memref<32x32xbf16, #tpu.memory_space<vmem>>, %arg26: memref<1x32xf32, #tpu.memory_space<vmem>>, %arg27: memref<1x32xf32, #tpu.memory_space<vmem>>, %arg28: memref<1x32xf32, #tpu.memory_space<vmem>>, %arg29: memref<32x32xbf16, #tpu.memory_space<vmem>>, %arg30: memref<1x32xf32, #tpu.memory_space<vmem>>, %arg31: memref<32x64xbf16, #tpu.memory_space<vmem>>, %arg32: memref<1x64xf32, #tpu.memory_space<vmem>>, %arg33: memref<32x32xbf16, #tpu.memory_space<vmem>>, %arg34: memref<1x32xf32, #tpu.memory_space<vmem>>, %arg35: memref<1x32xf32, #tpu.memory_space<vmem>>, %arg36: memref<1x32xf32, #tpu.memory_space<vmem>>, %arg37: memref<32x64xbf16, #tpu.memory_space<vmem>>, %arg38: memref<1x64xf32, #tpu.memory_space<vmem>>, %arg39: memref<64x32xbf16, #tpu.memory_space<vmem>>, %arg40: memref<1x32xf32, #tpu.memory_space<vmem>>, %arg41: memref<1x32xf32, #tpu.memory_space<vmem>>, %arg42: memref<1x32xf32, #tpu.memory_space<vmem>>, %arg43: memref<32x2xbf16, #tpu.memory_space<vmem>>, %arg44: memref<1x2xf32, #tpu.memory_space<vmem>>, %arg45: memref<1x8x2xf32, #tpu.memory_space<vmem>>) attributes {dimension_semantics = [#tpu.dimension_semantics<parallel>], iteration_bounds = array<i64: 2>, scalar_prefetch = 0 : i64, scratch_operands = 0 : i64, tpu.core_type = #tpu.core_type<tc>, window_params = [{pipeline_mode = #tpu.pipeline_mode<synchronous>, transform_indices = @transform_0, window_bounds = array<i64: 8, 32>}, {transform_indices = @transform_1, window_bounds = array<i64: 1, 8, 32>}, {pipeline_mode = #tpu.pipeline_mode<synchronous>, transform_indices = @transform_2, window_bounds = array<i64: 32, 96>}, {pipeline_mode = #tpu.pipeline_mode<synchronous>, transform_indices = @transform_3, window_bounds = array<i64: 1, 96>}, {pipeline_mode = #tpu.pipeline_mode<synchronous>, transform_indices = @transform_4, window_bounds = array<i64: 32, 32>}, {pipeline_mode = #tpu.pipeline_mode<synchronous>, transform_indices = @transform_5, window_bounds = array<i64: 1, 32>}, {pipeline_mode = #tpu.pipeline_mode<synchronous>, transform_indices = @transform_6, window_bounds = array<i64: 1, 32>}, {pipeline_mode = #tpu.pipeline_mode<synchronous>, transform_indices = @transform_7, window_bounds = array<i64: 1, 32>}, {pipeline_mode = #tpu.pipeline_mode<synchronous>, transform_indices = @transform_8, window_bounds = array<i64: 32, 32>}, {pipeline_mode = #tpu.pipeline_mode<synchronous>, transform_indices = @transform_9, window_bounds = array<i64: 1, 32>}, {pipeline_mode = #tpu.pipeline_mode<synchronous>, transform_indices = @transform_10, window_bounds = array<i64: 32, 64>}, {pipeline_mode = #tpu.pipeline_mode<synchronous>, transform_indices = @transform_11, window_bounds = array<i64: 1, 64>}, {pipeline_mode = #tpu.pipeline_mode<synchronous>, transform_indices = @transform_12, window_bounds = array<i64: 32, 32>}, {pipeline_mode = #tpu.pipeline_mode<synchronous>, transform_indices = @transform_13, window_bounds = array<i64: 1, 32>}, {pipeline_mode = #tpu.pipeline_mode<synchronous>, transform_indices = @transform_14, window_bounds = array<i64: 1, 32>}, {pipeline_mode = #tpu.pipeline_mode<synchronous>, transform_indices = @transform_15, window_bounds = array<i64: 1, 32>}, {pipeline_mode = #tpu.pipeline_mode<synchronous>, transform_indices = @transform_16, window_bounds = array<i64: 32, 64>}, {pipeline_mode = #tpu.pipeline_mode<synchronous>, transform_indices = @transform_17, window_bounds = array<i64: 1, 64>}, {pipeline_mode = #tpu.pipeline_mode<synchronous>, transform_indices = @transform_18, window_bounds = array<i64: 64, 32>}, {pipeline_mode = #tpu.pipeline_mode<synchronous>, transform_indices = @transform_19, window_bounds = array<i64: 1, 32>}, {pipeline_mode = #tpu.pipeline_mode<synchronous>, transform_indices = @transform_20, window_bounds = array<i64: 1, 32>}, {pipeline_mode = #tpu.pipeline_mode<synchronous>, transform_indices = @transform_21, window_bounds = array<i64: 1, 32>}, {pipeline_mode = #tpu.pipeline_mode<synchronous>, transform_indices = @transform_22, window_bounds = array<i64: 32, 96>}, {pipeline_mode = #tpu.pipeline_mode<synchronous>, transform_indices = @transform_23, window_bounds = array<i64: 1, 96>}, {pipeline_mode = #tpu.pipeline_mode<synchronous>, transform_indices = @transform_24, window_bounds = array<i64: 32, 32>}, {pipeline_mode = #tpu.pipeline_mode<synchronous>, transform_indices = @transform_25, window_bounds = array<i64: 1, 32>}, {pipeline_mode = #tpu.pipeline_mode<synchronous>, transform_indices = @transform_26, window_bounds = array<i64: 1, 32>}, {pipeline_mode = #tpu.pipeline_mode<synchronous>, transform_indices = @transform_27, window_bounds = array<i64: 1, 32>}, {pipeline_mode = #tpu.pipeline_mode<synchronous>, transform_indices = @transform_28, window_bounds = array<i64: 32, 32>}, {pipeline_mode = #tpu.pipeline_mode<synchronous>, transform_indices = @transform_29, window_bounds = array<i64: 1, 32>}, {pipeline_mode = #tpu.pipeline_mode<synchronous>, transform_indices = @transform_30, window_bounds = array<i64: 32, 64>}, {pipeline_mode = #tpu.pipeline_mode<synchronous>, transform_indices = @transform_31, window_bounds = array<i64: 1, 64>}, {pipeline_mode = #tpu.pipeline_mode<synchronous>, transform_indices = @transform_32, window_bounds = array<i64: 32, 32>}, {pipeline_mode = #tpu.pipeline_mode<synchronous>, transform_indices = @transform_33, window_bounds = array<i64: 1, 32>}, {pipeline_mode = #tpu.pipeline_mode<synchronous>, transform_indices = @transform_34, window_bounds = array<i64: 1, 32>}, {pipeline_mode = #tpu.pipeline_mode<synchronous>, transform_indices = @transform_35, window_bounds = array<i64: 1, 32>}, {pipeline_mode = #tpu.pipeline_mode<synchronous>, transform_indices = @transform_36, window_bounds = array<i64: 32, 64>}, {pipeline_mode = #tpu.pipeline_mode<synchronous>, transform_indices = @transform_37, window_bounds = array<i64: 1, 64>}, {pipeline_mode = #tpu.pipeline_mode<synchronous>, transform_indices = @transform_38, window_bounds = array<i64: 64, 32>}, {pipeline_mode = #tpu.pipeline_mode<synchronous>, transform_indices = @transform_39, window_bounds = array<i64: 1, 32>}, {pipeline_mode = #tpu.pipeline_mode<synchronous>, transform_indices = @transform_40, window_bounds = array<i64: 1, 32>}, {pipeline_mode = #tpu.pipeline_mode<synchronous>, transform_indices = @transform_41, window_bounds = array<i64: 1, 32>}, {pipeline_mode = #tpu.pipeline_mode<synchronous>, transform_indices = @transform_42, window_bounds = array<i64: 32, 2>}, {pipeline_mode = #tpu.pipeline_mode<synchronous>, transform_indices = @transform_43, window_bounds = array<i64: 1, 2>}, {transform_indices = @transform_44, window_bounds = array<i64: 1, 8, 2>}]} {
    %c0 = arith.constant 0 : index
    %c0_0 = arith.constant 0 : index
    %0 = vector.load %arg1[%c0, %c0_0] : memref<8x32xf32, #tpu.memory_space<vmem>>, vector<8x32xf32>
    %c0_1 = arith.constant 0 : index
    %c0_2 = arith.constant 0 : index
    %c0_3 = arith.constant 0 : index
    %1 = vector.load %arg2[%c0_1, %c0_2, %c0_3] : memref<1x8x32xf32, #tpu.memory_space<vmem>>, vector<1x8x32xf32>
    %2 = vector.shape_cast %1 : vector<1x8x32xf32> to vector<8x32xf32>
    %3 = arith.truncf %2 : vector<8x32xf32> to vector<8x32xbf16>
    %4 = arith.truncf %0 : vector<8x32xf32> to vector<8x32xbf16>
    %c0_4 = arith.constant 0 : index
    %c0_5 = arith.constant 0 : index
    %5 = vector.load %arg3[%c0_4, %c0_5] : memref<32x96xbf16, #tpu.memory_space<vmem>>, vector<32x96xbf16>
    %cst = arith.constant dense<0.000000e+00> : vector<8x96xf32>
    %6 = tpu.matmul %4, %5, %cst {dimension_numbers = #tpu.dot_dimension_numbers<[1], [0], [0], [1], [0, 0, 1, 1], [], []>} : vector<8x32xbf16>, vector<32x96xbf16>, vector<8x96xf32> -> vector<8x96xf32>
    %c0_6 = arith.constant 0 : index
    %c0_7 = arith.constant 0 : index
    %7 = vector.load %arg4[%c0_6, %c0_7] : memref<1x96xf32, #tpu.memory_space<vmem>>, vector<1x96xf32>
    %8 = vector.broadcast %7 : vector<1x96xf32> to vector<8x96xf32>
    %9 = arith.addf %6, %8 : vector<8x96xf32>
    %10 = vector.extract_strided_slice %9 {offsets = [0, 0], sizes = [8, 32], strides = [1, 1]} : vector<8x96xf32> to vector<8x32xf32>
    %11 = vector.extract_strided_slice %9 {offsets = [0, 32], sizes = [8, 32], strides = [1, 1]} : vector<8x96xf32> to vector<8x32xf32>
    %12 = vector.extract_strided_slice %9 {offsets = [0, 64], sizes = [8, 32], strides = [1, 1]} : vector<8x96xf32> to vector<8x32xf32>
    %13 = vector.shape_cast %10 : vector<8x32xf32> to vector<8x4x8xf32>
    %14 = tpu.transpose %13, [1, 0, 2] : vector<8x4x8xf32> -> vector<4x8x8xf32>
    %15 = arith.truncf %14 : vector<4x8x8xf32> to vector<4x8x8xbf16>
    %16 = vector.shape_cast %11 : vector<8x32xf32> to vector<8x4x8xf32>
    %17 = tpu.transpose %16, [1, 0, 2] : vector<8x4x8xf32> -> vector<4x8x8xf32>
    %18 = arith.truncf %17 : vector<4x8x8xf32> to vector<4x8x8xbf16>
    %19 = vector.shape_cast %12 : vector<8x32xf32> to vector<8x4x8xf32>
    %20 = tpu.transpose %19, [1, 0, 2] : vector<8x4x8xf32> -> vector<4x8x8xf32>
    %21 = arith.truncf %20 : vector<4x8x8xf32> to vector<4x8x8xbf16>
    "tpu.trace_start"() <{level = 10 : i32, message = "hqd,hkd->hqk"}> : () -> ()
    %cst_8 = arith.constant dense<0.000000e+00> : vector<4x8x8xf32>
    %22 = tpu.matmul %15, %18, %cst_8 {dimension_numbers = #tpu.dot_dimension_numbers<[2], [2], [1], [1], [0, 0, 0, 1, 1, 1], [0], [0]>} : vector<4x8x8xbf16>, vector<4x8x8xbf16>, vector<4x8x8xf32> -> vector<4x8x8xf32>
    "tpu.trace_stop"() : () -> ()
    %cst_9 = arith.constant dense<0xFF800000> : vector<4x8xf32>
    %23 = vector.multi_reduction <maximumf>, %22, %cst_9 [2] : vector<4x8x8xf32> to vector<4x8xf32>
    %24 = vector.shape_cast %23 : vector<4x8xf32> to vector<4x8x1xf32>
    %25 = vector.broadcast %24 : vector<4x8x1xf32> to vector<4x8x8xf32>
    %26 = arith.subf %22, %25 : vector<4x8x8xf32>
    %27 = math.exp %26 : vector<4x8x8xf32>
    %cst_10 = arith.constant dense<0.000000e+00> : vector<4x8xf32>
    %28 = vector.multi_reduction <add>, %27, %cst_10 [2] : vector<4x8x8xf32> to vector<4x8xf32>
    %29 = vector.shape_cast %28 : vector<4x8xf32> to vector<4x8x1xf32>
    %30 = tpu.reciprocal %29 {approx = true} : vector<4x8x1xf32> -> vector<4x8x1xf32>
    %31 = vector.broadcast %30 : vector<4x8x1xf32> to vector<4x8x8xf32>
    %32 = arith.mulf %27, %31 : vector<4x8x8xf32>
    %33 = arith.truncf %32 : vector<4x8x8xf32> to vector<4x8x8xbf16>
    "tpu.trace_start"() <{level = 10 : i32, message = "hqk,hkd->hqd"}> : () -> ()
    %cst_11 = arith.constant dense<0.000000e+00> : vector<4x8x8xf32>
    %34 = tpu.matmul %33, %21, %cst_11 {dimension_numbers = #tpu.dot_dimension_numbers<[2], [1], [1], [2], [0, 0, 0, 1, 1, 2], [0], [0]>} : vector<4x8x8xbf16>, vector<4x8x8xbf16>, vector<4x8x8xf32> -> vector<4x8x8xf32>
    "tpu.trace_stop"() : () -> ()
    %35 = tpu.transpose %34, [1, 0, 2] : vector<4x8x8xf32> -> vector<8x4x8xf32>
    %36 = vector.shape_cast %35 : vector<8x4x8xf32> to vector<8x32xf32>
    %37 = arith.truncf %36 : vector<8x32xf32> to vector<8x32xbf16>
    %c0_12 = arith.constant 0 : index
    %c0_13 = arith.constant 0 : index
    %38 = vector.load %arg5[%c0_12, %c0_13] : memref<32x32xbf16, #tpu.memory_space<vmem>>, vector<32x32xbf16>
    %cst_14 = arith.constant dense<0.000000e+00> : vector<8x32xf32>
    %39 = tpu.matmul %37, %38, %cst_14 {dimension_numbers = #tpu.dot_dimension_numbers<[1], [0], [0], [1], [0, 0, 1, 1], [], []>} : vector<8x32xbf16>, vector<32x32xbf16>, vector<8x32xf32> -> vector<8x32xf32>
    %c0_15 = arith.constant 0 : index
    %c0_16 = arith.constant 0 : index
    %40 = vector.load %arg6[%c0_15, %c0_16] : memref<1x32xf32, #tpu.memory_space<vmem>>, vector<1x32xf32>
    %41 = vector.broadcast %40 : vector<1x32xf32> to vector<8x32xf32>
    %42 = arith.addf %39, %41 : vector<8x32xf32>
    %c0_17 = arith.constant 0 : index
    %c0_18 = arith.constant 0 : index
    %43 = vector.load %arg7[%c0_17, %c0_18] : memref<1x32xf32, #tpu.memory_space<vmem>>, vector<1x32xf32>
    %c0_19 = arith.constant 0 : index
    %c0_20 = arith.constant 0 : index
    %44 = vector.load %arg8[%c0_19, %c0_20] : memref<1x32xf32, #tpu.memory_space<vmem>>, vector<1x32xf32>
    %45 = arith.addf %0, %42 : vector<8x32xf32>
    %cst_21 = arith.constant dense<0.000000e+00> : vector<8xf32>
    %46 = vector.multi_reduction <add>, %45, %cst_21 [1] : vector<8x32xf32> to vector<8xf32>
    %47 = vector.shape_cast %46 : vector<8xf32> to vector<8x1xf32>
    %cst_22 = arith.constant 3.200000e+01 : f32
    %48 = vector.broadcast %cst_22 : f32 to vector<8x1xf32>
    %49 = arith.divf %47, %48 : vector<8x1xf32>
    %50 = vector.broadcast %49 : vector<8x1xf32> to vector<8x32xf32>
    %51 = arith.subf %45, %50 : vector<8x32xf32>
    %52 = arith.mulf %51, %51 : vector<8x32xf32>
    %cst_23 = arith.constant dense<0.000000e+00> : vector<8xf32>
    %53 = vector.multi_reduction <add>, %52, %cst_23 [1] : vector<8x32xf32> to vector<8xf32>
    %54 = vector.shape_cast %53 : vector<8xf32> to vector<8x1xf32>
    %cst_24 = arith.constant 3.200000e+01 : f32
    %55 = vector.broadcast %cst_24 : f32 to vector<8x1xf32>
    %56 = arith.divf %54, %55 : vector<8x1xf32>
    %cst_25 = arith.constant 9.99999974E-6 : f32
    %57 = vector.broadcast %cst_25 : f32 to vector<8x1xf32>
    %58 = arith.addf %56, %57 : vector<8x1xf32>
    %59 = math.rsqrt %58 : vector<8x1xf32>
    %60 = vector.broadcast %59 : vector<8x1xf32> to vector<8x32xf32>
    %61 = arith.mulf %51, %60 : vector<8x32xf32>
    %62 = vector.broadcast %43 : vector<1x32xf32> to vector<8x32xf32>
    %63 = arith.mulf %61, %62 : vector<8x32xf32>
    %64 = vector.broadcast %44 : vector<1x32xf32> to vector<8x32xf32>
    %65 = arith.addf %63, %64 : vector<8x32xf32>
    %66 = arith.truncf %65 : vector<8x32xf32> to vector<8x32xbf16>
    %c0_26 = arith.constant 0 : index
    %c0_27 = arith.constant 0 : index
    %67 = vector.load %arg9[%c0_26, %c0_27] : memref<32x32xbf16, #tpu.memory_space<vmem>>, vector<32x32xbf16>
    %cst_28 = arith.constant dense<0.000000e+00> : vector<8x32xf32>
    %68 = tpu.matmul %66, %67, %cst_28 {dimension_numbers = #tpu.dot_dimension_numbers<[1], [0], [0], [1], [0, 0, 1, 1], [], []>} : vector<8x32xbf16>, vector<32x32xbf16>, vector<8x32xf32> -> vector<8x32xf32>
    %c0_29 = arith.constant 0 : index
    %c0_30 = arith.constant 0 : index
    %69 = vector.load %arg10[%c0_29, %c0_30] : memref<1x32xf32, #tpu.memory_space<vmem>>, vector<1x32xf32>
    %70 = vector.broadcast %69 : vector<1x32xf32> to vector<8x32xf32>
    %71 = arith.addf %68, %70 : vector<8x32xf32>
    %c0_31 = arith.constant 0 : index
    %c0_32 = arith.constant 0 : index
    %72 = vector.load %arg11[%c0_31, %c0_32] : memref<32x64xbf16, #tpu.memory_space<vmem>>, vector<32x64xbf16>
    %cst_33 = arith.constant dense<0.000000e+00> : vector<8x64xf32>
    %73 = tpu.matmul %3, %72, %cst_33 {dimension_numbers = #tpu.dot_dimension_numbers<[1], [0], [0], [1], [0, 0, 1, 1], [], []>} : vector<8x32xbf16>, vector<32x64xbf16>, vector<8x64xf32> -> vector<8x64xf32>
    %c0_34 = arith.constant 0 : index
    %c0_35 = arith.constant 0 : index
    %74 = vector.load %arg12[%c0_34, %c0_35] : memref<1x64xf32, #tpu.memory_space<vmem>>, vector<1x64xf32>
    %75 = vector.broadcast %74 : vector<1x64xf32> to vector<8x64xf32>
    %76 = arith.addf %73, %75 : vector<8x64xf32>
    %77 = vector.extract_strided_slice %76 {offsets = [0, 0], sizes = [8, 32], strides = [1, 1]} : vector<8x64xf32> to vector<8x32xf32>
    %78 = vector.extract_strided_slice %76 {offsets = [0, 32], sizes = [8, 32], strides = [1, 1]} : vector<8x64xf32> to vector<8x32xf32>
    %79 = vector.shape_cast %71 : vector<8x32xf32> to vector<8x4x8xf32>
    %80 = tpu.transpose %79, [1, 0, 2] : vector<8x4x8xf32> -> vector<4x8x8xf32>
    %81 = arith.truncf %80 : vector<4x8x8xf32> to vector<4x8x8xbf16>
    %82 = vector.shape_cast %77 : vector<8x32xf32> to vector<8x4x8xf32>
    %83 = tpu.transpose %82, [1, 0, 2] : vector<8x4x8xf32> -> vector<4x8x8xf32>
    %84 = arith.truncf %83 : vector<4x8x8xf32> to vector<4x8x8xbf16>
    %85 = vector.shape_cast %78 : vector<8x32xf32> to vector<8x4x8xf32>
    %86 = tpu.transpose %85, [1, 0, 2] : vector<8x4x8xf32> -> vector<4x8x8xf32>
    %87 = arith.truncf %86 : vector<4x8x8xf32> to vector<4x8x8xbf16>
    "tpu.trace_start"() <{level = 10 : i32, message = "hqd,hkd->hqk"}> : () -> ()
    %cst_36 = arith.constant dense<0.000000e+00> : vector<4x8x8xf32>
    %88 = tpu.matmul %81, %84, %cst_36 {dimension_numbers = #tpu.dot_dimension_numbers<[2], [2], [1], [1], [0, 0, 0, 1, 1, 1], [0], [0]>} : vector<4x8x8xbf16>, vector<4x8x8xbf16>, vector<4x8x8xf32> -> vector<4x8x8xf32>
    "tpu.trace_stop"() : () -> ()
    %cst_37 = arith.constant dense<0xFF800000> : vector<4x8xf32>
    %89 = vector.multi_reduction <maximumf>, %88, %cst_37 [2] : vector<4x8x8xf32> to vector<4x8xf32>
    %90 = vector.shape_cast %89 : vector<4x8xf32> to vector<4x8x1xf32>
    %91 = vector.broadcast %90 : vector<4x8x1xf32> to vector<4x8x8xf32>
    %92 = arith.subf %88, %91 : vector<4x8x8xf32>
    %93 = math.exp %92 : vector<4x8x8xf32>
    %cst_38 = arith.constant dense<0.000000e+00> : vector<4x8xf32>
    %94 = vector.multi_reduction <add>, %93, %cst_38 [2] : vector<4x8x8xf32> to vector<4x8xf32>
    %95 = vector.shape_cast %94 : vector<4x8xf32> to vector<4x8x1xf32>
    %96 = tpu.reciprocal %95 {approx = true} : vector<4x8x1xf32> -> vector<4x8x1xf32>
    %97 = vector.broadcast %96 : vector<4x8x1xf32> to vector<4x8x8xf32>
    %98 = arith.mulf %93, %97 : vector<4x8x8xf32>
    %99 = arith.truncf %98 : vector<4x8x8xf32> to vector<4x8x8xbf16>
    "tpu.trace_start"() <{level = 10 : i32, message = "hqk,hkd->hqd"}> : () -> ()
    %cst_39 = arith.constant dense<0.000000e+00> : vector<4x8x8xf32>
    %100 = tpu.matmul %99, %87, %cst_39 {dimension_numbers = #tpu.dot_dimension_numbers<[2], [1], [1], [2], [0, 0, 0, 1, 1, 2], [0], [0]>} : vector<4x8x8xbf16>, vector<4x8x8xbf16>, vector<4x8x8xf32> -> vector<4x8x8xf32>
    "tpu.trace_stop"() : () -> ()
    %101 = tpu.transpose %100, [1, 0, 2] : vector<4x8x8xf32> -> vector<8x4x8xf32>
    %102 = vector.shape_cast %101 : vector<8x4x8xf32> to vector<8x32xf32>
    %103 = arith.truncf %102 : vector<8x32xf32> to vector<8x32xbf16>
    %c0_40 = arith.constant 0 : index
    %c0_41 = arith.constant 0 : index
    %104 = vector.load %arg13[%c0_40, %c0_41] : memref<32x32xbf16, #tpu.memory_space<vmem>>, vector<32x32xbf16>
    %cst_42 = arith.constant dense<0.000000e+00> : vector<8x32xf32>
    %105 = tpu.matmul %103, %104, %cst_42 {dimension_numbers = #tpu.dot_dimension_numbers<[1], [0], [0], [1], [0, 0, 1, 1], [], []>} : vector<8x32xbf16>, vector<32x32xbf16>, vector<8x32xf32> -> vector<8x32xf32>
    %c0_43 = arith.constant 0 : index
    %c0_44 = arith.constant 0 : index
    %106 = vector.load %arg14[%c0_43, %c0_44] : memref<1x32xf32, #tpu.memory_space<vmem>>, vector<1x32xf32>
    %107 = vector.broadcast %106 : vector<1x32xf32> to vector<8x32xf32>
    %108 = arith.addf %105, %107 : vector<8x32xf32>
    %c0_45 = arith.constant 0 : index
    %c0_46 = arith.constant 0 : index
    %109 = vector.load %arg15[%c0_45, %c0_46] : memref<1x32xf32, #tpu.memory_space<vmem>>, vector<1x32xf32>
    %c0_47 = arith.constant 0 : index
    %c0_48 = arith.constant 0 : index
    %110 = vector.load %arg16[%c0_47, %c0_48] : memref<1x32xf32, #tpu.memory_space<vmem>>, vector<1x32xf32>
    %111 = arith.addf %65, %108 : vector<8x32xf32>
    %cst_49 = arith.constant dense<0.000000e+00> : vector<8xf32>
    %112 = vector.multi_reduction <add>, %111, %cst_49 [1] : vector<8x32xf32> to vector<8xf32>
    %113 = vector.shape_cast %112 : vector<8xf32> to vector<8x1xf32>
    %cst_50 = arith.constant 3.200000e+01 : f32
    %114 = vector.broadcast %cst_50 : f32 to vector<8x1xf32>
    %115 = arith.divf %113, %114 : vector<8x1xf32>
    %116 = vector.broadcast %115 : vector<8x1xf32> to vector<8x32xf32>
    %117 = arith.subf %111, %116 : vector<8x32xf32>
    %118 = arith.mulf %117, %117 : vector<8x32xf32>
    %cst_51 = arith.constant dense<0.000000e+00> : vector<8xf32>
    %119 = vector.multi_reduction <add>, %118, %cst_51 [1] : vector<8x32xf32> to vector<8xf32>
    %120 = vector.shape_cast %119 : vector<8xf32> to vector<8x1xf32>
    %cst_52 = arith.constant 3.200000e+01 : f32
    %121 = vector.broadcast %cst_52 : f32 to vector<8x1xf32>
    %122 = arith.divf %120, %121 : vector<8x1xf32>
    %cst_53 = arith.constant 9.99999974E-6 : f32
    %123 = vector.broadcast %cst_53 : f32 to vector<8x1xf32>
    %124 = arith.addf %122, %123 : vector<8x1xf32>
    %125 = math.rsqrt %124 : vector<8x1xf32>
    %126 = vector.broadcast %125 : vector<8x1xf32> to vector<8x32xf32>
    %127 = arith.mulf %117, %126 : vector<8x32xf32>
    %128 = vector.broadcast %109 : vector<1x32xf32> to vector<8x32xf32>
    %129 = arith.mulf %127, %128 : vector<8x32xf32>
    %130 = vector.broadcast %110 : vector<1x32xf32> to vector<8x32xf32>
    %131 = arith.addf %129, %130 : vector<8x32xf32>
    %132 = arith.truncf %131 : vector<8x32xf32> to vector<8x32xbf16>
    %c0_54 = arith.constant 0 : index
    %c0_55 = arith.constant 0 : index
    %133 = vector.load %arg17[%c0_54, %c0_55] : memref<32x64xbf16, #tpu.memory_space<vmem>>, vector<32x64xbf16>
    %cst_56 = arith.constant dense<0.000000e+00> : vector<8x64xf32>
    %134 = tpu.matmul %132, %133, %cst_56 {dimension_numbers = #tpu.dot_dimension_numbers<[1], [0], [0], [1], [0, 0, 1, 1], [], []>} : vector<8x32xbf16>, vector<32x64xbf16>, vector<8x64xf32> -> vector<8x64xf32>
    %c0_57 = arith.constant 0 : index
    %c0_58 = arith.constant 0 : index
    %135 = vector.load %arg18[%c0_57, %c0_58] : memref<1x64xf32, #tpu.memory_space<vmem>>, vector<1x64xf32>
    %136 = vector.broadcast %135 : vector<1x64xf32> to vector<8x64xf32>
    %137 = arith.addf %134, %136 : vector<8x64xf32>
    %cst_59 = arith.constant 0.000000e+00 : f32
    %138 = vector.broadcast %cst_59 : f32 to vector<8x64xf32>
    %139 = arith.maximumf %137, %138 : vector<8x64xf32>
    %140 = arith.truncf %139 : vector<8x64xf32> to vector<8x64xbf16>
    %c0_60 = arith.constant 0 : index
    %c0_61 = arith.constant 0 : index
    %141 = vector.load %arg19[%c0_60, %c0_61] : memref<64x32xbf16, #tpu.memory_space<vmem>>, vector<64x32xbf16>
    %cst_62 = arith.constant dense<0.000000e+00> : vector<8x32xf32>
    %142 = tpu.matmul %140, %141, %cst_62 {dimension_numbers = #tpu.dot_dimension_numbers<[1], [0], [0], [1], [0, 0, 1, 1], [], []>} : vector<8x64xbf16>, vector<64x32xbf16>, vector<8x32xf32> -> vector<8x32xf32>
    %c0_63 = arith.constant 0 : index
    %c0_64 = arith.constant 0 : index
    %143 = vector.load %arg20[%c0_63, %c0_64] : memref<1x32xf32, #tpu.memory_space<vmem>>, vector<1x32xf32>
    %144 = vector.broadcast %143 : vector<1x32xf32> to vector<8x32xf32>
    %145 = arith.addf %142, %144 : vector<8x32xf32>
    %c0_65 = arith.constant 0 : index
    %c0_66 = arith.constant 0 : index
    %146 = vector.load %arg21[%c0_65, %c0_66] : memref<1x32xf32, #tpu.memory_space<vmem>>, vector<1x32xf32>
    %c0_67 = arith.constant 0 : index
    %c0_68 = arith.constant 0 : index
    %147 = vector.load %arg22[%c0_67, %c0_68] : memref<1x32xf32, #tpu.memory_space<vmem>>, vector<1x32xf32>
    %148 = arith.addf %131, %145 : vector<8x32xf32>
    %cst_69 = arith.constant dense<0.000000e+00> : vector<8xf32>
    %149 = vector.multi_reduction <add>, %148, %cst_69 [1] : vector<8x32xf32> to vector<8xf32>
    %150 = vector.shape_cast %149 : vector<8xf32> to vector<8x1xf32>
    %cst_70 = arith.constant 3.200000e+01 : f32
    %151 = vector.broadcast %cst_70 : f32 to vector<8x1xf32>
    %152 = arith.divf %150, %151 : vector<8x1xf32>
    %153 = vector.broadcast %152 : vector<8x1xf32> to vector<8x32xf32>
    %154 = arith.subf %148, %153 : vector<8x32xf32>
    %155 = arith.mulf %154, %154 : vector<8x32xf32>
    %cst_71 = arith.constant dense<0.000000e+00> : vector<8xf32>
    %156 = vector.multi_reduction <add>, %155, %cst_71 [1] : vector<8x32xf32> to vector<8xf32>
    %157 = vector.shape_cast %156 : vector<8xf32> to vector<8x1xf32>
    %cst_72 = arith.constant 3.200000e+01 : f32
    %158 = vector.broadcast %cst_72 : f32 to vector<8x1xf32>
    %159 = arith.divf %157, %158 : vector<8x1xf32>
    %cst_73 = arith.constant 9.99999974E-6 : f32
    %160 = vector.broadcast %cst_73 : f32 to vector<8x1xf32>
    %161 = arith.addf %159, %160 : vector<8x1xf32>
    %162 = math.rsqrt %161 : vector<8x1xf32>
    %163 = vector.broadcast %162 : vector<8x1xf32> to vector<8x32xf32>
    %164 = arith.mulf %154, %163 : vector<8x32xf32>
    %165 = vector.broadcast %146 : vector<1x32xf32> to vector<8x32xf32>
    %166 = arith.mulf %164, %165 : vector<8x32xf32>
    %167 = vector.broadcast %147 : vector<1x32xf32> to vector<8x32xf32>
    %168 = arith.addf %166, %167 : vector<8x32xf32>
    %169 = arith.truncf %168 : vector<8x32xf32> to vector<8x32xbf16>
    %c0_74 = arith.constant 0 : index
    %c0_75 = arith.constant 0 : index
    %170 = vector.load %arg23[%c0_74, %c0_75] : memref<32x96xbf16, #tpu.memory_space<vmem>>, vector<32x96xbf16>
    %cst_76 = arith.constant dense<0.000000e+00> : vector<8x96xf32>
    %171 = tpu.matmul %169, %170, %cst_76 {dimension_numbers = #tpu.dot_dimension_numbers<[1], [0], [0], [1], [0, 0, 1, 1], [], []>} : vector<8x32xbf16>, vector<32x96xbf16>, vector<8x96xf32> -> vector<8x96xf32>
    %c0_77 = arith.constant 0 : index
    %c0_78 = arith.constant 0 : index
    %172 = vector.load %arg24[%c0_77, %c0_78] : memref<1x96xf32, #tpu.memory_space<vmem>>, vector<1x96xf32>
    %173 = vector.broadcast %172 : vector<1x96xf32> to vector<8x96xf32>
    %174 = arith.addf %171, %173 : vector<8x96xf32>
    %175 = vector.extract_strided_slice %174 {offsets = [0, 0], sizes = [8, 32], strides = [1, 1]} : vector<8x96xf32> to vector<8x32xf32>
    %176 = vector.extract_strided_slice %174 {offsets = [0, 32], sizes = [8, 32], strides = [1, 1]} : vector<8x96xf32> to vector<8x32xf32>
    %177 = vector.extract_strided_slice %174 {offsets = [0, 64], sizes = [8, 32], strides = [1, 1]} : vector<8x96xf32> to vector<8x32xf32>
    %178 = vector.shape_cast %175 : vector<8x32xf32> to vector<8x4x8xf32>
    %179 = tpu.transpose %178, [1, 0, 2] : vector<8x4x8xf32> -> vector<4x8x8xf32>
    %180 = arith.truncf %179 : vector<4x8x8xf32> to vector<4x8x8xbf16>
    %181 = vector.shape_cast %176 : vector<8x32xf32> to vector<8x4x8xf32>
    %182 = tpu.transpose %181, [1, 0, 2] : vector<8x4x8xf32> -> vector<4x8x8xf32>
    %183 = arith.truncf %182 : vector<4x8x8xf32> to vector<4x8x8xbf16>
    %184 = vector.shape_cast %177 : vector<8x32xf32> to vector<8x4x8xf32>
    %185 = tpu.transpose %184, [1, 0, 2] : vector<8x4x8xf32> -> vector<4x8x8xf32>
    %186 = arith.truncf %185 : vector<4x8x8xf32> to vector<4x8x8xbf16>
    "tpu.trace_start"() <{level = 10 : i32, message = "hqd,hkd->hqk"}> : () -> ()
    %cst_79 = arith.constant dense<0.000000e+00> : vector<4x8x8xf32>
    %187 = tpu.matmul %180, %183, %cst_79 {dimension_numbers = #tpu.dot_dimension_numbers<[2], [2], [1], [1], [0, 0, 0, 1, 1, 1], [0], [0]>} : vector<4x8x8xbf16>, vector<4x8x8xbf16>, vector<4x8x8xf32> -> vector<4x8x8xf32>
    "tpu.trace_stop"() : () -> ()
    %cst_80 = arith.constant dense<0xFF800000> : vector<4x8xf32>
    %188 = vector.multi_reduction <maximumf>, %187, %cst_80 [2] : vector<4x8x8xf32> to vector<4x8xf32>
    %189 = vector.shape_cast %188 : vector<4x8xf32> to vector<4x8x1xf32>
    %190 = vector.broadcast %189 : vector<4x8x1xf32> to vector<4x8x8xf32>
    %191 = arith.subf %187, %190 : vector<4x8x8xf32>
    %192 = math.exp %191 : vector<4x8x8xf32>
    %cst_81 = arith.constant dense<0.000000e+00> : vector<4x8xf32>
    %193 = vector.multi_reduction <add>, %192, %cst_81 [2] : vector<4x8x8xf32> to vector<4x8xf32>
    %194 = vector.shape_cast %193 : vector<4x8xf32> to vector<4x8x1xf32>
    %195 = tpu.reciprocal %194 {approx = true} : vector<4x8x1xf32> -> vector<4x8x1xf32>
    %196 = vector.broadcast %195 : vector<4x8x1xf32> to vector<4x8x8xf32>
    %197 = arith.mulf %192, %196 : vector<4x8x8xf32>
    %198 = arith.truncf %197 : vector<4x8x8xf32> to vector<4x8x8xbf16>
    "tpu.trace_start"() <{level = 10 : i32, message = "hqk,hkd->hqd"}> : () -> ()
    %cst_82 = arith.constant dense<0.000000e+00> : vector<4x8x8xf32>
    %199 = tpu.matmul %198, %186, %cst_82 {dimension_numbers = #tpu.dot_dimension_numbers<[2], [1], [1], [2], [0, 0, 0, 1, 1, 2], [0], [0]>} : vector<4x8x8xbf16>, vector<4x8x8xbf16>, vector<4x8x8xf32> -> vector<4x8x8xf32>
    "tpu.trace_stop"() : () -> ()
    %200 = tpu.transpose %199, [1, 0, 2] : vector<4x8x8xf32> -> vector<8x4x8xf32>
    %201 = vector.shape_cast %200 : vector<8x4x8xf32> to vector<8x32xf32>
    %202 = arith.truncf %201 : vector<8x32xf32> to vector<8x32xbf16>
    %c0_83 = arith.constant 0 : index
    %c0_84 = arith.constant 0 : index
    %203 = vector.load %arg25[%c0_83, %c0_84] : memref<32x32xbf16, #tpu.memory_space<vmem>>, vector<32x32xbf16>
    %cst_85 = arith.constant dense<0.000000e+00> : vector<8x32xf32>
    %204 = tpu.matmul %202, %203, %cst_85 {dimension_numbers = #tpu.dot_dimension_numbers<[1], [0], [0], [1], [0, 0, 1, 1], [], []>} : vector<8x32xbf16>, vector<32x32xbf16>, vector<8x32xf32> -> vector<8x32xf32>
    %c0_86 = arith.constant 0 : index
    %c0_87 = arith.constant 0 : index
    %205 = vector.load %arg26[%c0_86, %c0_87] : memref<1x32xf32, #tpu.memory_space<vmem>>, vector<1x32xf32>
    %206 = vector.broadcast %205 : vector<1x32xf32> to vector<8x32xf32>
    %207 = arith.addf %204, %206 : vector<8x32xf32>
    %c0_88 = arith.constant 0 : index
    %c0_89 = arith.constant 0 : index
    %208 = vector.load %arg27[%c0_88, %c0_89] : memref<1x32xf32, #tpu.memory_space<vmem>>, vector<1x32xf32>
    %c0_90 = arith.constant 0 : index
    %c0_91 = arith.constant 0 : index
    %209 = vector.load %arg28[%c0_90, %c0_91] : memref<1x32xf32, #tpu.memory_space<vmem>>, vector<1x32xf32>
    %210 = arith.addf %168, %207 : vector<8x32xf32>
    %cst_92 = arith.constant dense<0.000000e+00> : vector<8xf32>
    %211 = vector.multi_reduction <add>, %210, %cst_92 [1] : vector<8x32xf32> to vector<8xf32>
    %212 = vector.shape_cast %211 : vector<8xf32> to vector<8x1xf32>
    %cst_93 = arith.constant 3.200000e+01 : f32
    %213 = vector.broadcast %cst_93 : f32 to vector<8x1xf32>
    %214 = arith.divf %212, %213 : vector<8x1xf32>
    %215 = vector.broadcast %214 : vector<8x1xf32> to vector<8x32xf32>
    %216 = arith.subf %210, %215 : vector<8x32xf32>
    %217 = arith.mulf %216, %216 : vector<8x32xf32>
    %cst_94 = arith.constant dense<0.000000e+00> : vector<8xf32>
    %218 = vector.multi_reduction <add>, %217, %cst_94 [1] : vector<8x32xf32> to vector<8xf32>
    %219 = vector.shape_cast %218 : vector<8xf32> to vector<8x1xf32>
    %cst_95 = arith.constant 3.200000e+01 : f32
    %220 = vector.broadcast %cst_95 : f32 to vector<8x1xf32>
    %221 = arith.divf %219, %220 : vector<8x1xf32>
    %cst_96 = arith.constant 9.99999974E-6 : f32
    %222 = vector.broadcast %cst_96 : f32 to vector<8x1xf32>
    %223 = arith.addf %221, %222 : vector<8x1xf32>
    %224 = math.rsqrt %223 : vector<8x1xf32>
    %225 = vector.broadcast %224 : vector<8x1xf32> to vector<8x32xf32>
    %226 = arith.mulf %216, %225 : vector<8x32xf32>
    %227 = vector.broadcast %208 : vector<1x32xf32> to vector<8x32xf32>
    %228 = arith.mulf %226, %227 : vector<8x32xf32>
    %229 = vector.broadcast %209 : vector<1x32xf32> to vector<8x32xf32>
    %230 = arith.addf %228, %229 : vector<8x32xf32>
    %231 = arith.truncf %230 : vector<8x32xf32> to vector<8x32xbf16>
    %c0_97 = arith.constant 0 : index
    %c0_98 = arith.constant 0 : index
    %232 = vector.load %arg29[%c0_97, %c0_98] : memref<32x32xbf16, #tpu.memory_space<vmem>>, vector<32x32xbf16>
    %cst_99 = arith.constant dense<0.000000e+00> : vector<8x32xf32>
    %233 = tpu.matmul %231, %232, %cst_99 {dimension_numbers = #tpu.dot_dimension_numbers<[1], [0], [0], [1], [0, 0, 1, 1], [], []>} : vector<8x32xbf16>, vector<32x32xbf16>, vector<8x32xf32> -> vector<8x32xf32>
    %c0_100 = arith.constant 0 : index
    %c0_101 = arith.constant 0 : index
    %234 = vector.load %arg30[%c0_100, %c0_101] : memref<1x32xf32, #tpu.memory_space<vmem>>, vector<1x32xf32>
    %235 = vector.broadcast %234 : vector<1x32xf32> to vector<8x32xf32>
    %236 = arith.addf %233, %235 : vector<8x32xf32>
    %c0_102 = arith.constant 0 : index
    %c0_103 = arith.constant 0 : index
    %237 = vector.load %arg31[%c0_102, %c0_103] : memref<32x64xbf16, #tpu.memory_space<vmem>>, vector<32x64xbf16>
    %cst_104 = arith.constant dense<0.000000e+00> : vector<8x64xf32>
    %238 = tpu.matmul %3, %237, %cst_104 {dimension_numbers = #tpu.dot_dimension_numbers<[1], [0], [0], [1], [0, 0, 1, 1], [], []>} : vector<8x32xbf16>, vector<32x64xbf16>, vector<8x64xf32> -> vector<8x64xf32>
    %c0_105 = arith.constant 0 : index
    %c0_106 = arith.constant 0 : index
    %239 = vector.load %arg32[%c0_105, %c0_106] : memref<1x64xf32, #tpu.memory_space<vmem>>, vector<1x64xf32>
    %240 = vector.broadcast %239 : vector<1x64xf32> to vector<8x64xf32>
    %241 = arith.addf %238, %240 : vector<8x64xf32>
    %242 = vector.extract_strided_slice %241 {offsets = [0, 0], sizes = [8, 32], strides = [1, 1]} : vector<8x64xf32> to vector<8x32xf32>
    %243 = vector.extract_strided_slice %241 {offsets = [0, 32], sizes = [8, 32], strides = [1, 1]} : vector<8x64xf32> to vector<8x32xf32>
    %244 = vector.shape_cast %236 : vector<8x32xf32> to vector<8x4x8xf32>
    %245 = tpu.transpose %244, [1, 0, 2] : vector<8x4x8xf32> -> vector<4x8x8xf32>
    %246 = arith.truncf %245 : vector<4x8x8xf32> to vector<4x8x8xbf16>
    %247 = vector.shape_cast %242 : vector<8x32xf32> to vector<8x4x8xf32>
    %248 = tpu.transpose %247, [1, 0, 2] : vector<8x4x8xf32> -> vector<4x8x8xf32>
    %249 = arith.truncf %248 : vector<4x8x8xf32> to vector<4x8x8xbf16>
    %250 = vector.shape_cast %243 : vector<8x32xf32> to vector<8x4x8xf32>
    %251 = tpu.transpose %250, [1, 0, 2] : vector<8x4x8xf32> -> vector<4x8x8xf32>
    %252 = arith.truncf %251 : vector<4x8x8xf32> to vector<4x8x8xbf16>
    "tpu.trace_start"() <{level = 10 : i32, message = "hqd,hkd->hqk"}> : () -> ()
    %cst_107 = arith.constant dense<0.000000e+00> : vector<4x8x8xf32>
    %253 = tpu.matmul %246, %249, %cst_107 {dimension_numbers = #tpu.dot_dimension_numbers<[2], [2], [1], [1], [0, 0, 0, 1, 1, 1], [0], [0]>} : vector<4x8x8xbf16>, vector<4x8x8xbf16>, vector<4x8x8xf32> -> vector<4x8x8xf32>
    "tpu.trace_stop"() : () -> ()
    %cst_108 = arith.constant dense<0xFF800000> : vector<4x8xf32>
    %254 = vector.multi_reduction <maximumf>, %253, %cst_108 [2] : vector<4x8x8xf32> to vector<4x8xf32>
    %255 = vector.shape_cast %254 : vector<4x8xf32> to vector<4x8x1xf32>
    %256 = vector.broadcast %255 : vector<4x8x1xf32> to vector<4x8x8xf32>
    %257 = arith.subf %253, %256 : vector<4x8x8xf32>
    %258 = math.exp %257 : vector<4x8x8xf32>
    %cst_109 = arith.constant dense<0.000000e+00> : vector<4x8xf32>
    %259 = vector.multi_reduction <add>, %258, %cst_109 [2] : vector<4x8x8xf32> to vector<4x8xf32>
    %260 = vector.shape_cast %259 : vector<4x8xf32> to vector<4x8x1xf32>
    %261 = tpu.reciprocal %260 {approx = true} : vector<4x8x1xf32> -> vector<4x8x1xf32>
    %262 = vector.broadcast %261 : vector<4x8x1xf32> to vector<4x8x8xf32>
    %263 = arith.mulf %258, %262 : vector<4x8x8xf32>
    %264 = arith.truncf %263 : vector<4x8x8xf32> to vector<4x8x8xbf16>
    "tpu.trace_start"() <{level = 10 : i32, message = "hqk,hkd->hqd"}> : () -> ()
    %cst_110 = arith.constant dense<0.000000e+00> : vector<4x8x8xf32>
    %265 = tpu.matmul %264, %252, %cst_110 {dimension_numbers = #tpu.dot_dimension_numbers<[2], [1], [1], [2], [0, 0, 0, 1, 1, 2], [0], [0]>} : vector<4x8x8xbf16>, vector<4x8x8xbf16>, vector<4x8x8xf32> -> vector<4x8x8xf32>
    "tpu.trace_stop"() : () -> ()
    %266 = tpu.transpose %265, [1, 0, 2] : vector<4x8x8xf32> -> vector<8x4x8xf32>
    %267 = vector.shape_cast %266 : vector<8x4x8xf32> to vector<8x32xf32>
    %268 = arith.truncf %267 : vector<8x32xf32> to vector<8x32xbf16>
    %c0_111 = arith.constant 0 : index
    %c0_112 = arith.constant 0 : index
    %269 = vector.load %arg33[%c0_111, %c0_112] : memref<32x32xbf16, #tpu.memory_space<vmem>>, vector<32x32xbf16>
    %cst_113 = arith.constant dense<0.000000e+00> : vector<8x32xf32>
    %270 = tpu.matmul %268, %269, %cst_113 {dimension_numbers = #tpu.dot_dimension_numbers<[1], [0], [0], [1], [0, 0, 1, 1], [], []>} : vector<8x32xbf16>, vector<32x32xbf16>, vector<8x32xf32> -> vector<8x32xf32>
    %c0_114 = arith.constant 0 : index
    %c0_115 = arith.constant 0 : index
    %271 = vector.load %arg34[%c0_114, %c0_115] : memref<1x32xf32, #tpu.memory_space<vmem>>, vector<1x32xf32>
    %272 = vector.broadcast %271 : vector<1x32xf32> to vector<8x32xf32>
    %273 = arith.addf %270, %272 : vector<8x32xf32>
    %c0_116 = arith.constant 0 : index
    %c0_117 = arith.constant 0 : index
    %274 = vector.load %arg35[%c0_116, %c0_117] : memref<1x32xf32, #tpu.memory_space<vmem>>, vector<1x32xf32>
    %c0_118 = arith.constant 0 : index
    %c0_119 = arith.constant 0 : index
    %275 = vector.load %arg36[%c0_118, %c0_119] : memref<1x32xf32, #tpu.memory_space<vmem>>, vector<1x32xf32>
    %276 = arith.addf %230, %273 : vector<8x32xf32>
    %cst_120 = arith.constant dense<0.000000e+00> : vector<8xf32>
    %277 = vector.multi_reduction <add>, %276, %cst_120 [1] : vector<8x32xf32> to vector<8xf32>
    %278 = vector.shape_cast %277 : vector<8xf32> to vector<8x1xf32>
    %cst_121 = arith.constant 3.200000e+01 : f32
    %279 = vector.broadcast %cst_121 : f32 to vector<8x1xf32>
    %280 = arith.divf %278, %279 : vector<8x1xf32>
    %281 = vector.broadcast %280 : vector<8x1xf32> to vector<8x32xf32>
    %282 = arith.subf %276, %281 : vector<8x32xf32>
    %283 = arith.mulf %282, %282 : vector<8x32xf32>
    %cst_122 = arith.constant dense<0.000000e+00> : vector<8xf32>
    %284 = vector.multi_reduction <add>, %283, %cst_122 [1] : vector<8x32xf32> to vector<8xf32>
    %285 = vector.shape_cast %284 : vector<8xf32> to vector<8x1xf32>
    %cst_123 = arith.constant 3.200000e+01 : f32
    %286 = vector.broadcast %cst_123 : f32 to vector<8x1xf32>
    %287 = arith.divf %285, %286 : vector<8x1xf32>
    %cst_124 = arith.constant 9.99999974E-6 : f32
    %288 = vector.broadcast %cst_124 : f32 to vector<8x1xf32>
    %289 = arith.addf %287, %288 : vector<8x1xf32>
    %290 = math.rsqrt %289 : vector<8x1xf32>
    %291 = vector.broadcast %290 : vector<8x1xf32> to vector<8x32xf32>
    %292 = arith.mulf %282, %291 : vector<8x32xf32>
    %293 = vector.broadcast %274 : vector<1x32xf32> to vector<8x32xf32>
    %294 = arith.mulf %292, %293 : vector<8x32xf32>
    %295 = vector.broadcast %275 : vector<1x32xf32> to vector<8x32xf32>
    %296 = arith.addf %294, %295 : vector<8x32xf32>
    %297 = arith.truncf %296 : vector<8x32xf32> to vector<8x32xbf16>
    %c0_125 = arith.constant 0 : index
    %c0_126 = arith.constant 0 : index
    %298 = vector.load %arg37[%c0_125, %c0_126] : memref<32x64xbf16, #tpu.memory_space<vmem>>, vector<32x64xbf16>
    %cst_127 = arith.constant dense<0.000000e+00> : vector<8x64xf32>
    %299 = tpu.matmul %297, %298, %cst_127 {dimension_numbers = #tpu.dot_dimension_numbers<[1], [0], [0], [1], [0, 0, 1, 1], [], []>} : vector<8x32xbf16>, vector<32x64xbf16>, vector<8x64xf32> -> vector<8x64xf32>
    %c0_128 = arith.constant 0 : index
    %c0_129 = arith.constant 0 : index
    %300 = vector.load %arg38[%c0_128, %c0_129] : memref<1x64xf32, #tpu.memory_space<vmem>>, vector<1x64xf32>
    %301 = vector.broadcast %300 : vector<1x64xf32> to vector<8x64xf32>
    %302 = arith.addf %299, %301 : vector<8x64xf32>
    %cst_130 = arith.constant 0.000000e+00 : f32
    %303 = vector.broadcast %cst_130 : f32 to vector<8x64xf32>
    %304 = arith.maximumf %302, %303 : vector<8x64xf32>
    %305 = arith.truncf %304 : vector<8x64xf32> to vector<8x64xbf16>
    %c0_131 = arith.constant 0 : index
    %c0_132 = arith.constant 0 : index
    %306 = vector.load %arg39[%c0_131, %c0_132] : memref<64x32xbf16, #tpu.memory_space<vmem>>, vector<64x32xbf16>
    %cst_133 = arith.constant dense<0.000000e+00> : vector<8x32xf32>
    %307 = tpu.matmul %305, %306, %cst_133 {dimension_numbers = #tpu.dot_dimension_numbers<[1], [0], [0], [1], [0, 0, 1, 1], [], []>} : vector<8x64xbf16>, vector<64x32xbf16>, vector<8x32xf32> -> vector<8x32xf32>
    %c0_134 = arith.constant 0 : index
    %c0_135 = arith.constant 0 : index
    %308 = vector.load %arg40[%c0_134, %c0_135] : memref<1x32xf32, #tpu.memory_space<vmem>>, vector<1x32xf32>
    %309 = vector.broadcast %308 : vector<1x32xf32> to vector<8x32xf32>
    %310 = arith.addf %307, %309 : vector<8x32xf32>
    %c0_136 = arith.constant 0 : index
    %c0_137 = arith.constant 0 : index
    %311 = vector.load %arg41[%c0_136, %c0_137] : memref<1x32xf32, #tpu.memory_space<vmem>>, vector<1x32xf32>
    %c0_138 = arith.constant 0 : index
    %c0_139 = arith.constant 0 : index
    %312 = vector.load %arg42[%c0_138, %c0_139] : memref<1x32xf32, #tpu.memory_space<vmem>>, vector<1x32xf32>
    %313 = arith.addf %296, %310 : vector<8x32xf32>
    %cst_140 = arith.constant dense<0.000000e+00> : vector<8xf32>
    %314 = vector.multi_reduction <add>, %313, %cst_140 [1] : vector<8x32xf32> to vector<8xf32>
    %315 = vector.shape_cast %314 : vector<8xf32> to vector<8x1xf32>
    %cst_141 = arith.constant 3.200000e+01 : f32
    %316 = vector.broadcast %cst_141 : f32 to vector<8x1xf32>
    %317 = arith.divf %315, %316 : vector<8x1xf32>
    %318 = vector.broadcast %317 : vector<8x1xf32> to vector<8x32xf32>
    %319 = arith.subf %313, %318 : vector<8x32xf32>
    %320 = arith.mulf %319, %319 : vector<8x32xf32>
    %cst_142 = arith.constant dense<0.000000e+00> : vector<8xf32>
    %321 = vector.multi_reduction <add>, %320, %cst_142 [1] : vector<8x32xf32> to vector<8xf32>
    %322 = vector.shape_cast %321 : vector<8xf32> to vector<8x1xf32>
    %cst_143 = arith.constant 3.200000e+01 : f32
    %323 = vector.broadcast %cst_143 : f32 to vector<8x1xf32>
    %324 = arith.divf %322, %323 : vector<8x1xf32>
    %cst_144 = arith.constant 9.99999974E-6 : f32
    %325 = vector.broadcast %cst_144 : f32 to vector<8x1xf32>
    %326 = arith.addf %324, %325 : vector<8x1xf32>
    %327 = math.rsqrt %326 : vector<8x1xf32>
    %328 = vector.broadcast %327 : vector<8x1xf32> to vector<8x32xf32>
    %329 = arith.mulf %319, %328 : vector<8x32xf32>
    %330 = vector.broadcast %311 : vector<1x32xf32> to vector<8x32xf32>
    %331 = arith.mulf %329, %330 : vector<8x32xf32>
    %332 = vector.broadcast %312 : vector<1x32xf32> to vector<8x32xf32>
    %333 = arith.addf %331, %332 : vector<8x32xf32>
    %334 = arith.truncf %333 : vector<8x32xf32> to vector<8x32xbf16>
    %c0_145 = arith.constant 0 : index
    %c0_146 = arith.constant 0 : index
    %335 = vector.load %arg43[%c0_145, %c0_146] : memref<32x2xbf16, #tpu.memory_space<vmem>>, vector<32x2xbf16>
    %cst_147 = arith.constant dense<0.000000e+00> : vector<8x2xf32>
    %336 = tpu.matmul %334, %335, %cst_147 {dimension_numbers = #tpu.dot_dimension_numbers<[1], [0], [0], [1], [0, 0, 1, 1], [], []>} : vector<8x32xbf16>, vector<32x2xbf16>, vector<8x2xf32> -> vector<8x2xf32>
    %c0_148 = arith.constant 0 : index
    %c0_149 = arith.constant 0 : index
    %337 = vector.load %arg44[%c0_148, %c0_149] : memref<1x2xf32, #tpu.memory_space<vmem>>, vector<1x2xf32>
    %338 = vector.broadcast %337 : vector<1x2xf32> to vector<8x2xf32>
    %339 = arith.addf %336, %338 : vector<8x2xf32>
    %c0_150 = arith.constant 0 : index
    %c0_151 = arith.constant 0 : index
    %c0_152 = arith.constant 0 : index
    %340 = vector.load %arg45[%c0_150, %c0_151, %c0_152] : memref<1x8x2xf32, #tpu.memory_space<vmem>>, vector<1x8x2xf32>
    %341 = vector.shape_cast %340 : vector<1x8x2xf32> to vector<8x2xf32>
    %342 = vector.shape_cast %339 : vector<8x2xf32> to vector<1x8x2xf32>
    tpu.vector_store %arg45[%c0_150, %c0_151, %c0_152], %342 {strides = array<i32>} : memref<1x8x2xf32, #tpu.memory_space<vmem>>, vector<1x8x2xf32>,
    return
  }
  func.func @transform_0(%arg0: i32) -> (i32, i32) {
    %c0_i32 = arith.constant 0 : i32
    %c0_i32_0 = arith.constant 0 : i32
    %c0_i32_1 = arith.constant 0 : i32
    return %c0_i32, %c0_i32_0 : i32, i32
  }
  func.func @transform_1(%arg0: i32) -> (i32, i32, i32) {
    %c0_i32 = arith.constant 0 : i32
    %c0_i32_0 = arith.constant 0 : i32
    %c0_i32_1 = arith.constant 0 : i32
    return %arg0, %c0_i32, %c0_i32_0 : i32, i32, i32
  }
  func.func @transform_2(%arg0: i32) -> (i32, i32) {
    %c0_i32 = arith.constant 0 : i32
    %c0_i32_0 = arith.constant 0 : i32
    %c0_i32_1 = arith.constant 0 : i32
    return %c0_i32, %c0_i32_0 : i32, i32
  }
  func.func @transform_3(%arg0: i32) -> (i32, i32) {
    %c0_i32 = arith.constant 0 : i32
    %c0_i32_0 = arith.constant 0 : i32
    %c0_i32_1 = arith.constant 0 : i32
    return %c0_i32, %c0_i32_0 : i32, i32
  }
  func.func @transform_4(%arg0: i32) -> (i32, i32) {
    %c0_i32 = arith.constant 0 : i32
    %c0_i32_0 = arith.constant 0 : i32
    %c0_i32_1 = arith.constant 0 : i32
    return %c0_i32, %c0_i32_0 : i32, i32
  }
  func.func @transform_5(%arg0: i32) -> (i32, i32) {
    %c0_i32 = arith.constant 0 : i32
    %c0_i32_0 = arith.constant 0 : i32
    %c0_i32_1 = arith.constant 0 : i32
    return %c0_i32, %c0_i32_0 : i32, i32
  }
  func.func @transform_6(%arg0: i32) -> (i32, i32) {
    %c0_i32 = arith.constant 0 : i32
    %c0_i32_0 = arith.constant 0 : i32
    %c0_i32_1 = arith.constant 0 : i32
    return %c0_i32, %c0_i32_0 : i32, i32
  }
  func.func @transform_7(%arg0: i32) -> (i32, i32) {
    %c0_i32 = arith.constant 0 : i32
    %c0_i32_0 = arith.constant 0 : i32
    %c0_i32_1 = arith.constant 0 : i32
    return %c0_i32, %c0_i32_0 : i32, i32
  }
  func.func @transform_8(%arg0: i32) -> (i32, i32) {
    %c0_i32 = arith.constant 0 : i32
    %c0_i32_0 = arith.constant 0 : i32
    %c0_i32_1 = arith.constant 0 : i32
    return %c0_i32, %c0_i32_0 : i32, i32
  }
  func.func @transform_9(%arg0: i32) -> (i32, i32) {
    %c0_i32 = arith.constant 0 : i32
    %c0_i32_0 = arith.constant 0 : i32
    %c0_i32_1 = arith.constant 0 : i32
    return %c0_i32, %c0_i32_0 : i32, i32
  }
  func.func @transform_10(%arg0: i32) -> (i32, i32) {
    %c0_i32 = arith.constant 0 : i32
    %c0_i32_0 = arith.constant 0 : i32
    %c0_i32_1 = arith.constant 0 : i32
    return %c0_i32, %c0_i32_0 : i32, i32
  }
  func.func @transform_11(%arg0: i32) -> (i32, i32) {
    %c0_i32 = arith.constant 0 : i32
    %c0_i32_0 = arith.constant 0 : i32
    %c0_i32_1 = arith.constant 0 : i32
    return %c0_i32, %c0_i32_0 : i32, i32
  }
  func.func @transform_12(%arg0: i32) -> (i32, i32) {
    %c0_i32 = arith.constant 0 : i32
    %c0_i32_0 = arith.constant 0 : i32
    %c0_i32_1 = arith.constant 0 : i32
    return %c0_i32, %c0_i32_0 : i32, i32
  }
  func.func @transform_13(%arg0: i32) -> (i32, i32) {
    %c0_i32 = arith.constant 0 : i32
    %c0_i32_0 = arith.constant 0 : i32
    %c0_i32_1 = arith.constant 0 : i32
    return %c0_i32, %c0_i32_0 : i32, i32
  }
  func.func @transform_14(%arg0: i32) -> (i32, i32) {
    %c0_i32 = arith.constant 0 : i32
    %c0_i32_0 = arith.constant 0 : i32
    %c0_i32_1 = arith.constant 0 : i32
    return %c0_i32, %c0_i32_0 : i32, i32
  }
  func.func @transform_15(%arg0: i32) -> (i32, i32) {
    %c0_i32 = arith.constant 0 : i32
    %c0_i32_0 = arith.constant 0 : i32
    %c0_i32_1 = arith.constant 0 : i32
    return %c0_i32, %c0_i32_0 : i32, i32
  }
  func.func @transform_16(%arg0: i32) -> (i32, i32) {
    %c0_i32 = arith.constant 0 : i32
    %c0_i32_0 = arith.constant 0 : i32
    %c0_i32_1 = arith.constant 0 : i32
    return %c0_i32, %c0_i32_0 : i32, i32
  }
  func.func @transform_17(%arg0: i32) -> (i32, i32) {
    %c0_i32 = arith.constant 0 : i32
    %c0_i32_0 = arith.constant 0 : i32
    %c0_i32_1 = arith.constant 0 : i32
    return %c0_i32, %c0_i32_0 : i32, i32
  }
  func.func @transform_18(%arg0: i32) -> (i32, i32) {
    %c0_i32 = arith.constant 0 : i32
    %c0_i32_0 = arith.constant 0 : i32
    %c0_i32_1 = arith.constant 0 : i32
    return %c0_i32, %c0_i32_0 : i32, i32
  }
  func.func @transform_19(%arg0: i32) -> (i32, i32) {
    %c0_i32 = arith.constant 0 : i32
    %c0_i32_0 = arith.constant 0 : i32
    %c0_i32_1 = arith.constant 0 : i32
    return %c0_i32, %c0_i32_0 : i32, i32
  }
  func.func @transform_20(%arg0: i32) -> (i32, i32) {
    %c0_i32 = arith.constant 0 : i32
    %c0_i32_0 = arith.constant 0 : i32
    %c0_i32_1 = arith.constant 0 : i32
    return %c0_i32, %c0_i32_0 : i32, i32
  }
  func.func @transform_21(%arg0: i32) -> (i32, i32) {
    %c0_i32 = arith.constant 0 : i32
    %c0_i32_0 = arith.constant 0 : i32
    %c0_i32_1 = arith.constant 0 : i32
    return %c0_i32, %c0_i32_0 : i32, i32
  }
  func.func @transform_22(%arg0: i32) -> (i32, i32) {
    %c0_i32 = arith.constant 0 : i32
    %c0_i32_0 = arith.constant 0 : i32
    %c0_i32_1 = arith.constant 0 : i32
    return %c0_i32, %c0_i32_0 : i32, i32
  }
  func.func @transform_23(%arg0: i32) -> (i32, i32) {
    %c0_i32 = arith.constant 0 : i32
    %c0_i32_0 = arith.constant 0 : i32
    %c0_i32_1 = arith.constant 0 : i32
    return %c0_i32, %c0_i32_0 : i32, i32
  }
  func.func @transform_24(%arg0: i32) -> (i32, i32) {
    %c0_i32 = arith.constant 0 : i32
    %c0_i32_0 = arith.constant 0 : i32
    %c0_i32_1 = arith.constant 0 : i32
    return %c0_i32, %c0_i32_0 : i32, i32
  }
  func.func @transform_25(%arg0: i32) -> (i32, i32) {
    %c0_i32 = arith.constant 0 : i32
    %c0_i32_0 = arith.constant 0 : i32
    %c0_i32_1 = arith.constant 0 : i32
    return %c0_i32, %c0_i32_0 : i32, i32
  }
  func.func @transform_26(%arg0: i32) -> (i32, i32) {
    %c0_i32 = arith.constant 0 : i32
    %c0_i32_0 = arith.constant 0 : i32
    %c0_i32_1 = arith.constant 0 : i32
    return %c0_i32, %c0_i32_0 : i32, i32
  }
  func.func @transform_27(%arg0: i32) -> (i32, i32) {
    %c0_i32 = arith.constant 0 : i32
    %c0_i32_0 = arith.constant 0 : i32
    %c0_i32_1 = arith.constant 0 : i32
    return %c0_i32, %c0_i32_0 : i32, i32
  }
  func.func @transform_28(%arg0: i32) -> (i32, i32) {
    %c0_i32 = arith.constant 0 : i32
    %c0_i32_0 = arith.constant 0 : i32
    %c0_i32_1 = arith.constant 0 : i32
    return %c0_i32, %c0_i32_0 : i32, i32
  }
  func.func @transform_29(%arg0: i32) -> (i32, i32) {
    %c0_i32 = arith.constant 0 : i32
    %c0_i32_0 = arith.constant 0 : i32
    %c0_i32_1 = arith.constant 0 : i32
    return %c0_i32, %c0_i32_0 : i32, i32
  }
  func.func @transform_30(%arg0: i32) -> (i32, i32) {
    %c0_i32 = arith.constant 0 : i32
    %c0_i32_0 = arith.constant 0 : i32
    %c0_i32_1 = arith.constant 0 : i32
    return %c0_i32, %c0_i32_0 : i32, i32
  }
  func.func @transform_31(%arg0: i32) -> (i32, i32) {
    %c0_i32 = arith.constant 0 : i32
    %c0_i32_0 = arith.constant 0 : i32
    %c0_i32_1 = arith.constant 0 : i32
    return %c0_i32, %c0_i32_0 : i32, i32
  }
  func.func @transform_32(%arg0: i32) -> (i32, i32) {
    %c0_i32 = arith.constant 0 : i32
    %c0_i32_0 = arith.constant 0 : i32
    %c0_i32_1 = arith.constant 0 : i32
    return %c0_i32, %c0_i32_0 : i32, i32
  }
  func.func @transform_33(%arg0: i32) -> (i32, i32) {
    %c0_i32 = arith.constant 0 : i32
    %c0_i32_0 = arith.constant 0 : i32
    %c0_i32_1 = arith.constant 0 : i32
    return %c0_i32, %c0_i32_0 : i32, i32
  }
  func.func @transform_34(%arg0: i32) -> (i32, i32) {
    %c0_i32 = arith.constant 0 : i32
    %c0_i32_0 = arith.constant 0 : i32
    %c0_i32_1 = arith.constant 0 : i32
    return %c0_i32, %c0_i32_0 : i32, i32
  }
  func.func @transform_35(%arg0: i32) -> (i32, i32) {
    %c0_i32 = arith.constant 0 : i32
    %c0_i32_0 = arith.constant 0 : i32
    %c0_i32_1 = arith.constant 0 : i32
    return %c0_i32, %c0_i32_0 : i32, i32
  }
  func.func @transform_36(%arg0: i32) -> (i32, i32) {
    %c0_i32 = arith.constant 0 : i32
    %c0_i32_0 = arith.constant 0 : i32
    %c0_i32_1 = arith.constant 0 : i32
    return %c0_i32, %c0_i32_0 : i32, i32
  }
  func.func @transform_37(%arg0: i32) -> (i32, i32) {
    %c0_i32 = arith.constant 0 : i32
    %c0_i32_0 = arith.constant 0 : i32
    %c0_i32_1 = arith.constant 0 : i32
    return %c0_i32, %c0_i32_0 : i32, i32
  }
  func.func @transform_38(%arg0: i32) -> (i32, i32) {
    %c0_i32 = arith.constant 0 : i32
    %c0_i32_0 = arith.constant 0 : i32
    %c0_i32_1 = arith.constant 0 : i32
    return %c0_i32, %c0_i32_0 : i32, i32
  }
  func.func @transform_39(%arg0: i32) -> (i32, i32) {
    %c0_i32 = arith.constant 0 : i32
    %c0_i32_0 = arith.constant 0 : i32
    %c0_i32_1 = arith.constant 0 : i32
    return %c0_i32, %c0_i32_0 : i32, i32
  }
  func.func @transform_40(%arg0: i32) -> (i32, i32) {
    %c0_i32 = arith.constant 0 : i32
    %c0_i32_0 = arith.constant 0 : i32
    %c0_i32_1 = arith.constant 0 : i32
    return %c0_i32, %c0_i32_0 : i32, i32
  }
  func.func @transform_41(%arg0: i32) -> (i32, i32) {
    %c0_i32 = arith.constant 0 : i32
    %c0_i32_0 = arith.constant 0 : i32
    %c0_i32_1 = arith.constant 0 : i32
    return %c0_i32, %c0_i32_0 : i32, i32
  }
  func.func @transform_42(%arg0: i32) -> (i32, i32) {
    %c0_i32 = arith.constant 0 : i32
    %c0_i32_0 = arith.constant 0 : i32
    %c0_i32_1 = arith.constant 0 : i32
    return %c0_i32, %c0_i32_0 : i32, i32
  }
  func.func @transform_43(%arg0: i32) -> (i32, i32) {
    %c0_i32 = arith.constant 0 : i32
    %c0_i32_0 = arith.constant 0 : i32
    %c0_i32_1 = arith.constant 0 : i32
    return %c0_i32, %c0_i32_0 : i32, i32
  }
  func.func @transform_44(%arg0: i32) -> (i32, i32, i32) {
    %c0_i32 = arith.constant 0 : i32
    %c0_i32_0 = arith.constant 0 : i32
    %c0_i32_1 = arith.constant 0 : i32
    return %arg0, %c0_i32, %c0_i32_0 : i32, i32, i32
  }
}

</mosaic_0001>

<llo_original>
// kernel: tpu_custom_call.1
$region0: #{tpu_custom_call.1}
  #allocation0 [shape = 'u32[]', space=smem, size = 0x4, offset = 0x4, fixed_abs, tag = 'smem constant byte address 0x4 - core index']
  #allocation1 [shape = 'u32[144,128]{1,0:T(1,128)}', space=vmem, size = 0x12000, scoped, tag = 'internal scratch']
  %s0 = inlined_call_operand.smem [shape: u32[45], index: -1, kind: input, shape index: {}]
  %s1 = sld [smem:[%s0]]
  %s2 = scalar_lea.smem %s0, 1
  %s3 = sld [smem:[%s2]]
  %s4 = scalar_lea.smem %s0, 2
  %s5 = sld [smem:[%s4]]
  %s6 = scalar_lea.smem %s0, 3
  %s7 = sld [smem:[%s6]]
  %s8 = scalar_lea.smem %s0, 4
  %s9 = sld [smem:[%s8]]
  %s10 = scalar_lea.smem %s0, 5
  %s11 = sld [smem:[%s10]]
  %s12 = scalar_lea.smem %s0, 6
  %s13 = sld [smem:[%s12]]
  %s14 = scalar_lea.smem %s0, 7
  %s15 = sld [smem:[%s14]]
  %s16 = scalar_lea.smem %s0, 8
  %s17 = sld [smem:[%s16]]
  %s18 = scalar_lea.smem %s0, 9
  %s19 = sld [smem:[%s18]]
  %s20 = scalar_lea.smem %s0, 10
  %s21 = sld [smem:[%s20]]
  %s22 = scalar_lea.smem %s0, 11
  %s23 = sld [smem:[%s22]]
  %s24 = scalar_lea.smem %s0, 12
  %s25 = sld [smem:[%s24]]
  %s26 = scalar_lea.smem %s0, 13
  %s27 = sld [smem:[%s26]]
  %s28 = scalar_lea.smem %s0, 14
  %s29 = sld [smem:[%s28]]
  %s30 = scalar_lea.smem %s0, 15
  %s31 = sld [smem:[%s30]]
  %s32 = scalar_lea.smem %s0, 16
  %s33 = sld [smem:[%s32]]
  %s34 = scalar_lea.smem %s0, 17
  %s35 = sld [smem:[%s34]]
  %s36 = scalar_lea.smem %s0, 18
  %s37 = sld [smem:[%s36]]
  %s38 = scalar_lea.smem %s0, 19
  %s39 = sld [smem:[%s38]]
  %s40 = scalar_lea.smem %s0, 20
  %s41 = sld [smem:[%s40]]
  %s42 = scalar_lea.smem %s0, 21
  %s43 = sld [smem:[%s42]]
  %s44 = scalar_lea.smem %s0, 22
  %s45 = sld [smem:[%s44]]
  %s46 = scalar_lea.smem %s0, 23
  %s47 = sld [smem:[%s46]]
  %s48 = scalar_lea.smem %s0, 24
  %s49 = sld [smem:[%s48]]
  %s50 = scalar_lea.smem %s0, 25
  %s51 = sld [smem:[%s50]]
  %s52 = scalar_lea.smem %s0, 26
  %s53 = sld [smem:[%s52]]
  %s54 = scalar_lea.smem %s0, 27
  %s55 = sld [smem:[%s54]]
  %s56 = scalar_lea.smem %s0, 28
  %s57 = sld [smem:[%s56]]
  %s58 = scalar_lea.smem %s0, 29
  %s59 = sld [smem:[%s58]]
  %s60 = scalar_lea.smem %s0, 30
  %s61 = sld [smem:[%s60]]
  %s62 = scalar_lea.smem %s0, 31
  %s63 = sld [smem:[%s62]]
  %s64 = scalar_lea.smem %s0, 32
  %s65 = sld [smem:[%s64]]
  %s66 = scalar_lea.smem %s0, 33
  %s67 = sld [smem:[%s66]]
  %s68 = scalar_lea.smem %s0, 34
  %s69 = sld [smem:[%s68]]
  %s70 = scalar_lea.smem %s0, 35
  %s71 = sld [smem:[%s70]]
  %s72 = scalar_lea.smem %s0, 36
  %s73 = sld [smem:[%s72]]
  %s74 = scalar_lea.smem %s0, 37
  %s75 = sld [smem:[%s74]]
  %s76 = scalar_lea.smem %s0, 38
  %s77 = sld [smem:[%s76]]
  %s78 = scalar_lea.smem %s0, 39
  %s79 = sld [smem:[%s78]]
  %s80 = scalar_lea.smem %s0, 40
  %s81 = sld [smem:[%s80]]
  %s82 = scalar_lea.smem %s0, 41
  %s83 = sld [smem:[%s82]]
  %s84 = scalar_lea.smem %s0, 42
  %s85 = sld [smem:[%s84]]
  %s86 = scalar_lea.smem %s0, 43
  %s87 = sld [smem:[%s86]]
  %s88 = scalar_lea.smem %s0, 44
  %s89 = sld [smem:[%s88]]
  %s90 = sld [smem:[#allocation0]]
  $region293: #{tpu_custom_call.1} parent=0
    _
  %s92 = ssub.s32 1, %s90
  %s93 = scalar_select 0, %s92, %s90
  $region1: #{tpu_custom_call.1} parent=0
    #allocation2 [shape = 'u8[4096]{0}', space=vmem, size = 0x1000, scoped, tag = 'input window, operand 0, single buffered']
    #allocation3 [shape = 's32[2]{0}', space=sflag, size = 0x8, scoped, tag = 'scoped memory for tpu_custom_call.1']
    #allocation4 [shape = 'u8[512]{0}', space=vmem, size = 0x400, scoped, tag = 'input window, operand 3, single buffered']
    #allocation5 [shape = 's32[1]{0}', space=sflag, size = 0x4, scoped, tag = 'scoped memory for tpu_custom_call.1']
    #allocation6 [shape = 'u8[512]{0}', space=vmem, size = 0x400, scoped, tag = 'input window, operand 5, single buffered']
    #allocation7 [shape = 'u8[512]{0}', space=vmem, size = 0x400, scoped, tag = 'input window, operand 6, single buffered']
    #allocation8 [shape = 's32[1]{0}', space=sflag, size = 0x4, scoped, tag = 'scoped memory for tpu_custom_call.1']
    #allocation9 [shape = 'u8[512]{0}', space=vmem, size = 0x400, scoped, tag = 'input window, operand 7, single buffered']
    #allocation10 [shape = 'u8[512]{0}', space=vmem, size = 0x400, scoped, tag = 'input window, operand 9, single buffered']
    #allocation11 [shape = 's32[1]{0}', space=sflag, size = 0x4, scoped, tag = 'scoped memory for tpu_custom_call.1']
    #allocation12 [shape = 'u8[512]{0}', space=vmem, size = 0x400, scoped, tag = 'input window, operand 11, single buffered']
    #allocation13 [shape = 'u8[512]{0}', space=vmem, size = 0x400, scoped, tag = 'input window, operand 13, single buffered']
    #allocation14 [shape = 's32[1]{0}', space=sflag, size = 0x4, scoped, tag = 'scoped memory for tpu_custom_call.1']
    #allocation15 [shape = 'u8[512]{0}', space=vmem, size = 0x400, scoped, tag = 'input window, operand 14, single buffered']
    #allocation16 [shape = 'u8[512]{0}', space=vmem, size = 0x400, scoped, tag = 'input window, operand 15, single buffered']
    #allocation17 [shape = 's32[1]{0}', space=sflag, size = 0x4, scoped, tag = 'scoped memory for tpu_custom_call.1']
    #allocation18 [shape = 'u8[512]{0}', space=vmem, size = 0x400, scoped, tag = 'input window, operand 17, single buffered']
    #allocation19 [shape = 'u8[512]{0}', space=vmem, size = 0x400, scoped, tag = 'input window, operand 19, single buffered']
    #allocation20 [shape = 's32[1]{0}', space=sflag, size = 0x4, scoped, tag = 'scoped memory for tpu_custom_call.1']
    #allocation21 [shape = 'u8[512]{0}', space=vmem, size = 0x400, scoped, tag = 'input window, operand 20, single buffered']
    #allocation22 [shape = 'u8[512]{0}', space=vmem, size = 0x400, scoped, tag = 'input window, operand 21, single buffered']
    #allocation23 [shape = 's32[1]{0}', space=sflag, size = 0x4, scoped, tag = 'scoped memory for tpu_custom_call.1']
    #allocation24 [shape = 'u8[512]{0}', space=vmem, size = 0x400, scoped, tag = 'input window, operand 25, single buffered']
    #allocation25 [shape = 'u8[512]{0}', space=vmem, size = 0x400, scoped, tag = 'input window, operand 26, single buffered']
    #allocation26 [shape = 's32[1]{0}', space=sflag, size = 0x4, scoped, tag = 'scoped memory for tpu_custom_call.1']
    #allocation27 [shape = 'u8[512]{0}', space=vmem, size = 0x400, scoped, tag = 'input window, operand 27, single buffered']
    #allocation28 [shape = 'u8[512]{0}', space=vmem, size = 0x400, scoped, tag = 'input window, operand 29, single buffered']
    #allocation29 [shape = 's32[1]{0}', space=sflag, size = 0x4, scoped, tag = 'scoped memory for tpu_custom_call.1']
    #allocation30 [shape = 'u8[512]{0}', space=vmem, size = 0x400, scoped, tag = 'input window, operand 31, single buffered']
    #allocation31 [shape = 'u8[512]{0}', space=vmem, size = 0x400, scoped, tag = 'input window, operand 33, single buffered']
    #allocation32 [shape = 's32[1]{0}', space=sflag, size = 0x4, scoped, tag = 'scoped memory for tpu_custom_call.1']
    #allocation33 [shape = 'u8[512]{0}', space=vmem, size = 0x400, scoped, tag = 'input window, operand 34, single buffered']
    %94 = vsyncpa [#allocation3], 0
    %95 = vsyncpa [#allocation5], 0
    %96 = vsyncpa [#allocation8], 0
    %97 = vsyncpa [#allocation11], 0
    %98 = vsyncpa [#allocation14], 0
    %99 = vsyncpa [#allocation17], 0
    %100 = vsyncpa [#allocation20], 0
    %101 = vsyncpa [#allocation23], 0
    %102 = vsyncpa [#allocation26], 0
    %103 = vsyncpa [#allocation29], 0
    %104 = vsyncpa [#allocation32], 0
    loop: start=0, step=1, limit=4
    $region2: #{tpu_custom_call.1} parent=1 // loop_pre_header
      _
    $region3: #{tpu_custom_call.1} parent=1 // loop_header
      %s106 = sphi 0, %s110
      %p107 = scmp.ge.s32.totalorder %s106, 4
      %s114 = sphi 0, %s114
      %s116 = sphi 0, %s114
      %s117 = sphi 0, %s116
      %s131 = sphi 0, %s117
      %s137 = sphi 0, %s139
      %s140 = sphi 0, %s137
      %s141 = sphi 0, %s140
      %s157 = sphi 0, %s141
      %s161 = sphi 0, %s161
      %s163 = sphi 0, %s161
      %s164 = sphi 0, %s163
      %s178 = sphi 0, %s164
      %s182 = sphi 0, %s182
      %s184 = sphi 0, %s182
      %s185 = sphi 0, %s184
      %s199 = sphi 0, %s185
      %s203 = sphi 0, %s203
      %s205 = sphi 0, %s203
      %s206 = sphi 0, %s205
      %s220 = sphi 0, %s206
      %s224 = sphi 0, %s224
      %s226 = sphi 0, %s224
      %s227 = sphi 0, %s226
      %s241 = sphi 0, %s227
      %s245 = sphi 0, %s245
      %s247 = sphi 0, %s245
      %s248 = sphi 0, %s247
      %s262 = sphi 0, %s248
      %s266 = sphi 0, %s266
      %s268 = sphi 0, %s266
      %s269 = sphi 0, %s268
      %s283 = sphi 0, %s269
      %s287 = sphi 0, %s287
      %s289 = sphi 0, %s287
      %s290 = sphi 0, %s289
      %s304 = sphi 0, %s290
      %s308 = sphi 0, %s308
      %s310 = sphi 0, %s308
      %s311 = sphi 0, %s310
      %s325 = sphi 0, %s311
      %s329 = sphi 0, %s329
      %s331 = sphi 0, %s329
      %s332 = sphi 0, %s331
      %s346 = sphi 0, %s332
      %s350 = sphi 0, %s350
      %s352 = sphi 0, %s350
      %s353 = sphi 0, %s352
      %s367 = sphi 0, %s353
      %s371 = sphi 0, %s371
      %s373 = sphi 0, %s371
      %s374 = sphi 0, %s373
      %s388 = sphi 0, %s374
      %s392 = sphi 0, %s392
      %s394 = sphi 0, %s392
      %s395 = sphi 0, %s394
      %s409 = sphi 0, %s395
      %s413 = sphi 0, %s413
      %s415 = sphi 0, %s413
      %s416 = sphi 0, %s415
      %s430 = sphi 0, %s416
      %s434 = sphi 0, %s434
      %s436 = sphi 0, %s434
      %s437 = sphi 0, %s436
      %s451 = sphi 0, %s437
      %s455 = sphi 0, %s455
      %s457 = sphi 0, %s455
      %s458 = sphi 0, %s457
      %s472 = sphi 0, %s458
      %s476 = sphi 0, %s476
      %s478 = sphi 0, %s476
      %s479 = sphi 0, %s478
      %s493 = sphi 0, %s479
      %s497 = sphi 0, %s497
      %s499 = sphi 0, %s497
      %s500 = sphi 0, %s499
      %s514 = sphi 0, %s500
      %s518 = sphi 0, %s518
      %s520 = sphi 0, %s518
      %s521 = sphi 0, %s520
      %s535 = sphi 0, %s521
      %s539 = sphi 0, %s539
      %s541 = sphi 0, %s539
      %s542 = sphi 0, %s541
      %s556 = sphi 0, %s542
      %s560 = sphi 0, %s560
      %s562 = sphi 0, %s560
      %s563 = sphi 0, %s562
      %s577 = sphi 0, %s563
      %s581 = sphi 0, %s581
      %s583 = sphi 0, %s581
      %s584 = sphi 0, %s583
      %s598 = sphi 0, %s584
      %s602 = sphi 0, %s602
      %s604 = sphi 0, %s602
      %s605 = sphi 0, %s604
      %s619 = sphi 0, %s605
      %s623 = sphi 0, %s623
      %s625 = sphi 0, %s623
      %s626 = sphi 0, %s625
      %s640 = sphi 0, %s626
      %s644 = sphi 0, %s644
      %s646 = sphi 0, %s644
      %s647 = sphi 0, %s646
      %s661 = sphi 0, %s647
      %s665 = sphi 0, %s665
      %s667 = sphi 0, %s665
      %s668 = sphi 0, %s667
      %s682 = sphi 0, %s668
      %s686 = sphi 0, %s686
      %s688 = sphi 0, %s686
      %s689 = sphi 0, %s688
      %s703 = sphi 0, %s689
      %s707 = sphi 0, %s707
      %s709 = sphi 0, %s707
      %s710 = sphi 0, %s709
      %s724 = sphi 0, %s710
      %s728 = sphi 0, %s728
      %s730 = sphi 0, %s728
      %s731 = sphi 0, %s730
      %s745 = sphi 0, %s731
      %s749 = sphi 0, %s749
      %s751 = sphi 0, %s749
      %s752 = sphi 0, %s751
      %s766 = sphi 0, %s752
      %s770 = sphi 0, %s770
      %s772 = sphi 0, %s770
      %s773 = sphi 0, %s772
      %s787 = sphi 0, %s773
      %s791 = sphi 0, %s791
      %s793 = sphi 0, %s791
      %s794 = sphi 0, %s793
      %s808 = sphi 0, %s794
      %s812 = sphi 0, %s812
      %s814 = sphi 0, %s812
      %s815 = sphi 0, %s814
      %s829 = sphi 0, %s815
      %s833 = sphi 0, %s833
      %s835 = sphi 0, %s833
      %s836 = sphi 0, %s835
      %s850 = sphi 0, %s836
      %s854 = sphi 0, %s854
      %s856 = sphi 0, %s854
      %s857 = sphi 0, %s856
      %s871 = sphi 0, %s857
      %s875 = sphi 0, %s875
      %s877 = sphi 0, %s875
      %s878 = sphi 0, %s877
      %s892 = sphi 0, %s878
      %s896 = sphi 0, %s896
      %s898 = sphi 0, %s896
      %s899 = sphi 0, %s898
      %s913 = sphi 0, %s899
      %s917 = sphi 0, %s917
      %s919 = sphi 0, %s917
      %s920 = sphi 0, %s919
      %s934 = sphi 0, %s920
      %s938 = sphi 0, %s938
      %s940 = sphi 0, %s938
      %s941 = sphi 0, %s940
      %s955 = sphi 0, %s941
      %s959 = sphi 0, %s959
      %s961 = sphi 0, %s959
      %s962 = sphi 0, %s961
      %s976 = sphi 0, %s962
      %s980 = sphi 0, %s980
      %s982 = sphi 0, %s980
      %s983 = sphi 0, %s982
      %s997 = sphi 0, %s983
      %s1001 = sphi 0, %s1001
      %s1003 = sphi 0, %s1001
      %s1004 = sphi 0, %s1003
      %s1018 = sphi 0, %s1004
      %s1022 = sphi 0, %s1022
      %s1024 = sphi 0, %s1022
      %s1025 = sphi 0, %s1024
      %s1039 = sphi 0, %s1025
      %s1045 = sphi 0, %s1047
      %s1048 = sphi 0, %s1045
      %s1049 = sphi 0, %s1048
      %s1065 = sphi 0, %s1049
    $region4: #{tpu_custom_call.1} parent=1 // loop_header_branch
      %109 = sbr.rel (%p107) target = $region8
    $region5: #{tpu_custom_call.1} parent=1 // loop_body
      %s111 = ssub.s32 %s106, 1
      %s112 = ssub.s32 %s106, 2
      %s113 = sadd.s32 %s106, 1
      %s115 = sadd.s32 %s114, 1
      %p118 = scmp.eq.s32.totalorder %s106, 1
      %p119 = scmp.ne.s32.totalorder %s114, %s116
      %p120 = scmp.eq.s32.totalorder %s106, 0
      %p121 = por %p119, %p120
      %p122 = scmp.ne.s32.totalorder %s114, %s116
      %p123 = scmp.eq.s32.totalorder %s111, 1
      %p124 = por %p122, %p123
      %p125 = scmp.ne.s32.totalorder %s116, %s117
      %p126 = scmp.eq.s32.totalorder %s111, 0
      %p127 = por %p125, %p126
      %p128 = scmp.ne.s32.totalorder %s116, %s117
      %p129 = scmp.eq.s32.totalorder %s112, 1
      %p130 = por %p128, %p129
      %p132 = scmp.ne.s32.totalorder %s117, %s131
      %p133 = scmp.eq.s32.totalorder %s112, 0
      %p134 = por %p132, %p133
      %s135 = ssub.s32 %s106, %s113
      %p136 = scmp.eq.s32.totalorder %s135, 0
      %s138 = sadd.s32 %s137, 1
      %s139 = scalar_select %p136, %s137, %s138
      %p142 = pneg %p136
      %p143 = scmp.eq.s32.totalorder %s106, 1
      %p144 = por %p142, %p143
      %p145 = scmp.ne.s32.totalorder %s137, %s140
      %p146 = scmp.eq.s32.totalorder %s106, 0
      %p147 = por %p145, %p146
      %p148 = scmp.ne.s32.totalorder %s137, %s140
      %p149 = scmp.eq.s32.totalorder %s111, 1
      %p150 = por %p148, %p149
      %p151 = scmp.ne.s32.totalorder %s140, %s141
      %p152 = scmp.eq.s32.totalorder %s111, 0
      %p153 = por %p151, %p152
      %p154 = scmp.ne.s32.totalorder %s140, %s141
      %p155 = scmp.eq.s32.totalorder %s112, 1
      %p156 = por %p154, %p155
      %p158 = scmp.ne.s32.totalorder %s141, %s157
      %p159 = scmp.eq.s32.totalorder %s112, 0
      %p160 = por %p158, %p159
      %s162 = sadd.s32 %s161, 1
      %p165 = scmp.eq.s32.totalorder %s106, 1
      %p166 = scmp.ne.s32.totalorder %s161, %s163
      %p167 = scmp.eq.s32.totalorder %s106, 0
      %p168 = por %p166, %p167
      %p169 = scmp.ne.s32.totalorder %s161, %s163
      %p170 = scmp.eq.s32.totalorder %s111, 1
      %p171 = por %p169, %p170
      %p172 = scmp.ne.s32.totalorder %s163, %s164
      %p173 = scmp.eq.s32.totalorder %s111, 0
      %p174 = por %p172, %p173
      %p175 = scmp.ne.s32.totalorder %s163, %s164
      %p176 = scmp.eq.s32.totalorder %s112, 1
      %p177 = por %p175, %p176
      %p179 = scmp.ne.s32.totalorder %s164, %s178
      %p180 = scmp.eq.s32.totalorder %s112, 0
      %p181 = por %p179, %p180
      %s183 = sadd.s32 %s182, 1
      %p186 = scmp.eq.s32.totalorder %s106, 1
      %p187 = scmp.ne.s32.totalorder %s182, %s184
      %p188 = scmp.eq.s32.totalorder %s106, 0
      %p189 = por %p187, %p188
      %p190 = scmp.ne.s32.totalorder %s182, %s184
      %p191 = scmp.eq.s32.totalorder %s111, 1
      %p192 = por %p190, %p191
      %p193 = scmp.ne.s32.totalorder %s184, %s185
      %p194 = scmp.eq.s32.totalorder %s111, 0
      %p195 = por %p193, %p194
      %p196 = scmp.ne.s32.totalorder %s184, %s185
      %p197 = scmp.eq.s32.totalorder %s112, 1
      %p198 = por %p196, %p197
      %p200 = scmp.ne.s32.totalorder %s185, %s199
      %p201 = scmp.eq.s32.totalorder %s112, 0
      %p202 = por %p200, %p201
      %s204 = sadd.s32 %s203, 1
      %p207 = scmp.eq.s32.totalorder %s106, 1
      %p208 = scmp.ne.s32.totalorder %s203, %s205
      %p209 = scmp.eq.s32.totalorder %s106, 0
      %p210 = por %p208, %p209
      %p211 = scmp.ne.s32.totalorder %s203, %s205
      %p212 = scmp.eq.s32.totalorder %s111, 1
      %p213 = por %p211, %p212
      %p214 = scmp.ne.s32.totalorder %s205, %s206
      %p215 = scmp.eq.s32.totalorder %s111, 0
      %p216 = por %p214, %p215
      %p217 = scmp.ne.s32.totalorder %s205, %s206
      %p218 = scmp.eq.s32.totalorder %s112, 1
      %p219 = por %p217, %p218
      %p221 = scmp.ne.s32.totalorder %s206, %s220
      %p222 = scmp.eq.s32.totalorder %s112, 0
      %p223 = por %p221, %p222
      %s225 = sadd.s32 %s224, 1
      %p228 = scmp.eq.s32.totalorder %s106, 1
      %p229 = scmp.ne.s32.totalorder %s224, %s226
      %p230 = scmp.eq.s32.totalorder %s106, 0
      %p231 = por %p229, %p230
      %p232 = scmp.ne.s32.totalorder %s224, %s226
      %p233 = scmp.eq.s32.totalorder %s111, 1
      %p234 = por %p232, %p233
      %p235 = scmp.ne.s32.totalorder %s226, %s227
      %p236 = scmp.eq.s32.totalorder %s111, 0
      %p237 = por %p235, %p236
      %p238 = scmp.ne.s32.totalorder %s226, %s227
      %p239 = scmp.eq.s32.totalorder %s112, 1
      %p240 = por %p238, %p239
      %p242 = scmp.ne.s32.totalorder %s227, %s241
      %p243 = scmp.eq.s32.totalorder %s112, 0
      %p244 = por %p242, %p243
      %s246 = sadd.s32 %s245, 1
      %p249 = scmp.eq.s32.totalorder %s106, 1
      %p250 = scmp.ne.s32.totalorder %s245, %s247
      %p251 = scmp.eq.s32.totalorder %s106, 0
      %p252 = por %p250, %p251
      %p253 = scmp.ne.s32.totalorder %s245, %s247
      %p254 = scmp.eq.s32.totalorder %s111, 1
      %p255 = por %p253, %p254
      %p256 = scmp.ne.s32.totalorder %s247, %s248
      %p257 = scmp.eq.s32.totalorder %s111, 0
      %p258 = por %p256, %p257
      %p259 = scmp.ne.s32.totalorder %s247, %s248
      %p260 = scmp.eq.s32.totalorder %s112, 1
      %p261 = por %p259, %p260
      %p263 = scmp.ne.s32.totalorder %s248, %s262
      %p264 = scmp.eq.s32.totalorder %s112, 0
      %p265 = por %p263, %p264
      %s267 = sadd.s32 %s266, 1
      %p270 = scmp.eq.s32.totalorder %s106, 1
      %p271 = scmp.ne.s32.totalorder %s266, %s268
      %p272 = scmp.eq.s32.totalorder %s106, 0
      %p273 = por %p271, %p272
      %p274 = scmp.ne.s32.totalorder %s266, %s268
      %p275 = scmp.eq.s32.totalorder %s111, 1
      %p276 = por %p274, %p275
      %p277 = scmp.ne.s32.totalorder %s268, %s269
      %p278 = scmp.eq.s32.totalorder %s111, 0
      %p279 = por %p277, %p278
      %p280 = scmp.ne.s32.totalorder %s268, %s269
      %p281 = scmp.eq.s32.totalorder %s112, 1
      %p282 = por %p280, %p281
      %p284 = scmp.ne.s32.totalorder %s269, %s283
      %p285 = scmp.eq.s32.totalorder %s112, 0
      %p286 = por %p284, %p285
      %s288 = sadd.s32 %s287, 1
      %p291 = scmp.eq.s32.totalorder %s106, 1
      %p292 = scmp.ne.s32.totalorder %s287, %s289
      %p293 = scmp.eq.s32.totalorder %s106, 0
      %p294 = por %p292, %p293
      %p295 = scmp.ne.s32.totalorder %s287, %s289
      %p296 = scmp.eq.s32.totalorder %s111, 1
      %p297 = por %p295, %p296
      %p298 = scmp.ne.s32.totalorder %s289, %s290
      %p299 = scmp.eq.s32.totalorder %s111, 0
      %p300 = por %p298, %p299
      %p301 = scmp.ne.s32.totalorder %s289, %s290
      %p302 = scmp.eq.s32.totalorder %s112, 1
      %p303 = por %p301, %p302
      %p305 = scmp.ne.s32.totalorder %s290, %s304
      %p306 = scmp.eq.s32.totalorder %s112, 0
      %p307 = por %p305, %p306
      %s309 = sadd.s32 %s308, 1
      %p312 = scmp.eq.s32.totalorder %s106, 1
      %p313 = scmp.ne.s32.totalorder %s308, %s310
      %p314 = scmp.eq.s32.totalorder %s106, 0
      %p315 = por %p313, %p314
      %p316 = scmp.ne.s32.totalorder %s308, %s310
      %p317 = scmp.eq.s32.totalorder %s111, 1
      %p318 = por %p316, %p317
      %p319 = scmp.ne.s32.totalorder %s310, %s311
      %p320 = scmp.eq.s32.totalorder %s111, 0
      %p321 = por %p319, %p320
      %p322 = scmp.ne.s32.totalorder %s310, %s311
      %p323 = scmp.eq.s32.totalorder %s112, 1
      %p324 = por %p322, %p323
      %p326 = scmp.ne.s32.totalorder %s311, %s325
      %p327 = scmp.eq.s32.totalorder %s112, 0
      %p328 = por %p326, %p327
      %s330 = sadd.s32 %s329, 1
      %p333 = scmp.eq.s32.totalorder %s106, 1
      %p334 = scmp.ne.s32.totalorder %s329, %s331
      %p335 = scmp.eq.s32.totalorder %s106, 0
      %p336 = por %p334, %p335
      %p337 = scmp.ne.s32.totalorder %s329, %s331
      %p338 = scmp.eq.s32.totalorder %s111, 1
      %p339 = por %p337, %p338
      %p340 = scmp.ne.s32.totalorder %s331, %s332
      %p341 = scmp.eq.s32.totalorder %s111, 0
      %p342 = por %p340, %p341
      %p343 = scmp.ne.s32.totalorder %s331, %s332
      %p344 = scmp.eq.s32.totalorder %s112, 1
      %p345 = por %p343, %p344
      %p347 = scmp.ne.s32.totalorder %s332, %s346
      %p348 = scmp.eq.s32.totalorder %s112, 0
      %p349 = por %p347, %p348
      %s351 = sadd.s32 %s350, 1
      %p354 = scmp.eq.s32.totalorder %s106, 1
      %p355 = scmp.ne.s32.totalorder %s350, %s352
      %p356 = scmp.eq.s32.totalorder %s106, 0
      %p357 = por %p355, %p356
      %p358 = scmp.ne.s32.totalorder %s350, %s352
      %p359 = scmp.eq.s32.totalorder %s111, 1
      %p360 = por %p358, %p359
      %p361 = scmp.ne.s32.totalorder %s352, %s353
      %p362 = scmp.eq.s32.totalorder %s111, 0
      %p363 = por %p361, %p362
      %p364 = scmp.ne.s32.totalorder %s352, %s353
      %p365 = scmp.eq.s32.totalorder %s112, 1
      %p366 = por %p364, %p365
      %p368 = scmp.ne.s32.totalorder %s353, %s367
      %p369 = scmp.eq.s32.totalorder %s112, 0
      %p370 = por %p368, %p369
      %s372 = sadd.s32 %s371, 1
      %p375 = scmp.eq.s32.totalorder %s106, 1
      %p376 = scmp.ne.s32.totalorder %s371, %s373
      %p377 = scmp.eq.s32.totalorder %s106, 0
      %p378 = por %p376, %p377
      %p379 = scmp.ne.s32.totalorder %s371, %s373
      %p380 = scmp.eq.s32.totalorder %s111, 1
      %p381 = por %p379, %p380
      %p382 = scmp.ne.s32.totalorder %s373, %s374
      %p383 = scmp.eq.s32.totalorder %s111, 0
      %p384 = por %p382, %p383
      %p385 = scmp.ne.s32.totalorder %s373, %s374
      %p386 = scmp.eq.s32.totalorder %s112, 1
      %p387 = por %p385, %p386
      %p389 = scmp.ne.s32.totalorder %s374, %s388
      %p390 = scmp.eq.s32.totalorder %s112, 0
      %p391 = por %p389, %p390
      %s393 = sadd.s32 %s392, 1
      %p396 = scmp.eq.s32.totalorder %s106, 1
      %p397 = scmp.ne.s32.totalorder %s392, %s394
      %p398 = scmp.eq.s32.totalorder %s106, 0
      %p399 = por %p397, %p398
      %p400 = scmp.ne.s32.totalorder %s392, %s394
      %p401 = scmp.eq.s32.totalorder %s111, 1
      %p402 = por %p400, %p401
      %p403 = scmp.ne.s32.totalorder %s394, %s395
      %p404 = scmp.eq.s32.totalorder %s111, 0
      %p405 = por %p403, %p404
      %p406 = scmp.ne.s32.totalorder %s394, %s395
      %p407 = scmp.eq.s32.totalorder %s112, 1
      %p408 = por %p406, %p407
      %p410 = scmp.ne.s32.totalorder %s395, %s409
      %p411 = scmp.eq.s32.totalorder %s112, 0
      %p412 = por %p410, %p411
      %s414 = sadd.s32 %s413, 1
      %p417 = scmp.eq.s32.totalorder %s106, 1
      %p418 = scmp.ne.s32.totalorder %s413, %s415
      %p419 = scmp.eq.s32.totalorder %s106, 0
      %p420 = por %p418, %p419
      %p421 = scmp.ne.s32.totalorder %s413, %s415
      %p422 = scmp.eq.s32.totalorder %s111, 1
      %p423 = por %p421, %p422
      %p424 = scmp.ne.s32.totalorder %s415, %s416
      %p425 = scmp.eq.s32.totalorder %s111, 0
      %p426 = por %p424, %p425
      %p427 = scmp.ne.s32.totalorder %s415, %s416
      %p428 = scmp.eq.s32.totalorder %s112, 1
      %p429 = por %p427, %p428
      %p431 = scmp.ne.s32.totalorder %s416, %s430
      %p432 = scmp.eq.s32.totalorder %s112, 0
      %p433 = por %p431, %p432
      %s435 = sadd.s32 %s434, 1
      %p438 = scmp.eq.s32.totalorder %s106, 1
      %p439 = scmp.ne.s32.totalorder %s434, %s436
      %p440 = scmp.eq.s32.totalorder %s106, 0
      %p441 = por %p439, %p440
      %p442 = scmp.ne.s32.totalorder %s434, %s436
      %p443 = scmp.eq.s32.totalorder %s111, 1
      %p444 = por %p442, %p443
      %p445 = scmp.ne.s32.totalorder %s436, %s437
      %p446 = scmp.eq.s32.totalorder %s111, 0
      %p447 = por %p445, %p446
      %p448 = scmp.ne.s32.totalorder %s436, %s437
      %p449 = scmp.eq.s32.totalorder %s112, 1
      %p450 = por %p448, %p449
      %p452 = scmp.ne.s32.totalorder %s437, %s451
      %p453 = scmp.eq.s32.totalorder %s112, 0
      %p454 = por %p452, %p453
      %s456 = sadd.s32 %s455, 1
      %p459 = scmp.eq.s32.totalorder %s106, 1
      %p460 = scmp.ne.s32.totalorder %s455, %s457
      %p461 = scmp.eq.s32.totalorder %s106, 0
      %p462 = por %p460, %p461
      %p463 = scmp.ne.s32.totalorder %s455, %s457
      %p464 = scmp.eq.s32.totalorder %s111, 1
      %p465 = por %p463, %p464
      %p466 = scmp.ne.s32.totalorder %s457, %s458
      %p467 = scmp.eq.s32.totalorder %s111, 0
      %p468 = por %p466, %p467
      %p469 = scmp.ne.s32.totalorder %s457, %s458
      %p470 = scmp.eq.s32.totalorder %s112, 1
      %p471 = por %p469, %p470
      %p473 = scmp.ne.s32.totalorder %s458, %s472
      %p474 = scmp.eq.s32.totalorder %s112, 0
      %p475 = por %p473, %p474
      %s477 = sadd.s32 %s476, 1
      %p480 = scmp.eq.s32.totalorder %s106, 1
      %p481 = scmp.ne.s32.totalorder %s476, %s478
      %p482 = scmp.eq.s32.totalorder %s106, 0
      %p483 = por %p481, %p482
      %p484 = scmp.ne.s32.totalorder %s476, %s478
      %p485 = scmp.eq.s32.totalorder %s111, 1
      %p486 = por %p484, %p485
      %p487 = scmp.ne.s32.totalorder %s478, %s479
      %p488 = scmp.eq.s32.totalorder %s111, 0
      %p489 = por %p487, %p488
      %p490 = scmp.ne.s32.totalorder %s478, %s479
      %p491 = scmp.eq.s32.totalorder %s112, 1
      %p492 = por %p490, %p491
      %p494 = scmp.ne.s32.totalorder %s479, %s493
      %p495 = scmp.eq.s32.totalorder %s112, 0
      %p496 = por %p494, %p495
      %s498 = sadd.s32 %s497, 1
      %p501 = scmp.eq.s32.totalorder %s106, 1
      %p502 = scmp.ne.s32.totalorder %s497, %s499
      %p503 = scmp.eq.s32.totalorder %s106, 0
      %p504 = por %p502, %p503
      %p505 = scmp.ne.s32.totalorder %s497, %s499
      %p506 = scmp.eq.s32.totalorder %s111, 1
      %p507 = por %p505, %p506
      %p508 = scmp.ne.s32.totalorder %s499, %s500
      %p509 = scmp.eq.s32.totalorder %s111, 0
      %p510 = por %p508, %p509
      %p511 = scmp.ne.s32.totalorder %s499, %s500
      %p512 = scmp.eq.s32.totalorder %s112, 1
      %p513 = por %p511, %p512
      %p515 = scmp.ne.s32.totalorder %s500, %s514
      %p516 = scmp.eq.s32.totalorder %s112, 0
      %p517 = por %p515, %p516
      %s519 = sadd.s32 %s518, 1
      %p522 = scmp.eq.s32.totalorder %s106, 1
      %p523 = scmp.ne.s32.totalorder %s518, %s520
      %p524 = scmp.eq.s32.totalorder %s106, 0
      %p525 = por %p523, %p524
      %p526 = scmp.ne.s32.totalorder %s518, %s520
      %p527 = scmp.eq.s32.totalorder %s111, 1
      %p528 = por %p526, %p527
      %p529 = scmp.ne.s32.totalorder %s520, %s521
      %p530 = scmp.eq.s32.totalorder %s111, 0
      %p531 = por %p529, %p530
      %p532 = scmp.ne.s32.totalorder %s520, %s521
      %p533 = scmp.eq.s32.totalorder %s112, 1
      %p534 = por %p532, %p533
      %p536 = scmp.ne.s32.totalorder %s521, %s535
      %p537 = scmp.eq.s32.totalorder %s112, 0
      %p538 = por %p536, %p537
      %s540 = sadd.s32 %s539, 1
      %p543 = scmp.eq.s32.totalorder %s106, 1
      %p544 = scmp.ne.s32.totalorder %s539, %s541
      %p545 = scmp.eq.s32.totalorder %s106, 0
      %p546 = por %p544, %p545
      %p547 = scmp.ne.s32.totalorder %s539, %s541
      %p548 = scmp.eq.s32.totalorder %s111, 1
      %p549 = por %p547, %p548
      %p550 = scmp.ne.s32.totalorder %s541, %s542
      %p551 = scmp.eq.s32.totalorder %s111, 0
      %p552 = por %p550, %p551
      %p553 = scmp.ne.s32.totalorder %s541, %s542
      %p554 = scmp.eq.s32.totalorder %s112, 1
      %p555 = por %p553, %p554
      %p557 = scmp.ne.s32.totalorder %s542, %s556
      %p558 = scmp.eq.s32.totalorder %s112, 0
      %p559 = por %p557, %p558
      %s561 = sadd.s32 %s560, 1
      %p564 = scmp.eq.s32.totalorder %s106, 1
      %p565 = scmp.ne.s32.totalorder %s560, %s562
      %p566 = scmp.eq.s32.totalorder %s106, 0
      %p567 = por %p565, %p566
      %p568 = scmp.ne.s32.totalorder %s560, %s562
      %p569 = scmp.eq.s32.totalorder %s111, 1
      %p570 = por %p568, %p569
      %p571 = scmp.ne.s32.totalorder %s562, %s563
      %p572 = scmp.eq.s32.totalorder %s111, 0
      %p573 = por %p571, %p572
      %p574 = scmp.ne.s32.totalorder %s562, %s563
      %p575 = scmp.eq.s32.totalorder %s112, 1
      %p576 = por %p574, %p575
      %p578 = scmp.ne.s32.totalorder %s563, %s577
      %p579 = scmp.eq.s32.totalorder %s112, 0
      %p580 = por %p578, %p579
      %s582 = sadd.s32 %s581, 1
      %p585 = scmp.eq.s32.totalorder %s106, 1
      %p586 = scmp.ne.s32.totalorder %s581, %s583
      %p587 = scmp.eq.s32.totalorder %s106, 0
      %p588 = por %p586, %p587
      %p589 = scmp.ne.s32.totalorder %s581, %s583
      %p590 = scmp.eq.s32.totalorder %s111, 1
      %p591 = por %p589, %p590
      %p592 = scmp.ne.s32.totalorder %s583, %s584
      %p593 = scmp.eq.s32.totalorder %s111, 0
      %p594 = por %p592, %p593
      %p595 = scmp.ne.s32.totalorder %s583, %s584
      %p596 = scmp.eq.s32.totalorder %s112, 1
      %p597 = por %p595, %p596
      %p599 = scmp.ne.s32.totalorder %s584, %s598
      %p600 = scmp.eq.s32.totalorder %s112, 0
      %p601 = por %p599, %p600
      %s603 = sadd.s32 %s602, 1
      %p606 = scmp.eq.s32.totalorder %s106, 1
      %p607 = scmp.ne.s32.totalorder %s602, %s604
      %p608 = scmp.eq.s32.totalorder %s106, 0
      %p609 = por %p607, %p608
      %p610 = scmp.ne.s32.totalorder %s602, %s604
      %p611 = scmp.eq.s32.totalorder %s111, 1
      %p612 = por %p610, %p611
      %p613 = scmp.ne.s32.totalorder %s604, %s605
      %p614 = scmp.eq.s32.totalorder %s111, 0
      %p615 = por %p613, %p614
      %p616 = scmp.ne.s32.totalorder %s604, %s605
      %p617 = scmp.eq.s32.totalorder %s112, 1
      %p618 = por %p616, %p617
      %p620 = scmp.ne.s32.totalorder %s605, %s619
      %p621 = scmp.eq.s32.totalorder %s112, 0
      %p622 = por %p620, %p621
      %s624 = sadd.s32 %s623, 1
      %p627 = scmp.eq.s32.totalorder %s106, 1
      %p628 = scmp.ne.s32.totalorder %s623, %s625
      %p629 = scmp.eq.s32.totalorder %s106, 0
      %p630 = por %p628, %p629
      %p631 = scmp.ne.s32.totalorder %s623, %s625
      %p632 = scmp.eq.s32.totalorder %s111, 1
      %p633 = por %p631, %p632
      %p634 = scmp.ne.s32.totalorder %s625, %s626
      %p635 = scmp.eq.s32.totalorder %s111, 0
      %p636 = por %p634, %p635
      %p637 = scmp.ne.s32.totalorder %s625, %s626
      %p638 = scmp.eq.s32.totalorder %s112, 1
      %p639 = por %p637, %p638
      %p641 = scmp.ne.s32.totalorder %s626, %s640
      %p642 = scmp.eq.s32.totalorder %s112, 0
      %p643 = por %p641, %p642
      %s645 = sadd.s32 %s644, 1
      %p648 = scmp.eq.s32.totalorder %s106, 1
      %p649 = scmp.ne.s32.totalorder %s644, %s646
      %p650 = scmp.eq.s32.totalorder %s106, 0
      %p651 = por %p649, %p650
      %p652 = scmp.ne.s32.totalorder %s644, %s646
      %p653 = scmp.eq.s32.totalorder %s111, 1
      %p654 = por %p652, %p653
      %p655 = scmp.ne.s32.totalorder %s646, %s647
      %p656 = scmp.eq.s32.totalorder %s111, 0
      %p657 = por %p655, %p656
      %p658 = scmp.ne.s32.totalorder %s646, %s647
      %p659 = scmp.eq.s32.totalorder %s112, 1
      %p660 = por %p658, %p659
      %p662 = scmp.ne.s32.totalorder %s647, %s661
      %p663 = scmp.eq.s32.totalorder %s112, 0
      %p664 = por %p662, %p663
      %s666 = sadd.s32 %s665, 1
      %p669 = scmp.eq.s32.totalorder %s106, 1
      %p670 = scmp.ne.s32.totalorder %s665, %s667
      %p671 = scmp.eq.s32.totalorder %s106, 0
      %p672 = por %p670, %p671
      %p673 = scmp.ne.s32.totalorder %s665, %s667
      %p674 = scmp.eq.s32.totalorder %s111, 1
      %p675 = por %p673, %p674
      %p676 = scmp.ne.s32.totalorder %s667, %s668
      %p677 = scmp.eq.s32.totalorder %s111, 0
      %p678 = por %p676, %p677
      %p679 = scmp.ne.s32.totalorder %s667, %s668
      %p680 = scmp.eq.s32.totalorder %s112, 1
      %p681 = por %p679, %p680
      %p683 = scmp.ne.s32.totalorder %s668, %s682
      %p684 = scmp.eq.s32.totalorder %s112, 0
      %p685 = por %p683, %p684
      %s687 = sadd.s32 %s686, 1
      %p690 = scmp.eq.s32.totalorder %s106, 1
      %p691 = scmp.ne.s32.totalorder %s686, %s688
      %p692 = scmp.eq.s32.totalorder %s106, 0
      %p693 = por %p691, %p692
      %p694 = scmp.ne.s32.totalorder %s686, %s688
      %p695 = scmp.eq.s32.totalorder %s111, 1
      %p696 = por %p694, %p695
      %p697 = scmp.ne.s32.totalorder %s688, %s689
      %p698 = scmp.eq.s32.totalorder %s111, 0
      %p699 = por %p697, %p698
      %p700 = scmp.ne.s32.totalorder %s688, %s689
      %p701 = scmp.eq.s32.totalorder %s112, 1
      %p702 = por %p700, %p701
      %p704 = scmp.ne.s32.totalorder %s689, %s703
      %p705 = scmp.eq.s32.totalorder %s112, 0
      %p706 = por %p704, %p705
      %s708 = sadd.s32 %s707, 1
      %p711 = scmp.eq.s32.totalorder %s106, 1
      %p712 = scmp.ne.s32.totalorder %s707, %s709
      %p713 = scmp.eq.s32.totalorder %s106, 0
      %p714 = por %p712, %p713
      %p715 = scmp.ne.s32.totalorder %s707, %s709
      %p716 = scmp.eq.s32.totalorder %s111, 1
      %p717 = por %p715, %p716
      %p718 = scmp.ne.s32.totalorder %s709, %s710
      %p719 = scmp.eq.s32.totalorder %s111, 0
      %p720 = por %p718, %p719
      %p721 = scmp.ne.s32.totalorder %s709, %s710
      %p722 = scmp.eq.s32.totalorder %s112, 1
      %p723 = por %p721, %p722
      %p725 = scmp.ne.s32.totalorder %s710, %s724
      %p726 = scmp.eq.s32.totalorder %s112, 0
      %p727 = por %p725, %p726
      %s729 = sadd.s32 %s728, 1
      %p732 = scmp.eq.s32.totalorder %s106, 1
      %p733 = scmp.ne.s32.totalorder %s728, %s730
      %p734 = scmp.eq.s32.totalorder %s106, 0
      %p735 = por %p733, %p734
      %p736 = scmp.ne.s32.totalorder %s728, %s730
      %p737 = scmp.eq.s32.totalorder %s111, 1
      %p738 = por %p736, %p737
      %p739 = scmp.ne.s32.totalorder %s730, %s731
      %p740 = scmp.eq.s32.totalorder %s111, 0
      %p741 = por %p739, %p740
      %p742 = scmp.ne.s32.totalorder %s730, %s731
      %p743 = scmp.eq.s32.totalorder %s112, 1
      %p744 = por %p742, %p743
      %p746 = scmp.ne.s32.totalorder %s731, %s745
      %p747 = scmp.eq.s32.totalorder %s112, 0
      %p748 = por %p746, %p747
      %s750 = sadd.s32 %s749, 1
      %p753 = scmp.eq.s32.totalorder %s106, 1
      %p754 = scmp.ne.s32.totalorder %s749, %s751
      %p755 = scmp.eq.s32.totalorder %s106, 0
      %p756 = por %p754, %p755
      %p757 = scmp.ne.s32.totalorder %s749, %s751
      %p758 = scmp.eq.s32.totalorder %s111, 1
      %p759 = por %p757, %p758
      %p760 = scmp.ne.s32.totalorder %s751, %s752
      %p761 = scmp.eq.s32.totalorder %s111, 0
      %p762 = por %p760, %p761
      %p763 = scmp.ne.s32.totalorder %s751, %s752
      %p764 = scmp.eq.s32.totalorder %s112, 1
      %p765 = por %p763, %p764
      %p767 = scmp.ne.s32.totalorder %s752, %s766
      %p768 = scmp.eq.s32.totalorder %s112, 0
      %p769 = por %p767, %p768
      %s771 = sadd.s32 %s770, 1
      %p774 = scmp.eq.s32.totalorder %s106, 1
      %p775 = scmp.ne.s32.totalorder %s770, %s772
      %p776 = scmp.eq.s32.totalorder %s106, 0
      %p777 = por %p775, %p776
      %p778 = scmp.ne.s32.totalorder %s770, %s772
      %p779 = scmp.eq.s32.totalorder %s111, 1
      %p780 = por %p778, %p779
      %p781 = scmp.ne.s32.totalorder %s772, %s773
      %p782 = scmp.eq.s32.totalorder %s111, 0
      %p783 = por %p781, %p782
      %p784 = scmp.ne.s32.totalorder %s772, %s773
      %p785 = scmp.eq.s32.totalorder %s112, 1
      %p786 = por %p784, %p785
      %p788 = scmp.ne.s32.totalorder %s773, %s787
      %p789 = scmp.eq.s32.totalorder %s112, 0
      %p790 = por %p788, %p789
      %s792 = sadd.s32 %s791, 1
      %p795 = scmp.eq.s32.totalorder %s106, 1
      %p796 = scmp.ne.s32.totalorder %s791, %s793
      %p797 = scmp.eq.s32.totalorder %s106, 0
      %p798 = por %p796, %p797
      %p799 = scmp.ne.s32.totalorder %s791, %s793
      %p800 = scmp.eq.s32.totalorder %s111, 1
      %p801 = por %p799, %p800
      %p802 = scmp.ne.s32.totalorder %s793, %s794
      %p803 = scmp.eq.s32.totalorder %s111, 0
      %p804 = por %p802, %p803
      %p805 = scmp.ne.s32.totalorder %s793, %s794
      %p806 = scmp.eq.s32.totalorder %s112, 1
      %p807 = por %p805, %p806
      %p809 = scmp.ne.s32.totalorder %s794, %s808
      %p810 = scmp.eq.s32.totalorder %s112, 0
      %p811 = por %p809, %p810
      %s813 = sadd.s32 %s812, 1
      %p816 = scmp.eq.s32.totalorder %s106, 1
      %p817 = scmp.ne.s32.totalorder %s812, %s814
      %p818 = scmp.eq.s32.totalorder %s106, 0
      %p819 = por %p817, %p818
      %p820 = scmp.ne.s32.totalorder %s812, %s814
      %p821 = scmp.eq.s32.totalorder %s111, 1
      %p822 = por %p820, %p821
      %p823 = scmp.ne.s32.totalorder %s814, %s815
      %p824 = scmp.eq.s32.totalorder %s111, 0
      %p825 = por %p823, %p824
      %p826 = scmp.ne.s32.totalorder %s814, %s815
      %p827 = scmp.eq.s32.totalorder %s112, 1
      %p828 = por %p826, %p827
      %p830 = scmp.ne.s32.totalorder %s815, %s829
      %p831 = scmp.eq.s32.totalorder %s112, 0
      %p832 = por %p830, %p831
      %s834 = sadd.s32 %s833, 1
      %p837 = scmp.eq.s32.totalorder %s106, 1
      %p838 = scmp.ne.s32.totalorder %s833, %s835
      %p839 = scmp.eq.s32.totalorder %s106, 0
      %p840 = por %p838, %p839
      %p841 = scmp.ne.s32.totalorder %s833, %s835
      %p842 = scmp.eq.s32.totalorder %s111, 1
      %p843 = por %p841, %p842
      %p844 = scmp.ne.s32.totalorder %s835, %s836
      %p845 = scmp.eq.s32.totalorder %s111, 0
      %p846 = por %p844, %p845
      %p847 = scmp.ne.s32.totalorder %s835, %s836
      %p848 = scmp.eq.s32.totalorder %s112, 1
      %p849 = por %p847, %p848
      %p851 = scmp.ne.s32.totalorder %s836, %s850
      %p852 = scmp.eq.s32.totalorder %s112, 0
      %p853 = por %p851, %p852
      %s855 = sadd.s32 %s854, 1
      %p858 = scmp.eq.s32.totalorder %s106, 1
      %p859 = scmp.ne.s32.totalorder %s854, %s856
      %p860 = scmp.eq.s32.totalorder %s106, 0
      %p861 = por %p859, %p860
      %p862 = scmp.ne.s32.totalorder %s854, %s856
      %p863 = scmp.eq.s32.totalorder %s111, 1
      %p864 = por %p862, %p863
      %p865 = scmp.ne.s32.totalorder %s856, %s857
      %p866 = scmp.eq.s32.totalorder %s111, 0
      %p867 = por %p865, %p866
      %p868 = scmp.ne.s32.totalorder %s856, %s857
      %p869 = scmp.eq.s32.totalorder %s112, 1
      %p870 = por %p868, %p869
      %p872 = scmp.ne.s32.totalorder %s857, %s871
      %p873 = scmp.eq.s32.totalorder %s112, 0
      %p874 = por %p872, %p873
      %s876 = sadd.s32 %s875, 1
      %p879 = scmp.eq.s32.totalorder %s106, 1
      %p880 = scmp.ne.s32.totalorder %s875, %s877
      %p881 = scmp.eq.s32.totalorder %s106, 0
      %p882 = por %p880, %p881
      %p883 = scmp.ne.s32.totalorder %s875, %s877
      %p884 = scmp.eq.s32.totalorder %s111, 1
      %p885 = por %p883, %p884
      %p886 = scmp.ne.s32.totalorder %s877, %s878
      %p887 = scmp.eq.s32.totalorder %s111, 0
      %p888 = por %p886, %p887
      %p889 = scmp.ne.s32.totalorder %s877, %s878
      %p890 = scmp.eq.s32.totalorder %s112, 1
      %p891 = por %p889, %p890
      %p893 = scmp.ne.s32.totalorder %s878, %s892
      %p894 = scmp.eq.s32.totalorder %s112, 0
      %p895 = por %p893, %p894
      %s897 = sadd.s32 %s896, 1
      %p900 = scmp.eq.s32.totalorder %s106, 1
      %p901 = scmp.ne.s32.totalorder %s896, %s898
      %p902 = scmp.eq.s32.totalorder %s106, 0
      %p903 = por %p901, %p902
      %p904 = scmp.ne.s32.totalorder %s896, %s898
      %p905 = scmp.eq.s32.totalorder %s111, 1
      %p906 = por %p904, %p905
      %p907 = scmp.ne.s32.totalorder %s898, %s899
      %p908 = scmp.eq.s32.totalorder %s111, 0
      %p909 = por %p907, %p908
      %p910 = scmp.ne.s32.totalorder %s898, %s899
      %p911 = scmp.eq.s32.totalorder %s112, 1
      %p912 = por %p910, %p911
      %p914 = scmp.ne.s32.totalorder %s899, %s913
      %p915 = scmp.eq.s32.totalorder %s112, 0
      %p916 = por %p914, %p915
      %s918 = sadd.s32 %s917, 1
      %p921 = scmp.eq.s32.totalorder %s106, 1
      %p922 = scmp.ne.s32.totalorder %s917, %s919
      %p923 = scmp.eq.s32.totalorder %s106, 0
      %p924 = por %p922, %p923
      %p925 = scmp.ne.s32.totalorder %s917, %s919
      %p926 = scmp.eq.s32.totalorder %s111, 1
      %p927 = por %p925, %p926
      %p928 = scmp.ne.s32.totalorder %s919, %s920
      %p929 = scmp.eq.s32.totalorder %s111, 0
      %p930 = por %p928, %p929
      %p931 = scmp.ne.s32.totalorder %s919, %s920
      %p932 = scmp.eq.s32.totalorder %s112, 1
      %p933 = por %p931, %p932
      %p935 = scmp.ne.s32.totalorder %s920, %s934
      %p936 = scmp.eq.s32.totalorder %s112, 0
      %p937 = por %p935, %p936
      %s939 = sadd.s32 %s938, 1
      %p942 = scmp.eq.s32.totalorder %s106, 1
      %p943 = scmp.ne.s32.totalorder %s938, %s940
      %p944 = scmp.eq.s32.totalorder %s106, 0
      %p945 = por %p943, %p944
      %p946 = scmp.ne.s32.totalorder %s938, %s940
      %p947 = scmp.eq.s32.totalorder %s111, 1
      %p948 = por %p946, %p947
      %p949 = scmp.ne.s32.totalorder %s940, %s941
      %p950 = scmp.eq.s32.totalorder %s111, 0
      %p951 = por %p949, %p950
      %p952 = scmp.ne.s32.totalorder %s940, %s941
      %p953 = scmp.eq.s32.totalorder %s112, 1
      %p954 = por %p952, %p953
      %p956 = scmp.ne.s32.totalorder %s941, %s955
      %p957 = scmp.eq.s32.totalorder %s112, 0
      %p958 = por %p956, %p957
      %s960 = sadd.s32 %s959, 1
      %p963 = scmp.eq.s32.totalorder %s106, 1
      %p964 = scmp.ne.s32.totalorder %s959, %s961
      %p965 = scmp.eq.s32.totalorder %s106, 0
      %p966 = por %p964, %p965
      %p967 = scmp.ne.s32.totalorder %s959, %s961
      %p968 = scmp.eq.s32.totalorder %s111, 1
      %p969 = por %p967, %p968
      %p970 = scmp.ne.s32.totalorder %s961, %s962
      %p971 = scmp.eq.s32.totalorder %s111, 0
      %p972 = por %p970, %p971
      %p973 = scmp.ne.s32.totalorder %s961, %s962
      %p974 = scmp.eq.s32.totalorder %s112, 1
      %p975 = por %p973, %p974
      %p977 = scmp.ne.s32.totalorder %s962, %s976
      %p978 = scmp.eq.s32.totalorder %s112, 0
      %p979 = por %p977, %p978
      %s981 = sadd.s32 %s980, 1
      %p984 = scmp.eq.s32.totalorder %s106, 1
      %p985 = scmp.ne.s32.totalorder %s980, %s982
      %p986 = scmp.eq.s32.totalorder %s106, 0
      %p987 = por %p985, %p986
      %p988 = scmp.ne.s32.totalorder %s980, %s982
      %p989 = scmp.eq.s32.totalorder %s111, 1
      %p990 = por %p988, %p989
      %p991 = scmp.ne.s32.totalorder %s982, %s983
      %p992 = scmp.eq.s32.totalorder %s111, 0
      %p993 = por %p991, %p992
      %p994 = scmp.ne.s32.totalorder %s982, %s983
      %p995 = scmp.eq.s32.totalorder %s112, 1
      %p996 = por %p994, %p995
      %p998 = scmp.ne.s32.totalorder %s983, %s997
      %p999 = scmp.eq.s32.totalorder %s112, 0
      %p1000 = por %p998, %p999
      %s1002 = sadd.s32 %s1001, 1
      %p1005 = scmp.eq.s32.totalorder %s106, 1
      %p1006 = scmp.ne.s32.totalorder %s1001, %s1003
      %p1007 = scmp.eq.s32.totalorder %s106, 0
      %p1008 = por %p1006, %p1007
      %p1009 = scmp.ne.s32.totalorder %s1001, %s1003
      %p1010 = scmp.eq.s32.totalorder %s111, 1
      %p1011 = por %p1009, %p1010
      %p1012 = scmp.ne.s32.totalorder %s1003, %s1004
      %p1013 = scmp.eq.s32.totalorder %s111, 0
      %p1014 = por %p1012, %p1013
      %p1015 = scmp.ne.s32.totalorder %s1003, %s1004
      %p1016 = scmp.eq.s32.totalorder %s112, 1
      %p1017 = por %p1015, %p1016
      %p1019 = scmp.ne.s32.totalorder %s1004, %s1018
      %p1020 = scmp.eq.s32.totalorder %s112, 0
      %p1021 = por %p1019, %p1020
      %s1023 = sadd.s32 %s1022, 1
      %p1026 = scmp.eq.s32.totalorder %s106, 1
      %p1027 = scmp.ne.s32.totalorder %s1022, %s1024
      %p1028 = scmp.eq.s32.totalorder %s106, 0
      %p1029 = por %p1027, %p1028
      %p1030 = scmp.ne.s32.totalorder %s1022, %s1024
      %p1031 = scmp.eq.s32.totalorder %s111, 1
      %p1032 = por %p1030, %p1031
      %p1033 = scmp.ne.s32.totalorder %s1024, %s1025
      %p1034 = scmp.eq.s32.totalorder %s111, 0
      %p1035 = por %p1033, %p1034
      %p1036 = scmp.ne.s32.totalorder %s1024, %s1025
      %p1037 = scmp.eq.s32.totalorder %s112, 1
      %p1038 = por %p1036, %p1037
      %p1040 = scmp.ne.s32.totalorder %s1025, %s1039
      %p1041 = scmp.eq.s32.totalorder %s112, 0
      %p1042 = por %p1040, %p1041
      %s1043 = ssub.s32 %s106, %s113
      %p1044 = scmp.eq.s32.totalorder %s1043, 0
      %s1046 = sadd.s32 %s1045, 1
      %s1047 = scalar_select %p1044, %s1045, %s1046
      %p1050 = pneg %p1044
      %p1051 = scmp.eq.s32.totalorder %s106, 1
      %p1052 = por %p1050, %p1051
      %p1053 = scmp.ne.s32.totalorder %s1045, %s1048
      %p1054 = scmp.eq.s32.totalorder %s106, 0
      %p1055 = por %p1053, %p1054
      %p1056 = scmp.ne.s32.totalorder %s1045, %s1048
      %p1057 = scmp.eq.s32.totalorder %s111, 1
      %p1058 = por %p1056, %p1057
      %p1059 = scmp.ne.s32.totalorder %s1048, %s1049
      %p1060 = scmp.eq.s32.totalorder %s111, 0
      %p1061 = por %p1059, %p1060
      %p1062 = scmp.ne.s32.totalorder %s1048, %s1049
      %p1063 = scmp.eq.s32.totalorder %s112, 1
      %p1064 = por %p1062, %p1063
      %p1066 = scmp.ne.s32.totalorder %s1049, %s1065
      %p1067 = scmp.eq.s32.totalorder %s112, 0
      %p1068 = por %p1066, %p1067
      %p1069 = scmp.le.s32.totalorder 1, %s106
      %p1070 = scmp.lt.s32.totalorder %s106, 3
      %p1071 = pnand %p1069, %p1070
      %p1072 = pneg %p1071
      // Predicated region
      $region9: #{tpu_custom_call.1} parent=5 // pred_check
        _
      $region10: #{tpu_custom_call.1} parent=5 // pred_check_branch
        %1074 = sbr.rel (%p1071) target = $region12
      $region11: #{tpu_custom_call.1} parent=5 // pred_region
        %s1075 = ssub.s32 %s106, 1
        // Predicated region
        $region13: #{tpu_custom_call.1} parent=11 // pred_check
          %p1076 = pneg %p127
        $region14: #{tpu_custom_call.1} parent=11 // pred_check_branch
          %1078 = sbr.rel (%p1076) target = $region16
        $region15: #{tpu_custom_call.1} parent=11 // pred_region
          %s1080 = ssub.s32 128, 128
          %1081 = vsyncadd [#allocation3], %s1080
          %s1083 = sshll.u32 [#allocation2], 4
          %s1084 = int_to_ptr.vmem [resolvable:$true] %s1083
          %1086 = dma.hbm_to_vmem [thread:$0]  %s1, 128, %s1084, [#allocation3]
        $region16: #{tpu_custom_call.1} parent=11 // pred_fallthru
          _
        // Predicated region
        $region17: #{tpu_custom_call.1} parent=11 // pred_check
          %p1087 = pneg %p174
        $region18: #{tpu_custom_call.1} parent=11 // pred_check_branch
          %1089 = sbr.rel (%p1087) target = $region20
        $region19: #{tpu_custom_call.1} parent=11 // pred_region
          _
        $region20: #{tpu_custom_call.1} parent=11 // pred_fallthru
          _
        // Predicated region
        $region21: #{tpu_custom_call.1} parent=11 // pred_check
          %p1090 = pneg %p195
        $region22: #{tpu_custom_call.1} parent=11 // pred_check_branch
          %1092 = sbr.rel (%p1090) target = $region24
        $region23: #{tpu_custom_call.1} parent=11 // pred_region
          %s1094 = ssub.s32 16, 16
          %1095 = vsyncadd [#allocation5], %s1094
          %s1097 = sshll.u32 [#allocation4], 4
          %s1098 = int_to_ptr.vmem [resolvable:$true] %s1097
          %1100 = dma.hbm_to_vmem [thread:$0]  %s7, 16, %s1098, [#allocation5]
        $region24: #{tpu_custom_call.1} parent=11 // pred_fallthru
          _
        // Predicated region
        $region25: #{tpu_custom_call.1} parent=11 // pred_check
          %p1101 = pneg %p216
        $region26: #{tpu_custom_call.1} parent=11 // pred_check_branch
          %1103 = sbr.rel (%p1101) target = $region28
        $region27: #{tpu_custom_call.1} parent=11 // pred_region
          _
        $region28: #{tpu_custom_call.1} parent=11 // pred_fallthru
          _
        // Predicated region
        $region29: #{tpu_custom_call.1} parent=11 // pred_check
          %p1104 = pneg %p237
        $region30: #{tpu_custom_call.1} parent=11 // pred_check_branch
          %1106 = sbr.rel (%p1104) target = $region32
        $region31: #{tpu_custom_call.1} parent=11 // pred_region
          %s1108 = ssub.s32 16, 16
          %1109 = vsyncadd [#allocation5], %s1108
          %s1111 = sshll.u32 [#allocation6], 4
          %s1112 = int_to_ptr.vmem [resolvable:$true] %s1111
          %1114 = dma.hbm_to_vmem [thread:$0]  %s11, 16, %s1112, [#allocation5]
        $region32: #{tpu_custom_call.1} parent=11 // pred_fallthru
          _
        // Predicated region
        $region33: #{tpu_custom_call.1} parent=11 // pred_check
          %p1115 = pneg %p258
        $region34: #{tpu_custom_call.1} parent=11 // pred_check_branch
          %1117 = sbr.rel (%p1115) target = $region36
        $region35: #{tpu_custom_call.1} parent=11 // pred_region
          %s1119 = ssub.s32 16, 16
          %1120 = vsyncadd [#allocation8], %s1119
          %s1122 = sshll.u32 [#allocation7], 4
          %s1123 = int_to_ptr.vmem [resolvable:$true] %s1122
          %1125 = dma.hbm_to_vmem [thread:$0]  %s13, 16, %s1123, [#allocation8]
        $region36: #{tpu_custom_call.1} parent=11 // pred_fallthru
          _
        // Predicated region
        $region37: #{tpu_custom_call.1} parent=11 // pred_check
          %p1126 = pneg %p279
        $region38: #{tpu_custom_call.1} parent=11 // pred_check_branch
          %1128 = sbr.rel (%p1126) target = $region40
        $region39: #{tpu_custom_call.1} parent=11 // pred_region
          %s1130 = ssub.s32 16, 16
          %1131 = vsyncadd [#allocation8], %s1130
          %s1133 = sshll.u32 [#allocation9], 4
          %s1134 = int_to_ptr.vmem [resolvable:$true] %s1133
          %1136 = dma.hbm_to_vmem [thread:$0]  %s15, 16, %s1134, [#allocation8]
        $region40: #{tpu_custom_call.1} parent=11 // pred_fallthru
          _
        // Predicated region
        $region41: #{tpu_custom_call.1} parent=11 // pred_check
          %p1137 = pneg %p300
        $region42: #{tpu_custom_call.1} parent=11 // pred_check_branch
          %1139 = sbr.rel (%p1137) target = $region44
        $region43: #{tpu_custom_call.1} parent=11 // pred_region
          _
        $region44: #{tpu_custom_call.1} parent=11 // pred_fallthru
          _
        // Predicated region
        $region45: #{tpu_custom_call.1} parent=11 // pred_check
          %p1140 = pneg %p321
        $region46: #{tpu_custom_call.1} parent=11 // pred_check_branch
          %1142 = sbr.rel (%p1140) target = $region48
        $region47: #{tpu_custom_call.1} parent=11 // pred_region
          %s1144 = ssub.s32 16, 16
          %1145 = vsyncadd [#allocation11], %s1144
          %s1147 = sshll.u32 [#allocation10], 4
          %s1148 = int_to_ptr.vmem [resolvable:$true] %s1147
          %1150 = dma.hbm_to_vmem [thread:$0]  %s19, 16, %s1148, [#allocation11]
        $region48: #{tpu_custom_call.1} parent=11 // pred_fallthru
          _
        // Predicated region
        $region49: #{tpu_custom_call.1} parent=11 // pred_check
          %p1151 = pneg %p342
        $region50: #{tpu_custom_call.1} parent=11 // pred_check_branch
          %1153 = sbr.rel (%p1151) target = $region52
        $region51: #{tpu_custom_call.1} parent=11 // pred_region
          _
        $region52: #{tpu_custom_call.1} parent=11 // pred_fallthru
          _
        // Predicated region
        $region53: #{tpu_custom_call.1} parent=11 // pred_check
          %p1154 = pneg %p363
        $region54: #{tpu_custom_call.1} parent=11 // pred_check_branch
          %1156 = sbr.rel (%p1154) target = $region56
        $region55: #{tpu_custom_call.1} parent=11 // pred_region
          %s1158 = ssub.s32 16, 16
          %1159 = vsyncadd [#allocation11], %s1158
          %s1161 = sshll.u32 [#allocation12], 4
          %s1162 = int_to_ptr.vmem [resolvable:$true] %s1161
          %1164 = dma.hbm_to_vmem [thread:$0]  %s23, 16, %s1162, [#allocation11]
        $region56: #{tpu_custom_call.1} parent=11 // pred_fallthru
          _
        // Predicated region
        $region57: #{tpu_custom_call.1} parent=11 // pred_check
          %p1165 = pneg %p384
        $region58: #{tpu_custom_call.1} parent=11 // pred_check_branch
          %1167 = sbr.rel (%p1165) target = $region60
        $region59: #{tpu_custom_call.1} parent=11 // pred_region
          _
        $region60: #{tpu_custom_call.1} parent=11 // pred_fallthru
          _
        // Predicated region
        $region61: #{tpu_custom_call.1} parent=11 // pred_check
          %p1168 = pneg %p405
        $region62: #{tpu_custom_call.1} parent=11 // pred_check_branch
          %1170 = sbr.rel (%p1168) target = $region64
        $region63: #{tpu_custom_call.1} parent=11 // pred_region
          %s1172 = ssub.s32 16, 16
          %1173 = vsyncadd [#allocation14], %s1172
          %s1175 = sshll.u32 [#allocation13], 4
          %s1176 = int_to_ptr.vmem [resolvable:$true] %s1175
          %1178 = dma.hbm_to_vmem [thread:$0]  %s27, 16, %s1176, [#allocation14]
        $region64: #{tpu_custom_call.1} parent=11 // pred_fallthru
          _
        // Predicated region
        $region65: #{tpu_custom_call.1} parent=11 // pred_check
          %p1179 = pneg %p426
        $region66: #{tpu_custom_call.1} parent=11 // pred_check_branch
          %1181 = sbr.rel (%p1179) target = $region68
        $region67: #{tpu_custom_call.1} parent=11 // pred_region
          %s1183 = ssub.s32 16, 16
          %1184 = vsyncadd [#allocation14], %s1183
          %s1186 = sshll.u32 [#allocation15], 4
          %s1187 = int_to_ptr.vmem [resolvable:$true] %s1186
          %1189 = dma.hbm_to_vmem [thread:$0]  %s29, 16, %s1187, [#allocation14]
        $region68: #{tpu_custom_call.1} parent=11 // pred_fallthru
          _
        // Predicated region
        $region69: #{tpu_custom_call.1} parent=11 // pred_check
          %p1190 = pneg %p447
        $region70: #{tpu_custom_call.1} parent=11 // pred_check_branch
          %1192 = sbr.rel (%p1190) target = $region72
        $region71: #{tpu_custom_call.1} parent=11 // pred_region
          %s1194 = ssub.s32 16, 16
          %1195 = vsyncadd [#allocation17], %s1194
          %s1197 = sshll.u32 [#allocation16], 4
          %s1198 = int_to_ptr.vmem [resolvable:$true] %s1197
          %1200 = dma.hbm_to_vmem [thread:$0]  %s31, 16, %s1198, [#allocation17]
        $region72: #{tpu_custom_call.1} parent=11 // pred_fallthru
          _
        // Predicated region
        $region73: #{tpu_custom_call.1} parent=11 // pred_check
          %p1201 = pneg %p468
        $region74: #{tpu_custom_call.1} parent=11 // pred_check_branch
          %1203 = sbr.rel (%p1201) target = $region76
        $region75: #{tpu_custom_call.1} parent=11 // pred_region
          _
        $region76: #{tpu_custom_call.1} parent=11 // pred_fallthru
          _
        // Predicated region
        $region77: #{tpu_custom_call.1} parent=11 // pred_check
          %p1204 = pneg %p489
        $region78: #{tpu_custom_call.1} parent=11 // pred_check_branch
          %1206 = sbr.rel (%p1204) target = $region80
        $region79: #{tpu_custom_call.1} parent=11 // pred_region
          %s1208 = ssub.s32 16, 16
          %1209 = vsyncadd [#allocation17], %s1208
          %s1211 = sshll.u32 [#allocation18], 4
          %s1212 = int_to_ptr.vmem [resolvable:$true] %s1211
          %1214 = dma.hbm_to_vmem [thread:$0]  %s35, 16, %s1212, [#allocation17]
        $region80: #{tpu_custom_call.1} parent=11 // pred_fallthru
          _
        // Predicated region
        $region81: #{tpu_custom_call.1} parent=11 // pred_check
          %p1215 = pneg %p510
        $region82: #{tpu_custom_call.1} parent=11 // pred_check_branch
          %1217 = sbr.rel (%p1215) target = $region84
        $region83: #{tpu_custom_call.1} parent=11 // pred_region
          _
        $region84: #{tpu_custom_call.1} parent=11 // pred_fallthru
          _
        // Predicated region
        $region85: #{tpu_custom_call.1} parent=11 // pred_check
          %p1218 = pneg %p531
        $region86: #{tpu_custom_call.1} parent=11 // pred_check_branch
          %1220 = sbr.rel (%p1218) target = $region88
        $region87: #{tpu_custom_call.1} parent=11 // pred_region
          %s1222 = ssub.s32 16, 16
          %1223 = vsyncadd [#allocation20], %s1222
          %s1225 = sshll.u32 [#allocation19], 4
          %s1226 = int_to_ptr.vmem [resolvable:$true] %s1225
          %1228 = dma.hbm_to_vmem [thread:$0]  %s39, 16, %s1226, [#allocation20]
        $region88: #{tpu_custom_call.1} parent=11 // pred_fallthru
          _
        // Predicated region
        $region89: #{tpu_custom_call.1} parent=11 // pred_check
          %p1229 = pneg %p552
        $region90: #{tpu_custom_call.1} parent=11 // pred_check_branch
          %1231 = sbr.rel (%p1229) target = $region92
        $region91: #{tpu_custom_call.1} parent=11 // pred_region
          %s1233 = ssub.s32 16, 16
          %1234 = vsyncadd [#allocation20], %s1233
          %s1236 = sshll.u32 [#allocation21], 4
          %s1237 = int_to_ptr.vmem [resolvable:$true] %s1236
          %1239 = dma.hbm_to_vmem [thread:$0]  %s41, 16, %s1237, [#allocation20]
        $region92: #{tpu_custom_call.1} parent=11 // pred_fallthru
          _
        // Predicated region
        $region93: #{tpu_custom_call.1} parent=11 // pred_check
          %p1240 = pneg %p573
        $region94: #{tpu_custom_call.1} parent=11 // pred_check_branch
          %1242 = sbr.rel (%p1240) target = $region96
        $region95: #{tpu_custom_call.1} parent=11 // pred_region
          %s1244 = ssub.s32 16, 16
          %1245 = vsyncadd [#allocation23], %s1244
          %s1247 = sshll.u32 [#allocation22], 4
          %s1248 = int_to_ptr.vmem [resolvable:$true] %s1247
          %1250 = dma.hbm_to_vmem [thread:$0]  %s43, 16, %s1248, [#allocation23]
        $region96: #{tpu_custom_call.1} parent=11 // pred_fallthru
          _
        // Predicated region
        $region97: #{tpu_custom_call.1} parent=11 // pred_check
          %p1251 = pneg %p594
        $region98: #{tpu_custom_call.1} parent=11 // pred_check_branch
          %1253 = sbr.rel (%p1251) target = $region100
        $region99: #{tpu_custom_call.1} parent=11 // pred_region
          _
        $region100: #{tpu_custom_call.1} parent=11 // pred_fallthru
          _
        // Predicated region
        $region101: #{tpu_custom_call.1} parent=11 // pred_check
          %p1254 = pneg %p615
        $region102: #{tpu_custom_call.1} parent=11 // pred_check_branch
          %1256 = sbr.rel (%p1254) target = $region104
        $region103: #{tpu_custom_call.1} parent=11 // pred_region
          _
        $region104: #{tpu_custom_call.1} parent=11 // pred_fallthru
          _
        // Predicated region
        $region105: #{tpu_custom_call.1} parent=11 // pred_check
          %p1257 = pneg %p636
        $region106: #{tpu_custom_call.1} parent=11 // pred_check_branch
          %1259 = sbr.rel (%p1257) target = $region108
        $region107: #{tpu_custom_call.1} parent=11 // pred_region
          _
        $region108: #{tpu_custom_call.1} parent=11 // pred_fallthru
          _
        // Predicated region
        $region109: #{tpu_custom_call.1} parent=11 // pred_check
          %p1260 = pneg %p657
        $region110: #{tpu_custom_call.1} parent=11 // pred_check_branch
          %1262 = sbr.rel (%p1260) target = $region112
        $region111: #{tpu_custom_call.1} parent=11 // pred_region
          %s1264 = ssub.s32 16, 16
          %1265 = vsyncadd [#allocation23], %s1264
          %s1267 = sshll.u32 [#allocation24], 4
          %s1268 = int_to_ptr.vmem [resolvable:$true] %s1267
          %1270 = dma.hbm_to_vmem [thread:$0]  %s51, 16, %s1268, [#allocation23]
        $region112: #{tpu_custom_call.1} parent=11 // pred_fallthru
          _
        // Predicated region
        $region113: #{tpu_custom_call.1} parent=11 // pred_check
          %p1271 = pneg %p678
        $region114: #{tpu_custom_call.1} parent=11 // pred_check_branch
          %1273 = sbr.rel (%p1271) target = $region116
        $region115: #{tpu_custom_call.1} parent=11 // pred_region
          %s1275 = ssub.s32 16, 16
          %1276 = vsyncadd [#allocation26], %s1275
          %s1278 = sshll.u32 [#allocation25], 4
          %s1279 = int_to_ptr.vmem [resolvable:$true] %s1278
          %1281 = dma.hbm_to_vmem [thread:$0]  %s53, 16, %s1279, [#allocation26]
        $region116: #{tpu_custom_call.1} parent=11 // pred_fallthru
          _
        // Predicated region
        $region117: #{tpu_custom_call.1} parent=11 // pred_check
          %p1282 = pneg %p699
        $region118: #{tpu_custom_call.1} parent=11 // pred_check_branch
          %1284 = sbr.rel (%p1282) target = $region120
        $region119: #{tpu_custom_call.1} parent=11 // pred_region
          %s1286 = ssub.s32 16, 16
          %1287 = vsyncadd [#allocation26], %s1286
          %s1289 = sshll.u32 [#allocation27], 4
          %s1290 = int_to_ptr.vmem [resolvable:$true] %s1289
          %1292 = dma.hbm_to_vmem [thread:$0]  %s55, 16, %s1290, [#allocation26]
        $region120: #{tpu_custom_call.1} parent=11 // pred_fallthru
          _
        // Predicated region
        $region121: #{tpu_custom_call.1} parent=11 // pred_check
          %p1293 = pneg %p720
        $region122: #{tpu_custom_call.1} parent=11 // pred_check_branch
          %1295 = sbr.rel (%p1293) target = $region124
        $region123: #{tpu_custom_call.1} parent=11 // pred_region
          _
        $region124: #{tpu_custom_call.1} parent=11 // pred_fallthru
          _
        // Predicated region
        $region125: #{tpu_custom_call.1} parent=11 // pred_check
          %p1296 = pneg %p741
        $region126: #{tpu_custom_call.1} parent=11 // pred_check_branch
          %1298 = sbr.rel (%p1296) target = $region128
        $region127: #{tpu_custom_call.1} parent=11 // pred_region
          %s1300 = ssub.s32 16, 16
          %1301 = vsyncadd [#allocation29], %s1300
          %s1303 = sshll.u32 [#allocation28], 4
          %s1304 = int_to_ptr.vmem [resolvable:$true] %s1303
          %1306 = dma.hbm_to_vmem [thread:$0]  %s59, 16, %s1304, [#allocation29]
        $region128: #{tpu_custom_call.1} parent=11 // pred_fallthru
          _
        // Predicated region
        $region129: #{tpu_custom_call.1} parent=11 // pred_check
          %p1307 = pneg %p762
        $region130: #{tpu_custom_call.1} parent=11 // pred_check_branch
          %1309 = sbr.rel (%p1307) target = $region132
        $region131: #{tpu_custom_call.1} parent=11 // pred_region
          _
        $region132: #{tpu_custom_call.1} parent=11 // pred_fallthru
          _
        // Predicated region
        $region133: #{tpu_custom_call.1} parent=11 // pred_check
          %p1310 = pneg %p783
        $region134: #{tpu_custom_call.1} parent=11 // pred_check_branch
          %1312 = sbr.rel (%p1310) target = $region136
        $region135: #{tpu_custom_call.1} parent=11 // pred_region
          %s1314 = ssub.s32 16, 16
          %1315 = vsyncadd [#allocation29], %s1314
          %s1317 = sshll.u32 [#allocation30], 4
          %s1318 = int_to_ptr.vmem [resolvable:$true] %s1317
          %1320 = dma.hbm_to_vmem [thread:$0]  %s63, 16, %s1318, [#allocation29]
        $region136: #{tpu_custom_call.1} parent=11 // pred_fallthru
          _
        // Predicated region
        $region137: #{tpu_custom_call.1} parent=11 // pred_check
          %p1321 = pneg %p804
        $region138: #{tpu_custom_call.1} parent=11 // pred_check_branch
          %1323 = sbr.rel (%p1321) target = $region140
        $region139: #{tpu_custom_call.1} parent=11 // pred_region
          _
        $region140: #{tpu_custom_call.1} parent=11 // pred_fallthru
          _
        // Predicated region
        $region141: #{tpu_custom_call.1} parent=11 // pred_check
          %p1324 = pneg %p825
        $region142: #{tpu_custom_call.1} parent=11 // pred_check_branch
          %1326 = sbr.rel (%p1324) target = $region144
        $region143: #{tpu_custom_call.1} parent=11 // pred_region
          %s1328 = ssub.s32 16, 16
          %1329 = vsyncadd [#allocation32], %s1328
          %s1331 = sshll.u32 [#allocation31], 4
          %s1332 = int_to_ptr.vmem [resolvable:$true] %s1331
          %1334 = dma.hbm_to_vmem [thread:$0]  %s67, 16, %s1332, [#allocation32]
        $region144: #{tpu_custom_call.1} parent=11 // pred_fallthru
          _
        // Predicated region
        $region145: #{tpu_custom_call.1} parent=11 // pred_check
          %p1335 = pneg %p846
        $region146: #{tpu_custom_call.1} parent=11 // pred_check_branch
          %1337 = sbr.rel (%p1335) target = $region148
        $region147: #{tpu_custom_call.1} parent=11 // pred_region
          %s1339 = ssub.s32 16, 16
          %1340 = vsyncadd [#allocation32], %s1339
          %s1342 = sshll.u32 [#allocation33], 4
          %s1343 = int_to_ptr.vmem [resolvable:$true] %s1342
          %1345 = dma.hbm_to_vmem [thread:$0]  %s69, 16, %s1343, [#allocation32]
        $region148: #{tpu_custom_call.1} parent=11 // pred_fallthru
          _
        // Predicated region
        $region149: #{tpu_custom_call.1} parent=11 // pred_check
          %p1346 = pneg %p867
        $region150: #{tpu_custom_call.1} parent=11 // pred_check_branch
          %1348 = sbr.rel (%p1346) target = $region152
        $region151: #{tpu_custom_call.1} parent=11 // pred_region
          _
        $region152: #{tpu_custom_call.1} parent=11 // pred_fallthru
          _
        // Predicated region
        $region153: #{tpu_custom_call.1} parent=11 // pred_check
          %p1349 = pneg %p888
        $region154: #{tpu_custom_call.1} parent=11 // pred_check_branch
          %1351 = sbr.rel (%p1349) target = $region156
        $region155: #{tpu_custom_call.1} parent=11 // pred_region
          _
        $region156: #{tpu_custom_call.1} parent=11 // pred_fallthru
          _
        // Predicated region
        $region157: #{tpu_custom_call.1} parent=11 // pred_check
          %p1352 = pneg %p909
        $region158: #{tpu_custom_call.1} parent=11 // pred_check_branch
          %1354 = sbr.rel (%p1352) target = $region160
        $region159: #{tpu_custom_call.1} parent=11 // pred_region
          _
        $region160: #{tpu_custom_call.1} parent=11 // pred_fallthru
          _
        // Predicated region
        $region161: #{tpu_custom_call.1} parent=11 // pred_check
          %p1355 = pneg %p930
        $region162: #{tpu_custom_call.1} parent=11 // pred_check_branch
          %1357 = sbr.rel (%p1355) target = $region164
        $region163: #{tpu_custom_call.1} parent=11 // pred_region
          _
        $region164: #{tpu_custom_call.1} parent=11 // pred_fallthru
          _
        // Predicated region
        $region165: #{tpu_custom_call.1} parent=11 // pred_check
          %p1358 = pneg %p951
        $region166: #{tpu_custom_call.1} parent=11 // pred_check_branch
          %1360 = sbr.rel (%p1358) target = $region168
        $region167: #{tpu_custom_call.1} parent=11 // pred_region
          _
        $region168: #{tpu_custom_call.1} parent=11 // pred_fallthru
          _
        // Predicated region
        $region169: #{tpu_custom_call.1} parent=11 // pred_check
          %p1361 = pneg %p972
        $region170: #{tpu_custom_call.1} parent=11 // pred_check_branch
          %1363 = sbr.rel (%p1361) target = $region172
        $region171: #{tpu_custom_call.1} parent=11 // pred_region
          _
        $region172: #{tpu_custom_call.1} parent=11 // pred_fallthru
          _
        // Predicated region
        $region173: #{tpu_custom_call.1} parent=11 // pred_check
          %p1364 = pneg %p993
        $region174: #{tpu_custom_call.1} parent=11 // pred_check_branch
          %1366 = sbr.rel (%p1364) target = $region176
        $region175: #{tpu_custom_call.1} parent=11 // pred_region
          _
        $region176: #{tpu_custom_call.1} parent=11 // pred_fallthru
          _
        // Predicated region
        $region177: #{tpu_custom_call.1} parent=11 // pred_check
          %p1367 = pneg %p1014
        $region178: #{tpu_custom_call.1} parent=11 // pred_check_branch
          %1369 = sbr.rel (%p1367) target = $region180
        $region179: #{tpu_custom_call.1} parent=11 // pred_region
          _
        $region180: #{tpu_custom_call.1} parent=11 // pred_fallthru
          _
        // Predicated region
        $region181: #{tpu_custom_call.1} parent=11 // pred_check
          %p1370 = pneg %p1035
        $region182: #{tpu_custom_call.1} parent=11 // pred_check_branch
          %1372 = sbr.rel (%p1370) target = $region184
        $region183: #{tpu_custom_call.1} parent=11 // pred_region
          _
        $region184: #{tpu_custom_call.1} parent=11 // pred_fallthru
          _
      $region12: #{tpu_custom_call.1} parent=5 // pred_fallthru
        _
      %p1373 = scmp.lt.s32.totalorder %s106, 2
      // Predicated region
      $region185: #{tpu_custom_call.1} parent=5 // pred_check
        %p1374 = pneg %p1373
      $region186: #{tpu_custom_call.1} parent=5 // pred_check_branch
        %1376 = sbr.rel (%p1374) target = $region188
      $region187: #{tpu_custom_call.1} parent=5 // pred_region
        // Predicated region
        $region189: #{tpu_custom_call.1} parent=187 // pred_check
          %p1377 = pneg %p147
        $region190: #{tpu_custom_call.1} parent=187 // pred_check_branch
          %1379 = sbr.rel (%p1377) target = $region192
        $region191: #{tpu_custom_call.1} parent=187 // pred_region
          %p1380 = scmp.lt.s32.totalorder %s106, 1
          %s1381 = scalar_select %p1380, %s106, 1
          %s1382 = smul.addr %s1381, 8
          %s1383 = scalar_lea.vmem %s3, %s1382
        $region192: #{tpu_custom_call.1} parent=187 // pred_fallthru
          _
      $region188: #{tpu_custom_call.1} parent=5 // pred_fallthru
        _
      %p1384 = scmp.le.s32.totalorder 1, %s106
      %p1385 = scmp.lt.s32.totalorder %s106, 3
      %p1386 = pnand %p1384, %p1385
      %p1387 = pneg %p1386
      // Predicated region
      $region193: #{tpu_custom_call.1} parent=5 // pred_check
        _
      $region194: #{tpu_custom_call.1} parent=5 // pred_check_branch
        %1389 = sbr.rel (%p1386) target = $region196
      $region195: #{tpu_custom_call.1} parent=5 // pred_region
        %s1390 = ssub.s32 %s106, 1
        // Predicated region
        $region197: #{tpu_custom_call.1} parent=195 // pred_check
          %p1391 = pneg %p127
        $region198: #{tpu_custom_call.1} parent=195 // pred_check_branch
          %1393 = sbr.rel (%p1391) target = $region200
        $region199: #{tpu_custom_call.1} parent=195 // pred_region
          %1394 = dma.done [#allocation3], 128
        $region200: #{tpu_custom_call.1} parent=195 // pred_fallthru
          _
        // Predicated region
        $region201: #{tpu_custom_call.1} parent=195 // pred_check
          %p1395 = pneg %p195
        $region202: #{tpu_custom_call.1} parent=195 // pred_check_branch
          %1397 = sbr.rel (%p1395) target = $region204
        $region203: #{tpu_custom_call.1} parent=195 // pred_region
          %1398 = dma.done [#allocation5], 16
        $region204: #{tpu_custom_call.1} parent=195 // pred_fallthru
          _
        // Predicated region
        $region205: #{tpu_custom_call.1} parent=195 // pred_check
          %p1399 = pneg %p237
        $region206: #{tpu_custom_call.1} parent=195 // pred_check_branch
          %1401 = sbr.rel (%p1399) target = $region208
        $region207: #{tpu_custom_call.1} parent=195 // pred_region
          %1402 = dma.done [#allocation5], 16
        $region208: #{tpu_custom_call.1} parent=195 // pred_fallthru
          _
        // Predicated region
        $region209: #{tpu_custom_call.1} parent=195 // pred_check
          %p1403 = pneg %p258
        $region210: #{tpu_custom_call.1} parent=195 // pred_check_branch
          %1405 = sbr.rel (%p1403) target = $region212
        $region211: #{tpu_custom_call.1} parent=195 // pred_region
          %1406 = dma.done [#allocation8], 16
        $region212: #{tpu_custom_call.1} parent=195 // pred_fallthru
          _
        // Predicated region
        $region213: #{tpu_custom_call.1} parent=195 // pred_check
          %p1407 = pneg %p279
        $region214: #{tpu_custom_call.1} parent=195 // pred_check_branch
          %1409 = sbr.rel (%p1407) target = $region216
        $region215: #{tpu_custom_call.1} parent=195 // pred_region
          %1410 = dma.done [#allocation8], 16
        $region216: #{tpu_custom_call.1} parent=195 // pred_fallthru
          _
        // Predicated region
        $region217: #{tpu_custom_call.1} parent=195 // pred_check
          %p1411 = pneg %p321
        $region218: #{tpu_custom_call.1} parent=195 // pred_check_branch
          %1413 = sbr.rel (%p1411) target = $region220
        $region219: #{tpu_custom_call.1} parent=195 // pred_region
          %1414 = dma.done [#allocation11], 16
        $region220: #{tpu_custom_call.1} parent=195 // pred_fallthru
          _
        // Predicated region
        $region221: #{tpu_custom_call.1} parent=195 // pred_check
          %p1415 = pneg %p363
        $region222: #{tpu_custom_call.1} parent=195 // pred_check_branch
          %1417 = sbr.rel (%p1415) target = $region224
        $region223: #{tpu_custom_call.1} parent=195 // pred_region
          %1418 = dma.done [#allocation11], 16
        $region224: #{tpu_custom_call.1} parent=195 // pred_fallthru
          _
        // Predicated region
        $region225: #{tpu_custom_call.1} parent=195 // pred_check
          %p1419 = pneg %p405
        $region226: #{tpu_custom_call.1} parent=195 // pred_check_branch
          %1421 = sbr.rel (%p1419) target = $region228
        $region227: #{tpu_custom_call.1} parent=195 // pred_region
          %1422 = dma.done [#allocation14], 16
        $region228: #{tpu_custom_call.1} parent=195 // pred_fallthru
          _
        // Predicated region
        $region229: #{tpu_custom_call.1} parent=195 // pred_check
          %p1423 = pneg %p426
        $region230: #{tpu_custom_call.1} parent=195 // pred_check_branch
          %1425 = sbr.rel (%p1423) target = $region232
        $region231: #{tpu_custom_call.1} parent=195 // pred_region
          %1426 = dma.done [#allocation14], 16
        $region232: #{tpu_custom_call.1} parent=195 // pred_fallthru
          _
        // Predicated region
        $region233: #{tpu_custom_call.1} parent=195 // pred_check
          %p1427 = pneg %p447
        $region234: #{tpu_custom_call.1} parent=195 // pred_check_branch
          %1429 = sbr.rel (%p1427) target = $region236
        $region235: #{tpu_custom_call.1} parent=195 // pred_region
          %1430 = dma.done [#allocation17], 16
        $region236: #{tpu_custom_call.1} parent=195 // pred_fallthru
          _
        // Predicated region
        $region237: #{tpu_custom_call.1} parent=195 // pred_check
          %p1431 = pneg %p489
        $region238: #{tpu_custom_call.1} parent=195 // pred_check_branch
          %1433 = sbr.rel (%p1431) target = $region240
        $region239: #{tpu_custom_call.1} parent=195 // pred_region
          %1434 = dma.done [#allocation17], 16
        $region240: #{tpu_custom_call.1} parent=195 // pred_fallthru
          _
        // Predicated region
        $region241: #{tpu_custom_call.1} parent=195 // pred_check
          %p1435 = pneg %p531
        $region242: #{tpu_custom_call.1} parent=195 // pred_check_branch
          %1437 = sbr.rel (%p1435) target = $region244
        $region243: #{tpu_custom_call.1} parent=195 // pred_region
          %1438 = dma.done [#allocation20], 16
        $region244: #{tpu_custom_call.1} parent=195 // pred_fallthru
          _
        // Predicated region
        $region245: #{tpu_custom_call.1} parent=195 // pred_check
          %p1439 = pneg %p552
        $region246: #{tpu_custom_call.1} parent=195 // pred_check_branch
          %1441 = sbr.rel (%p1439) target = $region248
        $region247: #{tpu_custom_call.1} parent=195 // pred_region
          %1442 = dma.done [#allocation20], 16
        $region248: #{tpu_custom_call.1} parent=195 // pred_fallthru
          _
        // Predicated region
        $region249: #{tpu_custom_call.1} parent=195 // pred_check
          %p1443 = pneg %p573
        $region250: #{tpu_custom_call.1} parent=195 // pred_check_branch
          %1445 = sbr.rel (%p1443) target = $region252
        $region251: #{tpu_custom_call.1} parent=195 // pred_region
          %1446 = dma.done [#allocation23], 16
        $region252: #{tpu_custom_call.1} parent=195 // pred_fallthru
          _
        // Predicated region
        $region253: #{tpu_custom_call.1} parent=195 // pred_check
          %p1447 = pneg %p657
        $region254: #{tpu_custom_call.1} parent=195 // pred_check_branch
          %1449 = sbr.rel (%p1447) target = $region256
        $region255: #{tpu_custom_call.1} parent=195 // pred_region
          %1450 = dma.done [#allocation23], 16
        $region256: #{tpu_custom_call.1} parent=195 // pred_fallthru
          _
        // Predicated region
        $region257: #{tpu_custom_call.1} parent=195 // pred_check
          %p1451 = pneg %p678
        $region258: #{tpu_custom_call.1} parent=195 // pred_check_branch
          %1453 = sbr.rel (%p1451) target = $region260
        $region259: #{tpu_custom_call.1} parent=195 // pred_region
          %1454 = dma.done [#allocation26], 16
        $region260: #{tpu_custom_call.1} parent=195 // pred_fallthru
          _
        // Predicated region
        $region261: #{tpu_custom_call.1} parent=195 // pred_check
          %p1455 = pneg %p699
        $region262: #{tpu_custom_call.1} parent=195 // pred_check_branch
          %1457 = sbr.rel (%p1455) target = $region264
        $region263: #{tpu_custom_call.1} parent=195 // pred_region
          %1458 = dma.done [#allocation26], 16
        $region264: #{tpu_custom_call.1} parent=195 // pred_fallthru
          _
        // Predicated region
        $region265: #{tpu_custom_call.1} parent=195 // pred_check
          %p1459 = pneg %p741
        $region266: #{tpu_custom_call.1} parent=195 // pred_check_branch
          %1461 = sbr.rel (%p1459) target = $region268
        $region267: #{tpu_custom_call.1} parent=195 // pred_region
          %1462 = dma.done [#allocation29], 16
        $region268: #{tpu_custom_call.1} parent=195 // pred_fallthru
          _
        // Predicated region
        $region269: #{tpu_custom_call.1} parent=195 // pred_check
          %p1463 = pneg %p783
        $region270: #{tpu_custom_call.1} parent=195 // pred_check_branch
          %1465 = sbr.rel (%p1463) target = $region272
        $region271: #{tpu_custom_call.1} parent=195 // pred_region
          %1466 = dma.done [#allocation29], 16
        $region272: #{tpu_custom_call.1} parent=195 // pred_fallthru
          _
        // Predicated region
        $region273: #{tpu_custom_call.1} parent=195 // pred_check
          %p1467 = pneg %p825
        $region274: #{tpu_custom_call.1} parent=195 // pred_check_branch
          %1469 = sbr.rel (%p1467) target = $region276
        $region275: #{tpu_custom_call.1} parent=195 // pred_region
          %1470 = dma.done [#allocation32], 16
        $region276: #{tpu_custom_call.1} parent=195 // pred_fallthru
          _
        // Predicated region
        $region277: #{tpu_custom_call.1} parent=195 // pred_check
          %p1471 = pneg %p846
        $region278: #{tpu_custom_call.1} parent=195 // pred_check_branch
          %1473 = sbr.rel (%p1471) target = $region280
        $region279: #{tpu_custom_call.1} parent=195 // pred_region
          %1474 = dma.done [#allocation32], 16
        $region280: #{tpu_custom_call.1} parent=195 // pred_fallthru
          _
        %p1475 = pneg %p127
        %p1476 = pneg %p124
        %p1477 = scmp.lt.s32.totalorder %s111, 1
        %s1478 = scalar_select %p1477, %s111, 1
        %s1479 = smul.addr %s1478, 8
        %s1480 = scalar_lea.vmem %s3, %s1479
        %p1481 = pneg %p153
        %p1482 = pneg %p150
        %p1483 = pneg %p174
        %p1484 = pneg %p171
        %p1485 = pneg %p195
        %p1486 = pneg %p192
        %p1487 = pneg %p216
        %p1488 = pneg %p213
        %p1489 = pneg %p237
        %p1490 = pneg %p234
        %p1491 = pneg %p258
        %p1492 = pneg %p255
        %p1493 = pneg %p279
        %p1494 = pneg %p276
        %p1495 = pneg %p300
        %p1496 = pneg %p297
        %p1497 = pneg %p321
        %p1498 = pneg %p318
        %p1499 = pneg %p342
        %p1500 = pneg %p339
        %p1501 = pneg %p363
        %p1502 = pneg %p360
        %p1503 = pneg %p384
        %p1504 = pneg %p381
        %p1505 = pneg %p405
        %p1506 = pneg %p402
        %p1507 = pneg %p426
        %p1508 = pneg %p423
        %p1509 = pneg %p447
        %p1510 = pneg %p444
        %p1511 = pneg %p468
        %p1512 = pneg %p465
        %p1513 = pneg %p489
        %p1514 = pneg %p486
        %p1515 = pneg %p510
        %p1516 = pneg %p507
        %p1517 = pneg %p531
        %p1518 = pneg %p528
        %p1519 = pneg %p552
        %p1520 = pneg %p549
        %p1521 = pneg %p573
        %p1522 = pneg %p570
        %p1523 = pneg %p594
        %p1524 = pneg %p591
        %p1525 = pneg %p615
        %p1526 = pneg %p612
        %p1527 = pneg %p636
        %p1528 = pneg %p633
        %p1529 = pneg %p657
        %p1530 = pneg %p654
        %p1531 = pneg %p678
        %p1532 = pneg %p675
        %p1533 = pneg %p699
        %p1534 = pneg %p696
        %p1535 = pneg %p720
        %p1536 = pneg %p717
        %p1537 = pneg %p741
        %p1538 = pneg %p738
        %p1539 = pneg %p762
        %p1540 = pneg %p759
        %p1541 = pneg %p783
        %p1542 = pneg %p780
        %p1543 = pneg %p804
        %p1544 = pneg %p801
        %p1545 = pneg %p825
        %p1546 = pneg %p822
        %p1547 = pneg %p846
        %p1548 = pneg %p843
        %p1549 = pneg %p867
        %p1550 = pneg %p864
        %p1551 = pneg %p888
        %p1552 = pneg %p885
        %p1553 = pneg %p909
        %p1554 = pneg %p906
        %p1555 = pneg %p930
        %p1556 = pneg %p927
        %p1557 = pneg %p951
        %p1558 = pneg %p948
        %p1559 = pneg %p972
        %p1560 = pneg %p969
        %p1561 = pneg %p993
        %p1562 = pneg %p990
        %p1563 = pneg %p1014
        %p1564 = pneg %p1011
        %p1565 = pneg %p1035
        %p1566 = pneg %p1032
        %p1567 = pneg %p1061
        %p1568 = pneg %p1058
        %p1569 = scmp.lt.s32.totalorder %s111, 1
        %s1570 = scalar_select %p1569, %s111, 1
        %s1571 = smul.addr %s1570, 8
        %s1572 = scalar_lea.vmem %s89, %s1571
        %p1573 = scmp.lt.s32.totalorder %s111, 1
        %s1574 = scalar_select %p1573, %s111, 1
        %s1575 = smul.addr %s1574, 8
        %s1576 = scalar_lea.vmem %s3, %s1575
        %p1577 = scmp.lt.s32.totalorder %s111, 1
        %s1578 = scalar_select %p1577, %s111, 1
        %s1579 = smul.addr %s1578, 8
        %s1580 = scalar_lea.vmem %s89, %s1579
        %v1582 = vld [vmem:[#allocation2] sm:$0xff]
        %v1583 = vld [vmem:[%s1576] sm:$0xff]
        %v1584 = vpack.c.bf16 %v1583, %v1583
        %v1585 = vpack.c.bf16 %v1582, %v1582
        %v1586 = vld [vmem:[%s5] sm:$0xf]
        %v1587 = vld [vmem:[%s5 + $0x4] sm:$0xf]
        %v1588 = vld [vmem:[%s5 + $0x8] sm:$0xf]
        %v1589 = vld [vmem:[%s5 + $0xc] sm:$0xf]
        %v1590 = vld [vmem:[#allocation4] sm:$0x1]
        %v1592 = vlaneseq
        %v1593 = vshrl.u32 %v1592, 7
        %v1594 = vsub.s32 0, %v1593
        %v1595 = vrot.slane %v1590, %v1594
        %v1601 = vunpack.c.l.b16 %v1586
        %v1602 = vunpack.c.l.b16 %v1587
        %v1603 = vunpack.c.l.b16 %v1588
        %v1604 = vunpack.c.l.b16 %v1589
        %v1605 = vpack.c.b16 %v1602, %v1601
        %v1606 = vpack.c.b16 %v1604, %v1603
        %vm1609 = vcmask 261120
        %v1611 = vsel %vm1609, %v1585, 0
        %1613 = vmatprep.subr.bf16.mxu0 0
        %1614 = vmatpush1.bf16.msra.mxu0 %v1605
        %1615 = vmatprep.subr.bf16.mxu0 0
        %1616 = vmatpush1.bf16.msra.mxu0 %v1606
        %1617 = vmatprep.subr.bf16.mxu0 0
        %1618 = vmatpush1.bf16.msra.mxu0 0
        %1619 = vmatprep.subr.bf16.mxu0 0
        %1620 = vmatpush1.bf16.msra.mxu0 0
        %1621 = vmatprep.subr.bf16.mxu0 0
        %1622 = vmatpush1.bf16.msra.mxu0 0
        %1623 = vmatprep.subr.bf16.mxu0 0
        %1624 = vmatpush1.bf16.msra.mxu0 0
        %1625 = vmatprep.subr.bf16.mxu0 0
        %1626 = vmatpush1.bf16.msra.mxu0 0
        %1627 = vmatprep.subr.bf16.mxu0 0
        %1628 = vmatpush1.bf16.msra.mxu0 0
        %1629 = vmatprep.subr.bf16.mxu0 0
        %1630 = vmatpush1.bf16.msra.mxu0 0
        %1631 = vmatprep.subr.bf16.mxu0 0
        %1632 = vmatpush1.bf16.msra.mxu0 0
        %1633 = vmatprep.subr.bf16.mxu0 0
        %1634 = vmatpush1.bf16.msra.mxu0 0
        %1635 = vmatprep.subr.bf16.mxu0 0
        %1636 = vmatpush1.bf16.msra.mxu0 0
        %1637 = vmatprep.subr.bf16.mxu0 0
        %1638 = vmatpush1.bf16.msra.mxu0 0
        %1639 = vmatprep.subr.bf16.mxu0 0
        %1640 = vmatpush1.bf16.msra.mxu0 0
        %1641 = vmatprep.subr.bf16.mxu0 0
        %1642 = vmatpush1.bf16.msra.mxu0 0
        %1643 = vmatprep.subr.bf16.mxu0 0
        %1644 = vmatpush1.bf16.msra.mxu0 0
        %1645 = vmatprep.mubr.bf16.mxu0 0
        %1646 = vmatmul.mubr.bf16.gmra.mrb[0].mxu0 %v1611
        %v1647 = vpop.f32.mrb[0].mxu0
        %v1648 = vadd.f32 %v1595, %v1647
        %v1649 = vpop.f32.mrb[0].mxu0
        %v1650 = vpop.f32.mrb[0].mxu0
        %v1651 = vpop.f32.mrb[0].mxu0
        %1652 = vdwg.mxu0
        %1654 = vrot.lane.b32.xlu0 %v1648, 120
        %v1655 = vpop.permute.xlu0 %1654
        %1657 = vrot.lane.b32.xlu0 %v1648, 112
        %v1658 = vpop.permute.xlu0 %1657
        %1660 = vrot.lane.b32.xlu0 %v1648, 104
        %v1661 = vpop.permute.xlu0 %1660
        %v1663 = vcombine.low %v1648, %v1658
        %v1664 = vcombine.high %v1648, %v1658
        %v1666 = vunpack.c.l.s4 1983009808
        %v1667 = vunpack.c.0.s8 %v1666
        %v1668 = vlaneseq
        %v1669 = vshrl.u32 %v1668, 7
        %v1670 = vsub.s32 %v1667, %v1669
        %v1671 = vrot.slane %v1663, %v1670
        %v1673 = vunpack.c.l.s4 1983009808
        %v1674 = vunpack.c.0.s8 %v1673
        %v1675 = vlaneseq
        %v1676 = vshrl.u32 %v1675, 7
        %v1677 = vsub.s32 %v1674, %v1676
        %v1678 = vrot.slane %v1664, %v1677
        %v1679 = vcombine.low %v1655, %v1661
        %v1680 = vcombine.high %v1655, %v1661
        %v1682 = vunpack.c.l.s4 1983009808
        %v1683 = vunpack.c.0.s8 %v1682
        %v1684 = vlaneseq
        %v1685 = vshrl.u32 %v1684, 7
        %v1686 = vsub.s32 %v1683, %v1685
        %v1687 = vrot.slane %v1679, %v1686
        %v1689 = vunpack.c.l.s4 1983009808
        %v1690 = vunpack.c.0.s8 %v1689
        %v1691 = vlaneseq
        %v1692 = vshrl.u32 %v1691, 7
        %v1693 = vsub.s32 %v1690, %v1692
        %v1694 = vrot.slane %v1680, %v1693
        %v1695 = vcombine.low %v1671, %v1687
        %v1696 = vcombine.high %v1671, %v1687
        %v1698 = vunpack.c.l.s4 1934713408
        %v1699 = vunpack.c.0.s8 %v1698
        %v1700 = vlaneseq
        %v1701 = vshrl.u32 %v1700, 7
        %v1702 = vsub.s32 %v1699, %v1701
        %v1703 = vrot.slane %v1695, %v1702
        %v1705 = vunpack.c.l.s4 1934713408
        %v1706 = vunpack.c.0.s8 %v1705
        %v1707 = vlaneseq
        %v1708 = vshrl.u32 %v1707, 7
        %v1709 = vsub.s32 %v1706, %v1708
        %v1710 = vrot.slane %v1696, %v1709
        %v1711 = vcombine.low %v1678, %v1694
        %v1712 = vcombine.high %v1678, %v1694
        %v1714 = vunpack.c.l.s4 1934713408
        %v1715 = vunpack.c.0.s8 %v1714
        %v1716 = vlaneseq
        %v1717 = vshrl.u32 %v1716, 7
        %v1718 = vsub.s32 %v1715, %v1717
        %v1719 = vrot.slane %v1711, %v1718
        %v1721 = vunpack.c.l.s4 1934713408
        %v1722 = vunpack.c.0.s8 %v1721
        %v1723 = vlaneseq
        %v1724 = vshrl.u32 %v1723, 7
        %v1725 = vsub.s32 %v1722, %v1724
        %v1726 = vrot.slane %v1712, %v1725
        %v1727 = vcombine.high %v1703, 0.0
        %v1728 = vcombine.high %v1710, 0.0
        %v1729 = vcombine.high %v1719, 0.0
        %v1730 = vcombine.high %v1726, 0.0
        %v1731 = vcombine.low %v1703, %v1710
        %v1733 = vunpack.c.l.s4 1983009808
        %v1734 = vunpack.c.0.s8 %v1733
        %v1735 = vlaneseq
        %v1736 = vshrl.u32 %v1735, 7
        %v1737 = vsub.s32 %v1734, %v1736
        %v1738 = vrot.slane %v1731, %v1737
        %v1739 = vcombine.low %v1727, %v1728
        %v1741 = vunpack.c.l.s4 1983009808
        %v1742 = vunpack.c.0.s8 %v1741
        %v1743 = vlaneseq
        %v1744 = vshrl.u32 %v1743, 7
        %v1745 = vsub.s32 %v1742, %v1744
        %v1746 = vrot.slane %v1739, %v1745
        %v1747 = vcombine.low %v1719, %v1726
        %v1749 = vunpack.c.l.s4 1983009808
        %v1750 = vunpack.c.0.s8 %v1749
        %v1751 = vlaneseq
        %v1752 = vshrl.u32 %v1751, 7
        %v1753 = vsub.s32 %v1750, %v1752
        %v1754 = vrot.slane %v1747, %v1753
        %v1755 = vcombine.low %v1729, %v1730
        %v1757 = vunpack.c.l.s4 1983009808
        %v1758 = vunpack.c.0.s8 %v1757
        %v1759 = vlaneseq
        %v1760 = vshrl.u32 %v1759, 7
        %v1761 = vsub.s32 %v1758, %v1760
        %v1762 = vrot.slane %v1755, %v1761
        %v1763 = vcombine.low %v1738, %v1746
        %v1764 = vcombine.high %v1738, %v1746
        %v1766 = vunpack.c.l.s4 1934713408
        %v1767 = vunpack.c.0.s8 %v1766
        %v1768 = vlaneseq
        %v1769 = vshrl.u32 %v1768, 7
        %v1770 = vsub.s32 %v1767, %v1769
        %v1771 = vrot.slane %v1763, %v1770
        %v1773 = vunpack.c.l.s4 1934713408
        %v1774 = vunpack.c.0.s8 %v1773
        %v1775 = vlaneseq
        %v1776 = vshrl.u32 %v1775, 7
        %v1777 = vsub.s32 %v1774, %v1776
        %v1778 = vrot.slane %v1764, %v1777
        %v1779 = vcombine.low %v1754, %v1762
        %v1780 = vcombine.high %v1754, %v1762
        %v1782 = vunpack.c.l.s4 1934713408
        %v1783 = vunpack.c.0.s8 %v1782
        %v1784 = vlaneseq
        %v1785 = vshrl.u32 %v1784, 7
        %v1786 = vsub.s32 %v1783, %v1785
        %v1787 = vrot.slane %v1779, %v1786
        %v1789 = vunpack.c.l.s4 1934713408
        %v1790 = vunpack.c.0.s8 %v1789
        %v1791 = vlaneseq
        %v1792 = vshrl.u32 %v1791, 7
        %v1793 = vsub.s32 %v1790, %v1792
        %v1794 = vrot.slane %v1780, %v1793
        %v1795 = vcombine.low %v1771, %v1787
        %v1796 = vcombine.high %v1771, %v1787
        %v1797 = vcombine.low %v1778, %v1794
        %v1798 = vcombine.high %v1778, %v1794
        %v1799 = vpack.c.bf16 %v1795, %v1795
        %v1800 = vpack.c.bf16 %v1796, %v1796
        %v1801 = vpack.c.bf16 %v1797, %v1797
        %v1802 = vpack.c.bf16 %v1798, %v1798
        %1803 = vrot.lane.b32.xlu0 %v1648, 96
        %v1804 = vpop.permute.xlu0 %1803
        %1805 = vrot.lane.b32.xlu0 %v1655, 96
        %v1806 = vpop.permute.xlu0 %1805
        %1807 = vrot.lane.b32.xlu0 %v1658, 96
        %v1808 = vpop.permute.xlu0 %1807
        %1809 = vrot.lane.b32.xlu0 %v1661, 96
        %v1810 = vpop.permute.xlu0 %1809
        %v1815 = vcombine.low %v1804, %v1808
        %v1816 = vcombine.high %v1804, %v1808
        %v1818 = vunpack.c.l.s4 1983009808
        %v1819 = vunpack.c.0.s8 %v1818
        %v1820 = vlaneseq
        %v1821 = vshrl.u32 %v1820, 7
        %v1822 = vsub.s32 %v1819, %v1821
        %v1823 = vrot.slane %v1815, %v1822
        %v1825 = vunpack.c.l.s4 1983009808
        %v1826 = vunpack.c.0.s8 %v1825
        %v1827 = vlaneseq
        %v1828 = vshrl.u32 %v1827, 7
        %v1829 = vsub.s32 %v1826, %v1828
        %v1830 = vrot.slane %v1816, %v1829
        %v1831 = vcombine.low %v1806, %v1810
        %v1832 = vcombine.high %v1806, %v1810
        %v1834 = vunpack.c.l.s4 1983009808
        %v1835 = vunpack.c.0.s8 %v1834
        %v1836 = vlaneseq
        %v1837 = vshrl.u32 %v1836, 7
        %v1838 = vsub.s32 %v1835, %v1837
        %v1839 = vrot.slane %v1831, %v1838
        %v1841 = vunpack.c.l.s4 1983009808
        %v1842 = vunpack.c.0.s8 %v1841
        %v1843 = vlaneseq
        %v1844 = vshrl.u32 %v1843, 7
        %v1845 = vsub.s32 %v1842, %v1844
        %v1846 = vrot.slane %v1832, %v1845
        %v1847 = vcombine.low %v1823, %v1839
        %v1848 = vcombine.high %v1823, %v1839
        %v1850 = vunpack.c.l.s4 1934713408
        %v1851 = vunpack.c.0.s8 %v1850
        %v1852 = vlaneseq
        %v1853 = vshrl.u32 %v1852, 7
        %v1854 = vsub.s32 %v1851, %v1853
        %v1855 = vrot.slane %v1847, %v1854
        %v1857 = vunpack.c.l.s4 1934713408
        %v1858 = vunpack.c.0.s8 %v1857
        %v1859 = vlaneseq
        %v1860 = vshrl.u32 %v1859, 7
        %v1861 = vsub.s32 %v1858, %v1860
        %v1862 = vrot.slane %v1848, %v1861
        %v1863 = vcombine.low %v1830, %v1846
        %v1864 = vcombine.high %v1830, %v1846
        %v1866 = vunpack.c.l.s4 1934713408
        %v1867 = vunpack.c.0.s8 %v1866
        %v1868 = vlaneseq
        %v1869 = vshrl.u32 %v1868, 7
        %v1870 = vsub.s32 %v1867, %v1869
        %v1871 = vrot.slane %v1863, %v1870
        %v1873 = vunpack.c.l.s4 1934713408
        %v1874 = vunpack.c.0.s8 %v1873
        %v1875 = vlaneseq
        %v1876 = vshrl.u32 %v1875, 7
        %v1877 = vsub.s32 %v1874, %v1876
        %v1878 = vrot.slane %v1864, %v1877
        %v1879 = vcombine.high %v1855, 0.0
        %v1880 = vcombine.high %v1862, 0.0
        %v1881 = vcombine.high %v1871, 0.0
        %v1882 = vcombine.high %v1878, 0.0
        %v1883 = vcombine.low %v1855, %v1862
        %v1885 = vunpack.c.l.s4 1983009808
        %v1886 = vunpack.c.0.s8 %v1885
        %v1887 = vlaneseq
        %v1888 = vshrl.u32 %v1887, 7
        %v1889 = vsub.s32 %v1886, %v1888
        %v1890 = vrot.slane %v1883, %v1889
        %v1891 = vcombine.low %v1879, %v1880
        %v1893 = vunpack.c.l.s4 1983009808
        %v1894 = vunpack.c.0.s8 %v1893
        %v1895 = vlaneseq
        %v1896 = vshrl.u32 %v1895, 7
        %v1897 = vsub.s32 %v1894, %v1896
        %v1898 = vrot.slane %v1891, %v1897
        %v1899 = vcombine.low %v1871, %v1878
        %v1901 = vunpack.c.l.s4 1983009808
        %v1902 = vunpack.c.0.s8 %v1901
        %v1903 = vlaneseq
        %v1904 = vshrl.u32 %v1903, 7
        %v1905 = vsub.s32 %v1902, %v1904
        %v1906 = vrot.slane %v1899, %v1905
        %v1907 = vcombine.low %v1881, %v1882
        %v1909 = vunpack.c.l.s4 1983009808
        %v1910 = vunpack.c.0.s8 %v1909
        %v1911 = vlaneseq
        %v1912 = vshrl.u32 %v1911, 7
        %v1913 = vsub.s32 %v1910, %v1912
        %v1914 = vrot.slane %v1907, %v1913
        %v1915 = vcombine.low %v1890, %v1898
        %v1916 = vcombine.high %v1890, %v1898
        %v1918 = vunpack.c.l.s4 1934713408
        %v1919 = vunpack.c.0.s8 %v1918
        %v1920 = vlaneseq
        %v1921 = vshrl.u32 %v1920, 7
        %v1922 = vsub.s32 %v1919, %v1921
        %v1923 = vrot.slane %v1915, %v1922
        %v1925 = vunpack.c.l.s4 1934713408
        %v1926 = vunpack.c.0.s8 %v1925
        %v1927 = vlaneseq
        %v1928 = vshrl.u32 %v1927, 7
        %v1929 = vsub.s32 %v1926, %v1928
        %v1930 = vrot.slane %v1916, %v1929
        %v1931 = vcombine.low %v1906, %v1914
        %v1932 = vcombine.high %v1906, %v1914
        %v1934 = vunpack.c.l.s4 1934713408
        %v1935 = vunpack.c.0.s8 %v1934
        %v1936 = vlaneseq
        %v1937 = vshrl.u32 %v1936, 7
        %v1938 = vsub.s32 %v1935, %v1937
        %v1939 = vrot.slane %v1931, %v1938
        %v1941 = vunpack.c.l.s4 1934713408
        %v1942 = vunpack.c.0.s8 %v1941
        %v1943 = vlaneseq
        %v1944 = vshrl.u32 %v1943, 7
        %v1945 = vsub.s32 %v1942, %v1944
        %v1946 = vrot.slane %v1932, %v1945
        %v1947 = vcombine.low %v1923, %v1939
        %v1948 = vcombine.high %v1923, %v1939
        %v1949 = vcombine.low %v1930, %v1946
        %v1950 = vcombine.high %v1930, %v1946
        %v1951 = vpack.c.bf16 %v1947, %v1947
        %v1952 = vpack.c.bf16 %v1948, %v1948
        %v1953 = vpack.c.bf16 %v1949, %v1949
        %v1954 = vpack.c.bf16 %v1950, %v1950
        %1955 = vrot.lane.b32.xlu0 %v1648, 64
        %v1956 = vpop.permute.xlu0 %1955
        %1957 = vrot.lane.b32.xlu0 %v1655, 64
        %v1958 = vpop.permute.xlu0 %1957
        %1959 = vrot.lane.b32.xlu0 %v1658, 64
        %v1960 = vpop.permute.xlu0 %1959
        %1961 = vrot.lane.b32.xlu0 %v1661, 64
        %v1962 = vpop.permute.xlu0 %1961
        %v1967 = vcombine.low %v1956, %v1960
        %v1968 = vcombine.high %v1956, %v1960
        %v1970 = vunpack.c.l.s4 1983009808
        %v1971 = vunpack.c.0.s8 %v1970
        %v1972 = vlaneseq
        %v1973 = vshrl.u32 %v1972, 7
        %v1974 = vsub.s32 %v1971, %v1973
        %v1975 = vrot.slane %v1967, %v1974
        %v1977 = vunpack.c.l.s4 1983009808
        %v1978 = vunpack.c.0.s8 %v1977
        %v1979 = vlaneseq
        %v1980 = vshrl.u32 %v1979, 7
        %v1981 = vsub.s32 %v1978, %v1980
        %v1982 = vrot.slane %v1968, %v1981
        %v1983 = vcombine.low %v1958, %v1962
        %v1984 = vcombine.high %v1958, %v1962
        %v1986 = vunpack.c.l.s4 1983009808
        %v1987 = vunpack.c.0.s8 %v1986
        %v1988 = vlaneseq
        %v1989 = vshrl.u32 %v1988, 7
        %v1990 = vsub.s32 %v1987, %v1989
        %v1991 = vrot.slane %v1983, %v1990
        %v1993 = vunpack.c.l.s4 1983009808
        %v1994 = vunpack.c.0.s8 %v1993
        %v1995 = vlaneseq
        %v1996 = vshrl.u32 %v1995, 7
        %v1997 = vsub.s32 %v1994, %v1996
        %v1998 = vrot.slane %v1984, %v1997
        %v1999 = vcombine.low %v1975, %v1991
        %v2000 = vcombine.high %v1975, %v1991
        %v2002 = vunpack.c.l.s4 1934713408
        %v2003 = vunpack.c.0.s8 %v2002
        %v2004 = vlaneseq
        %v2005 = vshrl.u32 %v2004, 7
        %v2006 = vsub.s32 %v2003, %v2005
        %v2007 = vrot.slane %v1999, %v2006
        %v2009 = vunpack.c.l.s4 1934713408
        %v2010 = vunpack.c.0.s8 %v2009
        %v2011 = vlaneseq
        %v2012 = vshrl.u32 %v2011, 7
        %v2013 = vsub.s32 %v2010, %v2012
        %v2014 = vrot.slane %v2000, %v2013
        %v2015 = vcombine.low %v1982, %v1998
        %v2016 = vcombine.high %v1982, %v1998
        %v2018 = vunpack.c.l.s4 1934713408
        %v2019 = vunpack.c.0.s8 %v2018
        %v2020 = vlaneseq
        %v2021 = vshrl.u32 %v2020, 7
        %v2022 = vsub.s32 %v2019, %v2021
        %v2023 = vrot.slane %v2015, %v2022
        %v2025 = vunpack.c.l.s4 1934713408
        %v2026 = vunpack.c.0.s8 %v2025
        %v2027 = vlaneseq
        %v2028 = vshrl.u32 %v2027, 7
        %v2029 = vsub.s32 %v2026, %v2028
        %v2030 = vrot.slane %v2016, %v2029
        %v2031 = vcombine.high %v2007, 0.0
        %v2032 = vcombine.high %v2014, 0.0
        %v2033 = vcombine.high %v2023, 0.0
        %v2034 = vcombine.high %v2030, 0.0
        %v2035 = vcombine.low %v2007, %v2014
        %v2037 = vunpack.c.l.s4 1983009808
        %v2038 = vunpack.c.0.s8 %v2037
        %v2039 = vlaneseq
        %v2040 = vshrl.u32 %v2039, 7
        %v2041 = vsub.s32 %v2038, %v2040
        %v2042 = vrot.slane %v2035, %v2041
        %v2043 = vcombine.low %v2031, %v2032
        %v2045 = vunpack.c.l.s4 1983009808
        %v2046 = vunpack.c.0.s8 %v2045
        %v2047 = vlaneseq
        %v2048 = vshrl.u32 %v2047, 7
        %v2049 = vsub.s32 %v2046, %v2048
        %v2050 = vrot.slane %v2043, %v2049
        %v2051 = vcombine.low %v2023, %v2030
        %v2053 = vunpack.c.l.s4 1983009808
        %v2054 = vunpack.c.0.s8 %v2053
        %v2055 = vlaneseq
        %v2056 = vshrl.u32 %v2055, 7
        %v2057 = vsub.s32 %v2054, %v2056
        %v2058 = vrot.slane %v2051, %v2057
        %v2059 = vcombine.low %v2033, %v2034
        %v2061 = vunpack.c.l.s4 1983009808
        %v2062 = vunpack.c.0.s8 %v2061
        %v2063 = vlaneseq
        %v2064 = vshrl.u32 %v2063, 7
        %v2065 = vsub.s32 %v2062, %v2064
        %v2066 = vrot.slane %v2059, %v2065
        %v2067 = vcombine.low %v2042, %v2050
        %v2068 = vcombine.high %v2042, %v2050
        %v2070 = vunpack.c.l.s4 1934713408
        %v2071 = vunpack.c.0.s8 %v2070
        %v2072 = vlaneseq
        %v2073 = vshrl.u32 %v2072, 7
        %v2074 = vsub.s32 %v2071, %v2073
        %v2075 = vrot.slane %v2067, %v2074
        %v2077 = vunpack.c.l.s4 1934713408
        %v2078 = vunpack.c.0.s8 %v2077
        %v2079 = vlaneseq
        %v2080 = vshrl.u32 %v2079, 7
        %v2081 = vsub.s32 %v2078, %v2080
        %v2082 = vrot.slane %v2068, %v2081
        %v2083 = vcombine.low %v2058, %v2066
        %v2084 = vcombine.high %v2058, %v2066
        %v2086 = vunpack.c.l.s4 1934713408
        %v2087 = vunpack.c.0.s8 %v2086
        %v2088 = vlaneseq
        %v2089 = vshrl.u32 %v2088, 7
        %v2090 = vsub.s32 %v2087, %v2089
        %v2091 = vrot.slane %v2083, %v2090
        %v2093 = vunpack.c.l.s4 1934713408
        %v2094 = vunpack.c.0.s8 %v2093
        %v2095 = vlaneseq
        %v2096 = vshrl.u32 %v2095, 7
        %v2097 = vsub.s32 %v2094, %v2096
        %v2098 = vrot.slane %v2084, %v2097
        %v2099 = vcombine.low %v2075, %v2091
        %v2100 = vcombine.high %v2075, %v2091
        %v2101 = vcombine.low %v2082, %v2098
        %v2102 = vcombine.high %v2082, %v2098
        %v2103 = vpack.c.bf16 %v2099, %v2099
        %v2104 = vpack.c.bf16 %v2100, %v2100
        %v2105 = vpack.c.bf16 %v2101, %v2101
        %v2106 = vpack.c.bf16 %v2102, %v2102
        %vm2107 = vcmask 64512
        %v2109 = vsel %vm2107, %v1799, 0
        %v2112 = vsel %vm2107, %v1951, 0
        %2114 = vmatprep.subr.bf16.mxu0 0
        %2115 = vmatpush1.bf16.xpose.msra.mxu0 %v2112
        %2116 = vmatprep.subr.bf16.mxu0 0
        %2117 = vmatpush1.bf16.xpose.msra.mxu0 0
        %2118 = vmatprep.subr.bf16.mxu0 0
        %2119 = vmatpush1.bf16.xpose.msra.mxu0 0
        %2120 = vmatprep.subr.bf16.mxu0 0
        %2121 = vmatpush1.bf16.xpose.msra.mxu0 0
        %2122 = vmatprep.subr.bf16.mxu0 0
        %2123 = vmatpush1.bf16.xpose.msra.mxu0 0
        %2124 = vmatprep.subr.bf16.mxu0 0
        %2125 = vmatpush1.bf16.xpose.msra.mxu0 0
        %2126 = vmatprep.subr.bf16.mxu0 0
        %2127 = vmatpush1.bf16.xpose.msra.mxu0 0
        %2128 = vmatprep.subr.bf16.mxu0 0
        %2129 = vmatpush1.bf16.xpose.msra.mxu0 0
        %2130 = vmatprep.subr.bf16.mxu0 0
        %2131 = vmatpush1.bf16.xpose.msra.mxu0 0
        %2132 = vmatprep.subr.bf16.mxu0 0
        %2133 = vmatpush1.bf16.xpose.msra.mxu0 0
        %2134 = vmatprep.subr.bf16.mxu0 0
        %2135 = vmatpush1.bf16.xpose.msra.mxu0 0
        %2136 = vmatprep.subr.bf16.mxu0 0
        %2137 = vmatpush1.bf16.xpose.msra.mxu0 0
        %2138 = vmatprep.subr.bf16.mxu0 0
        %2139 = vmatpush1.bf16.xpose.msra.mxu0 0
        %2140 = vmatprep.subr.bf16.mxu0 0
        %2141 = vmatpush1.bf16.xpose.msra.mxu0 0
        %2142 = vmatprep.subr.bf16.mxu0 0
        %2143 = vmatpush1.bf16.xpose.msra.mxu0 0
        %2144 = vmatprep.subr.bf16.mxu0 0
        %2145 = vmatpush1.bf16.xpose.msra.mxu0 0
        %2146 = vmatprep.mubr.bf16.mxu0 0
        %2147 = vmatmul.mubr.bf16.gmra.mrb[0].mxu0 %v2109
        %v2148 = vpop.f32.mrb[0].mxu0
        %v2149 = vadd.f32 0.0, %v2148
        %v2150 = vpop.f32.mrb[0].mxu0
        %v2151 = vpop.f32.mrb[0].mxu0
        %v2152 = vpop.f32.mrb[0].mxu0
        %2153 = vdwg.mxu0
        %v2155 = vsel %vm2107, %v1800, 0
        %v2158 = vsel %vm2107, %v1952, 0
        %2160 = vmatprep.subr.bf16.mxu0 0
        %2161 = vmatpush1.bf16.xpose.msra.mxu0 %v2158
        %2162 = vmatprep.subr.bf16.mxu0 0
        %2163 = vmatpush1.bf16.xpose.msra.mxu0 0
        %2164 = vmatprep.subr.bf16.mxu0 0
        %2165 = vmatpush1.bf16.xpose.msra.mxu0 0
        %2166 = vmatprep.subr.bf16.mxu0 0
        %2167 = vmatpush1.bf16.xpose.msra.mxu0 0
        %2168 = vmatprep.subr.bf16.mxu0 0
        %2169 = vmatpush1.bf16.xpose.msra.mxu0 0
        %2170 = vmatprep.subr.bf16.mxu0 0
        %2171 = vmatpush1.bf16.xpose.msra.mxu0 0
        %2172 = vmatprep.subr.bf16.mxu0 0
        %2173 = vmatpush1.bf16.xpose.msra.mxu0 0
        %2174 = vmatprep.subr.bf16.mxu0 0
        %2175 = vmatpush1.bf16.xpose.msra.mxu0 0
        %2176 = vmatprep.subr.bf16.mxu0 0
        %2177 = vmatpush1.bf16.xpose.msra.mxu0 0
        %2178 = vmatprep.subr.bf16.mxu0 0
        %2179 = vmatpush1.bf16.xpose.msra.mxu0 0
        %2180 = vmatprep.subr.bf16.mxu0 0
        %2181 = vmatpush1.bf16.xpose.msra.mxu0 0
        %2182 = vmatprep.subr.bf16.mxu0 0
        %2183 = vmatpush1.bf16.xpose.msra.mxu0 0
        %2184 = vmatprep.subr.bf16.mxu0 0
        %2185 = vmatpush1.bf16.xpose.msra.mxu0 0
        %2186 = vmatprep.subr.bf16.mxu0 0
        %2187 = vmatpush1.bf16.xpose.msra.mxu0 0
        %2188 = vmatprep.subr.bf16.mxu0 0
        %2189 = vmatpush1.bf16.xpose.msra.mxu0 0
        %2190 = vmatprep.subr.bf16.mxu0 0
        %2191 = vmatpush1.bf16.xpose.msra.mxu0 0
        %2192 = vmatprep.mubr.bf16.mxu0 0
        %2193 = vmatmul.mubr.bf16.gmra.mrb[0].mxu0 %v2155
        %v2194 = vpop.f32.mrb[0].mxu0
        %v2195 = vadd.f32 0.0, %v2194
        %v2196 = vpop.f32.mrb[0].mxu0
        %v2197 = vpop.f32.mrb[0].mxu0
        %v2198 = vpop.f32.mrb[0].mxu0
        %2199 = vdwg.mxu0
        %v2201 = vsel %vm2107, %v1801, 0
        %v2204 = vsel %vm2107, %v1953, 0
        %2206 = vmatprep.subr.bf16.mxu0 0
        %2207 = vmatpush1.bf16.xpose.msra.mxu0 %v2204
        %2208 = vmatprep.subr.bf16.mxu0 0
        %2209 = vmatpush1.bf16.xpose.msra.mxu0 0
        %2210 = vmatprep.subr.bf16.mxu0 0
        %2211 = vmatpush1.bf16.xpose.msra.mxu0 0
        %2212 = vmatprep.subr.bf16.mxu0 0
        %2213 = vmatpush1.bf16.xpose.msra.mxu0 0
        %2214 = vmatprep.subr.bf16.mxu0 0
        %2215 = vmatpush1.bf16.xpose.msra.mxu0 0
        %2216 = vmatprep.subr.bf16.mxu0 0
        %2217 = vmatpush1.bf16.xpose.msra.mxu0 0
        %2218 = vmatprep.subr.bf16.mxu0 0
        %2219 = vmatpush1.bf16.xpose.msra.mxu0 0
        %2220 = vmatprep.subr.bf16.mxu0 0
        %2221 = vmatpush1.bf16.xpose.msra.mxu0 0
        %2222 = vmatprep.subr.bf16.mxu0 0
        %2223 = vmatpush1.bf16.xpose.msra.mxu0 0
        %2224 = vmatprep.subr.bf16.mxu0 0
        %2225 = vmatpush1.bf16.xpose.msra.mxu0 0
        %2226 = vmatprep.subr.bf16.mxu0 0
        %2227 = vmatpush1.bf16.xpose.msra.mxu0 0
        %2228 = vmatprep.subr.bf16.mxu0 0
        %2229 = vmatpush1.bf16.xpose.msra.mxu0 0
        %2230 = vmatprep.subr.bf16.mxu0 0
        %2231 = vmatpush1.bf16.xpose.msra.mxu0 0
        %2232 = vmatprep.subr.bf16.mxu0 0
        %2233 = vmatpush1.bf16.xpose.msra.mxu0 0
        %2234 = vmatprep.subr.bf16.mxu0 0
        %2235 = vmatpush1.bf16.xpose.msra.mxu0 0
        %2236 = vmatprep.subr.bf16.mxu0 0
        %2237 = vmatpush1.bf16.xpose.msra.mxu0 0
        %2238 = vmatprep.mubr.bf16.mxu0 0
        %2239 = vmatmul.mubr.bf16.gmra.mrb[0].mxu0 %v2201
        %v2240 = vpop.f32.mrb[0].mxu0
        %v2241 = vadd.f32 0.0, %v2240
        %v2242 = vpop.f32.mrb[0].mxu0
        %v2243 = vpop.f32.mrb[0].mxu0
        %v2244 = vpop.f32.mrb[0].mxu0
        %2245 = vdwg.mxu0
        %v2247 = vsel %vm2107, %v1802, 0
        %v2250 = vsel %vm2107, %v1954, 0
        %2252 = vmatprep.subr.bf16.mxu0 0
        %2253 = vmatpush1.bf16.xpose.msra.mxu0 %v2250
        %2254 = vmatprep.subr.bf16.mxu0 0
        %2255 = vmatpush1.bf16.xpose.msra.mxu0 0
        %2256 = vmatprep.subr.bf16.mxu0 0
        %2257 = vmatpush1.bf16.xpose.msra.mxu0 0
        %2258 = vmatprep.subr.bf16.mxu0 0
        %2259 = vmatpush1.bf16.xpose.msra.mxu0 0
        %2260 = vmatprep.subr.bf16.mxu0 0
        %2261 = vmatpush1.bf16.xpose.msra.mxu0 0
        %2262 = vmatprep.subr.bf16.mxu0 0
        %2263 = vmatpush1.bf16.xpose.msra.mxu0 0
        %2264 = vmatprep.subr.bf16.mxu0 0
        %2265 = vmatpush1.bf16.xpose.msra.mxu0 0
        %2266 = vmatprep.subr.bf16.mxu0 0
        %2267 = vmatpush1.bf16.xpose.msra.mxu0 0
        %2268 = vmatprep.subr.bf16.mxu0 0
        %2269 = vmatpush1.bf16.xpose.msra.mxu0 0
        %2270 = vmatprep.subr.bf16.mxu0 0
        %2271 = vmatpush1.bf16.xpose.msra.mxu0 0
        %2272 = vmatprep.subr.bf16.mxu0 0
        %2273 = vmatpush1.bf16.xpose.msra.mxu0 0
        %2274 = vmatprep.subr.bf16.mxu0 0
        %2275 = vmatpush1.bf16.xpose.msra.mxu0 0
        %2276 = vmatprep.subr.bf16.mxu0 0
        %2277 = vmatpush1.bf16.xpose.msra.mxu0 0
        %2278 = vmatprep.subr.bf16.mxu0 0
        %2279 = vmatpush1.bf16.xpose.msra.mxu0 0
        %2280 = vmatprep.subr.bf16.mxu0 0
        %2281 = vmatpush1.bf16.xpose.msra.mxu0 0
        %2282 = vmatprep.subr.bf16.mxu0 0
        %2283 = vmatpush1.bf16.xpose.msra.mxu0 0
        %2284 = vmatprep.mubr.bf16.mxu0 0
        %2285 = vmatmul.mubr.bf16.gmra.mrb[0].mxu0 %v2247
        %v2286 = vpop.f32.mrb[0].mxu0
        %v2287 = vadd.f32 0.0, %v2286
        %v2288 = vpop.f32.mrb[0].mxu0
        %v2289 = vpop.f32.mrb[0].mxu0
        %v2290 = vpop.f32.mrb[0].mxu0
        %2291 = vdwg.mxu0
        %v2292 = vsel %vm2107, %v2149, -inf
        %2293 = vmax.xlane.f32.xlu0 %v2292
        %v2294 = vpop.xlane.xlu0 %2293
        %v2295 = vsel %vm2107, %v2195, -inf
        %2296 = vmax.xlane.f32.xlu0 %v2295
        %v2297 = vpop.xlane.xlu0 %2296
        %v2298 = vsel %vm2107, %v2241, -inf
        %2299 = vmax.xlane.f32.xlu0 %v2298
        %v2300 = vpop.xlane.xlu0 %2299
        %v2301 = vsel %vm2107, %v2287, -inf
        %2302 = vmax.xlane.f32.xlu0 %v2301
        %v2303 = vpop.xlane.xlu0 %2302
        %v2304 = vsub.f32 %v2149, %v2294
        %v2305 = vsub.f32 %v2195, %v2297
        %v2306 = vsub.f32 %v2241, %v2300
        %v2307 = vsub.f32 %v2287, %v2303
        %v2308 = vmul.f32 %v2304, 1.442695
        %v2309 = vpow.pop %v2308
        %v2310 = vmul.f32 %v2305, 1.442695
        %v2311 = vpow.pop %v2310
        %v2312 = vmul.f32 %v2306, 1.442695
        %v2313 = vpow.pop %v2312
        %v2314 = vmul.f32 %v2307, 1.442695
        %v2315 = vpow.pop %v2314
        %v2316 = vsel %vm2107, %v2309, 0.0
        %2317 = vadd.xlane.f32.xlu0 %v2316
        %v2318 = vpop.xlane.xlu0 %2317
        %v2319 = vsel %vm2107, %v2311, 0.0
        %2320 = vadd.xlane.f32.xlu0 %v2319
        %v2321 = vpop.xlane.xlu0 %2320
        %v2322 = vsel %vm2107, %v2313, 0.0
        %2323 = vadd.xlane.f32.xlu0 %v2322
        %v2324 = vpop.xlane.xlu0 %2323
        %v2325 = vsel %vm2107, %v2315, 0.0
        %2326 = vadd.xlane.f32.xlu0 %v2325
        %v2327 = vpop.xlane.xlu0 %2326
        %v2328 = vrcp.pop %v2318
        %v2329 = vrcp.pop %v2321
        %v2330 = vrcp.pop %v2324
        %v2331 = vrcp.pop %v2327
        %v2332 = vmul.f32 %v2309, %v2328
        %v2333 = vmul.f32 %v2311, %v2329
        %v2334 = vmul.f32 %v2313, %v2330
        %v2335 = vmul.f32 %v2315, %v2331
        %v2336 = vpack.c.bf16 %v2332, %v2332
        %v2337 = vpack.c.bf16 %v2333, %v2333
        %v2338 = vpack.c.bf16 %v2334, %v2334
        %v2339 = vpack.c.bf16 %v2335, %v2335
        %v2341 = vsel %vm2107, %v2336, 0
        %vm2343 = vcmask 1043456
        %v2345 = vsel %vm2343, %v2103, 0
        %2347 = vmatprep.subr.bf16.mxu0 0
        %2348 = vmatpush1.bf16.msra.mxu0 %v2345
        %2349 = vmatprep.subr.bf16.mxu0 0
        %2350 = vmatpush1.bf16.msra.mxu0 0
        %2351 = vmatprep.subr.bf16.mxu0 0
        %2352 = vmatpush1.bf16.msra.mxu0 0
        %2353 = vmatprep.subr.bf16.mxu0 0
        %2354 = vmatpush1.bf16.msra.mxu0 0
        %2355 = vmatprep.subr.bf16.mxu0 0
        %2356 = vmatpush1.bf16.msra.mxu0 0
        %2357 = vmatprep.subr.bf16.mxu0 0
        %2358 = vmatpush1.bf16.msra.mxu0 0
        %2359 = vmatprep.subr.bf16.mxu0 0
        %2360 = vmatpush1.bf16.msra.mxu0 0
        %2361 = vmatprep.subr.bf16.mxu0 0
        %2362 = vmatpush1.bf16.msra.mxu0 0
        %2363 = vmatprep.subr.bf16.mxu0 0
        %2364 = vmatpush1.bf16.msra.mxu0 0
        %2365 = vmatprep.subr.bf16.mxu0 0
        %2366 = vmatpush1.bf16.msra.mxu0 0
        %2367 = vmatprep.subr.bf16.mxu0 0
        %2368 = vmatpush1.bf16.msra.mxu0 0
        %2369 = vmatprep.subr.bf16.mxu0 0
        %2370 = vmatpush1.bf16.msra.mxu0 0
        %2371 = vmatprep.subr.bf16.mxu0 0
        %2372 = vmatpush1.bf16.msra.mxu0 0
        %2373 = vmatprep.subr.bf16.mxu0 0
        %2374 = vmatpush1.bf16.msra.mxu0 0
        %2375 = vmatprep.subr.bf16.mxu0 0
        %2376 = vmatpush1.bf16.msra.mxu0 0
        %2377 = vmatprep.subr.bf16.mxu0 0
        %2378 = vmatpush1.bf16.msra.mxu0 0
        %2379 = vmatprep.mubr.bf16.mxu0 0
        %2380 = vmatmul.mubr.bf16.gmra.mrb[0].mxu0 %v2341
        %v2381 = vpop.f32.mrb[0].mxu0
        %v2382 = vadd.f32 0.0, %v2381
        %v2383 = vpop.f32.mrb[0].mxu0
        %v2384 = vpop.f32.mrb[0].mxu0
        %v2385 = vpop.f32.mrb[0].mxu0
        %2386 = vdwg.mxu0
        %v2388 = vsel %vm2107, %v2337, 0
        %v2391 = vsel %vm2343, %v2104, 0
        %2393 = vmatprep.subr.bf16.mxu0 0
        %2394 = vmatpush1.bf16.msra.mxu0 %v2391
        %2395 = vmatprep.subr.bf16.mxu0 0
        %2396 = vmatpush1.bf16.msra.mxu0 0
        %2397 = vmatprep.subr.bf16.mxu0 0
        %2398 = vmatpush1.bf16.msra.mxu0 0
        %2399 = vmatprep.subr.bf16.mxu0 0
        %2400 = vmatpush1.bf16.msra.mxu0 0
        %2401 = vmatprep.subr.bf16.mxu0 0
        %2402 = vmatpush1.bf16.msra.mxu0 0
        %2403 = vmatprep.subr.bf16.mxu0 0
        %2404 = vmatpush1.bf16.msra.mxu0 0
        %2405 = vmatprep.subr.bf16.mxu0 0
        %2406 = vmatpush1.bf16.msra.mxu0 0
        %2407 = vmatprep.subr.bf16.mxu0 0
        %2408 = vmatpush1.bf16.msra.mxu0 0
        %2409 = vmatprep.subr.bf16.mxu0 0
        %2410 = vmatpush1.bf16.msra.mxu0 0
        %2411 = vmatprep.subr.bf16.mxu0 0
        %2412 = vmatpush1.bf16.msra.mxu0 0
        %2413 = vmatprep.subr.bf16.mxu0 0
        %2414 = vmatpush1.bf16.msra.mxu0 0
        %2415 = vmatprep.subr.bf16.mxu0 0
        %2416 = vmatpush1.bf16.msra.mxu0 0
        %2417 = vmatprep.subr.bf16.mxu0 0
        %2418 = vmatpush1.bf16.msra.mxu0 0
        %2419 = vmatprep.subr.bf16.mxu0 0
        %2420 = vmatpush1.bf16.msra.mxu0 0
        %2421 = vmatprep.subr.bf16.mxu0 0
        %2422 = vmatpush1.bf16.msra.mxu0 0
        %2423 = vmatprep.subr.bf16.mxu0 0
        %2424 = vmatpush1.bf16.msra.mxu0 0
        %2425 = vmatprep.mubr.bf16.mxu0 0
        %2426 = vmatmul.mubr.bf16.gmra.mrb[0].mxu0 %v2388
        %v2427 = vpop.f32.mrb[0].mxu0
        %v2428 = vadd.f32 0.0, %v2427
        %v2429 = vpop.f32.mrb[0].mxu0
        %v2430 = vpop.f32.mrb[0].mxu0
        %v2431 = vpop.f32.mrb[0].mxu0
        %2432 = vdwg.mxu0
        %v2434 = vsel %vm2107, %v2338, 0
        %v2437 = vsel %vm2343, %v2105, 0
        %2439 = vmatprep.subr.bf16.mxu0 0
        %2440 = vmatpush1.bf16.msra.mxu0 %v2437
        %2441 = vmatprep.subr.bf16.mxu0 0
        %2442 = vmatpush1.bf16.msra.mxu0 0
        %2443 = vmatprep.subr.bf16.mxu0 0
        %2444 = vmatpush1.bf16.msra.mxu0 0
        %2445 = vmatprep.subr.bf16.mxu0 0
        %2446 = vmatpush1.bf16.msra.mxu0 0
        %2447 = vmatprep.subr.bf16.mxu0 0
        %2448 = vmatpush1.bf16.msra.mxu0 0
        %2449 = vmatprep.subr.bf16.mxu0 0
        %2450 = vmatpush1.bf16.msra.mxu0 0
        %2451 = vmatprep.subr.bf16.mxu0 0
        %2452 = vmatpush1.bf16.msra.mxu0 0
        %2453 = vmatprep.subr.bf16.mxu0 0
        %2454 = vmatpush1.bf16.msra.mxu0 0
        %2455 = vmatprep.subr.bf16.mxu0 0
        %2456 = vmatpush1.bf16.msra.mxu0 0
        %2457 = vmatprep.subr.bf16.mxu0 0
        %2458 = vmatpush1.bf16.msra.mxu0 0
        %2459 = vmatprep.subr.bf16.mxu0 0
        %2460 = vmatpush1.bf16.msra.mxu0 0
        %2461 = vmatprep.subr.bf16.mxu0 0
        %2462 = vmatpush1.bf16.msra.mxu0 0
        %2463 = vmatprep.subr.bf16.mxu0 0
        %2464 = vmatpush1.bf16.msra.mxu0 0
        %2465 = vmatprep.subr.bf16.mxu0 0
        %2466 = vmatpush1.bf16.msra.mxu0 0
        %2467 = vmatprep.subr.bf16.mxu0 0
        %2468 = vmatpush1.bf16.msra.mxu0 0
        %2469 = vmatprep.subr.bf16.mxu0 0
        %2470 = vmatpush1.bf16.msra.mxu0 0
        %2471 = vmatprep.mubr.bf16.mxu0 0
        %2472 = vmatmul.mubr.bf16.gmra.mrb[0].mxu0 %v2434
        %v2473 = vpop.f32.mrb[0].mxu0
        %v2474 = vadd.f32 0.0, %v2473
        %v2475 = vpop.f32.mrb[0].mxu0
        %v2476 = vpop.f32.mrb[0].mxu0
        %v2477 = vpop.f32.mrb[0].mxu0
        %2478 = vdwg.mxu0
        %v2480 = vsel %vm2107, %v2339, 0
        %v2483 = vsel %vm2343, %v2106, 0
        %2485 = vmatprep.subr.bf16.mxu0 0
        %2486 = vmatpush1.bf16.msra.mxu0 %v2483
        %2487 = vmatprep.subr.bf16.mxu0 0
        %2488 = vmatpush1.bf16.msra.mxu0 0
        %2489 = vmatprep.subr.bf16.mxu0 0
        %2490 = vmatpush1.bf16.msra.mxu0 0
        %2491 = vmatprep.subr.bf16.mxu0 0
        %2492 = vmatpush1.bf16.msra.mxu0 0
        %2493 = vmatprep.subr.bf16.mxu0 0
        %2494 = vmatpush1.bf16.msra.mxu0 0
        %2495 = vmatprep.subr.bf16.mxu0 0
        %2496 = vmatpush1.bf16.msra.mxu0 0
        %2497 = vmatprep.subr.bf16.mxu0 0
        %2498 = vmatpush1.bf16.msra.mxu0 0
        %2499 = vmatprep.subr.bf16.mxu0 0
        %2500 = vmatpush1.bf16.msra.mxu0 0
        %2501 = vmatprep.subr.bf16.mxu0 0
        %2502 = vmatpush1.bf16.msra.mxu0 0
        %2503 = vmatprep.subr.bf16.mxu0 0
        %2504 = vmatpush1.bf16.msra.mxu0 0
        %2505 = vmatprep.subr.bf16.mxu0 0
        %2506 = vmatpush1.bf16.msra.mxu0 0
        %2507 = vmatprep.subr.bf16.mxu0 0
        %2508 = vmatpush1.bf16.msra.mxu0 0
        %2509 = vmatprep.subr.bf16.mxu0 0
        %2510 = vmatpush1.bf16.msra.mxu0 0
        %2511 = vmatprep.subr.bf16.mxu0 0
        %2512 = vmatpush1.bf16.msra.mxu0 0
        %2513 = vmatprep.subr.bf16.mxu0 0
        %2514 = vmatpush1.bf16.msra.mxu0 0
        %2515 = vmatprep.subr.bf16.mxu0 0
        %2516 = vmatpush1.bf16.msra.mxu0 0
        %2517 = vmatprep.mubr.bf16.mxu0 0
        %2518 = vmatmul.mubr.bf16.gmra.mrb[0].mxu0 %v2480
        %v2519 = vpop.f32.mrb[0].mxu0
        %v2520 = vadd.f32 0.0, %v2519
        %v2521 = vpop.f32.mrb[0].mxu0
        %v2522 = vpop.f32.mrb[0].mxu0
        %v2523 = vpop.f32.mrb[0].mxu0
        %2524 = vdwg.mxu0
        %v2525 = vcombine.low %v2382, %v2474
        %v2526 = vcombine.high %v2382, %v2474
        %v2528 = vunpack.c.l.s4 1983009808
        %v2529 = vunpack.c.0.s8 %v2528
        %v2530 = vlaneseq
        %v2531 = vshrl.u32 %v2530, 7
        %v2532 = vsub.s32 %v2529, %v2531
        %v2533 = vrot.slane %v2525, %v2532
        %v2535 = vunpack.c.l.s4 1983009808
        %v2536 = vunpack.c.0.s8 %v2535
        %v2537 = vlaneseq
        %v2538 = vshrl.u32 %v2537, 7
        %v2539 = vsub.s32 %v2536, %v2538
        %v2540 = vrot.slane %v2526, %v2539
        %v2541 = vcombine.low %v2428, %v2520
        %v2542 = vcombine.high %v2428, %v2520
        %v2544 = vunpack.c.l.s4 1983009808
        %v2545 = vunpack.c.0.s8 %v2544
        %v2546 = vlaneseq
        %v2547 = vshrl.u32 %v2546, 7
        %v2548 = vsub.s32 %v2545, %v2547
        %v2549 = vrot.slane %v2541, %v2548
        %v2551 = vunpack.c.l.s4 1983009808
        %v2552 = vunpack.c.0.s8 %v2551
        %v2553 = vlaneseq
        %v2554 = vshrl.u32 %v2553, 7
        %v2555 = vsub.s32 %v2552, %v2554
        %v2556 = vrot.slane %v2542, %v2555
        %v2557 = vcombine.low %v2533, %v2549
        %v2558 = vcombine.high %v2533, %v2549
        %v2560 = vunpack.c.l.s4 1934713408
        %v2561 = vunpack.c.0.s8 %v2560
        %v2562 = vlaneseq
        %v2563 = vshrl.u32 %v2562, 7
        %v2564 = vsub.s32 %v2561, %v2563
        %v2565 = vrot.slane %v2557, %v2564
        %v2567 = vunpack.c.l.s4 1934713408
        %v2568 = vunpack.c.0.s8 %v2567
        %v2569 = vlaneseq
        %v2570 = vshrl.u32 %v2569, 7
        %v2571 = vsub.s32 %v2568, %v2570
        %v2572 = vrot.slane %v2558, %v2571
        %v2573 = vcombine.low %v2540, %v2556
        %v2574 = vcombine.high %v2540, %v2556
        %v2576 = vunpack.c.l.s4 1934713408
        %v2577 = vunpack.c.0.s8 %v2576
        %v2578 = vlaneseq
        %v2579 = vshrl.u32 %v2578, 7
        %v2580 = vsub.s32 %v2577, %v2579
        %v2581 = vrot.slane %v2573, %v2580
        %v2583 = vunpack.c.l.s4 1934713408
        %v2584 = vunpack.c.0.s8 %v2583
        %v2585 = vlaneseq
        %v2586 = vshrl.u32 %v2585, 7
        %v2587 = vsub.s32 %v2584, %v2586
        %v2588 = vrot.slane %v2574, %v2587
        %v2589 = vcombine.high %v2565, 0.0
        %v2590 = vcombine.high %v2572, 0.0
        %v2591 = vcombine.high %v2581, 0.0
        %v2592 = vcombine.high %v2588, 0.0
        %v2593 = vcombine.low %v2565, %v2572
        %v2595 = vunpack.c.l.s4 1983009808
        %v2596 = vunpack.c.0.s8 %v2595
        %v2597 = vlaneseq
        %v2598 = vshrl.u32 %v2597, 7
        %v2599 = vsub.s32 %v2596, %v2598
        %v2600 = vrot.slane %v2593, %v2599
        %v2601 = vcombine.low %v2589, %v2590
        %v2603 = vunpack.c.l.s4 1983009808
        %v2604 = vunpack.c.0.s8 %v2603
        %v2605 = vlaneseq
        %v2606 = vshrl.u32 %v2605, 7
        %v2607 = vsub.s32 %v2604, %v2606
        %v2608 = vrot.slane %v2601, %v2607
        %v2609 = vcombine.low %v2581, %v2588
        %v2611 = vunpack.c.l.s4 1983009808
        %v2612 = vunpack.c.0.s8 %v2611
        %v2613 = vlaneseq
        %v2614 = vshrl.u32 %v2613, 7
        %v2615 = vsub.s32 %v2612, %v2614
        %v2616 = vrot.slane %v2609, %v2615
        %v2617 = vcombine.low %v2591, %v2592
        %v2619 = vunpack.c.l.s4 1983009808
        %v2620 = vunpack.c.0.s8 %v2619
        %v2621 = vlaneseq
        %v2622 = vshrl.u32 %v2621, 7
        %v2623 = vsub.s32 %v2620, %v2622
        %v2624 = vrot.slane %v2617, %v2623
        %v2625 = vcombine.low %v2600, %v2608
        %v2626 = vcombine.high %v2600, %v2608
        %v2628 = vunpack.c.l.s4 1934713408
        %v2629 = vunpack.c.0.s8 %v2628
        %v2630 = vlaneseq
        %v2631 = vshrl.u32 %v2630, 7
        %v2632 = vsub.s32 %v2629, %v2631
        %v2633 = vrot.slane %v2625, %v2632
        %v2635 = vunpack.c.l.s4 1934713408
        %v2636 = vunpack.c.0.s8 %v2635
        %v2637 = vlaneseq
        %v2638 = vshrl.u32 %v2637, 7
        %v2639 = vsub.s32 %v2636, %v2638
        %v2640 = vrot.slane %v2626, %v2639
        %v2641 = vcombine.low %v2616, %v2624
        %v2642 = vcombine.high %v2616, %v2624
        %v2644 = vunpack.c.l.s4 1934713408
        %v2645 = vunpack.c.0.s8 %v2644
        %v2646 = vlaneseq
        %v2647 = vshrl.u32 %v2646, 7
        %v2648 = vsub.s32 %v2645, %v2647
        %v2649 = vrot.slane %v2641, %v2648
        %v2651 = vunpack.c.l.s4 1934713408
        %v2652 = vunpack.c.0.s8 %v2651
        %v2653 = vlaneseq
        %v2654 = vshrl.u32 %v2653, 7
        %v2655 = vsub.s32 %v2652, %v2654
        %v2656 = vrot.slane %v2642, %v2655
        %v2657 = vcombine.low %v2633, %v2649
        %v2658 = vcombine.high %v2633, %v2649
        %v2659 = vcombine.low %v2640, %v2656
        %v2660 = vcombine.high %v2640, %v2656
        %2662 = vrot.lane.b32.xlu0 %v2658, 8
        %v2663 = vpop.permute.xlu0 %2662
        %2666 = vrot.lane.b32.xlu0 %v2659, 16
        %v2667 = vpop.permute.xlu0 %2666
        %2670 = vrot.lane.b32.xlu0 %v2660, 24
        %v2671 = vpop.permute.xlu0 %2670
        %v2673 = vsel %vm2107, %v2657, %v2663
        %vm2674 = vcmask 130048
        %v2675 = vsel %vm2674, %v2673, %v2667
        %vm2676 = vcmask 195584
        %v2677 = vsel %vm2676, %v2675, %v2671
        %v2678 = vpack.c.bf16 %v2677, %v2677
        %v2679 = vld [vmem:[%s9] sm:$0xf]
        %v2680 = vld [vmem:[%s9 + $0x4] sm:$0xf]
        %v2681 = vld [vmem:[%s9 + $0x8] sm:$0xf]
        %v2682 = vld [vmem:[%s9 + $0xc] sm:$0xf]
        %v2683 = vld [vmem:[#allocation6] sm:$0x1]
        %v2685 = vlaneseq
        %v2686 = vshrl.u32 %v2685, 7
        %v2687 = vsub.s32 0, %v2686
        %v2688 = vrot.slane %v2683, %v2687
        %v2694 = vunpack.c.l.b16 %v2679
        %v2695 = vunpack.c.l.b16 %v2680
        %v2696 = vunpack.c.l.b16 %v2681
        %v2697 = vunpack.c.l.b16 %v2682
        %v2698 = vpack.c.b16 %v2695, %v2694
        %v2699 = vpack.c.b16 %v2697, %v2696
        %v2703 = vsel %vm1609, %v2678, 0
        %2705 = vmatprep.subr.bf16.mxu0 0
        %2706 = vmatpush1.bf16.msra.mxu0 %v2698
        %2707 = vmatprep.subr.bf16.mxu0 0
        %2708 = vmatpush1.bf16.msra.mxu0 %v2699
        %2709 = vmatprep.subr.bf16.mxu0 0
        %2710 = vmatpush1.bf16.msra.mxu0 0
        %2711 = vmatprep.subr.bf16.mxu0 0
        %2712 = vmatpush1.bf16.msra.mxu0 0
        %2713 = vmatprep.subr.bf16.mxu0 0
        %2714 = vmatpush1.bf16.msra.mxu0 0
        %2715 = vmatprep.subr.bf16.mxu0 0
        %2716 = vmatpush1.bf16.msra.mxu0 0
        %2717 = vmatprep.subr.bf16.mxu0 0
        %2718 = vmatpush1.bf16.msra.mxu0 0
        %2719 = vmatprep.subr.bf16.mxu0 0
        %2720 = vmatpush1.bf16.msra.mxu0 0
        %2721 = vmatprep.subr.bf16.mxu0 0
        %2722 = vmatpush1.bf16.msra.mxu0 0
        %2723 = vmatprep.subr.bf16.mxu0 0
        %2724 = vmatpush1.bf16.msra.mxu0 0
        %2725 = vmatprep.subr.bf16.mxu0 0
        %2726 = vmatpush1.bf16.msra.mxu0 0
        %2727 = vmatprep.subr.bf16.mxu0 0
        %2728 = vmatpush1.bf16.msra.mxu0 0
        %2729 = vmatprep.subr.bf16.mxu0 0
        %2730 = vmatpush1.bf16.msra.mxu0 0
        %2731 = vmatprep.subr.bf16.mxu0 0
        %2732 = vmatpush1.bf16.msra.mxu0 0
        %2733 = vmatprep.subr.bf16.mxu0 0
        %2734 = vmatpush1.bf16.msra.mxu0 0
        %2735 = vmatprep.subr.bf16.mxu0 0
        %2736 = vmatpush1.bf16.msra.mxu0 0
        %2737 = vmatprep.mubr.bf16.mxu0 0
        %2738 = vmatmul.mubr.bf16.gmra.mrb[0].mxu0 %v2703
        %v2739 = vpop.f32.mrb[0].mxu0
        %v2740 = vadd.f32 %v2688, %v2739
        %v2741 = vpop.f32.mrb[0].mxu0
        %v2742 = vpop.f32.mrb[0].mxu0
        %v2743 = vpop.f32.mrb[0].mxu0
        %2744 = vdwg.mxu0
        %v2745 = vld [vmem:[#allocation7] sm:$0x1]
        %v2746 = vld [vmem:[#allocation9] sm:$0x1]
        %v2747 = vadd.f32 %v1582, %v2740
        %v2748 = vsel %vm1609, %v2747, 0.0
        %2749 = vadd.xlane.f32.xlu0 %v2748
        %v2750 = vpop.xlane.xlu0 %2749
        %v2751 = vrcp.pop 32.0
        %v2752 = vmul.f32 %v2750, %v2751
        %v2753 = vsub.f32 %v2747, %v2752
        %v2754 = vmul.f32 %v2753, %v2753
        %v2755 = vsel %vm1609, %v2754, 0.0
        %2756 = vadd.xlane.f32.xlu0 %v2755
        %v2757 = vpop.xlane.xlu0 %2756
        %v2758 = vmul.f32 %v2757, %v2751
        %v2759 = vadd.f32 %v2758, 1e-05
        %v2760 = vrsqrt.pop %v2759
        %v2761 = vmul.f32 %v2753, %v2760
        %v2763 = vlaneseq
        %v2764 = vshrl.u32 %v2763, 7
        %v2765 = vsub.s32 0, %v2764
        %v2766 = vrot.slane %v2745, %v2765
        %v2768 = vmul.f32 %v2761, %v2766
        %v2770 = vlaneseq
        %v2771 = vshrl.u32 %v2770, 7
        %v2772 = vsub.s32 0, %v2771
        %v2773 = vrot.slane %v2746, %v2772
        %v2775 = vadd.f32 %v2768, %v2773
        %v2776 = vpack.c.bf16 %v2775, %v2775
        %v2777 = vld [vmem:[%s17] sm:$0xf]
        %v2778 = vld [vmem:[%s17 + $0x4] sm:$0xf]
        %v2779 = vld [vmem:[%s17 + $0x8] sm:$0xf]
        %v2780 = vld [vmem:[%s17 + $0xc] sm:$0xf]
        %v2781 = vld [vmem:[#allocation10] sm:$0x1]
        %v2783 = vlaneseq
        %v2784 = vshrl.u32 %v2783, 7
        %v2785 = vsub.s32 0, %v2784
        %v2786 = vrot.slane %v2781, %v2785
        %v2792 = vunpack.c.l.b16 %v2777
        %v2793 = vunpack.c.l.b16 %v2778
        %v2794 = vunpack.c.l.b16 %v2779
        %v2795 = vunpack.c.l.b16 %v2780
        %v2796 = vpack.c.b16 %v2793, %v2792
        %v2797 = vpack.c.b16 %v2795, %v2794
        %v2801 = vsel %vm1609, %v2776, 0
        %2803 = vmatprep.subr.bf16.mxu0 0
        %2804 = vmatpush1.bf16.msra.mxu0 %v2796
        %2805 = vmatprep.subr.bf16.mxu0 0
        %2806 = vmatpush1.bf16.msra.mxu0 %v2797
        %2807 = vmatprep.subr.bf16.mxu0 0
        %2808 = vmatpush1.bf16.msra.mxu0 0
        %2809 = vmatprep.subr.bf16.mxu0 0
        %2810 = vmatpush1.bf16.msra.mxu0 0
        %2811 = vmatprep.subr.bf16.mxu0 0
        %2812 = vmatpush1.bf16.msra.mxu0 0
        %2813 = vmatprep.subr.bf16.mxu0 0
        %2814 = vmatpush1.bf16.msra.mxu0 0
        %2815 = vmatprep.subr.bf16.mxu0 0
        %2816 = vmatpush1.bf16.msra.mxu0 0
        %2817 = vmatprep.subr.bf16.mxu0 0
        %2818 = vmatpush1.bf16.msra.mxu0 0
        %2819 = vmatprep.subr.bf16.mxu0 0
        %2820 = vmatpush1.bf16.msra.mxu0 0
        %2821 = vmatprep.subr.bf16.mxu0 0
        %2822 = vmatpush1.bf16.msra.mxu0 0
        %2823 = vmatprep.subr.bf16.mxu0 0
        %2824 = vmatpush1.bf16.msra.mxu0 0
        %2825 = vmatprep.subr.bf16.mxu0 0
        %2826 = vmatpush1.bf16.msra.mxu0 0
        %2827 = vmatprep.subr.bf16.mxu0 0
        %2828 = vmatpush1.bf16.msra.mxu0 0
        %2829 = vmatprep.subr.bf16.mxu0 0
        %2830 = vmatpush1.bf16.msra.mxu0 0
        %2831 = vmatprep.subr.bf16.mxu0 0
        %2832 = vmatpush1.bf16.msra.mxu0 0
        %2833 = vmatprep.subr.bf16.mxu0 0
        %2834 = vmatpush1.bf16.msra.mxu0 0
        %2835 = vmatprep.mubr.bf16.mxu0 0
        %2836 = vmatmul.mubr.bf16.gmra.mrb[0].mxu0 %v2801
        %v2837 = vpop.f32.mrb[0].mxu0
        %v2838 = vadd.f32 %v2786, %v2837
        %v2839 = vpop.f32.mrb[0].mxu0
        %v2840 = vpop.f32.mrb[0].mxu0
        %v2841 = vpop.f32.mrb[0].mxu0
        %2842 = vdwg.mxu0
        %v2843 = vld [vmem:[%s21] sm:$0xf]
        %v2844 = vld [vmem:[%s21 + $0x4] sm:$0xf]
        %v2845 = vld [vmem:[%s21 + $0x8] sm:$0xf]
        %v2846 = vld [vmem:[%s21 + $0xc] sm:$0xf]
        %v2847 = vld [vmem:[#allocation12] sm:$0x1]
        %v2849 = vlaneseq
        %v2850 = vshrl.u32 %v2849, 7
        %v2851 = vsub.s32 0, %v2850
        %v2852 = vrot.slane %v2847, %v2851
        %v2858 = vunpack.c.l.b16 %v2843
        %v2859 = vunpack.c.l.b16 %v2844
        %v2860 = vunpack.c.l.b16 %v2845
        %v2861 = vunpack.c.l.b16 %v2846
        %v2862 = vpack.c.b16 %v2859, %v2858
        %v2863 = vpack.c.b16 %v2861, %v2860
        %v2867 = vsel %vm1609, %v1584, 0
        %2869 = vmatprep.subr.bf16.mxu0 0
        %2870 = vmatpush1.bf16.msra.mxu0 %v2862
        %2871 = vmatprep.subr.bf16.mxu0 0
        %2872 = vmatpush1.bf16.msra.mxu0 %v2863
        %2873 = vmatprep.subr.bf16.mxu0 0
        %2874 = vmatpush1.bf16.msra.mxu0 0
        %2875 = vmatprep.subr.bf16.mxu0 0
        %2876 = vmatpush1.bf16.msra.mxu0 0
        %2877 = vmatprep.subr.bf16.mxu0 0
        %2878 = vmatpush1.bf16.msra.mxu0 0
        %2879 = vmatprep.subr.bf16.mxu0 0
        %2880 = vmatpush1.bf16.msra.mxu0 0
        %2881 = vmatprep.subr.bf16.mxu0 0
        %2882 = vmatpush1.bf16.msra.mxu0 0
        %2883 = vmatprep.subr.bf16.mxu0 0
        %2884 = vmatpush1.bf16.msra.mxu0 0
        %2885 = vmatprep.subr.bf16.mxu0 0
        %2886 = vmatpush1.bf16.msra.mxu0 0
        %2887 = vmatprep.subr.bf16.mxu0 0
        %2888 = vmatpush1.bf16.msra.mxu0 0
        %2889 = vmatprep.subr.bf16.mxu0 0
        %2890 = vmatpush1.bf16.msra.mxu0 0
        %2891 = vmatprep.subr.bf16.mxu0 0
        %2892 = vmatpush1.bf16.msra.mxu0 0
        %2893 = vmatprep.subr.bf16.mxu0 0
        %2894 = vmatpush1.bf16.msra.mxu0 0
        %2895 = vmatprep.subr.bf16.mxu0 0
        %2896 = vmatpush1.bf16.msra.mxu0 0
        %2897 = vmatprep.subr.bf16.mxu0 0
        %2898 = vmatpush1.bf16.msra.mxu0 0
        %2899 = vmatprep.subr.bf16.mxu0 0
        %2900 = vmatpush1.bf16.msra.mxu0 0
        %2901 = vmatprep.mubr.bf16.mxu0 0
        %2902 = vmatmul.mubr.bf16.gmra.mrb[0].mxu0 %v2867
        %v2903 = vpop.f32.mrb[0].mxu0
        %v2904 = vadd.f32 %v2852, %v2903
        %v2905 = vpop.f32.mrb[0].mxu0
        %v2906 = vpop.f32.mrb[0].mxu0
        %v2907 = vpop.f32.mrb[0].mxu0
        %2908 = vdwg.mxu0
        %2910 = vrot.lane.b32.xlu0 %v2838, 120
        %v2911 = vpop.permute.xlu0 %2910
        %2913 = vrot.lane.b32.xlu0 %v2838, 112
        %v2914 = vpop.permute.xlu0 %2913
        %2916 = vrot.lane.b32.xlu0 %v2838, 104
        %v2917 = vpop.permute.xlu0 %2916
        %v2919 = vcombine.low %v2838, %v2914
        %v2920 = vcombine.high %v2838, %v2914
        %v2922 = vunpack.c.l.s4 1983009808
        %v2923 = vunpack.c.0.s8 %v2922
        %v2924 = vlaneseq
        %v2925 = vshrl.u32 %v2924, 7
        %v2926 = vsub.s32 %v2923, %v2925
        %v2927 = vrot.slane %v2919, %v2926
        %v2929 = vunpack.c.l.s4 1983009808
        %v2930 = vunpack.c.0.s8 %v2929
        %v2931 = vlaneseq
        %v2932 = vshrl.u32 %v2931, 7
        %v2933 = vsub.s32 %v2930, %v2932
        %v2934 = vrot.slane %v2920, %v2933
        %v2935 = vcombine.low %v2911, %v2917
        %v2936 = vcombine.high %v2911, %v2917
        %v2938 = vunpack.c.l.s4 1983009808
        %v2939 = vunpack.c.0.s8 %v2938
        %v2940 = vlaneseq
        %v2941 = vshrl.u32 %v2940, 7
        %v2942 = vsub.s32 %v2939, %v2941
        %v2943 = vrot.slane %v2935, %v2942
        %v2945 = vunpack.c.l.s4 1983009808
        %v2946 = vunpack.c.0.s8 %v2945
        %v2947 = vlaneseq
        %v2948 = vshrl.u32 %v2947, 7
        %v2949 = vsub.s32 %v2946, %v2948
        %v2950 = vrot.slane %v2936, %v2949
        %v2951 = vcombine.low %v2927, %v2943
        %v2952 = vcombine.high %v2927, %v2943
        %v2954 = vunpack.c.l.s4 1934713408
        %v2955 = vunpack.c.0.s8 %v2954
        %v2956 = vlaneseq
        %v2957 = vshrl.u32 %v2956, 7
        %v2958 = vsub.s32 %v2955, %v2957
        %v2959 = vrot.slane %v2951, %v2958
        %v2961 = vunpack.c.l.s4 1934713408
        %v2962 = vunpack.c.0.s8 %v2961
        %v2963 = vlaneseq
        %v2964 = vshrl.u32 %v2963, 7
        %v2965 = vsub.s32 %v2962, %v2964
        %v2966 = vrot.slane %v2952, %v2965
        %v2967 = vcombine.low %v2934, %v2950
        %v2968 = vcombine.high %v2934, %v2950
        %v2970 = vunpack.c.l.s4 1934713408
        %v2971 = vunpack.c.0.s8 %v2970
        %v2972 = vlaneseq
        %v2973 = vshrl.u32 %v2972, 7
        %v2974 = vsub.s32 %v2971, %v2973
        %v2975 = vrot.slane %v2967, %v2974
        %v2977 = vunpack.c.l.s4 1934713408
        %v2978 = vunpack.c.0.s8 %v2977
        %v2979 = vlaneseq
        %v2980 = vshrl.u32 %v2979, 7
        %v2981 = vsub.s32 %v2978, %v2980
        %v2982 = vrot.slane %v2968, %v2981
        %v2983 = vcombine.high %v2959, 0.0
        %v2984 = vcombine.high %v2966, 0.0
        %v2985 = vcombine.high %v2975, 0.0
        %v2986 = vcombine.high %v2982, 0.0
        %v2987 = vcombine.low %v2959, %v2966
        %v2989 = vunpack.c.l.s4 1983009808
        %v2990 = vunpack.c.0.s8 %v2989
        %v2991 = vlaneseq
        %v2992 = vshrl.u32 %v2991, 7
        %v2993 = vsub.s32 %v2990, %v2992
        %v2994 = vrot.slane %v2987, %v2993
        %v2995 = vcombine.low %v2983, %v2984
        %v2997 = vunpack.c.l.s4 1983009808
        %v2998 = vunpack.c.0.s8 %v2997
        %v2999 = vlaneseq
        %v3000 = vshrl.u32 %v2999, 7
        %v3001 = vsub.s32 %v2998, %v3000
        %v3002 = vrot.slane %v2995, %v3001
        %v3003 = vcombine.low %v2975, %v2982
        %v3005 = vunpack.c.l.s4 1983009808
        %v3006 = vunpack.c.0.s8 %v3005
        %v3007 = vlaneseq
        %v3008 = vshrl.u32 %v3007, 7
        %v3009 = vsub.s32 %v3006, %v3008
        %v3010 = vrot.slane %v3003, %v3009
        %v3011 = vcombine.low %v2985, %v2986
        %v3013 = vunpack.c.l.s4 1983009808
        %v3014 = vunpack.c.0.s8 %v3013
        %v3015 = vlaneseq
        %v3016 = vshrl.u32 %v3015, 7
        %v3017 = vsub.s32 %v3014, %v3016
        %v3018 = vrot.slane %v3011, %v3017
        %v3019 = vcombine.low %v2994, %v3002
        %v3020 = vcombine.high %v2994, %v3002
        %v3022 = vunpack.c.l.s4 1934713408
        %v3023 = vunpack.c.0.s8 %v3022
        %v3024 = vlaneseq
        %v3025 = vshrl.u32 %v3024, 7
        %v3026 = vsub.s32 %v3023, %v3025
        %v3027 = vrot.slane %v3019, %v3026
        %v3029 = vunpack.c.l.s4 1934713408
        %v3030 = vunpack.c.0.s8 %v3029
        %v3031 = vlaneseq
        %v3032 = vshrl.u32 %v3031, 7
        %v3033 = vsub.s32 %v3030, %v3032
        %v3034 = vrot.slane %v3020, %v3033
        %v3035 = vcombine.low %v3010, %v3018
        %v3036 = vcombine.high %v3010, %v3018
        %v3038 = vunpack.c.l.s4 1934713408
        %v3039 = vunpack.c.0.s8 %v3038
        %v3040 = vlaneseq
        %v3041 = vshrl.u32 %v3040, 7
        %v3042 = vsub.s32 %v3039, %v3041
        %v3043 = vrot.slane %v3035, %v3042
        %v3045 = vunpack.c.l.s4 1934713408
        %v3046 = vunpack.c.0.s8 %v3045
        %v3047 = vlaneseq
        %v3048 = vshrl.u32 %v3047, 7
        %v3049 = vsub.s32 %v3046, %v3048
        %v3050 = vrot.slane %v3036, %v3049
        %v3051 = vcombine.low %v3027, %v3043
        %v3052 = vcombine.high %v3027, %v3043
        %v3053 = vcombine.low %v3034, %v3050
        %v3054 = vcombine.high %v3034, %v3050
        %v3055 = vpack.c.bf16 %v3051, %v3051
        %v3056 = vpack.c.bf16 %v3052, %v3052
        %v3057 = vpack.c.bf16 %v3053, %v3053
        %v3058 = vpack.c.bf16 %v3054, %v3054
        %3060 = vrot.lane.b32.xlu0 %v2904, 120
        %v3061 = vpop.permute.xlu0 %3060
        %3063 = vrot.lane.b32.xlu0 %v2904, 112
        %v3064 = vpop.permute.xlu0 %3063
        %3066 = vrot.lane.b32.xlu0 %v2904, 104
        %v3067 = vpop.permute.xlu0 %3066
        %v3069 = vcombine.low %v2904, %v3064
        %v3070 = vcombine.high %v2904, %v3064
        %v3072 = vunpack.c.l.s4 1983009808
        %v3073 = vunpack.c.0.s8 %v3072
        %v3074 = vlaneseq
        %v3075 = vshrl.u32 %v3074, 7
        %v3076 = vsub.s32 %v3073, %v3075
        %v3077 = vrot.slane %v3069, %v3076
        %v3079 = vunpack.c.l.s4 1983009808
        %v3080 = vunpack.c.0.s8 %v3079
        %v3081 = vlaneseq
        %v3082 = vshrl.u32 %v3081, 7
        %v3083 = vsub.s32 %v3080, %v3082
        %v3084 = vrot.slane %v3070, %v3083
        %v3085 = vcombine.low %v3061, %v3067
        %v3086 = vcombine.high %v3061, %v3067
        %v3088 = vunpack.c.l.s4 1983009808
        %v3089 = vunpack.c.0.s8 %v3088
        %v3090 = vlaneseq
        %v3091 = vshrl.u32 %v3090, 7
        %v3092 = vsub.s32 %v3089, %v3091
        %v3093 = vrot.slane %v3085, %v3092
        %v3095 = vunpack.c.l.s4 1983009808
        %v3096 = vunpack.c.0.s8 %v3095
        %v3097 = vlaneseq
        %v3098 = vshrl.u32 %v3097, 7
        %v3099 = vsub.s32 %v3096, %v3098
        %v3100 = vrot.slane %v3086, %v3099
        %v3101 = vcombine.low %v3077, %v3093
        %v3102 = vcombine.high %v3077, %v3093
        %v3104 = vunpack.c.l.s4 1934713408
        %v3105 = vunpack.c.0.s8 %v3104
        %v3106 = vlaneseq
        %v3107 = vshrl.u32 %v3106, 7
        %v3108 = vsub.s32 %v3105, %v3107
        %v3109 = vrot.slane %v3101, %v3108
        %v3111 = vunpack.c.l.s4 1934713408
        %v3112 = vunpack.c.0.s8 %v3111
        %v3113 = vlaneseq
        %v3114 = vshrl.u32 %v3113, 7
        %v3115 = vsub.s32 %v3112, %v3114
        %v3116 = vrot.slane %v3102, %v3115
        %v3117 = vcombine.low %v3084, %v3100
        %v3118 = vcombine.high %v3084, %v3100
        %v3120 = vunpack.c.l.s4 1934713408
        %v3121 = vunpack.c.0.s8 %v3120
        %v3122 = vlaneseq
        %v3123 = vshrl.u32 %v3122, 7
        %v3124 = vsub.s32 %v3121, %v3123
        %v3125 = vrot.slane %v3117, %v3124
        %v3127 = vunpack.c.l.s4 1934713408
        %v3128 = vunpack.c.0.s8 %v3127
        %v3129 = vlaneseq
        %v3130 = vshrl.u32 %v3129, 7
        %v3131 = vsub.s32 %v3128, %v3130
        %v3132 = vrot.slane %v3118, %v3131
        %v3133 = vcombine.high %v3109, 0.0
        %v3134 = vcombine.high %v3116, 0.0
        %v3135 = vcombine.high %v3125, 0.0
        %v3136 = vcombine.high %v3132, 0.0
        %v3137 = vcombine.low %v3109, %v3116
        %v3139 = vunpack.c.l.s4 1983009808
        %v3140 = vunpack.c.0.s8 %v3139
        %v3141 = vlaneseq
        %v3142 = vshrl.u32 %v3141, 7
        %v3143 = vsub.s32 %v3140, %v3142
        %v3144 = vrot.slane %v3137, %v3143
        %v3145 = vcombine.low %v3133, %v3134
        %v3147 = vunpack.c.l.s4 1983009808
        %v3148 = vunpack.c.0.s8 %v3147
        %v3149 = vlaneseq
        %v3150 = vshrl.u32 %v3149, 7
        %v3151 = vsub.s32 %v3148, %v3150
        %v3152 = vrot.slane %v3145, %v3151
        %v3153 = vcombine.low %v3125, %v3132
        %v3155 = vunpack.c.l.s4 1983009808
        %v3156 = vunpack.c.0.s8 %v3155
        %v3157 = vlaneseq
        %v3158 = vshrl.u32 %v3157, 7
        %v3159 = vsub.s32 %v3156, %v3158
        %v3160 = vrot.slane %v3153, %v3159
        %v3161 = vcombine.low %v3135, %v3136
        %v3163 = vunpack.c.l.s4 1983009808
        %v3164 = vunpack.c.0.s8 %v3163
        %v3165 = vlaneseq
        %v3166 = vshrl.u32 %v3165, 7
        %v3167 = vsub.s32 %v3164, %v3166
        %v3168 = vrot.slane %v3161, %v3167
        %v3169 = vcombine.low %v3144, %v3152
        %v3170 = vcombine.high %v3144, %v3152
        %v3172 = vunpack.c.l.s4 1934713408
        %v3173 = vunpack.c.0.s8 %v3172
        %v3174 = vlaneseq
        %v3175 = vshrl.u32 %v3174, 7
        %v3176 = vsub.s32 %v3173, %v3175
        %v3177 = vrot.slane %v3169, %v3176
        %v3179 = vunpack.c.l.s4 1934713408
        %v3180 = vunpack.c.0.s8 %v3179
        %v3181 = vlaneseq
        %v3182 = vshrl.u32 %v3181, 7
        %v3183 = vsub.s32 %v3180, %v3182
        %v3184 = vrot.slane %v3170, %v3183
        %v3185 = vcombine.low %v3160, %v3168
        %v3186 = vcombine.high %v3160, %v3168
        %v3188 = vunpack.c.l.s4 1934713408
        %v3189 = vunpack.c.0.s8 %v3188
        %v3190 = vlaneseq
        %v3191 = vshrl.u32 %v3190, 7
        %v3192 = vsub.s32 %v3189, %v3191
        %v3193 = vrot.slane %v3185, %v3192
        %v3195 = vunpack.c.l.s4 1934713408
        %v3196 = vunpack.c.0.s8 %v3195
        %v3197 = vlaneseq
        %v3198 = vshrl.u32 %v3197, 7
        %v3199 = vsub.s32 %v3196, %v3198
        %v3200 = vrot.slane %v3186, %v3199
        %v3201 = vcombine.low %v3177, %v3193
        %v3202 = vcombine.high %v3177, %v3193
        %v3203 = vcombine.low %v3184, %v3200
        %v3204 = vcombine.high %v3184, %v3200
        %v3205 = vpack.c.bf16 %v3201, %v3201
        %v3206 = vpack.c.bf16 %v3202, %v3202
        %v3207 = vpack.c.bf16 %v3203, %v3203
        %v3208 = vpack.c.bf16 %v3204, %v3204
        %3209 = vrot.lane.b32.xlu0 %v2904, 96
        %v3210 = vpop.permute.xlu0 %3209
        %3211 = vrot.lane.b32.xlu0 %v3061, 96
        %v3212 = vpop.permute.xlu0 %3211
        %3213 = vrot.lane.b32.xlu0 %v3064, 96
        %v3214 = vpop.permute.xlu0 %3213
        %3215 = vrot.lane.b32.xlu0 %v3067, 96
        %v3216 = vpop.permute.xlu0 %3215
        %v3221 = vcombine.low %v3210, %v3214
        %v3222 = vcombine.high %v3210, %v3214
        %v3224 = vunpack.c.l.s4 1983009808
        %v3225 = vunpack.c.0.s8 %v3224
        %v3226 = vlaneseq
        %v3227 = vshrl.u32 %v3226, 7
        %v3228 = vsub.s32 %v3225, %v3227
        %v3229 = vrot.slane %v3221, %v3228
        %v3231 = vunpack.c.l.s4 1983009808
        %v3232 = vunpack.c.0.s8 %v3231
        %v3233 = vlaneseq
        %v3234 = vshrl.u32 %v3233, 7
        %v3235 = vsub.s32 %v3232, %v3234
        %v3236 = vrot.slane %v3222, %v3235
        %v3237 = vcombine.low %v3212, %v3216
        %v3238 = vcombine.high %v3212, %v3216
        %v3240 = vunpack.c.l.s4 1983009808
        %v3241 = vunpack.c.0.s8 %v3240
        %v3242 = vlaneseq
        %v3243 = vshrl.u32 %v3242, 7
        %v3244 = vsub.s32 %v3241, %v3243
        %v3245 = vrot.slane %v3237, %v3244
        %v3247 = vunpack.c.l.s4 1983009808
        %v3248 = vunpack.c.0.s8 %v3247
        %v3249 = vlaneseq
        %v3250 = vshrl.u32 %v3249, 7
        %v3251 = vsub.s32 %v3248, %v3250
        %v3252 = vrot.slane %v3238, %v3251
        %v3253 = vcombine.low %v3229, %v3245
        %v3254 = vcombine.high %v3229, %v3245
        %v3256 = vunpack.c.l.s4 1934713408
        %v3257 = vunpack.c.0.s8 %v3256
        %v3258 = vlaneseq
        %v3259 = vshrl.u32 %v3258, 7
        %v3260 = vsub.s32 %v3257, %v3259
        %v3261 = vrot.slane %v3253, %v3260
        %v3263 = vunpack.c.l.s4 1934713408
        %v3264 = vunpack.c.0.s8 %v3263
        %v3265 = vlaneseq
        %v3266 = vshrl.u32 %v3265, 7
        %v3267 = vsub.s32 %v3264, %v3266
        %v3268 = vrot.slane %v3254, %v3267
        %v3269 = vcombine.low %v3236, %v3252
        %v3270 = vcombine.high %v3236, %v3252
        %v3272 = vunpack.c.l.s4 1934713408
        %v3273 = vunpack.c.0.s8 %v3272
        %v3274 = vlaneseq
        %v3275 = vshrl.u32 %v3274, 7
        %v3276 = vsub.s32 %v3273, %v3275
        %v3277 = vrot.slane %v3269, %v3276
        %v3279 = vunpack.c.l.s4 1934713408
        %v3280 = vunpack.c.0.s8 %v3279
        %v3281 = vlaneseq
        %v3282 = vshrl.u32 %v3281, 7
        %v3283 = vsub.s32 %v3280, %v3282
        %v3284 = vrot.slane %v3270, %v3283
        %v3285 = vcombine.high %v3261, 0.0
        %v3286 = vcombine.high %v3268, 0.0
        %v3287 = vcombine.high %v3277, 0.0
        %v3288 = vcombine.high %v3284, 0.0
        %v3289 = vcombine.low %v3261, %v3268
        %v3291 = vunpack.c.l.s4 1983009808
        %v3292 = vunpack.c.0.s8 %v3291
        %v3293 = vlaneseq
        %v3294 = vshrl.u32 %v3293, 7
        %v3295 = vsub.s32 %v3292, %v3294
        %v3296 = vrot.slane %v3289, %v3295
        %v3297 = vcombine.low %v3285, %v3286
        %v3299 = vunpack.c.l.s4 1983009808
        %v3300 = vunpack.c.0.s8 %v3299
        %v3301 = vlaneseq
        %v3302 = vshrl.u32 %v3301, 7
        %v3303 = vsub.s32 %v3300, %v3302
        %v3304 = vrot.slane %v3297, %v3303
        %v3305 = vcombine.low %v3277, %v3284
        %v3307 = vunpack.c.l.s4 1983009808
        %v3308 = vunpack.c.0.s8 %v3307
        %v3309 = vlaneseq
        %v3310 = vshrl.u32 %v3309, 7
        %v3311 = vsub.s32 %v3308, %v3310
        %v3312 = vrot.slane %v3305, %v3311
        %v3313 = vcombine.low %v3287, %v3288
        %v3315 = vunpack.c.l.s4 1983009808
        %v3316 = vunpack.c.0.s8 %v3315
        %v3317 = vlaneseq
        %v3318 = vshrl.u32 %v3317, 7
        %v3319 = vsub.s32 %v3316, %v3318
        %v3320 = vrot.slane %v3313, %v3319
        %v3321 = vcombine.low %v3296, %v3304
        %v3322 = vcombine.high %v3296, %v3304
        %v3324 = vunpack.c.l.s4 1934713408
        %v3325 = vunpack.c.0.s8 %v3324
        %v3326 = vlaneseq
        %v3327 = vshrl.u32 %v3326, 7
        %v3328 = vsub.s32 %v3325, %v3327
        %v3329 = vrot.slane %v3321, %v3328
        %v3331 = vunpack.c.l.s4 1934713408
        %v3332 = vunpack.c.0.s8 %v3331
        %v3333 = vlaneseq
        %v3334 = vshrl.u32 %v3333, 7
        %v3335 = vsub.s32 %v3332, %v3334
        %v3336 = vrot.slane %v3322, %v3335
        %v3337 = vcombine.low %v3312, %v3320
        %v3338 = vcombine.high %v3312, %v3320
        %v3340 = vunpack.c.l.s4 1934713408
        %v3341 = vunpack.c.0.s8 %v3340
        %v3342 = vlaneseq
        %v3343 = vshrl.u32 %v3342, 7
        %v3344 = vsub.s32 %v3341, %v3343
        %v3345 = vrot.slane %v3337, %v3344
        %v3347 = vunpack.c.l.s4 1934713408
        %v3348 = vunpack.c.0.s8 %v3347
        %v3349 = vlaneseq
        %v3350 = vshrl.u32 %v3349, 7
        %v3351 = vsub.s32 %v3348, %v3350
        %v3352 = vrot.slane %v3338, %v3351
        %v3353 = vcombine.low %v3329, %v3345
        %v3354 = vcombine.high %v3329, %v3345
        %v3355 = vcombine.low %v3336, %v3352
        %v3356 = vcombine.high %v3336, %v3352
        %v3357 = vpack.c.bf16 %v3353, %v3353
        %v3358 = vpack.c.bf16 %v3354, %v3354
        %v3359 = vpack.c.bf16 %v3355, %v3355
        %v3360 = vpack.c.bf16 %v3356, %v3356
        %v3362 = vsel %vm2107, %v3055, 0
        %v3365 = vsel %vm2107, %v3205, 0
        %3367 = vmatprep.subr.bf16.mxu0 0
        %3368 = vmatpush1.bf16.xpose.msra.mxu0 %v3365
        %3369 = vmatprep.subr.bf16.mxu0 0
        %3370 = vmatpush1.bf16.xpose.msra.mxu0 0
        %3371 = vmatprep.subr.bf16.mxu0 0
        %3372 = vmatpush1.bf16.xpose.msra.mxu0 0
        %3373 = vmatprep.subr.bf16.mxu0 0
        %3374 = vmatpush1.bf16.xpose.msra.mxu0 0
        %3375 = vmatprep.subr.bf16.mxu0 0
        %3376 = vmatpush1.bf16.xpose.msra.mxu0 0
        %3377 = vmatprep.subr.bf16.mxu0 0
        %3378 = vmatpush1.bf16.xpose.msra.mxu0 0
        %3379 = vmatprep.subr.bf16.mxu0 0
        %3380 = vmatpush1.bf16.xpose.msra.mxu0 0
        %3381 = vmatprep.subr.bf16.mxu0 0
        %3382 = vmatpush1.bf16.xpose.msra.mxu0 0
        %3383 = vmatprep.subr.bf16.mxu0 0
        %3384 = vmatpush1.bf16.xpose.msra.mxu0 0
        %3385 = vmatprep.subr.bf16.mxu0 0
        %3386 = vmatpush1.bf16.xpose.msra.mxu0 0
        %3387 = vmatprep.subr.bf16.mxu0 0
        %3388 = vmatpush1.bf16.xpose.msra.mxu0 0
        %3389 = vmatprep.subr.bf16.mxu0 0
        %3390 = vmatpush1.bf16.xpose.msra.mxu0 0
        %3391 = vmatprep.subr.bf16.mxu0 0
        %3392 = vmatpush1.bf16.xpose.msra.mxu0 0
        %3393 = vmatprep.subr.bf16.mxu0 0
        %3394 = vmatpush1.bf16.xpose.msra.mxu0 0
        %3395 = vmatprep.subr.bf16.mxu0 0
        %3396 = vmatpush1.bf16.xpose.msra.mxu0 0
        %3397 = vmatprep.subr.bf16.mxu0 0
        %3398 = vmatpush1.bf16.xpose.msra.mxu0 0
        %3399 = vmatprep.mubr.bf16.mxu0 0
        %3400 = vmatmul.mubr.bf16.gmra.mrb[0].mxu0 %v3362
        %v3401 = vpop.f32.mrb[0].mxu0
        %v3402 = vadd.f32 0.0, %v3401
        %v3403 = vpop.f32.mrb[0].mxu0
        %v3404 = vpop.f32.mrb[0].mxu0
        %v3405 = vpop.f32.mrb[0].mxu0
        %3406 = vdwg.mxu0
        %v3408 = vsel %vm2107, %v3056, 0
        %v3411 = vsel %vm2107, %v3206, 0
        %3413 = vmatprep.subr.bf16.mxu0 0
        %3414 = vmatpush1.bf16.xpose.msra.mxu0 %v3411
        %3415 = vmatprep.subr.bf16.mxu0 0
        %3416 = vmatpush1.bf16.xpose.msra.mxu0 0
        %3417 = vmatprep.subr.bf16.mxu0 0
        %3418 = vmatpush1.bf16.xpose.msra.mxu0 0
        %3419 = vmatprep.subr.bf16.mxu0 0
        %3420 = vmatpush1.bf16.xpose.msra.mxu0 0
        %3421 = vmatprep.subr.bf16.mxu0 0
        %3422 = vmatpush1.bf16.xpose.msra.mxu0 0
        %3423 = vmatprep.subr.bf16.mxu0 0
        %3424 = vmatpush1.bf16.xpose.msra.mxu0 0
        %3425 = vmatprep.subr.bf16.mxu0 0
        %3426 = vmatpush1.bf16.xpose.msra.mxu0 0
        %3427 = vmatprep.subr.bf16.mxu0 0
        %3428 = vmatpush1.bf16.xpose.msra.mxu0 0
        %3429 = vmatprep.subr.bf16.mxu0 0
        %3430 = vmatpush1.bf16.xpose.msra.mxu0 0
        %3431 = vmatprep.subr.bf16.mxu0 0
        %3432 = vmatpush1.bf16.xpose.msra.mxu0 0
        %3433 = vmatprep.subr.bf16.mxu0 0
        %3434 = vmatpush1.bf16.xpose.msra.mxu0 0
        %3435 = vmatprep.subr.bf16.mxu0 0
        %3436 = vmatpush1.bf16.xpose.msra.mxu0 0
        %3437 = vmatprep.subr.bf16.mxu0 0
        %3438 = vmatpush1.bf16.xpose.msra.mxu0 0
        %3439 = vmatprep.subr.bf16.mxu0 0
        %3440 = vmatpush1.bf16.xpose.msra.mxu0 0
        %3441 = vmatprep.subr.bf16.mxu0 0
        %3442 = vmatpush1.bf16.xpose.msra.mxu0 0
        %3443 = vmatprep.subr.bf16.mxu0 0
        %3444 = vmatpush1.bf16.xpose.msra.mxu0 0
        %3445 = vmatprep.mubr.bf16.mxu0 0
        %3446 = vmatmul.mubr.bf16.gmra.mrb[0].mxu0 %v3408
        %v3447 = vpop.f32.mrb[0].mxu0
        %v3448 = vadd.f32 0.0, %v3447
        %v3449 = vpop.f32.mrb[0].mxu0
        %v3450 = vpop.f32.mrb[0].mxu0
        %v3451 = vpop.f32.mrb[0].mxu0
        %3452 = vdwg.mxu0
        %v3454 = vsel %vm2107, %v3057, 0
        %v3457 = vsel %vm2107, %v3207, 0
        %3459 = vmatprep.subr.bf16.mxu0 0
        %3460 = vmatpush1.bf16.xpose.msra.mxu0 %v3457
        %3461 = vmatprep.subr.bf16.mxu0 0
        %3462 = vmatpush1.bf16.xpose.msra.mxu0 0
        %3463 = vmatprep.subr.bf16.mxu0 0
        %3464 = vmatpush1.bf16.xpose.msra.mxu0 0
        %3465 = vmatprep.subr.bf16.mxu0 0
        %3466 = vmatpush1.bf16.xpose.msra.mxu0 0
        %3467 = vmatprep.subr.bf16.mxu0 0
        %3468 = vmatpush1.bf16.xpose.msra.mxu0 0
        %3469 = vmatprep.subr.bf16.mxu0 0
        %3470 = vmatpush1.bf16.xpose.msra.mxu0 0
        %3471 = vmatprep.subr.bf16.mxu0 0
        %3472 = vmatpush1.bf16.xpose.msra.mxu0 0
        %3473 = vmatprep.subr.bf16.mxu0 0
        %3474 = vmatpush1.bf16.xpose.msra.mxu0 0
        %3475 = vmatprep.subr.bf16.mxu0 0
        %3476 = vmatpush1.bf16.xpose.msra.mxu0 0
        %3477 = vmatprep.subr.bf16.mxu0 0
        %3478 = vmatpush1.bf16.xpose.msra.mxu0 0
        %3479 = vmatprep.subr.bf16.mxu0 0
        %3480 = vmatpush1.bf16.xpose.msra.mxu0 0
        %3481 = vmatprep.subr.bf16.mxu0 0
        %3482 = vmatpush1.bf16.xpose.msra.mxu0 0
        %3483 = vmatprep.subr.bf16.mxu0 0
        %3484 = vmatpush1.bf16.xpose.msra.mxu0 0
        %3485 = vmatprep.subr.bf16.mxu0 0
        %3486 = vmatpush1.bf16.xpose.msra.mxu0 0
        %3487 = vmatprep.subr.bf16.mxu0 0
        %3488 = vmatpush1.bf16.xpose.msra.mxu0 0
        %3489 = vmatprep.subr.bf16.mxu0 0
        %3490 = vmatpush1.bf16.xpose.msra.mxu0 0
        %3491 = vmatprep.mubr.bf16.mxu0 0
        %3492 = vmatmul.mubr.bf16.gmra.mrb[0].mxu0 %v3454
        %v3493 = vpop.f32.mrb[0].mxu0
        %v3494 = vadd.f32 0.0, %v3493
        %v3495 = vpop.f32.mrb[0].mxu0
        %v3496 = vpop.f32.mrb[0].mxu0
        %v3497 = vpop.f32.mrb[0].mxu0
        %3498 = vdwg.mxu0
        %v3500 = vsel %vm2107, %v3058, 0
        %v3503 = vsel %vm2107, %v3208, 0
        %3505 = vmatprep.subr.bf16.mxu0 0
        %3506 = vmatpush1.bf16.xpose.msra.mxu0 %v3503
        %3507 = vmatprep.subr.bf16.mxu0 0
        %3508 = vmatpush1.bf16.xpose.msra.mxu0 0
        %3509 = vmatprep.subr.bf16.mxu0 0
        %3510 = vmatpush1.bf16.xpose.msra.mxu0 0
        %3511 = vmatprep.subr.bf16.mxu0 0
        %3512 = vmatpush1.bf16.xpose.msra.mxu0 0
        %3513 = vmatprep.subr.bf16.mxu0 0
        %3514 = vmatpush1.bf16.xpose.msra.mxu0 0
        %3515 = vmatprep.subr.bf16.mxu0 0
        %3516 = vmatpush1.bf16.xpose.msra.mxu0 0
        %3517 = vmatprep.subr.bf16.mxu0 0
        %3518 = vmatpush1.bf16.xpose.msra.mxu0 0
        %3519 = vmatprep.subr.bf16.mxu0 0
        %3520 = vmatpush1.bf16.xpose.msra.mxu0 0
        %3521 = vmatprep.subr.bf16.mxu0 0
        %3522 = vmatpush1.bf16.xpose.msra.mxu0 0
        %3523 = vmatprep.subr.bf16.mxu0 0
        %3524 = vmatpush1.bf16.xpose.msra.mxu0 0
        %3525 = vmatprep.subr.bf16.mxu0 0
        %3526 = vmatpush1.bf16.xpose.msra.mxu0 0
        %3527 = vmatprep.subr.bf16.mxu0 0
        %3528 = vmatpush1.bf16.xpose.msra.mxu0 0
        %3529 = vmatprep.subr.bf16.mxu0 0
        %3530 = vmatpush1.bf16.xpose.msra.mxu0 0
        %3531 = vmatprep.subr.bf16.mxu0 0
        %3532 = vmatpush1.bf16.xpose.msra.mxu0 0
        %3533 = vmatprep.subr.bf16.mxu0 0
        %3534 = vmatpush1.bf16.xpose.msra.mxu0 0
        %3535 = vmatprep.subr.bf16.mxu0 0
        %3536 = vmatpush1.bf16.xpose.msra.mxu0 0
        %3537 = vmatprep.mubr.bf16.mxu0 0
        %3538 = vmatmul.mubr.bf16.gmra.mrb[0].mxu0 %v3500
        %v3539 = vpop.f32.mrb[0].mxu0
        %v3540 = vadd.f32 0.0, %v3539
        %v3541 = vpop.f32.mrb[0].mxu0
        %v3542 = vpop.f32.mrb[0].mxu0
        %v3543 = vpop.f32.mrb[0].mxu0
        %3544 = vdwg.mxu0
        %v3545 = vsel %vm2107, %v3402, -inf
        %3546 = vmax.xlane.f32.xlu0 %v3545
        %v3547 = vpop.xlane.xlu0 %3546
        %v3548 = vsel %vm2107, %v3448, -inf
        %3549 = vmax.xlane.f32.xlu0 %v3548
        %v3550 = vpop.xlane.xlu0 %3549
        %v3551 = vsel %vm2107, %v3494, -inf
        %3552 = vmax.xlane.f32.xlu0 %v3551
        %v3553 = vpop.xlane.xlu0 %3552
        %v3554 = vsel %vm2107, %v3540, -inf
        %3555 = vmax.xlane.f32.xlu0 %v3554
        %v3556 = vpop.xlane.xlu0 %3555
        %v3557 = vsub.f32 %v3402, %v3547
        %v3558 = vsub.f32 %v3448, %v3550
        %v3559 = vsub.f32 %v3494, %v3553
        %v3560 = vsub.f32 %v3540, %v3556
        %v3561 = vmul.f32 %v3557, 1.442695
        %v3562 = vpow.pop %v3561
        %v3563 = vmul.f32 %v3558, 1.442695
        %v3564 = vpow.pop %v3563
        %v3565 = vmul.f32 %v3559, 1.442695
        %v3566 = vpow.pop %v3565
        %v3567 = vmul.f32 %v3560, 1.442695
        %v3568 = vpow.pop %v3567
        %v3569 = vsel %vm2107, %v3562, 0.0
        %3570 = vadd.xlane.f32.xlu0 %v3569
        %v3571 = vpop.xlane.xlu0 %3570
        %v3572 = vsel %vm2107, %v3564, 0.0
        %3573 = vadd.xlane.f32.xlu0 %v3572
        %v3574 = vpop.xlane.xlu0 %3573
        %v3575 = vsel %vm2107, %v3566, 0.0
        %3576 = vadd.xlane.f32.xlu0 %v3575
        %v3577 = vpop.xlane.xlu0 %3576
        %v3578 = vsel %vm2107, %v3568, 0.0
        %3579 = vadd.xlane.f32.xlu0 %v3578
        %v3580 = vpop.xlane.xlu0 %3579
        %v3581 = vrcp.pop %v3571
        %v3582 = vrcp.pop %v3574
        %v3583 = vrcp.pop %v3577
        %v3584 = vrcp.pop %v3580
        %v3585 = vmul.f32 %v3562, %v3581
        %v3586 = vmul.f32 %v3564, %v3582
        %v3587 = vmul.f32 %v3566, %v3583
        %v3588 = vmul.f32 %v3568, %v3584
        %v3589 = vpack.c.bf16 %v3585, %v3585
        %v3590 = vpack.c.bf16 %v3586, %v3586
        %v3591 = vpack.c.bf16 %v3587, %v3587
        %v3592 = vpack.c.bf16 %v3588, %v3588
        %v3594 = vsel %vm2107, %v3589, 0
        %v3597 = vsel %vm2343, %v3357, 0
        %3599 = vmatprep.subr.bf16.mxu0 0
        %3600 = vmatpush1.bf16.msra.mxu0 %v3597
        %3601 = vmatprep.subr.bf16.mxu0 0
        %3602 = vmatpush1.bf16.msra.mxu0 0
        %3603 = vmatprep.subr.bf16.mxu0 0
        %3604 = vmatpush1.bf16.msra.mxu0 0
        %3605 = vmatprep.subr.bf16.mxu0 0
        %3606 = vmatpush1.bf16.msra.mxu0 0
        %3607 = vmatprep.subr.bf16.mxu0 0
        %3608 = vmatpush1.bf16.msra.mxu0 0
        %3609 = vmatprep.subr.bf16.mxu0 0
        %3610 = vmatpush1.bf16.msra.mxu0 0
        %3611 = vmatprep.subr.bf16.mxu0 0
        %3612 = vmatpush1.bf16.msra.mxu0 0
        %3613 = vmatprep.subr.bf16.mxu0 0
        %3614 = vmatpush1.bf16.msra.mxu0 0
        %3615 = vmatprep.subr.bf16.mxu0 0
        %3616 = vmatpush1.bf16.msra.mxu0 0
        %3617 = vmatprep.subr.bf16.mxu0 0
        %3618 = vmatpush1.bf16.msra.mxu0 0
        %3619 = vmatprep.subr.bf16.mxu0 0
        %3620 = vmatpush1.bf16.msra.mxu0 0
        %3621 = vmatprep.subr.bf16.mxu0 0
        %3622 = vmatpush1.bf16.msra.mxu0 0
        %3623 = vmatprep.subr.bf16.mxu0 0
        %3624 = vmatpush1.bf16.msra.mxu0 0
        %3625 = vmatprep.subr.bf16.mxu0 0
        %3626 = vmatpush1.bf16.msra.mxu0 0
        %3627 = vmatprep.subr.bf16.mxu0 0
        %3628 = vmatpush1.bf16.msra.mxu0 0
        %3629 = vmatprep.subr.bf16.mxu0 0
        %3630 = vmatpush1.bf16.msra.mxu0 0
        %3631 = vmatprep.mubr.bf16.mxu0 0
        %3632 = vmatmul.mubr.bf16.gmra.mrb[0].mxu0 %v3594
        %v3633 = vpop.f32.mrb[0].mxu0
        %v3634 = vadd.f32 0.0, %v3633
        %v3635 = vpop.f32.mrb[0].mxu0
        %v3636 = vpop.f32.mrb[0].mxu0
        %v3637 = vpop.f32.mrb[0].mxu0
        %3638 = vdwg.mxu0
        %v3640 = vsel %vm2107, %v3590, 0
        %v3643 = vsel %vm2343, %v3358, 0
        %3645 = vmatprep.subr.bf16.mxu0 0
        %3646 = vmatpush1.bf16.msra.mxu0 %v3643
        %3647 = vmatprep.subr.bf16.mxu0 0
        %3648 = vmatpush1.bf16.msra.mxu0 0
        %3649 = vmatprep.subr.bf16.mxu0 0
        %3650 = vmatpush1.bf16.msra.mxu0 0
        %3651 = vmatprep.subr.bf16.mxu0 0
        %3652 = vmatpush1.bf16.msra.mxu0 0
        %3653 = vmatprep.subr.bf16.mxu0 0
        %3654 = vmatpush1.bf16.msra.mxu0 0
        %3655 = vmatprep.subr.bf16.mxu0 0
        %3656 = vmatpush1.bf16.msra.mxu0 0
        %3657 = vmatprep.subr.bf16.mxu0 0
        %3658 = vmatpush1.bf16.msra.mxu0 0
        %3659 = vmatprep.subr.bf16.mxu0 0
        %3660 = vmatpush1.bf16.msra.mxu0 0
        %3661 = vmatprep.subr.bf16.mxu0 0
        %3662 = vmatpush1.bf16.msra.mxu0 0
        %3663 = vmatprep.subr.bf16.mxu0 0
        %3664 = vmatpush1.bf16.msra.mxu0 0
        %3665 = vmatprep.subr.bf16.mxu0 0
        %3666 = vmatpush1.bf16.msra.mxu0 0
        %3667 = vmatprep.subr.bf16.mxu0 0
        %3668 = vmatpush1.bf16.msra.mxu0 0
        %3669 = vmatprep.subr.bf16.mxu0 0
        %3670 = vmatpush1.bf16.msra.mxu0 0
        %3671 = vmatprep.subr.bf16.mxu0 0
        %3672 = vmatpush1.bf16.msra.mxu0 0
        %3673 = vmatprep.subr.bf16.mxu0 0
        %3674 = vmatpush1.bf16.msra.mxu0 0
        %3675 = vmatprep.subr.bf16.mxu0 0
        %3676 = vmatpush1.bf16.msra.mxu0 0
        %3677 = vmatprep.mubr.bf16.mxu0 0
        %3678 = vmatmul.mubr.bf16.gmra.mrb[0].mxu0 %v3640
        %v3679 = vpop.f32.mrb[0].mxu0
        %v3680 = vadd.f32 0.0, %v3679
        %v3681 = vpop.f32.mrb[0].mxu0
        %v3682 = vpop.f32.mrb[0].mxu0
        %v3683 = vpop.f32.mrb[0].mxu0
        %3684 = vdwg.mxu0
        %v3686 = vsel %vm2107, %v3591, 0
        %v3689 = vsel %vm2343, %v3359, 0
        %3691 = vmatprep.subr.bf16.mxu0 0
        %3692 = vmatpush1.bf16.msra.mxu0 %v3689
        %3693 = vmatprep.subr.bf16.mxu0 0
        %3694 = vmatpush1.bf16.msra.mxu0 0
        %3695 = vmatprep.subr.bf16.mxu0 0
        %3696 = vmatpush1.bf16.msra.mxu0 0
        %3697 = vmatprep.subr.bf16.mxu0 0
        %3698 = vmatpush1.bf16.msra.mxu0 0
        %3699 = vmatprep.subr.bf16.mxu0 0
        %3700 = vmatpush1.bf16.msra.mxu0 0
        %3701 = vmatprep.subr.bf16.mxu0 0
        %3702 = vmatpush1.bf16.msra.mxu0 0
        %3703 = vmatprep.subr.bf16.mxu0 0
        %3704 = vmatpush1.bf16.msra.mxu0 0
        %3705 = vmatprep.subr.bf16.mxu0 0
        %3706 = vmatpush1.bf16.msra.mxu0 0
        %3707 = vmatprep.subr.bf16.mxu0 0
        %3708 = vmatpush1.bf16.msra.mxu0 0
        %3709 = vmatprep.subr.bf16.mxu0 0
        %3710 = vmatpush1.bf16.msra.mxu0 0
        %3711 = vmatprep.subr.bf16.mxu0 0
        %3712 = vmatpush1.bf16.msra.mxu0 0
        %3713 = vmatprep.subr.bf16.mxu0 0
        %3714 = vmatpush1.bf16.msra.mxu0 0
        %3715 = vmatprep.subr.bf16.mxu0 0
        %3716 = vmatpush1.bf16.msra.mxu0 0
        %3717 = vmatprep.subr.bf16.mxu0 0
        %3718 = vmatpush1.bf16.msra.mxu0 0
        %3719 = vmatprep.subr.bf16.mxu0 0
        %3720 = vmatpush1.bf16.msra.mxu0 0
        %3721 = vmatprep.subr.bf16.mxu0 0
        %3722 = vmatpush1.bf16.msra.mxu0 0
        %3723 = vmatprep.mubr.bf16.mxu0 0
        %3724 = vmatmul.mubr.bf16.gmra.mrb[0].mxu0 %v3686
        %v3725 = vpop.f32.mrb[0].mxu0
        %v3726 = vadd.f32 0.0, %v3725
        %v3727 = vpop.f32.mrb[0].mxu0
        %v3728 = vpop.f32.mrb[0].mxu0
        %v3729 = vpop.f32.mrb[0].mxu0
        %3730 = vdwg.mxu0
        %v3732 = vsel %vm2107, %v3592, 0
        %v3735 = vsel %vm2343, %v3360, 0
        %3737 = vmatprep.subr.bf16.mxu0 0
        %3738 = vmatpush1.bf16.msra.mxu0 %v3735
        %3739 = vmatprep.subr.bf16.mxu0 0
        %3740 = vmatpush1.bf16.msra.mxu0 0
        %3741 = vmatprep.subr.bf16.mxu0 0
        %3742 = vmatpush1.bf16.msra.mxu0 0
        %3743 = vmatprep.subr.bf16.mxu0 0
        %3744 = vmatpush1.bf16.msra.mxu0 0
        %3745 = vmatprep.subr.bf16.mxu0 0
        %3746 = vmatpush1.bf16.msra.mxu0 0
        %3747 = vmatprep.subr.bf16.mxu0 0
        %3748 = vmatpush1.bf16.msra.mxu0 0
        %3749 = vmatprep.subr.bf16.mxu0 0
        %3750 = vmatpush1.bf16.msra.mxu0 0
        %3751 = vmatprep.subr.bf16.mxu0 0
        %3752 = vmatpush1.bf16.msra.mxu0 0
        %3753 = vmatprep.subr.bf16.mxu0 0
        %3754 = vmatpush1.bf16.msra.mxu0 0
        %3755 = vmatprep.subr.bf16.mxu0 0
        %3756 = vmatpush1.bf16.msra.mxu0 0
        %3757 = vmatprep.subr.bf16.mxu0 0
        %3758 = vmatpush1.bf16.msra.mxu0 0
        %3759 = vmatprep.subr.bf16.mxu0 0
        %3760 = vmatpush1.bf16.msra.mxu0 0
        %3761 = vmatprep.subr.bf16.mxu0 0
        %3762 = vmatpush1.bf16.msra.mxu0 0
        %3763 = vmatprep.subr.bf16.mxu0 0
        %3764 = vmatpush1.bf16.msra.mxu0 0
        %3765 = vmatprep.subr.bf16.mxu0 0
        %3766 = vmatpush1.bf16.msra.mxu0 0
        %3767 = vmatprep.subr.bf16.mxu0 0
        %3768 = vmatpush1.bf16.msra.mxu0 0
        %3769 = vmatprep.mubr.bf16.mxu0 0
        %3770 = vmatmul.mubr.bf16.gmra.mrb[0].mxu0 %v3732
        %v3771 = vpop.f32.mrb[0].mxu0
        %v3772 = vadd.f32 0.0, %v3771
        %v3773 = vpop.f32.mrb[0].mxu0
        %v3774 = vpop.f32.mrb[0].mxu0
        %v3775 = vpop.f32.mrb[0].mxu0
        %3776 = vdwg.mxu0
        %v3777 = vcombine.low %v3634, %v3726
        %v3778 = vcombine.high %v3634, %v3726
        %v3780 = vunpack.c.l.s4 1983009808
        %v3781 = vunpack.c.0.s8 %v3780
        %v3782 = vlaneseq
        %v3783 = vshrl.u32 %v3782, 7
        %v3784 = vsub.s32 %v3781, %v3783
        %v3785 = vrot.slane %v3777, %v3784
        %v3787 = vunpack.c.l.s4 1983009808
        %v3788 = vunpack.c.0.s8 %v3787
        %v3789 = vlaneseq
        %v3790 = vshrl.u32 %v3789, 7
        %v3791 = vsub.s32 %v3788, %v3790
        %v3792 = vrot.slane %v3778, %v3791
        %v3793 = vcombine.low %v3680, %v3772
        %v3794 = vcombine.high %v3680, %v3772
        %v3796 = vunpack.c.l.s4 1983009808
        %v3797 = vunpack.c.0.s8 %v3796
        %v3798 = vlaneseq
        %v3799 = vshrl.u32 %v3798, 7
        %v3800 = vsub.s32 %v3797, %v3799
        %v3801 = vrot.slane %v3793, %v3800
        %v3803 = vunpack.c.l.s4 1983009808
        %v3804 = vunpack.c.0.s8 %v3803
        %v3805 = vlaneseq
        %v3806 = vshrl.u32 %v3805, 7
        %v3807 = vsub.s32 %v3804, %v3806
        %v3808 = vrot.slane %v3794, %v3807
        %v3809 = vcombine.low %v3785, %v3801
        %v3810 = vcombine.high %v3785, %v3801
        %v3812 = vunpack.c.l.s4 1934713408
        %v3813 = vunpack.c.0.s8 %v3812
        %v3814 = vlaneseq
        %v3815 = vshrl.u32 %v3814, 7
        %v3816 = vsub.s32 %v3813, %v3815
        %v3817 = vrot.slane %v3809, %v3816
        %v3819 = vunpack.c.l.s4 1934713408
        %v3820 = vunpack.c.0.s8 %v3819
        %v3821 = vlaneseq
        %v3822 = vshrl.u32 %v3821, 7
        %v3823 = vsub.s32 %v3820, %v3822
        %v3824 = vrot.slane %v3810, %v3823
        %v3825 = vcombine.low %v3792, %v3808
        %v3826 = vcombine.high %v3792, %v3808
        %v3828 = vunpack.c.l.s4 1934713408
        %v3829 = vunpack.c.0.s8 %v3828
        %v3830 = vlaneseq
        %v3831 = vshrl.u32 %v3830, 7
        %v3832 = vsub.s32 %v3829, %v3831
        %v3833 = vrot.slane %v3825, %v3832
        %v3835 = vunpack.c.l.s4 1934713408
        %v3836 = vunpack.c.0.s8 %v3835
        %v3837 = vlaneseq
        %v3838 = vshrl.u32 %v3837, 7
        %v3839 = vsub.s32 %v3836, %v3838
        %v3840 = vrot.slane %v3826, %v3839
        %v3841 = vcombine.high %v3817, 0.0
        %v3842 = vcombine.high %v3824, 0.0
        %v3843 = vcombine.high %v3833, 0.0
        %v3844 = vcombine.high %v3840, 0.0
        %v3845 = vcombine.low %v3817, %v3824
        %v3847 = vunpack.c.l.s4 1983009808
        %v3848 = vunpack.c.0.s8 %v3847
        %v3849 = vlaneseq
        %v3850 = vshrl.u32 %v3849, 7
        %v3851 = vsub.s32 %v3848, %v3850
        %v3852 = vrot.slane %v3845, %v3851
        %v3853 = vcombine.low %v3841, %v3842
        %v3855 = vunpack.c.l.s4 1983009808
        %v3856 = vunpack.c.0.s8 %v3855
        %v3857 = vlaneseq
        %v3858 = vshrl.u32 %v3857, 7
        %v3859 = vsub.s32 %v3856, %v3858
        %v3860 = vrot.slane %v3853, %v3859
        %v3861 = vcombine.low %v3833, %v3840
        %v3863 = vunpack.c.l.s4 1983009808
        %v3864 = vunpack.c.0.s8 %v3863
        %v3865 = vlaneseq
        %v3866 = vshrl.u32 %v3865, 7
        %v3867 = vsub.s32 %v3864, %v3866
        %v3868 = vrot.slane %v3861, %v3867
        %v3869 = vcombine.low %v3843, %v3844
        %v3871 = vunpack.c.l.s4 1983009808
        %v3872 = vunpack.c.0.s8 %v3871
        %v3873 = vlaneseq
        %v3874 = vshrl.u32 %v3873, 7
        %v3875 = vsub.s32 %v3872, %v3874
        %v3876 = vrot.slane %v3869, %v3875
        %v3877 = vcombine.low %v3852, %v3860
        %v3878 = vcombine.high %v3852, %v3860
        %v3880 = vunpack.c.l.s4 1934713408
        %v3881 = vunpack.c.0.s8 %v3880
        %v3882 = vlaneseq
        %v3883 = vshrl.u32 %v3882, 7
        %v3884 = vsub.s32 %v3881, %v3883
        %v3885 = vrot.slane %v3877, %v3884
        %v3887 = vunpack.c.l.s4 1934713408
        %v3888 = vunpack.c.0.s8 %v3887
        %v3889 = vlaneseq
        %v3890 = vshrl.u32 %v3889, 7
        %v3891 = vsub.s32 %v3888, %v3890
        %v3892 = vrot.slane %v3878, %v3891
        %v3893 = vcombine.low %v3868, %v3876
        %v3894 = vcombine.high %v3868, %v3876
        %v3896 = vunpack.c.l.s4 1934713408
        %v3897 = vunpack.c.0.s8 %v3896
        %v3898 = vlaneseq
        %v3899 = vshrl.u32 %v3898, 7
        %v3900 = vsub.s32 %v3897, %v3899
        %v3901 = vrot.slane %v3893, %v3900
        %v3903 = vunpack.c.l.s4 1934713408
        %v3904 = vunpack.c.0.s8 %v3903
        %v3905 = vlaneseq
        %v3906 = vshrl.u32 %v3905, 7
        %v3907 = vsub.s32 %v3904, %v3906
        %v3908 = vrot.slane %v3894, %v3907
        %v3909 = vcombine.low %v3885, %v3901
        %v3910 = vcombine.high %v3885, %v3901
        %v3911 = vcombine.low %v3892, %v3908
        %v3912 = vcombine.high %v3892, %v3908
        %3914 = vrot.lane.b32.xlu0 %v3910, 8
        %v3915 = vpop.permute.xlu0 %3914
        %3918 = vrot.lane.b32.xlu0 %v3911, 16
        %v3919 = vpop.permute.xlu0 %3918
        %3922 = vrot.lane.b32.xlu0 %v3912, 24
        %v3923 = vpop.permute.xlu0 %3922
        %v3925 = vsel %vm2107, %v3909, %v3915
        %v3926 = vsel %vm2674, %v3925, %v3919
        %v3927 = vsel %vm2676, %v3926, %v3923
        %v3928 = vpack.c.bf16 %v3927, %v3927
        %v3929 = vld [vmem:[%s25] sm:$0xf]
        %v3930 = vld [vmem:[%s25 + $0x4] sm:$0xf]
        %v3931 = vld [vmem:[%s25 + $0x8] sm:$0xf]
        %v3932 = vld [vmem:[%s25 + $0xc] sm:$0xf]
        %v3933 = vld [vmem:[#allocation13] sm:$0x1]
        %v3935 = vlaneseq
        %v3936 = vshrl.u32 %v3935, 7
        %v3937 = vsub.s32 0, %v3936
        %v3938 = vrot.slane %v3933, %v3937
        %v3944 = vunpack.c.l.b16 %v3929
        %v3945 = vunpack.c.l.b16 %v3930
        %v3946 = vunpack.c.l.b16 %v3931
        %v3947 = vunpack.c.l.b16 %v3932
        %v3948 = vpack.c.b16 %v3945, %v3944
        %v3949 = vpack.c.b16 %v3947, %v3946
        %v3953 = vsel %vm1609, %v3928, 0
        %3955 = vmatprep.subr.bf16.mxu0 0
        %3956 = vmatpush1.bf16.msra.mxu0 %v3948
        %3957 = vmatprep.subr.bf16.mxu0 0
        %3958 = vmatpush1.bf16.msra.mxu0 %v3949
        %3959 = vmatprep.subr.bf16.mxu0 0
        %3960 = vmatpush1.bf16.msra.mxu0 0
        %3961 = vmatprep.subr.bf16.mxu0 0
        %3962 = vmatpush1.bf16.msra.mxu0 0
        %3963 = vmatprep.subr.bf16.mxu0 0
        %3964 = vmatpush1.bf16.msra.mxu0 0
        %3965 = vmatprep.subr.bf16.mxu0 0
        %3966 = vmatpush1.bf16.msra.mxu0 0
        %3967 = vmatprep.subr.bf16.mxu0 0
        %3968 = vmatpush1.bf16.msra.mxu0 0
        %3969 = vmatprep.subr.bf16.mxu0 0
        %3970 = vmatpush1.bf16.msra.mxu0 0
        %3971 = vmatprep.subr.bf16.mxu0 0
        %3972 = vmatpush1.bf16.msra.mxu0 0
        %3973 = vmatprep.subr.bf16.mxu0 0
        %3974 = vmatpush1.bf16.msra.mxu0 0
        %3975 = vmatprep.subr.bf16.mxu0 0
        %3976 = vmatpush1.bf16.msra.mxu0 0
        %3977 = vmatprep.subr.bf16.mxu0 0
        %3978 = vmatpush1.bf16.msra.mxu0 0
        %3979 = vmatprep.subr.bf16.mxu0 0
        %3980 = vmatpush1.bf16.msra.mxu0 0
        %3981 = vmatprep.subr.bf16.mxu0 0
        %3982 = vmatpush1.bf16.msra.mxu0 0
        %3983 = vmatprep.subr.bf16.mxu0 0
        %3984 = vmatpush1.bf16.msra.mxu0 0
        %3985 = vmatprep.subr.bf16.mxu0 0
        %3986 = vmatpush1.bf16.msra.mxu0 0
        %3987 = vmatprep.mubr.bf16.mxu0 0
        %3988 = vmatmul.mubr.bf16.gmra.mrb[0].mxu0 %v3953
        %v3989 = vpop.f32.mrb[0].mxu0
        %v3990 = vadd.f32 %v3938, %v3989
        %v3991 = vpop.f32.mrb[0].mxu0
        %v3992 = vpop.f32.mrb[0].mxu0
        %v3993 = vpop.f32.mrb[0].mxu0
        %3994 = vdwg.mxu0
        %v3995 = vld [vmem:[#allocation15] sm:$0x1]
        %v3996 = vld [vmem:[#allocation16] sm:$0x1]
        %v3997 = vadd.f32 %v2775, %v3990
        %v3998 = vsel %vm1609, %v3997, 0.0
        %3999 = vadd.xlane.f32.xlu0 %v3998
        %v4000 = vpop.xlane.xlu0 %3999
        %v4001 = vmul.f32 %v4000, %v2751
        %v4002 = vsub.f32 %v3997, %v4001
        %v4003 = vmul.f32 %v4002, %v4002
        %v4004 = vsel %vm1609, %v4003, 0.0
        %4005 = vadd.xlane.f32.xlu0 %v4004
        %v4006 = vpop.xlane.xlu0 %4005
        %v4007 = vmul.f32 %v4006, %v2751
        %v4008 = vadd.f32 %v4007, 1e-05
        %v4009 = vrsqrt.pop %v4008
        %v4010 = vmul.f32 %v4002, %v4009
        %v4012 = vlaneseq
        %v4013 = vshrl.u32 %v4012, 7
        %v4014 = vsub.s32 0, %v4013
        %v4015 = vrot.slane %v3995, %v4014
        %v4017 = vmul.f32 %v4010, %v4015
        %v4019 = vlaneseq
        %v4020 = vshrl.u32 %v4019, 7
        %v4021 = vsub.s32 0, %v4020
        %v4022 = vrot.slane %v3996, %v4021
        %v4024 = vadd.f32 %v4017, %v4022
        %v4025 = vpack.c.bf16 %v4024, %v4024
        %v4026 = vld [vmem:[%s33] sm:$0xf]
        %v4027 = vld [vmem:[%s33 + $0x4] sm:$0xf]
        %v4028 = vld [vmem:[%s33 + $0x8] sm:$0xf]
        %v4029 = vld [vmem:[%s33 + $0xc] sm:$0xf]
        %v4030 = vld [vmem:[#allocation18] sm:$0x1]
        %v4032 = vlaneseq
        %v4033 = vshrl.u32 %v4032, 7
        %v4034 = vsub.s32 0, %v4033
        %v4035 = vrot.slane %v4030, %v4034
        %v4041 = vunpack.c.l.b16 %v4026
        %v4042 = vunpack.c.l.b16 %v4027
        %v4043 = vunpack.c.l.b16 %v4028
        %v4044 = vunpack.c.l.b16 %v4029
        %v4045 = vpack.c.b16 %v4042, %v4041
        %v4046 = vpack.c.b16 %v4044, %v4043
        %v4050 = vsel %vm1609, %v4025, 0
        %4052 = vmatprep.subr.bf16.mxu0 0
        %4053 = vmatpush1.bf16.msra.mxu0 %v4045
        %4054 = vmatprep.subr.bf16.mxu0 0
        %4055 = vmatpush1.bf16.msra.mxu0 %v4046
        %4056 = vmatprep.subr.bf16.mxu0 0
        %4057 = vmatpush1.bf16.msra.mxu0 0
        %4058 = vmatprep.subr.bf16.mxu0 0
        %4059 = vmatpush1.bf16.msra.mxu0 0
        %4060 = vmatprep.subr.bf16.mxu0 0
        %4061 = vmatpush1.bf16.msra.mxu0 0
        %4062 = vmatprep.subr.bf16.mxu0 0
        %4063 = vmatpush1.bf16.msra.mxu0 0
        %4064 = vmatprep.subr.bf16.mxu0 0
        %4065 = vmatpush1.bf16.msra.mxu0 0
        %4066 = vmatprep.subr.bf16.mxu0 0
        %4067 = vmatpush1.bf16.msra.mxu0 0
        %4068 = vmatprep.subr.bf16.mxu0 0
        %4069 = vmatpush1.bf16.msra.mxu0 0
        %4070 = vmatprep.subr.bf16.mxu0 0
        %4071 = vmatpush1.bf16.msra.mxu0 0
        %4072 = vmatprep.subr.bf16.mxu0 0
        %4073 = vmatpush1.bf16.msra.mxu0 0
        %4074 = vmatprep.subr.bf16.mxu0 0
        %4075 = vmatpush1.bf16.msra.mxu0 0
        %4076 = vmatprep.subr.bf16.mxu0 0
        %4077 = vmatpush1.bf16.msra.mxu0 0
        %4078 = vmatprep.subr.bf16.mxu0 0
        %4079 = vmatpush1.bf16.msra.mxu0 0
        %4080 = vmatprep.subr.bf16.mxu0 0
        %4081 = vmatpush1.bf16.msra.mxu0 0
        %4082 = vmatprep.subr.bf16.mxu0 0
        %4083 = vmatpush1.bf16.msra.mxu0 0
        %4084 = vmatprep.mubr.bf16.mxu0 0
        %4085 = vmatmul.mubr.bf16.gmra.mrb[0].mxu0 %v4050
        %v4086 = vpop.f32.mrb[0].mxu0
        %v4087 = vadd.f32 %v4035, %v4086
        %v4088 = vpop.f32.mrb[0].mxu0
        %v4089 = vpop.f32.mrb[0].mxu0
        %v4090 = vpop.f32.mrb[0].mxu0
        %4091 = vdwg.mxu0
        %v4092 = vmax.f32 %v4087, 0.0
        %v4093 = vpack.c.bf16 %v4092, %v4092
        %v4094 = vld [vmem:[%s37] sm:$0xf]
        %v4095 = vld [vmem:[%s37 + $0x4] sm:$0xf]
        %v4096 = vld [vmem:[%s37 + $0x8] sm:$0xf]
        %v4097 = vld [vmem:[%s37 + $0xc] sm:$0xf]
        %v4098 = vld [vmem:[%s37 + $0x10] sm:$0xf]
        %v4099 = vld [vmem:[%s37 + $0x14] sm:$0xf]
        %v4100 = vld [vmem:[%s37 + $0x18] sm:$0xf]
        %v4101 = vld [vmem:[%s37 + $0x1c] sm:$0xf]
        %v4102 = vld [vmem:[#allocation19] sm:$0x1]
        %v4104 = vlaneseq
        %v4105 = vshrl.u32 %v4104, 7
        %v4106 = vsub.s32 0, %v4105
        %v4107 = vrot.slane %v4102, %v4106
        %v4117 = vunpack.c.l.b16 %v4094
        %v4118 = vunpack.c.l.b16 %v4095
        %v4119 = vunpack.c.l.b16 %v4096
        %v4120 = vunpack.c.l.b16 %v4097
        %v4121 = vunpack.c.l.b16 %v4098
        %v4122 = vunpack.c.l.b16 %v4099
        %v4123 = vunpack.c.l.b16 %v4100
        %v4124 = vunpack.c.l.b16 %v4101
        %v4125 = vpack.c.b16 %v4118, %v4117
        %v4126 = vpack.c.b16 %v4120, %v4119
        %v4127 = vpack.c.b16 %v4122, %v4121
        %v4128 = vpack.c.b16 %v4124, %v4123
        %vm4133 = vcmask 523264
        %v4135 = vsel %vm4133, %v4093, 0
        %4137 = vmatprep.subr.bf16.mxu0 0
        %4138 = vmatpush1.bf16.msra.mxu0 %v4125
        %4139 = vmatprep.subr.bf16.mxu0 0
        %4140 = vmatpush1.bf16.msra.mxu0 %v4126
        %4141 = vmatprep.subr.bf16.mxu0 0
        %4142 = vmatpush1.bf16.msra.mxu0 %v4127
        %4143 = vmatprep.subr.bf16.mxu0 0
        %4144 = vmatpush1.bf16.msra.mxu0 %v4128
        %4145 = vmatprep.subr.bf16.mxu0 0
        %4146 = vmatpush1.bf16.msra.mxu0 0
        %4147 = vmatprep.subr.bf16.mxu0 0
        %4148 = vmatpush1.bf16.msra.mxu0 0
        %4149 = vmatprep.subr.bf16.mxu0 0
        %4150 = vmatpush1.bf16.msra.mxu0 0
        %4151 = vmatprep.subr.bf16.mxu0 0
        %4152 = vmatpush1.bf16.msra.mxu0 0
        %4153 = vmatprep.subr.bf16.mxu0 0
        %4154 = vmatpush1.bf16.msra.mxu0 0
        %4155 = vmatprep.subr.bf16.mxu0 0
        %4156 = vmatpush1.bf16.msra.mxu0 0
        %4157 = vmatprep.subr.bf16.mxu0 0
        %4158 = vmatpush1.bf16.msra.mxu0 0
        %4159 = vmatprep.subr.bf16.mxu0 0
        %4160 = vmatpush1.bf16.msra.mxu0 0
        %4161 = vmatprep.subr.bf16.mxu0 0
        %4162 = vmatpush1.bf16.msra.mxu0 0
        %4163 = vmatprep.subr.bf16.mxu0 0
        %4164 = vmatpush1.bf16.msra.mxu0 0
        %4165 = vmatprep.subr.bf16.mxu0 0
        %4166 = vmatpush1.bf16.msra.mxu0 0
        %4167 = vmatprep.subr.bf16.mxu0 0
        %4168 = vmatpush1.bf16.msra.mxu0 0
        %4169 = vmatprep.mubr.bf16.mxu0 0
        %4170 = vmatmul.mubr.bf16.gmra.mrb[0].mxu0 %v4135
        %v4171 = vpop.f32.mrb[0].mxu0
        %v4172 = vadd.f32 %v4107, %v4171
        %v4173 = vpop.f32.mrb[0].mxu0
        %v4174 = vpop.f32.mrb[0].mxu0
        %v4175 = vpop.f32.mrb[0].mxu0
        %4176 = vdwg.mxu0
        %v4177 = vld [vmem:[#allocation21] sm:$0x1]
        %v4178 = vld [vmem:[#allocation22] sm:$0x1]
        %v4179 = vadd.f32 %v4024, %v4172
        %v4180 = vsel %vm1609, %v4179, 0.0
        %4181 = vadd.xlane.f32.xlu0 %v4180
        %v4182 = vpop.xlane.xlu0 %4181
        %v4183 = vmul.f32 %v4182, %v2751
        %v4184 = vsub.f32 %v4179, %v4183
        %v4185 = vmul.f32 %v4184, %v4184
        %v4186 = vsel %vm1609, %v4185, 0.0
        %4187 = vadd.xlane.f32.xlu0 %v4186
        %v4188 = vpop.xlane.xlu0 %4187
        %v4189 = vmul.f32 %v4188, %v2751
        %v4190 = vadd.f32 %v4189, 1e-05
        %v4191 = vrsqrt.pop %v4190
        %v4192 = vmul.f32 %v4184, %v4191
        %v4194 = vlaneseq
        %v4195 = vshrl.u32 %v4194, 7
        %v4196 = vsub.s32 0, %v4195
        %v4197 = vrot.slane %v4177, %v4196
        %v4199 = vmul.f32 %v4192, %v4197
        %v4201 = vlaneseq
        %v4202 = vshrl.u32 %v4201, 7
        %v4203 = vsub.s32 0, %v4202
        %v4204 = vrot.slane %v4178, %v4203
        %v4206 = vadd.f32 %v4199, %v4204
        %v4207 = vpack.c.bf16 %v4206, %v4206
        %v4208 = vld [vmem:[%s45] sm:$0xf]
        %v4209 = vld [vmem:[%s45 + $0x4] sm:$0xf]
        %v4210 = vld [vmem:[%s45 + $0x8] sm:$0xf]
        %v4211 = vld [vmem:[%s45 + $0xc] sm:$0xf]
        %v4212 = vld [vmem:[%s47] sm:$0x1]
        %v4214 = vlaneseq
        %v4215 = vshrl.u32 %v4214, 7
        %v4216 = vsub.s32 0, %v4215
        %v4217 = vrot.slane %v4212, %v4216
        %v4223 = vunpack.c.l.b16 %v4208
        %v4224 = vunpack.c.l.b16 %v4209
        %v4225 = vunpack.c.l.b16 %v4210
        %v4226 = vunpack.c.l.b16 %v4211
        %v4227 = vpack.c.b16 %v4224, %v4223
        %v4228 = vpack.c.b16 %v4226, %v4225
        %v4232 = vsel %vm1609, %v4207, 0
        %4234 = vmatprep.subr.bf16.mxu0 0
        %4235 = vmatpush1.bf16.msra.mxu0 %v4227
        %4236 = vmatprep.subr.bf16.mxu0 0
        %4237 = vmatpush1.bf16.msra.mxu0 %v4228
        %4238 = vmatprep.subr.bf16.mxu0 0
        %4239 = vmatpush1.bf16.msra.mxu0 0
        %4240 = vmatprep.subr.bf16.mxu0 0
        %4241 = vmatpush1.bf16.msra.mxu0 0
        %4242 = vmatprep.subr.bf16.mxu0 0
        %4243 = vmatpush1.bf16.msra.mxu0 0
        %4244 = vmatprep.subr.bf16.mxu0 0
        %4245 = vmatpush1.bf16.msra.mxu0 0
        %4246 = vmatprep.subr.bf16.mxu0 0
        %4247 = vmatpush1.bf16.msra.mxu0 0
        %4248 = vmatprep.subr.bf16.mxu0 0
        %4249 = vmatpush1.bf16.msra.mxu0 0
        %4250 = vmatprep.subr.bf16.mxu0 0
        %4251 = vmatpush1.bf16.msra.mxu0 0
        %4252 = vmatprep.subr.bf16.mxu0 0
        %4253 = vmatpush1.bf16.msra.mxu0 0
        %4254 = vmatprep.subr.bf16.mxu0 0
        %4255 = vmatpush1.bf16.msra.mxu0 0
        %4256 = vmatprep.subr.bf16.mxu0 0
        %4257 = vmatpush1.bf16.msra.mxu0 0
        %4258 = vmatprep.subr.bf16.mxu0 0
        %4259 = vmatpush1.bf16.msra.mxu0 0
        %4260 = vmatprep.subr.bf16.mxu0 0
        %4261 = vmatpush1.bf16.msra.mxu0 0
        %4262 = vmatprep.subr.bf16.mxu0 0
        %4263 = vmatpush1.bf16.msra.mxu0 0
        %4264 = vmatprep.subr.bf16.mxu0 0
        %4265 = vmatpush1.bf16.msra.mxu0 0
        %4266 = vmatprep.mubr.bf16.mxu0 0
        %4267 = vmatmul.mubr.bf16.gmra.mrb[0].mxu0 %v4232
        %v4268 = vpop.f32.mrb[0].mxu0
        %v4269 = vadd.f32 %v4217, %v4268
        %v4270 = vpop.f32.mrb[0].mxu0
        %v4271 = vpop.f32.mrb[0].mxu0
        %v4272 = vpop.f32.mrb[0].mxu0
        %4273 = vdwg.mxu0
        %4275 = vrot.lane.b32.xlu0 %v4269, 120
        %v4276 = vpop.permute.xlu0 %4275
        %4278 = vrot.lane.b32.xlu0 %v4269, 112
        %v4279 = vpop.permute.xlu0 %4278
        %4281 = vrot.lane.b32.xlu0 %v4269, 104
        %v4282 = vpop.permute.xlu0 %4281
        %v4284 = vcombine.low %v4269, %v4279
        %v4285 = vcombine.high %v4269, %v4279
        %v4287 = vunpack.c.l.s4 1983009808
        %v4288 = vunpack.c.0.s8 %v4287
        %v4289 = vlaneseq
        %v4290 = vshrl.u32 %v4289, 7
        %v4291 = vsub.s32 %v4288, %v4290
        %v4292 = vrot.slane %v4284, %v4291
        %v4294 = vunpack.c.l.s4 1983009808
        %v4295 = vunpack.c.0.s8 %v4294
        %v4296 = vlaneseq
        %v4297 = vshrl.u32 %v4296, 7
        %v4298 = vsub.s32 %v4295, %v4297
        %v4299 = vrot.slane %v4285, %v4298
        %v4300 = vcombine.low %v4276, %v4282
        %v4301 = vcombine.high %v4276, %v4282
        %v4303 = vunpack.c.l.s4 1983009808
        %v4304 = vunpack.c.0.s8 %v4303
        %v4305 = vlaneseq
        %v4306 = vshrl.u32 %v4305, 7
        %v4307 = vsub.s32 %v4304, %v4306
        %v4308 = vrot.slane %v4300, %v4307
        %v4310 = vunpack.c.l.s4 1983009808
        %v4311 = vunpack.c.0.s8 %v4310
        %v4312 = vlaneseq
        %v4313 = vshrl.u32 %v4312, 7
        %v4314 = vsub.s32 %v4311, %v4313
        %v4315 = vrot.slane %v4301, %v4314
        %v4316 = vcombine.low %v4292, %v4308
        %v4317 = vcombine.high %v4292, %v4308
        %v4319 = vunpack.c.l.s4 1934713408
        %v4320 = vunpack.c.0.s8 %v4319
        %v4321 = vlaneseq
        %v4322 = vshrl.u32 %v4321, 7
        %v4323 = vsub.s32 %v4320, %v4322
        %v4324 = vrot.slane %v4316, %v4323
        %v4326 = vunpack.c.l.s4 1934713408
        %v4327 = vunpack.c.0.s8 %v4326
        %v4328 = vlaneseq
        %v4329 = vshrl.u32 %v4328, 7
        %v4330 = vsub.s32 %v4327, %v4329
        %v4331 = vrot.slane %v4317, %v4330
        %v4332 = vcombine.low %v4299, %v4315
        %v4333 = vcombine.high %v4299, %v4315
        %v4335 = vunpack.c.l.s4 1934713408
        %v4336 = vunpack.c.0.s8 %v4335
        %v4337 = vlaneseq
        %v4338 = vshrl.u32 %v4337, 7
        %v4339 = vsub.s32 %v4336, %v4338
        %v4340 = vrot.slane %v4332, %v4339
        %v4342 = vunpack.c.l.s4 1934713408
        %v4343 = vunpack.c.0.s8 %v4342
        %v4344 = vlaneseq
        %v4345 = vshrl.u32 %v4344, 7
        %v4346 = vsub.s32 %v4343, %v4345
        %v4347 = vrot.slane %v4333, %v4346
        %v4348 = vcombine.high %v4324, 0.0
        %v4349 = vcombine.high %v4331, 0.0
        %v4350 = vcombine.high %v4340, 0.0
        %v4351 = vcombine.high %v4347, 0.0
        %v4352 = vcombine.low %v4324, %v4331
        %v4354 = vunpack.c.l.s4 1983009808
        %v4355 = vunpack.c.0.s8 %v4354
        %v4356 = vlaneseq
        %v4357 = vshrl.u32 %v4356, 7
        %v4358 = vsub.s32 %v4355, %v4357
        %v4359 = vrot.slane %v4352, %v4358
        %v4360 = vcombine.low %v4348, %v4349
        %v4362 = vunpack.c.l.s4 1983009808
        %v4363 = vunpack.c.0.s8 %v4362
        %v4364 = vlaneseq
        %v4365 = vshrl.u32 %v4364, 7
        %v4366 = vsub.s32 %v4363, %v4365
        %v4367 = vrot.slane %v4360, %v4366
        %v4368 = vcombine.low %v4340, %v4347
        %v4370 = vunpack.c.l.s4 1983009808
        %v4371 = vunpack.c.0.s8 %v4370
        %v4372 = vlaneseq
        %v4373 = vshrl.u32 %v4372, 7
        %v4374 = vsub.s32 %v4371, %v4373
        %v4375 = vrot.slane %v4368, %v4374
        %v4376 = vcombine.low %v4350, %v4351
        %v4378 = vunpack.c.l.s4 1983009808
        %v4379 = vunpack.c.0.s8 %v4378
        %v4380 = vlaneseq
        %v4381 = vshrl.u32 %v4380, 7
        %v4382 = vsub.s32 %v4379, %v4381
        %v4383 = vrot.slane %v4376, %v4382
        %v4384 = vcombine.low %v4359, %v4367
        %v4385 = vcombine.high %v4359, %v4367
        %v4387 = vunpack.c.l.s4 1934713408
        %v4388 = vunpack.c.0.s8 %v4387
        %v4389 = vlaneseq
        %v4390 = vshrl.u32 %v4389, 7
        %v4391 = vsub.s32 %v4388, %v4390
        %v4392 = vrot.slane %v4384, %v4391
        %v4394 = vunpack.c.l.s4 1934713408
        %v4395 = vunpack.c.0.s8 %v4394
        %v4396 = vlaneseq
        %v4397 = vshrl.u32 %v4396, 7
        %v4398 = vsub.s32 %v4395, %v4397
        %v4399 = vrot.slane %v4385, %v4398
        %v4400 = vcombine.low %v4375, %v4383
        %v4401 = vcombine.high %v4375, %v4383
        %v4403 = vunpack.c.l.s4 1934713408
        %v4404 = vunpack.c.0.s8 %v4403
        %v4405 = vlaneseq
        %v4406 = vshrl.u32 %v4405, 7
        %v4407 = vsub.s32 %v4404, %v4406
        %v4408 = vrot.slane %v4400, %v4407
        %v4410 = vunpack.c.l.s4 1934713408
        %v4411 = vunpack.c.0.s8 %v4410
        %v4412 = vlaneseq
        %v4413 = vshrl.u32 %v4412, 7
        %v4414 = vsub.s32 %v4411, %v4413
        %v4415 = vrot.slane %v4401, %v4414
        %v4416 = vcombine.low %v4392, %v4408
        %v4417 = vcombine.high %v4392, %v4408
        %v4418 = vcombine.low %v4399, %v4415
        %v4419 = vcombine.high %v4399, %v4415
        %v4420 = vpack.c.bf16 %v4416, %v4416
        %v4421 = vpack.c.bf16 %v4417, %v4417
        %v4422 = vpack.c.bf16 %v4418, %v4418
        %v4423 = vpack.c.bf16 %v4419, %v4419
        %4424 = vrot.lane.b32.xlu0 %v4269, 96
        %v4425 = vpop.permute.xlu0 %4424
        %4426 = vrot.lane.b32.xlu0 %v4276, 96
        %v4427 = vpop.permute.xlu0 %4426
        %4428 = vrot.lane.b32.xlu0 %v4279, 96
        %v4429 = vpop.permute.xlu0 %4428
        %4430 = vrot.lane.b32.xlu0 %v4282, 96
        %v4431 = vpop.permute.xlu0 %4430
        %v4436 = vcombine.low %v4425, %v4429
        %v4437 = vcombine.high %v4425, %v4429
        %v4439 = vunpack.c.l.s4 1983009808
        %v4440 = vunpack.c.0.s8 %v4439
        %v4441 = vlaneseq
        %v4442 = vshrl.u32 %v4441, 7
        %v4443 = vsub.s32 %v4440, %v4442
        %v4444 = vrot.slane %v4436, %v4443
        %v4446 = vunpack.c.l.s4 1983009808
        %v4447 = vunpack.c.0.s8 %v4446
        %v4448 = vlaneseq
        %v4449 = vshrl.u32 %v4448, 7
        %v4450 = vsub.s32 %v4447, %v4449
        %v4451 = vrot.slane %v4437, %v4450
        %v4452 = vcombine.low %v4427, %v4431
        %v4453 = vcombine.high %v4427, %v4431
        %v4455 = vunpack.c.l.s4 1983009808
        %v4456 = vunpack.c.0.s8 %v4455
        %v4457 = vlaneseq
        %v4458 = vshrl.u32 %v4457, 7
        %v4459 = vsub.s32 %v4456, %v4458
        %v4460 = vrot.slane %v4452, %v4459
        %v4462 = vunpack.c.l.s4 1983009808
        %v4463 = vunpack.c.0.s8 %v4462
        %v4464 = vlaneseq
        %v4465 = vshrl.u32 %v4464, 7
        %v4466 = vsub.s32 %v4463, %v4465
        %v4467 = vrot.slane %v4453, %v4466
        %v4468 = vcombine.low %v4444, %v4460
        %v4469 = vcombine.high %v4444, %v4460
        %v4471 = vunpack.c.l.s4 1934713408
        %v4472 = vunpack.c.0.s8 %v4471
        %v4473 = vlaneseq
        %v4474 = vshrl.u32 %v4473, 7
        %v4475 = vsub.s32 %v4472, %v4474
        %v4476 = vrot.slane %v4468, %v4475
        %v4478 = vunpack.c.l.s4 1934713408
        %v4479 = vunpack.c.0.s8 %v4478
        %v4480 = vlaneseq
        %v4481 = vshrl.u32 %v4480, 7
        %v4482 = vsub.s32 %v4479, %v4481
        %v4483 = vrot.slane %v4469, %v4482
        %v4484 = vcombine.low %v4451, %v4467
        %v4485 = vcombine.high %v4451, %v4467
        %v4487 = vunpack.c.l.s4 1934713408
        %v4488 = vunpack.c.0.s8 %v4487
        %v4489 = vlaneseq
        %v4490 = vshrl.u32 %v4489, 7
        %v4491 = vsub.s32 %v4488, %v4490
        %v4492 = vrot.slane %v4484, %v4491
        %v4494 = vunpack.c.l.s4 1934713408
        %v4495 = vunpack.c.0.s8 %v4494
        %v4496 = vlaneseq
        %v4497 = vshrl.u32 %v4496, 7
        %v4498 = vsub.s32 %v4495, %v4497
        %v4499 = vrot.slane %v4485, %v4498
        %v4500 = vcombine.high %v4476, 0.0
        %v4501 = vcombine.high %v4483, 0.0
        %v4502 = vcombine.high %v4492, 0.0
        %v4503 = vcombine.high %v4499, 0.0
        %v4504 = vcombine.low %v4476, %v4483
        %v4506 = vunpack.c.l.s4 1983009808
        %v4507 = vunpack.c.0.s8 %v4506
        %v4508 = vlaneseq
        %v4509 = vshrl.u32 %v4508, 7
        %v4510 = vsub.s32 %v4507, %v4509
        %v4511 = vrot.slane %v4504, %v4510
        %v4512 = vcombine.low %v4500, %v4501
        %v4514 = vunpack.c.l.s4 1983009808
        %v4515 = vunpack.c.0.s8 %v4514
        %v4516 = vlaneseq
        %v4517 = vshrl.u32 %v4516, 7
        %v4518 = vsub.s32 %v4515, %v4517
        %v4519 = vrot.slane %v4512, %v4518
        %v4520 = vcombine.low %v4492, %v4499
        %v4522 = vunpack.c.l.s4 1983009808
        %v4523 = vunpack.c.0.s8 %v4522
        %v4524 = vlaneseq
        %v4525 = vshrl.u32 %v4524, 7
        %v4526 = vsub.s32 %v4523, %v4525
        %v4527 = vrot.slane %v4520, %v4526
        %v4528 = vcombine.low %v4502, %v4503
        %v4530 = vunpack.c.l.s4 1983009808
        %v4531 = vunpack.c.0.s8 %v4530
        %v4532 = vlaneseq
        %v4533 = vshrl.u32 %v4532, 7
        %v4534 = vsub.s32 %v4531, %v4533
        %v4535 = vrot.slane %v4528, %v4534
        %v4536 = vcombine.low %v4511, %v4519
        %v4537 = vcombine.high %v4511, %v4519
        %v4539 = vunpack.c.l.s4 1934713408
        %v4540 = vunpack.c.0.s8 %v4539
        %v4541 = vlaneseq
        %v4542 = vshrl.u32 %v4541, 7
        %v4543 = vsub.s32 %v4540, %v4542
        %v4544 = vrot.slane %v4536, %v4543
        %v4546 = vunpack.c.l.s4 1934713408
        %v4547 = vunpack.c.0.s8 %v4546
        %v4548 = vlaneseq
        %v4549 = vshrl.u32 %v4548, 7
        %v4550 = vsub.s32 %v4547, %v4549
        %v4551 = vrot.slane %v4537, %v4550
        %v4552 = vcombine.low %v4527, %v4535
        %v4553 = vcombine.high %v4527, %v4535
        %v4555 = vunpack.c.l.s4 1934713408
        %v4556 = vunpack.c.0.s8 %v4555
        %v4557 = vlaneseq
        %v4558 = vshrl.u32 %v4557, 7
        %v4559 = vsub.s32 %v4556, %v4558
        %v4560 = vrot.slane %v4552, %v4559
        %v4562 = vunpack.c.l.s4 1934713408
        %v4563 = vunpack.c.0.s8 %v4562
        %v4564 = vlaneseq
        %v4565 = vshrl.u32 %v4564, 7
        %v4566 = vsub.s32 %v4563, %v4565
        %v4567 = vrot.slane %v4553, %v4566
        %v4568 = vcombine.low %v4544, %v4560
        %v4569 = vcombine.high %v4544, %v4560
        %v4570 = vcombine.low %v4551, %v4567
        %v4571 = vcombine.high %v4551, %v4567
        %v4572 = vpack.c.bf16 %v4568, %v4568
        %v4573 = vpack.c.bf16 %v4569, %v4569
        %v4574 = vpack.c.bf16 %v4570, %v4570
        %v4575 = vpack.c.bf16 %v4571, %v4571
        %4576 = vrot.lane.b32.xlu0 %v4269, 64
        %v4577 = vpop.permute.xlu0 %4576
        %4578 = vrot.lane.b32.xlu0 %v4276, 64
        %v4579 = vpop.permute.xlu0 %4578
        %4580 = vrot.lane.b32.xlu0 %v4279, 64
        %v4581 = vpop.permute.xlu0 %4580
        %4582 = vrot.lane.b32.xlu0 %v4282, 64
        %v4583 = vpop.permute.xlu0 %4582
        %v4588 = vcombine.low %v4577, %v4581
        %v4589 = vcombine.high %v4577, %v4581
        %v4591 = vunpack.c.l.s4 1983009808
        %v4592 = vunpack.c.0.s8 %v4591
        %v4593 = vlaneseq
        %v4594 = vshrl.u32 %v4593, 7
        %v4595 = vsub.s32 %v4592, %v4594
        %v4596 = vrot.slane %v4588, %v4595
        %v4598 = vunpack.c.l.s4 1983009808
        %v4599 = vunpack.c.0.s8 %v4598
        %v4600 = vlaneseq
        %v4601 = vshrl.u32 %v4600, 7
        %v4602 = vsub.s32 %v4599, %v4601
        %v4603 = vrot.slane %v4589, %v4602
        %v4604 = vcombine.low %v4579, %v4583
        %v4605 = vcombine.high %v4579, %v4583
        %v4607 = vunpack.c.l.s4 1983009808
        %v4608 = vunpack.c.0.s8 %v4607
        %v4609 = vlaneseq
        %v4610 = vshrl.u32 %v4609, 7
        %v4611 = vsub.s32 %v4608, %v4610
        %v4612 = vrot.slane %v4604, %v4611
        %v4614 = vunpack.c.l.s4 1983009808
        %v4615 = vunpack.c.0.s8 %v4614
        %v4616 = vlaneseq
        %v4617 = vshrl.u32 %v4616, 7
        %v4618 = vsub.s32 %v4615, %v4617
        %v4619 = vrot.slane %v4605, %v4618
        %v4620 = vcombine.low %v4596, %v4612
        %v4621 = vcombine.high %v4596, %v4612
        %v4623 = vunpack.c.l.s4 1934713408
        %v4624 = vunpack.c.0.s8 %v4623
        %v4625 = vlaneseq
        %v4626 = vshrl.u32 %v4625, 7
        %v4627 = vsub.s32 %v4624, %v4626
        %v4628 = vrot.slane %v4620, %v4627
        %v4630 = vunpack.c.l.s4 1934713408
        %v4631 = vunpack.c.0.s8 %v4630
        %v4632 = vlaneseq
        %v4633 = vshrl.u32 %v4632, 7
        %v4634 = vsub.s32 %v4631, %v4633
        %v4635 = vrot.slane %v4621, %v4634
        %v4636 = vcombine.low %v4603, %v4619
        %v4637 = vcombine.high %v4603, %v4619
        %v4639 = vunpack.c.l.s4 1934713408
        %v4640 = vunpack.c.0.s8 %v4639
        %v4641 = vlaneseq
        %v4642 = vshrl.u32 %v4641, 7
        %v4643 = vsub.s32 %v4640, %v4642
        %v4644 = vrot.slane %v4636, %v4643
        %v4646 = vunpack.c.l.s4 1934713408
        %v4647 = vunpack.c.0.s8 %v4646
        %v4648 = vlaneseq
        %v4649 = vshrl.u32 %v4648, 7
        %v4650 = vsub.s32 %v4647, %v4649
        %v4651 = vrot.slane %v4637, %v4650
        %v4652 = vcombine.high %v4628, 0.0
        %v4653 = vcombine.high %v4635, 0.0
        %v4654 = vcombine.high %v4644, 0.0
        %v4655 = vcombine.high %v4651, 0.0
        %v4656 = vcombine.low %v4628, %v4635
        %v4658 = vunpack.c.l.s4 1983009808
        %v4659 = vunpack.c.0.s8 %v4658
        %v4660 = vlaneseq
        %v4661 = vshrl.u32 %v4660, 7
        %v4662 = vsub.s32 %v4659, %v4661
        %v4663 = vrot.slane %v4656, %v4662
        %v4664 = vcombine.low %v4652, %v4653
        %v4666 = vunpack.c.l.s4 1983009808
        %v4667 = vunpack.c.0.s8 %v4666
        %v4668 = vlaneseq
        %v4669 = vshrl.u32 %v4668, 7
        %v4670 = vsub.s32 %v4667, %v4669
        %v4671 = vrot.slane %v4664, %v4670
        %v4672 = vcombine.low %v4644, %v4651
        %v4674 = vunpack.c.l.s4 1983009808
        %v4675 = vunpack.c.0.s8 %v4674
        %v4676 = vlaneseq
        %v4677 = vshrl.u32 %v4676, 7
        %v4678 = vsub.s32 %v4675, %v4677
        %v4679 = vrot.slane %v4672, %v4678
        %v4680 = vcombine.low %v4654, %v4655
        %v4682 = vunpack.c.l.s4 1983009808
        %v4683 = vunpack.c.0.s8 %v4682
        %v4684 = vlaneseq
        %v4685 = vshrl.u32 %v4684, 7
        %v4686 = vsub.s32 %v4683, %v4685
        %v4687 = vrot.slane %v4680, %v4686
        %v4688 = vcombine.low %v4663, %v4671
        %v4689 = vcombine.high %v4663, %v4671
        %v4691 = vunpack.c.l.s4 1934713408
        %v4692 = vunpack.c.0.s8 %v4691
        %v4693 = vlaneseq
        %v4694 = vshrl.u32 %v4693, 7
        %v4695 = vsub.s32 %v4692, %v4694
        %v4696 = vrot.slane %v4688, %v4695
        %v4698 = vunpack.c.l.s4 1934713408
        %v4699 = vunpack.c.0.s8 %v4698
        %v4700 = vlaneseq
        %v4701 = vshrl.u32 %v4700, 7
        %v4702 = vsub.s32 %v4699, %v4701
        %v4703 = vrot.slane %v4689, %v4702
        %v4704 = vcombine.low %v4679, %v4687
        %v4705 = vcombine.high %v4679, %v4687
        %v4707 = vunpack.c.l.s4 1934713408
        %v4708 = vunpack.c.0.s8 %v4707
        %v4709 = vlaneseq
        %v4710 = vshrl.u32 %v4709, 7
        %v4711 = vsub.s32 %v4708, %v4710
        %v4712 = vrot.slane %v4704, %v4711
        %v4714 = vunpack.c.l.s4 1934713408
        %v4715 = vunpack.c.0.s8 %v4714
        %v4716 = vlaneseq
        %v4717 = vshrl.u32 %v4716, 7
        %v4718 = vsub.s32 %v4715, %v4717
        %v4719 = vrot.slane %v4705, %v4718
        %v4720 = vcombine.low %v4696, %v4712
        %v4721 = vcombine.high %v4696, %v4712
        %v4722 = vcombine.low %v4703, %v4719
        %v4723 = vcombine.high %v4703, %v4719
        %v4724 = vpack.c.bf16 %v4720, %v4720
        %v4725 = vpack.c.bf16 %v4721, %v4721
        %v4726 = vpack.c.bf16 %v4722, %v4722
        %v4727 = vpack.c.bf16 %v4723, %v4723
        %v4729 = vsel %vm2107, %v4420, 0
        %v4732 = vsel %vm2107, %v4572, 0
        %4734 = vmatprep.subr.bf16.mxu0 0
        %4735 = vmatpush1.bf16.xpose.msra.mxu0 %v4732
        %4736 = vmatprep.subr.bf16.mxu0 0
        %4737 = vmatpush1.bf16.xpose.msra.mxu0 0
        %4738 = vmatprep.subr.bf16.mxu0 0
        %4739 = vmatpush1.bf16.xpose.msra.mxu0 0
        %4740 = vmatprep.subr.bf16.mxu0 0
        %4741 = vmatpush1.bf16.xpose.msra.mxu0 0
        %4742 = vmatprep.subr.bf16.mxu0 0
        %4743 = vmatpush1.bf16.xpose.msra.mxu0 0
        %4744 = vmatprep.subr.bf16.mxu0 0
        %4745 = vmatpush1.bf16.xpose.msra.mxu0 0
        %4746 = vmatprep.subr.bf16.mxu0 0
        %4747 = vmatpush1.bf16.xpose.msra.mxu0 0
        %4748 = vmatprep.subr.bf16.mxu0 0
        %4749 = vmatpush1.bf16.xpose.msra.mxu0 0
        %4750 = vmatprep.subr.bf16.mxu0 0
        %4751 = vmatpush1.bf16.xpose.msra.mxu0 0
        %4752 = vmatprep.subr.bf16.mxu0 0
        %4753 = vmatpush1.bf16.xpose.msra.mxu0 0
        %4754 = vmatprep.subr.bf16.mxu0 0
        %4755 = vmatpush1.bf16.xpose.msra.mxu0 0
        %4756 = vmatprep.subr.bf16.mxu0 0
        %4757 = vmatpush1.bf16.xpose.msra.mxu0 0
        %4758 = vmatprep.subr.bf16.mxu0 0
        %4759 = vmatpush1.bf16.xpose.msra.mxu0 0
        %4760 = vmatprep.subr.bf16.mxu0 0
        %4761 = vmatpush1.bf16.xpose.msra.mxu0 0
        %4762 = vmatprep.subr.bf16.mxu0 0
        %4763 = vmatpush1.bf16.xpose.msra.mxu0 0
        %4764 = vmatprep.subr.bf16.mxu0 0
        %4765 = vmatpush1.bf16.xpose.msra.mxu0 0
        %4766 = vmatprep.mubr.bf16.mxu0 0
        %4767 = vmatmul.mubr.bf16.gmra.mrb[0].mxu0 %v4729
        %v4768 = vpop.f32.mrb[0].mxu0
        %v4769 = vadd.f32 0.0, %v4768
        %v4770 = vpop.f32.mrb[0].mxu0
        %v4771 = vpop.f32.mrb[0].mxu0
        %v4772 = vpop.f32.mrb[0].mxu0
        %4773 = vdwg.mxu0
        %v4775 = vsel %vm2107, %v4421, 0
        %v4778 = vsel %vm2107, %v4573, 0
        %4780 = vmatprep.subr.bf16.mxu0 0
        %4781 = vmatpush1.bf16.xpose.msra.mxu0 %v4778
        %4782 = vmatprep.subr.bf16.mxu0 0
        %4783 = vmatpush1.bf16.xpose.msra.mxu0 0
        %4784 = vmatprep.subr.bf16.mxu0 0
        %4785 = vmatpush1.bf16.xpose.msra.mxu0 0
        %4786 = vmatprep.subr.bf16.mxu0 0
        %4787 = vmatpush1.bf16.xpose.msra.mxu0 0
        %4788 = vmatprep.subr.bf16.mxu0 0
        %4789 = vmatpush1.bf16.xpose.msra.mxu0 0
        %4790 = vmatprep.subr.bf16.mxu0 0
        %4791 = vmatpush1.bf16.xpose.msra.mxu0 0
        %4792 = vmatprep.subr.bf16.mxu0 0
        %4793 = vmatpush1.bf16.xpose.msra.mxu0 0
        %4794 = vmatprep.subr.bf16.mxu0 0
        %4795 = vmatpush1.bf16.xpose.msra.mxu0 0
        %4796 = vmatprep.subr.bf16.mxu0 0
        %4797 = vmatpush1.bf16.xpose.msra.mxu0 0
        %4798 = vmatprep.subr.bf16.mxu0 0
        %4799 = vmatpush1.bf16.xpose.msra.mxu0 0
        %4800 = vmatprep.subr.bf16.mxu0 0
        %4801 = vmatpush1.bf16.xpose.msra.mxu0 0
        %4802 = vmatprep.subr.bf16.mxu0 0
        %4803 = vmatpush1.bf16.xpose.msra.mxu0 0
        %4804 = vmatprep.subr.bf16.mxu0 0
        %4805 = vmatpush1.bf16.xpose.msra.mxu0 0
        %4806 = vmatprep.subr.bf16.mxu0 0
        %4807 = vmatpush1.bf16.xpose.msra.mxu0 0
        %4808 = vmatprep.subr.bf16.mxu0 0
        %4809 = vmatpush1.bf16.xpose.msra.mxu0 0
        %4810 = vmatprep.subr.bf16.mxu0 0
        %4811 = vmatpush1.bf16.xpose.msra.mxu0 0
        %4812 = vmatprep.mubr.bf16.mxu0 0
        %4813 = vmatmul.mubr.bf16.gmra.mrb[0].mxu0 %v4775
        %v4814 = vpop.f32.mrb[0].mxu0
        %v4815 = vadd.f32 0.0, %v4814
        %v4816 = vpop.f32.mrb[0].mxu0
        %v4817 = vpop.f32.mrb[0].mxu0
        %v4818 = vpop.f32.mrb[0].mxu0
        %4819 = vdwg.mxu0
        %v4821 = vsel %vm2107, %v4422, 0
        %v4824 = vsel %vm2107, %v4574, 0
        %4826 = vmatprep.subr.bf16.mxu0 0
        %4827 = vmatpush1.bf16.xpose.msra.mxu0 %v4824
        %4828 = vmatprep.subr.bf16.mxu0 0
        %4829 = vmatpush1.bf16.xpose.msra.mxu0 0
        %4830 = vmatprep.subr.bf16.mxu0 0
        %4831 = vmatpush1.bf16.xpose.msra.mxu0 0
        %4832 = vmatprep.subr.bf16.mxu0 0
        %4833 = vmatpush1.bf16.xpose.msra.mxu0 0
        %4834 = vmatprep.subr.bf16.mxu0 0
        %4835 = vmatpush1.bf16.xpose.msra.mxu0 0
        %4836 = vmatprep.subr.bf16.mxu0 0
        %4837 = vmatpush1.bf16.xpose.msra.mxu0 0
        %4838 = vmatprep.subr.bf16.mxu0 0
        %4839 = vmatpush1.bf16.xpose.msra.mxu0 0
        %4840 = vmatprep.subr.bf16.mxu0 0
        %4841 = vmatpush1.bf16.xpose.msra.mxu0 0
        %4842 = vmatprep.subr.bf16.mxu0 0
        %4843 = vmatpush1.bf16.xpose.msra.mxu0 0
        %4844 = vmatprep.subr.bf16.mxu0 0
        %4845 = vmatpush1.bf16.xpose.msra.mxu0 0
        %4846 = vmatprep.subr.bf16.mxu0 0
        %4847 = vmatpush1.bf16.xpose.msra.mxu0 0
        %4848 = vmatprep.subr.bf16.mxu0 0
        %4849 = vmatpush1.bf16.xpose.msra.mxu0 0
        %4850 = vmatprep.subr.bf16.mxu0 0
        %4851 = vmatpush1.bf16.xpose.msra.mxu0 0
        %4852 = vmatprep.subr.bf16.mxu0 0
        %4853 = vmatpush1.bf16.xpose.msra.mxu0 0
        %4854 = vmatprep.subr.bf16.mxu0 0
        %4855 = vmatpush1.bf16.xpose.msra.mxu0 0
        %4856 = vmatprep.subr.bf16.mxu0 0
        %4857 = vmatpush1.bf16.xpose.msra.mxu0 0
        %4858 = vmatprep.mubr.bf16.mxu0 0
        %4859 = vmatmul.mubr.bf16.gmra.mrb[0].mxu0 %v4821
        %v4860 = vpop.f32.mrb[0].mxu0
        %v4861 = vadd.f32 0.0, %v4860
        %v4862 = vpop.f32.mrb[0].mxu0
        %v4863 = vpop.f32.mrb[0].mxu0
        %v4864 = vpop.f32.mrb[0].mxu0
        %4865 = vdwg.mxu0
        %v4867 = vsel %vm2107, %v4423, 0
        %v4870 = vsel %vm2107, %v4575, 0
        %4872 = vmatprep.subr.bf16.mxu0 0
        %4873 = vmatpush1.bf16.xpose.msra.mxu0 %v4870
        %4874 = vmatprep.subr.bf16.mxu0 0
        %4875 = vmatpush1.bf16.xpose.msra.mxu0 0
        %4876 = vmatprep.subr.bf16.mxu0 0
        %4877 = vmatpush1.bf16.xpose.msra.mxu0 0
        %4878 = vmatprep.subr.bf16.mxu0 0
        %4879 = vmatpush1.bf16.xpose.msra.mxu0 0
        %4880 = vmatprep.subr.bf16.mxu0 0
        %4881 = vmatpush1.bf16.xpose.msra.mxu0 0
        %4882 = vmatprep.subr.bf16.mxu0 0
        %4883 = vmatpush1.bf16.xpose.msra.mxu0 0
        %4884 = vmatprep.subr.bf16.mxu0 0
        %4885 = vmatpush1.bf16.xpose.msra.mxu0 0
        %4886 = vmatprep.subr.bf16.mxu0 0
        %4887 = vmatpush1.bf16.xpose.msra.mxu0 0
        %4888 = vmatprep.subr.bf16.mxu0 0
        %4889 = vmatpush1.bf16.xpose.msra.mxu0 0
        %4890 = vmatprep.subr.bf16.mxu0 0
        %4891 = vmatpush1.bf16.xpose.msra.mxu0 0
        %4892 = vmatprep.subr.bf16.mxu0 0
        %4893 = vmatpush1.bf16.xpose.msra.mxu0 0
        %4894 = vmatprep.subr.bf16.mxu0 0
        %4895 = vmatpush1.bf16.xpose.msra.mxu0 0
        %4896 = vmatprep.subr.bf16.mxu0 0
        %4897 = vmatpush1.bf16.xpose.msra.mxu0 0
        %4898 = vmatprep.subr.bf16.mxu0 0
        %4899 = vmatpush1.bf16.xpose.msra.mxu0 0
        %4900 = vmatprep.subr.bf16.mxu0 0
        %4901 = vmatpush1.bf16.xpose.msra.mxu0 0
        %4902 = vmatprep.subr.bf16.mxu0 0
        %4903 = vmatpush1.bf16.xpose.msra.mxu0 0
        %4904 = vmatprep.mubr.bf16.mxu0 0
        %4905 = vmatmul.mubr.bf16.gmra.mrb[0].mxu0 %v4867
        %v4906 = vpop.f32.mrb[0].mxu0
        %v4907 = vadd.f32 0.0, %v4906
        %v4908 = vpop.f32.mrb[0].mxu0
        %v4909 = vpop.f32.mrb[0].mxu0
        %v4910 = vpop.f32.mrb[0].mxu0
        %4911 = vdwg.mxu0
        %v4912 = vsel %vm2107, %v4769, -inf
        %4913 = vmax.xlane.f32.xlu0 %v4912
        %v4914 = vpop.xlane.xlu0 %4913
        %v4915 = vsel %vm2107, %v4815, -inf
        %4916 = vmax.xlane.f32.xlu0 %v4915
        %v4917 = vpop.xlane.xlu0 %4916
        %v4918 = vsel %vm2107, %v4861, -inf
        %4919 = vmax.xlane.f32.xlu0 %v4918
        %v4920 = vpop.xlane.xlu0 %4919
        %v4921 = vsel %vm2107, %v4907, -inf
        %4922 = vmax.xlane.f32.xlu0 %v4921
        %v4923 = vpop.xlane.xlu0 %4922
        %v4924 = vsub.f32 %v4769, %v4914
        %v4925 = vsub.f32 %v4815, %v4917
        %v4926 = vsub.f32 %v4861, %v4920
        %v4927 = vsub.f32 %v4907, %v4923
        %v4928 = vmul.f32 %v4924, 1.442695
        %v4929 = vpow.pop %v4928
        %v4930 = vmul.f32 %v4925, 1.442695
        %v4931 = vpow.pop %v4930
        %v4932 = vmul.f32 %v4926, 1.442695
        %v4933 = vpow.pop %v4932
        %v4934 = vmul.f32 %v4927, 1.442695
        %v4935 = vpow.pop %v4934
        %v4936 = vsel %vm2107, %v4929, 0.0
        %4937 = vadd.xlane.f32.xlu0 %v4936
        %v4938 = vpop.xlane.xlu0 %4937
        %v4939 = vsel %vm2107, %v4931, 0.0
        %4940 = vadd.xlane.f32.xlu0 %v4939
        %v4941 = vpop.xlane.xlu0 %4940
        %v4942 = vsel %vm2107, %v4933, 0.0
        %4943 = vadd.xlane.f32.xlu0 %v4942
        %v4944 = vpop.xlane.xlu0 %4943
        %v4945 = vsel %vm2107, %v4935, 0.0
        %4946 = vadd.xlane.f32.xlu0 %v4945
        %v4947 = vpop.xlane.xlu0 %4946
        %v4948 = vrcp.pop %v4938
        %v4949 = vrcp.pop %v4941
        %v4950 = vrcp.pop %v4944
        %v4951 = vrcp.pop %v4947
        %v4952 = vmul.f32 %v4929, %v4948
        %v4953 = vmul.f32 %v4931, %v4949
        %v4954 = vmul.f32 %v4933, %v4950
        %v4955 = vmul.f32 %v4935, %v4951
        %v4956 = vpack.c.bf16 %v4952, %v4952
        %v4957 = vpack.c.bf16 %v4953, %v4953
        %v4958 = vpack.c.bf16 %v4954, %v4954
        %v4959 = vpack.c.bf16 %v4955, %v4955
        %v4961 = vsel %vm2107, %v4956, 0
        %v4964 = vsel %vm2343, %v4724, 0
        %4966 = vmatprep.subr.bf16.mxu0 0
        %4967 = vmatpush1.bf16.msra.mxu0 %v4964
        %4968 = vmatprep.subr.bf16.mxu0 0
        %4969 = vmatpush1.bf16.msra.mxu0 0
        %4970 = vmatprep.subr.bf16.mxu0 0
        %4971 = vmatpush1.bf16.msra.mxu0 0
        %4972 = vmatprep.subr.bf16.mxu0 0
        %4973 = vmatpush1.bf16.msra.mxu0 0
        %4974 = vmatprep.subr.bf16.mxu0 0
        %4975 = vmatpush1.bf16.msra.mxu0 0
        %4976 = vmatprep.subr.bf16.mxu0 0
        %4977 = vmatpush1.bf16.msra.mxu0 0
        %4978 = vmatprep.subr.bf16.mxu0 0
        %4979 = vmatpush1.bf16.msra.mxu0 0
        %4980 = vmatprep.subr.bf16.mxu0 0
        %4981 = vmatpush1.bf16.msra.mxu0 0
        %4982 = vmatprep.subr.bf16.mxu0 0
        %4983 = vmatpush1.bf16.msra.mxu0 0
        %4984 = vmatprep.subr.bf16.mxu0 0
        %4985 = vmatpush1.bf16.msra.mxu0 0
        %4986 = vmatprep.subr.bf16.mxu0 0
        %4987 = vmatpush1.bf16.msra.mxu0 0
        %4988 = vmatprep.subr.bf16.mxu0 0
        %4989 = vmatpush1.bf16.msra.mxu0 0
        %4990 = vmatprep.subr.bf16.mxu0 0
        %4991 = vmatpush1.bf16.msra.mxu0 0
        %4992 = vmatprep.subr.bf16.mxu0 0
        %4993 = vmatpush1.bf16.msra.mxu0 0
        %4994 = vmatprep.subr.bf16.mxu0 0
        %4995 = vmatpush1.bf16.msra.mxu0 0
        %4996 = vmatprep.subr.bf16.mxu0 0
        %4997 = vmatpush1.bf16.msra.mxu0 0
        %4998 = vmatprep.mubr.bf16.mxu0 0
        %4999 = vmatmul.mubr.bf16.gmra.mrb[0].mxu0 %v4961
        %v5000 = vpop.f32.mrb[0].mxu0
        %v5001 = vadd.f32 0.0, %v5000
        %v5002 = vpop.f32.mrb[0].mxu0
        %v5003 = vpop.f32.mrb[0].mxu0
        %v5004 = vpop.f32.mrb[0].mxu0
        %5005 = vdwg.mxu0
        %v5007 = vsel %vm2107, %v4957, 0
        %v5010 = vsel %vm2343, %v4725, 0
        %5012 = vmatprep.subr.bf16.mxu0 0
        %5013 = vmatpush1.bf16.msra.mxu0 %v5010
        %5014 = vmatprep.subr.bf16.mxu0 0
        %5015 = vmatpush1.bf16.msra.mxu0 0
        %5016 = vmatprep.subr.bf16.mxu0 0
        %5017 = vmatpush1.bf16.msra.mxu0 0
        %5018 = vmatprep.subr.bf16.mxu0 0
        %5019 = vmatpush1.bf16.msra.mxu0 0
        %5020 = vmatprep.subr.bf16.mxu0 0
        %5021 = vmatpush1.bf16.msra.mxu0 0
        %5022 = vmatprep.subr.bf16.mxu0 0
        %5023 = vmatpush1.bf16.msra.mxu0 0
        %5024 = vmatprep.subr.bf16.mxu0 0
        %5025 = vmatpush1.bf16.msra.mxu0 0
        %5026 = vmatprep.subr.bf16.mxu0 0
        %5027 = vmatpush1.bf16.msra.mxu0 0
        %5028 = vmatprep.subr.bf16.mxu0 0
        %5029 = vmatpush1.bf16.msra.mxu0 0
        %5030 = vmatprep.subr.bf16.mxu0 0
        %5031 = vmatpush1.bf16.msra.mxu0 0
        %5032 = vmatprep.subr.bf16.mxu0 0
        %5033 = vmatpush1.bf16.msra.mxu0 0
        %5034 = vmatprep.subr.bf16.mxu0 0
        %5035 = vmatpush1.bf16.msra.mxu0 0
        %5036 = vmatprep.subr.bf16.mxu0 0
        %5037 = vmatpush1.bf16.msra.mxu0 0
        %5038 = vmatprep.subr.bf16.mxu0 0
        %5039 = vmatpush1.bf16.msra.mxu0 0
        %5040 = vmatprep.subr.bf16.mxu0 0
        %5041 = vmatpush1.bf16.msra.mxu0 0
        %5042 = vmatprep.subr.bf16.mxu0 0
        %5043 = vmatpush1.bf16.msra.mxu0 0
        %5044 = vmatprep.mubr.bf16.mxu0 0
        %5045 = vmatmul.mubr.bf16.gmra.mrb[0].mxu0 %v5007
        %v5046 = vpop.f32.mrb[0].mxu0
        %v5047 = vadd.f32 0.0, %v5046
        %v5048 = vpop.f32.mrb[0].mxu0
        %v5049 = vpop.f32.mrb[0].mxu0
        %v5050 = vpop.f32.mrb[0].mxu0
        %5051 = vdwg.mxu0
        %v5053 = vsel %vm2107, %v4958, 0
        %v5056 = vsel %vm2343, %v4726, 0
        %5058 = vmatprep.subr.bf16.mxu0 0
        %5059 = vmatpush1.bf16.msra.mxu0 %v5056
        %5060 = vmatprep.subr.bf16.mxu0 0
        %5061 = vmatpush1.bf16.msra.mxu0 0
        %5062 = vmatprep.subr.bf16.mxu0 0
        %5063 = vmatpush1.bf16.msra.mxu0 0
        %5064 = vmatprep.subr.bf16.mxu0 0
        %5065 = vmatpush1.bf16.msra.mxu0 0
        %5066 = vmatprep.subr.bf16.mxu0 0
        %5067 = vmatpush1.bf16.msra.mxu0 0
        %5068 = vmatprep.subr.bf16.mxu0 0
        %5069 = vmatpush1.bf16.msra.mxu0 0
        %5070 = vmatprep.subr.bf16.mxu0 0
        %5071 = vmatpush1.bf16.msra.mxu0 0
        %5072 = vmatprep.subr.bf16.mxu0 0
        %5073 = vmatpush1.bf16.msra.mxu0 0
        %5074 = vmatprep.subr.bf16.mxu0 0
        %5075 = vmatpush1.bf16.msra.mxu0 0
        %5076 = vmatprep.subr.bf16.mxu0 0
        %5077 = vmatpush1.bf16.msra.mxu0 0
        %5078 = vmatprep.subr.bf16.mxu0 0
        %5079 = vmatpush1.bf16.msra.mxu0 0
        %5080 = vmatprep.subr.bf16.mxu0 0
        %5081 = vmatpush1.bf16.msra.mxu0 0
        %5082 = vmatprep.subr.bf16.mxu0 0
        %5083 = vmatpush1.bf16.msra.mxu0 0
        %5084 = vmatprep.subr.bf16.mxu0 0
        %5085 = vmatpush1.bf16.msra.mxu0 0
        %5086 = vmatprep.subr.bf16.mxu0 0
        %5087 = vmatpush1.bf16.msra.mxu0 0
        %5088 = vmatprep.subr.bf16.mxu0 0
        %5089 = vmatpush1.bf16.msra.mxu0 0
        %5090 = vmatprep.mubr.bf16.mxu0 0
        %5091 = vmatmul.mubr.bf16.gmra.mrb[0].mxu0 %v5053
        %v5092 = vpop.f32.mrb[0].mxu0
        %v5093 = vadd.f32 0.0, %v5092
        %v5094 = vpop.f32.mrb[0].mxu0
        %v5095 = vpop.f32.mrb[0].mxu0
        %v5096 = vpop.f32.mrb[0].mxu0
        %5097 = vdwg.mxu0
        %v5099 = vsel %vm2107, %v4959, 0
        %v5102 = vsel %vm2343, %v4727, 0
        %5104 = vmatprep.subr.bf16.mxu0 0
        %5105 = vmatpush1.bf16.msra.mxu0 %v5102
        %5106 = vmatprep.subr.bf16.mxu0 0
        %5107 = vmatpush1.bf16.msra.mxu0 0
        %5108 = vmatprep.subr.bf16.mxu0 0
        %5109 = vmatpush1.bf16.msra.mxu0 0
        %5110 = vmatprep.subr.bf16.mxu0 0
        %5111 = vmatpush1.bf16.msra.mxu0 0
        %5112 = vmatprep.subr.bf16.mxu0 0
        %5113 = vmatpush1.bf16.msra.mxu0 0
        %5114 = vmatprep.subr.bf16.mxu0 0
        %5115 = vmatpush1.bf16.msra.mxu0 0
        %5116 = vmatprep.subr.bf16.mxu0 0
        %5117 = vmatpush1.bf16.msra.mxu0 0
        %5118 = vmatprep.subr.bf16.mxu0 0
        %5119 = vmatpush1.bf16.msra.mxu0 0
        %5120 = vmatprep.subr.bf16.mxu0 0
        %5121 = vmatpush1.bf16.msra.mxu0 0
        %5122 = vmatprep.subr.bf16.mxu0 0
        %5123 = vmatpush1.bf16.msra.mxu0 0
        %5124 = vmatprep.subr.bf16.mxu0 0
        %5125 = vmatpush1.bf16.msra.mxu0 0
        %5126 = vmatprep.subr.bf16.mxu0 0
        %5127 = vmatpush1.bf16.msra.mxu0 0
        %5128 = vmatprep.subr.bf16.mxu0 0
        %5129 = vmatpush1.bf16.msra.mxu0 0
        %5130 = vmatprep.subr.bf16.mxu0 0
        %5131 = vmatpush1.bf16.msra.mxu0 0
        %5132 = vmatprep.subr.bf16.mxu0 0
        %5133 = vmatpush1.bf16.msra.mxu0 0
        %5134 = vmatprep.subr.bf16.mxu0 0
        %5135 = vmatpush1.bf16.msra.mxu0 0
        %5136 = vmatprep.mubr.bf16.mxu0 0
        %5137 = vmatmul.mubr.bf16.gmra.mrb[0].mxu0 %v5099
        %v5138 = vpop.f32.mrb[0].mxu0
        %v5139 = vadd.f32 0.0, %v5138
        %v5140 = vpop.f32.mrb[0].mxu0
        %v5141 = vpop.f32.mrb[0].mxu0
        %v5142 = vpop.f32.mrb[0].mxu0
        %5143 = vdwg.mxu0
        %v5144 = vcombine.low %v5001, %v5093
        %v5145 = vcombine.high %v5001, %v5093
        %v5147 = vunpack.c.l.s4 1983009808
        %v5148 = vunpack.c.0.s8 %v5147
        %v5149 = vlaneseq
        %v5150 = vshrl.u32 %v5149, 7
        %v5151 = vsub.s32 %v5148, %v5150
        %v5152 = vrot.slane %v5144, %v5151
        %v5154 = vunpack.c.l.s4 1983009808
        %v5155 = vunpack.c.0.s8 %v5154
        %v5156 = vlaneseq
        %v5157 = vshrl.u32 %v5156, 7
        %v5158 = vsub.s32 %v5155, %v5157
        %v5159 = vrot.slane %v5145, %v5158
        %v5160 = vcombine.low %v5047, %v5139
        %v5161 = vcombine.high %v5047, %v5139
        %v5163 = vunpack.c.l.s4 1983009808
        %v5164 = vunpack.c.0.s8 %v5163
        %v5165 = vlaneseq
        %v5166 = vshrl.u32 %v5165, 7
        %v5167 = vsub.s32 %v5164, %v5166
        %v5168 = vrot.slane %v5160, %v5167
        %v5170 = vunpack.c.l.s4 1983009808
        %v5171 = vunpack.c.0.s8 %v5170
        %v5172 = vlaneseq
        %v5173 = vshrl.u32 %v5172, 7
        %v5174 = vsub.s32 %v5171, %v5173
        %v5175 = vrot.slane %v5161, %v5174
        %v5176 = vcombine.low %v5152, %v5168
        %v5177 = vcombine.high %v5152, %v5168
        %v5179 = vunpack.c.l.s4 1934713408
        %v5180 = vunpack.c.0.s8 %v5179
        %v5181 = vlaneseq
        %v5182 = vshrl.u32 %v5181, 7
        %v5183 = vsub.s32 %v5180, %v5182
        %v5184 = vrot.slane %v5176, %v5183
        %v5186 = vunpack.c.l.s4 1934713408
        %v5187 = vunpack.c.0.s8 %v5186
        %v5188 = vlaneseq
        %v5189 = vshrl.u32 %v5188, 7
        %v5190 = vsub.s32 %v5187, %v5189
        %v5191 = vrot.slane %v5177, %v5190
        %v5192 = vcombine.low %v5159, %v5175
        %v5193 = vcombine.high %v5159, %v5175
        %v5195 = vunpack.c.l.s4 1934713408
        %v5196 = vunpack.c.0.s8 %v5195
        %v5197 = vlaneseq
        %v5198 = vshrl.u32 %v5197, 7
        %v5199 = vsub.s32 %v5196, %v5198
        %v5200 = vrot.slane %v5192, %v5199
        %v5202 = vunpack.c.l.s4 1934713408
        %v5203 = vunpack.c.0.s8 %v5202
        %v5204 = vlaneseq
        %v5205 = vshrl.u32 %v5204, 7
        %v5206 = vsub.s32 %v5203, %v5205
        %v5207 = vrot.slane %v5193, %v5206
        %v5208 = vcombine.high %v5184, 0.0
        %v5209 = vcombine.high %v5191, 0.0
        %v5210 = vcombine.high %v5200, 0.0
        %v5211 = vcombine.high %v5207, 0.0
        %v5212 = vcombine.low %v5184, %v5191
        %v5214 = vunpack.c.l.s4 1983009808
        %v5215 = vunpack.c.0.s8 %v5214
        %v5216 = vlaneseq
        %v5217 = vshrl.u32 %v5216, 7
        %v5218 = vsub.s32 %v5215, %v5217
        %v5219 = vrot.slane %v5212, %v5218
        %v5220 = vcombine.low %v5208, %v5209
        %v5222 = vunpack.c.l.s4 1983009808
        %v5223 = vunpack.c.0.s8 %v5222
        %v5224 = vlaneseq
        %v5225 = vshrl.u32 %v5224, 7
        %v5226 = vsub.s32 %v5223, %v5225
        %v5227 = vrot.slane %v5220, %v5226
        %v5228 = vcombine.low %v5200, %v5207
        %v5230 = vunpack.c.l.s4 1983009808
        %v5231 = vunpack.c.0.s8 %v5230
        %v5232 = vlaneseq
        %v5233 = vshrl.u32 %v5232, 7
        %v5234 = vsub.s32 %v5231, %v5233
        %v5235 = vrot.slane %v5228, %v5234
        %v5236 = vcombine.low %v5210, %v5211
        %v5238 = vunpack.c.l.s4 1983009808
        %v5239 = vunpack.c.0.s8 %v5238
        %v5240 = vlaneseq
        %v5241 = vshrl.u32 %v5240, 7
        %v5242 = vsub.s32 %v5239, %v5241
        %v5243 = vrot.slane %v5236, %v5242
        %v5244 = vcombine.low %v5219, %v5227
        %v5245 = vcombine.high %v5219, %v5227
        %v5247 = vunpack.c.l.s4 1934713408
        %v5248 = vunpack.c.0.s8 %v5247
        %v5249 = vlaneseq
        %v5250 = vshrl.u32 %v5249, 7
        %v5251 = vsub.s32 %v5248, %v5250
        %v5252 = vrot.slane %v5244, %v5251
        %v5254 = vunpack.c.l.s4 1934713408
        %v5255 = vunpack.c.0.s8 %v5254
        %v5256 = vlaneseq
        %v5257 = vshrl.u32 %v5256, 7
        %v5258 = vsub.s32 %v5255, %v5257
        %v5259 = vrot.slane %v5245, %v5258
        %v5260 = vcombine.low %v5235, %v5243
        %v5261 = vcombine.high %v5235, %v5243
        %v5263 = vunpack.c.l.s4 1934713408
        %v5264 = vunpack.c.0.s8 %v5263
        %v5265 = vlaneseq
        %v5266 = vshrl.u32 %v5265, 7
        %v5267 = vsub.s32 %v5264, %v5266
        %v5268 = vrot.slane %v5260, %v5267
        %v5270 = vunpack.c.l.s4 1934713408
        %v5271 = vunpack.c.0.s8 %v5270
        %v5272 = vlaneseq
        %v5273 = vshrl.u32 %v5272, 7
        %v5274 = vsub.s32 %v5271, %v5273
        %v5275 = vrot.slane %v5261, %v5274
        %v5276 = vcombine.low %v5252, %v5268
        %v5277 = vcombine.high %v5252, %v5268
        %v5278 = vcombine.low %v5259, %v5275
        %v5279 = vcombine.high %v5259, %v5275
        %5281 = vrot.lane.b32.xlu0 %v5277, 8
        %v5282 = vpop.permute.xlu0 %5281
        %5285 = vrot.lane.b32.xlu0 %v5278, 16
        %v5286 = vpop.permute.xlu0 %5285
        %5289 = vrot.lane.b32.xlu0 %v5279, 24
        %v5290 = vpop.permute.xlu0 %5289
        %v5292 = vsel %vm2107, %v5276, %v5282
        %v5293 = vsel %vm2674, %v5292, %v5286
        %v5294 = vsel %vm2676, %v5293, %v5290
        %v5295 = vpack.c.bf16 %v5294, %v5294
        %v5296 = vld [vmem:[%s49] sm:$0xf]
        %v5297 = vld [vmem:[%s49 + $0x4] sm:$0xf]
        %v5298 = vld [vmem:[%s49 + $0x8] sm:$0xf]
        %v5299 = vld [vmem:[%s49 + $0xc] sm:$0xf]
        %v5300 = vld [vmem:[#allocation24] sm:$0x1]
        %v5302 = vlaneseq
        %v5303 = vshrl.u32 %v5302, 7
        %v5304 = vsub.s32 0, %v5303
        %v5305 = vrot.slane %v5300, %v5304
        %v5311 = vunpack.c.l.b16 %v5296
        %v5312 = vunpack.c.l.b16 %v5297
        %v5313 = vunpack.c.l.b16 %v5298
        %v5314 = vunpack.c.l.b16 %v5299
        %v5315 = vpack.c.b16 %v5312, %v5311
        %v5316 = vpack.c.b16 %v5314, %v5313
        %v5320 = vsel %vm1609, %v5295, 0
        %5322 = vmatprep.subr.bf16.mxu0 0
        %5323 = vmatpush1.bf16.msra.mxu0 %v5315
        %5324 = vmatprep.subr.bf16.mxu0 0
        %5325 = vmatpush1.bf16.msra.mxu0 %v5316
        %5326 = vmatprep.subr.bf16.mxu0 0
        %5327 = vmatpush1.bf16.msra.mxu0 0
        %5328 = vmatprep.subr.bf16.mxu0 0
        %5329 = vmatpush1.bf16.msra.mxu0 0
        %5330 = vmatprep.subr.bf16.mxu0 0
        %5331 = vmatpush1.bf16.msra.mxu0 0
        %5332 = vmatprep.subr.bf16.mxu0 0
        %5333 = vmatpush1.bf16.msra.mxu0 0
        %5334 = vmatprep.subr.bf16.mxu0 0
        %5335 = vmatpush1.bf16.msra.mxu0 0
        %5336 = vmatprep.subr.bf16.mxu0 0
        %5337 = vmatpush1.bf16.msra.mxu0 0
        %5338 = vmatprep.subr.bf16.mxu0 0
        %5339 = vmatpush1.bf16.msra.mxu0 0
        %5340 = vmatprep.subr.bf16.mxu0 0
        %5341 = vmatpush1.bf16.msra.mxu0 0
        %5342 = vmatprep.subr.bf16.mxu0 0
        %5343 = vmatpush1.bf16.msra.mxu0 0
        %5344 = vmatprep.subr.bf16.mxu0 0
        %5345 = vmatpush1.bf16.msra.mxu0 0
        %5346 = vmatprep.subr.bf16.mxu0 0
        %5347 = vmatpush1.bf16.msra.mxu0 0
        %5348 = vmatprep.subr.bf16.mxu0 0
        %5349 = vmatpush1.bf16.msra.mxu0 0
        %5350 = vmatprep.subr.bf16.mxu0 0
        %5351 = vmatpush1.bf16.msra.mxu0 0
        %5352 = vmatprep.subr.bf16.mxu0 0
        %5353 = vmatpush1.bf16.msra.mxu0 0
        %5354 = vmatprep.mubr.bf16.mxu0 0
        %5355 = vmatmul.mubr.bf16.gmra.mrb[0].mxu0 %v5320
        %v5356 = vpop.f32.mrb[0].mxu0
        %v5357 = vadd.f32 %v5305, %v5356
        %v5358 = vpop.f32.mrb[0].mxu0
        %v5359 = vpop.f32.mrb[0].mxu0
        %v5360 = vpop.f32.mrb[0].mxu0
        %5361 = vdwg.mxu0
        %v5362 = vld [vmem:[#allocation25] sm:$0x1]
        %v5363 = vld [vmem:[#allocation27] sm:$0x1]
        %v5364 = vadd.f32 %v4206, %v5357
        %v5365 = vsel %vm1609, %v5364, 0.0
        %5366 = vadd.xlane.f32.xlu0 %v5365
        %v5367 = vpop.xlane.xlu0 %5366
        %v5368 = vmul.f32 %v5367, %v2751
        %v5369 = vsub.f32 %v5364, %v5368
        %v5370 = vmul.f32 %v5369, %v5369
        %v5371 = vsel %vm1609, %v5370, 0.0
        %5372 = vadd.xlane.f32.xlu0 %v5371
        %v5373 = vpop.xlane.xlu0 %5372
        %v5374 = vmul.f32 %v5373, %v2751
        %v5375 = vadd.f32 %v5374, 1e-05
        %v5376 = vrsqrt.pop %v5375
        %v5377 = vmul.f32 %v5369, %v5376
        %v5379 = vlaneseq
        %v5380 = vshrl.u32 %v5379, 7
        %v5381 = vsub.s32 0, %v5380
        %v5382 = vrot.slane %v5362, %v5381
        %v5384 = vmul.f32 %v5377, %v5382
        %v5386 = vlaneseq
        %v5387 = vshrl.u32 %v5386, 7
        %v5388 = vsub.s32 0, %v5387
        %v5389 = vrot.slane %v5363, %v5388
        %v5391 = vadd.f32 %v5384, %v5389
        %v5392 = vpack.c.bf16 %v5391, %v5391
        %v5393 = vld [vmem:[%s57] sm:$0xf]
        %v5394 = vld [vmem:[%s57 + $0x4] sm:$0xf]
        %v5395 = vld [vmem:[%s57 + $0x8] sm:$0xf]
        %v5396 = vld [vmem:[%s57 + $0xc] sm:$0xf]
        %v5397 = vld [vmem:[#allocation28] sm:$0x1]
        %v5399 = vlaneseq
        %v5400 = vshrl.u32 %v5399, 7
        %v5401 = vsub.s32 0, %v5400
        %v5402 = vrot.slane %v5397, %v5401
        %v5408 = vunpack.c.l.b16 %v5393
        %v5409 = vunpack.c.l.b16 %v5394
        %v5410 = vunpack.c.l.b16 %v5395
        %v5411 = vunpack.c.l.b16 %v5396
        %v5412 = vpack.c.b16 %v5409, %v5408
        %v5413 = vpack.c.b16 %v5411, %v5410
        %v5417 = vsel %vm1609, %v5392, 0
        %5419 = vmatprep.subr.bf16.mxu0 0
        %5420 = vmatpush1.bf16.msra.mxu0 %v5412
        %5421 = vmatprep.subr.bf16.mxu0 0
        %5422 = vmatpush1.bf16.msra.mxu0 %v5413
        %5423 = vmatprep.subr.bf16.mxu0 0
        %5424 = vmatpush1.bf16.msra.mxu0 0
        %5425 = vmatprep.subr.bf16.mxu0 0
        %5426 = vmatpush1.bf16.msra.mxu0 0
        %5427 = vmatprep.subr.bf16.mxu0 0
        %5428 = vmatpush1.bf16.msra.mxu0 0
        %5429 = vmatprep.subr.bf16.mxu0 0
        %5430 = vmatpush1.bf16.msra.mxu0 0
        %5431 = vmatprep.subr.bf16.mxu0 0
        %5432 = vmatpush1.bf16.msra.mxu0 0
        %5433 = vmatprep.subr.bf16.mxu0 0
        %5434 = vmatpush1.bf16.msra.mxu0 0
        %5435 = vmatprep.subr.bf16.mxu0 0
        %5436 = vmatpush1.bf16.msra.mxu0 0
        %5437 = vmatprep.subr.bf16.mxu0 0
        %5438 = vmatpush1.bf16.msra.mxu0 0
        %5439 = vmatprep.subr.bf16.mxu0 0
        %5440 = vmatpush1.bf16.msra.mxu0 0
        %5441 = vmatprep.subr.bf16.mxu0 0
        %5442 = vmatpush1.bf16.msra.mxu0 0
        %5443 = vmatprep.subr.bf16.mxu0 0
        %5444 = vmatpush1.bf16.msra.mxu0 0
        %5445 = vmatprep.subr.bf16.mxu0 0
        %5446 = vmatpush1.bf16.msra.mxu0 0
        %5447 = vmatprep.subr.bf16.mxu0 0
        %5448 = vmatpush1.bf16.msra.mxu0 0
        %5449 = vmatprep.subr.bf16.mxu0 0
        %5450 = vmatpush1.bf16.msra.mxu0 0
        %5451 = vmatprep.mubr.bf16.mxu0 0
        %5452 = vmatmul.mubr.bf16.gmra.mrb[0].mxu0 %v5417
        %v5453 = vpop.f32.mrb[0].mxu0
        %v5454 = vadd.f32 %v5402, %v5453
        %v5455 = vpop.f32.mrb[0].mxu0
        %v5456 = vpop.f32.mrb[0].mxu0
        %v5457 = vpop.f32.mrb[0].mxu0
        %5458 = vdwg.mxu0
        %v5459 = vld [vmem:[%s61] sm:$0xf]
        %v5460 = vld [vmem:[%s61 + $0x4] sm:$0xf]
        %v5461 = vld [vmem:[%s61 + $0x8] sm:$0xf]
        %v5462 = vld [vmem:[%s61 + $0xc] sm:$0xf]
        %v5463 = vld [vmem:[#allocation30] sm:$0x1]
        %v5465 = vlaneseq
        %v5466 = vshrl.u32 %v5465, 7
        %v5467 = vsub.s32 0, %v5466
        %v5468 = vrot.slane %v5463, %v5467
        %v5474 = vunpack.c.l.b16 %v5459
        %v5475 = vunpack.c.l.b16 %v5460
        %v5476 = vunpack.c.l.b16 %v5461
        %v5477 = vunpack.c.l.b16 %v5462
        %v5478 = vpack.c.b16 %v5475, %v5474
        %v5479 = vpack.c.b16 %v5477, %v5476
        %5482 = vmatprep.subr.bf16.mxu0 0
        %5483 = vmatpush1.bf16.msra.mxu0 %v5478
        %5484 = vmatprep.subr.bf16.mxu0 0
        %5485 = vmatpush1.bf16.msra.mxu0 %v5479
        %5486 = vmatprep.subr.bf16.mxu0 0
        %5487 = vmatpush1.bf16.msra.mxu0 0
        %5488 = vmatprep.subr.bf16.mxu0 0
        %5489 = vmatpush1.bf16.msra.mxu0 0
        %5490 = vmatprep.subr.bf16.mxu0 0
        %5491 = vmatpush1.bf16.msra.mxu0 0
        %5492 = vmatprep.subr.bf16.mxu0 0
        %5493 = vmatpush1.bf16.msra.mxu0 0
        %5494 = vmatprep.subr.bf16.mxu0 0
        %5495 = vmatpush1.bf16.msra.mxu0 0
        %5496 = vmatprep.subr.bf16.mxu0 0
        %5497 = vmatpush1.bf16.msra.mxu0 0
        %5498 = vmatprep.subr.bf16.mxu0 0
        %5499 = vmatpush1.bf16.msra.mxu0 0
        %5500 = vmatprep.subr.bf16.mxu0 0
        %5501 = vmatpush1.bf16.msra.mxu0 0
        %5502 = vmatprep.subr.bf16.mxu0 0
        %5503 = vmatpush1.bf16.msra.mxu0 0
        %5504 = vmatprep.subr.bf16.mxu0 0
        %5505 = vmatpush1.bf16.msra.mxu0 0
        %5506 = vmatprep.subr.bf16.mxu0 0
        %5507 = vmatpush1.bf16.msra.mxu0 0
        %5508 = vmatprep.subr.bf16.mxu0 0
        %5509 = vmatpush1.bf16.msra.mxu0 0
        %5510 = vmatprep.subr.bf16.mxu0 0
        %5511 = vmatpush1.bf16.msra.mxu0 0
        %5512 = vmatprep.subr.bf16.mxu0 0
        %5513 = vmatpush1.bf16.msra.mxu0 0
        %5514 = vmatprep.mubr.bf16.mxu0 0
        %5515 = vmatmul.mubr.bf16.gmra.mrb[0].mxu0 %v2867
        %v5516 = vpop.f32.mrb[0].mxu0
        %v5517 = vadd.f32 %v5468, %v5516
        %v5518 = vpop.f32.mrb[0].mxu0
        %v5519 = vpop.f32.mrb[0].mxu0
        %v5520 = vpop.f32.mrb[0].mxu0
        %5521 = vdwg.mxu0
        %5523 = vrot.lane.b32.xlu0 %v5454, 120
        %v5524 = vpop.permute.xlu0 %5523
        %5526 = vrot.lane.b32.xlu0 %v5454, 112
        %v5527 = vpop.permute.xlu0 %5526
        %5529 = vrot.lane.b32.xlu0 %v5454, 104
        %v5530 = vpop.permute.xlu0 %5529
        %v5532 = vcombine.low %v5454, %v5527
        %v5533 = vcombine.high %v5454, %v5527
        %v5535 = vunpack.c.l.s4 1983009808
        %v5536 = vunpack.c.0.s8 %v5535
        %v5537 = vlaneseq
        %v5538 = vshrl.u32 %v5537, 7
        %v5539 = vsub.s32 %v5536, %v5538
        %v5540 = vrot.slane %v5532, %v5539
        %v5542 = vunpack.c.l.s4 1983009808
        %v5543 = vunpack.c.0.s8 %v5542
        %v5544 = vlaneseq
        %v5545 = vshrl.u32 %v5544, 7
        %v5546 = vsub.s32 %v5543, %v5545
        %v5547 = vrot.slane %v5533, %v5546
        %v5548 = vcombine.low %v5524, %v5530
        %v5549 = vcombine.high %v5524, %v5530
        %v5551 = vunpack.c.l.s4 1983009808
        %v5552 = vunpack.c.0.s8 %v5551
        %v5553 = vlaneseq
        %v5554 = vshrl.u32 %v5553, 7
        %v5555 = vsub.s32 %v5552, %v5554
        %v5556 = vrot.slane %v5548, %v5555
        %v5558 = vunpack.c.l.s4 1983009808
        %v5559 = vunpack.c.0.s8 %v5558
        %v5560 = vlaneseq
        %v5561 = vshrl.u32 %v5560, 7
        %v5562 = vsub.s32 %v5559, %v5561
        %v5563 = vrot.slane %v5549, %v5562
        %v5564 = vcombine.low %v5540, %v5556
        %v5565 = vcombine.high %v5540, %v5556
        %v5567 = vunpack.c.l.s4 1934713408
        %v5568 = vunpack.c.0.s8 %v5567
        %v5569 = vlaneseq
        %v5570 = vshrl.u32 %v5569, 7
        %v5571 = vsub.s32 %v5568, %v5570
        %v5572 = vrot.slane %v5564, %v5571
        %v5574 = vunpack.c.l.s4 1934713408
        %v5575 = vunpack.c.0.s8 %v5574
        %v5576 = vlaneseq
        %v5577 = vshrl.u32 %v5576, 7
        %v5578 = vsub.s32 %v5575, %v5577
        %v5579 = vrot.slane %v5565, %v5578
        %v5580 = vcombine.low %v5547, %v5563
        %v5581 = vcombine.high %v5547, %v5563
        %v5583 = vunpack.c.l.s4 1934713408
        %v5584 = vunpack.c.0.s8 %v5583
        %v5585 = vlaneseq
        %v5586 = vshrl.u32 %v5585, 7
        %v5587 = vsub.s32 %v5584, %v5586
        %v5588 = vrot.slane %v5580, %v5587
        %v5590 = vunpack.c.l.s4 1934713408
        %v5591 = vunpack.c.0.s8 %v5590
        %v5592 = vlaneseq
        %v5593 = vshrl.u32 %v5592, 7
        %v5594 = vsub.s32 %v5591, %v5593
        %v5595 = vrot.slane %v5581, %v5594
        %v5596 = vcombine.high %v5572, 0.0
        %v5597 = vcombine.high %v5579, 0.0
        %v5598 = vcombine.high %v5588, 0.0
        %v5599 = vcombine.high %v5595, 0.0
        %v5600 = vcombine.low %v5572, %v5579
        %v5602 = vunpack.c.l.s4 1983009808
        %v5603 = vunpack.c.0.s8 %v5602
        %v5604 = vlaneseq
        %v5605 = vshrl.u32 %v5604, 7
        %v5606 = vsub.s32 %v5603, %v5605
        %v5607 = vrot.slane %v5600, %v5606
        %v5608 = vcombine.low %v5596, %v5597
        %v5610 = vunpack.c.l.s4 1983009808
        %v5611 = vunpack.c.0.s8 %v5610
        %v5612 = vlaneseq
        %v5613 = vshrl.u32 %v5612, 7
        %v5614 = vsub.s32 %v5611, %v5613
        %v5615 = vrot.slane %v5608, %v5614
        %v5616 = vcombine.low %v5588, %v5595
        %v5618 = vunpack.c.l.s4 1983009808
        %v5619 = vunpack.c.0.s8 %v5618
        %v5620 = vlaneseq
        %v5621 = vshrl.u32 %v5620, 7
        %v5622 = vsub.s32 %v5619, %v5621
        %v5623 = vrot.slane %v5616, %v5622
        %v5624 = vcombine.low %v5598, %v5599
        %v5626 = vunpack.c.l.s4 1983009808
        %v5627 = vunpack.c.0.s8 %v5626
        %v5628 = vlaneseq
        %v5629 = vshrl.u32 %v5628, 7
        %v5630 = vsub.s32 %v5627, %v5629
        %v5631 = vrot.slane %v5624, %v5630
        %v5632 = vcombine.low %v5607, %v5615
        %v5633 = vcombine.high %v5607, %v5615
        %v5635 = vunpack.c.l.s4 1934713408
        %v5636 = vunpack.c.0.s8 %v5635
        %v5637 = vlaneseq
        %v5638 = vshrl.u32 %v5637, 7
        %v5639 = vsub.s32 %v5636, %v5638
        %v5640 = vrot.slane %v5632, %v5639
        %v5642 = vunpack.c.l.s4 1934713408
        %v5643 = vunpack.c.0.s8 %v5642
        %v5644 = vlaneseq
        %v5645 = vshrl.u32 %v5644, 7
        %v5646 = vsub.s32 %v5643, %v5645
        %v5647 = vrot.slane %v5633, %v5646
        %v5648 = vcombine.low %v5623, %v5631
        %v5649 = vcombine.high %v5623, %v5631
        %v5651 = vunpack.c.l.s4 1934713408
        %v5652 = vunpack.c.0.s8 %v5651
        %v5653 = vlaneseq
        %v5654 = vshrl.u32 %v5653, 7
        %v5655 = vsub.s32 %v5652, %v5654
        %v5656 = vrot.slane %v5648, %v5655
        %v5658 = vunpack.c.l.s4 1934713408
        %v5659 = vunpack.c.0.s8 %v5658
        %v5660 = vlaneseq
        %v5661 = vshrl.u32 %v5660, 7
        %v5662 = vsub.s32 %v5659, %v5661
        %v5663 = vrot.slane %v5649, %v5662
        %v5664 = vcombine.low %v5640, %v5656
        %v5665 = vcombine.high %v5640, %v5656
        %v5666 = vcombine.low %v5647, %v5663
        %v5667 = vcombine.high %v5647, %v5663
        %v5668 = vpack.c.bf16 %v5664, %v5664
        %v5669 = vpack.c.bf16 %v5665, %v5665
        %v5670 = vpack.c.bf16 %v5666, %v5666
        %v5671 = vpack.c.bf16 %v5667, %v5667
        %5673 = vrot.lane.b32.xlu0 %v5517, 120
        %v5674 = vpop.permute.xlu0 %5673
        %5676 = vrot.lane.b32.xlu0 %v5517, 112
        %v5677 = vpop.permute.xlu0 %5676
        %5679 = vrot.lane.b32.xlu0 %v5517, 104
        %v5680 = vpop.permute.xlu0 %5679
        %v5682 = vcombine.low %v5517, %v5677
        %v5683 = vcombine.high %v5517, %v5677
        %v5685 = vunpack.c.l.s4 1983009808
        %v5686 = vunpack.c.0.s8 %v5685
        %v5687 = vlaneseq
        %v5688 = vshrl.u32 %v5687, 7
        %v5689 = vsub.s32 %v5686, %v5688
        %v5690 = vrot.slane %v5682, %v5689
        %v5692 = vunpack.c.l.s4 1983009808
        %v5693 = vunpack.c.0.s8 %v5692
        %v5694 = vlaneseq
        %v5695 = vshrl.u32 %v5694, 7
        %v5696 = vsub.s32 %v5693, %v5695
        %v5697 = vrot.slane %v5683, %v5696
        %v5698 = vcombine.low %v5674, %v5680
        %v5699 = vcombine.high %v5674, %v5680
        %v5701 = vunpack.c.l.s4 1983009808
        %v5702 = vunpack.c.0.s8 %v5701
        %v5703 = vlaneseq
        %v5704 = vshrl.u32 %v5703, 7
        %v5705 = vsub.s32 %v5702, %v5704
        %v5706 = vrot.slane %v5698, %v5705
        %v5708 = vunpack.c.l.s4 1983009808
        %v5709 = vunpack.c.0.s8 %v5708
        %v5710 = vlaneseq
        %v5711 = vshrl.u32 %v5710, 7
        %v5712 = vsub.s32 %v5709, %v5711
        %v5713 = vrot.slane %v5699, %v5712
        %v5714 = vcombine.low %v5690, %v5706
        %v5715 = vcombine.high %v5690, %v5706
        %v5717 = vunpack.c.l.s4 1934713408
        %v5718 = vunpack.c.0.s8 %v5717
        %v5719 = vlaneseq
        %v5720 = vshrl.u32 %v5719, 7
        %v5721 = vsub.s32 %v5718, %v5720
        %v5722 = vrot.slane %v5714, %v5721
        %v5724 = vunpack.c.l.s4 1934713408
        %v5725 = vunpack.c.0.s8 %v5724
        %v5726 = vlaneseq
        %v5727 = vshrl.u32 %v5726, 7
        %v5728 = vsub.s32 %v5725, %v5727
        %v5729 = vrot.slane %v5715, %v5728
        %v5730 = vcombine.low %v5697, %v5713
        %v5731 = vcombine.high %v5697, %v5713
        %v5733 = vunpack.c.l.s4 1934713408
        %v5734 = vunpack.c.0.s8 %v5733
        %v5735 = vlaneseq
        %v5736 = vshrl.u32 %v5735, 7
        %v5737 = vsub.s32 %v5734, %v5736
        %v5738 = vrot.slane %v5730, %v5737
        %v5740 = vunpack.c.l.s4 1934713408
        %v5741 = vunpack.c.0.s8 %v5740
        %v5742 = vlaneseq
        %v5743 = vshrl.u32 %v5742, 7
        %v5744 = vsub.s32 %v5741, %v5743
        %v5745 = vrot.slane %v5731, %v5744
        %v5746 = vcombine.high %v5722, 0.0
        %v5747 = vcombine.high %v5729, 0.0
        %v5748 = vcombine.high %v5738, 0.0
        %v5749 = vcombine.high %v5745, 0.0
        %v5750 = vcombine.low %v5722, %v5729
        %v5752 = vunpack.c.l.s4 1983009808
        %v5753 = vunpack.c.0.s8 %v5752
        %v5754 = vlaneseq
        %v5755 = vshrl.u32 %v5754, 7
        %v5756 = vsub.s32 %v5753, %v5755
        %v5757 = vrot.slane %v5750, %v5756
        %v5758 = vcombine.low %v5746, %v5747
        %v5760 = vunpack.c.l.s4 1983009808
        %v5761 = vunpack.c.0.s8 %v5760
        %v5762 = vlaneseq
        %v5763 = vshrl.u32 %v5762, 7
        %v5764 = vsub.s32 %v5761, %v5763
        %v5765 = vrot.slane %v5758, %v5764
        %v5766 = vcombine.low %v5738, %v5745
        %v5768 = vunpack.c.l.s4 1983009808
        %v5769 = vunpack.c.0.s8 %v5768
        %v5770 = vlaneseq
        %v5771 = vshrl.u32 %v5770, 7
        %v5772 = vsub.s32 %v5769, %v5771
        %v5773 = vrot.slane %v5766, %v5772
        %v5774 = vcombine.low %v5748, %v5749
        %v5776 = vunpack.c.l.s4 1983009808
        %v5777 = vunpack.c.0.s8 %v5776
        %v5778 = vlaneseq
        %v5779 = vshrl.u32 %v5778, 7
        %v5780 = vsub.s32 %v5777, %v5779
        %v5781 = vrot.slane %v5774, %v5780
        %v5782 = vcombine.low %v5757, %v5765
        %v5783 = vcombine.high %v5757, %v5765
        %v5785 = vunpack.c.l.s4 1934713408
        %v5786 = vunpack.c.0.s8 %v5785
        %v5787 = vlaneseq
        %v5788 = vshrl.u32 %v5787, 7
        %v5789 = vsub.s32 %v5786, %v5788
        %v5790 = vrot.slane %v5782, %v5789
        %v5792 = vunpack.c.l.s4 1934713408
        %v5793 = vunpack.c.0.s8 %v5792
        %v5794 = vlaneseq
        %v5795 = vshrl.u32 %v5794, 7
        %v5796 = vsub.s32 %v5793, %v5795
        %v5797 = vrot.slane %v5783, %v5796
        %v5798 = vcombine.low %v5773, %v5781
        %v5799 = vcombine.high %v5773, %v5781
        %v5801 = vunpack.c.l.s4 1934713408
        %v5802 = vunpack.c.0.s8 %v5801
        %v5803 = vlaneseq
        %v5804 = vshrl.u32 %v5803, 7
        %v5805 = vsub.s32 %v5802, %v5804
        %v5806 = vrot.slane %v5798, %v5805
        %v5808 = vunpack.c.l.s4 1934713408
        %v5809 = vunpack.c.0.s8 %v5808
        %v5810 = vlaneseq
        %v5811 = vshrl.u32 %v5810, 7
        %v5812 = vsub.s32 %v5809, %v5811
        %v5813 = vrot.slane %v5799, %v5812
        %v5814 = vcombine.low %v5790, %v5806
        %v5815 = vcombine.high %v5790, %v5806
        %v5816 = vcombine.low %v5797, %v5813
        %v5817 = vcombine.high %v5797, %v5813
        %v5818 = vpack.c.bf16 %v5814, %v5814
        %v5819 = vpack.c.bf16 %v5815, %v5815
        %v5820 = vpack.c.bf16 %v5816, %v5816
        %v5821 = vpack.c.bf16 %v5817, %v5817
        %5822 = vrot.lane.b32.xlu0 %v5517, 96
        %v5823 = vpop.permute.xlu0 %5822
        %5824 = vrot.lane.b32.xlu0 %v5674, 96
        %v5825 = vpop.permute.xlu0 %5824
        %5826 = vrot.lane.b32.xlu0 %v5677, 96
        %v5827 = vpop.permute.xlu0 %5826
        %5828 = vrot.lane.b32.xlu0 %v5680, 96
        %v5829 = vpop.permute.xlu0 %5828
        %v5834 = vcombine.low %v5823, %v5827
        %v5835 = vcombine.high %v5823, %v5827
        %v5837 = vunpack.c.l.s4 1983009808
        %v5838 = vunpack.c.0.s8 %v5837
        %v5839 = vlaneseq
        %v5840 = vshrl.u32 %v5839, 7
        %v5841 = vsub.s32 %v5838, %v5840
        %v5842 = vrot.slane %v5834, %v5841
        %v5844 = vunpack.c.l.s4 1983009808
        %v5845 = vunpack.c.0.s8 %v5844
        %v5846 = vlaneseq
        %v5847 = vshrl.u32 %v5846, 7
        %v5848 = vsub.s32 %v5845, %v5847
        %v5849 = vrot.slane %v5835, %v5848
        %v5850 = vcombine.low %v5825, %v5829
        %v5851 = vcombine.high %v5825, %v5829
        %v5853 = vunpack.c.l.s4 1983009808
        %v5854 = vunpack.c.0.s8 %v5853
        %v5855 = vlaneseq
        %v5856 = vshrl.u32 %v5855, 7
        %v5857 = vsub.s32 %v5854, %v5856
        %v5858 = vrot.slane %v5850, %v5857
        %v5860 = vunpack.c.l.s4 1983009808
        %v5861 = vunpack.c.0.s8 %v5860
        %v5862 = vlaneseq
        %v5863 = vshrl.u32 %v5862, 7
        %v5864 = vsub.s32 %v5861, %v5863
        %v5865 = vrot.slane %v5851, %v5864
        %v5866 = vcombine.low %v5842, %v5858
        %v5867 = vcombine.high %v5842, %v5858
        %v5869 = vunpack.c.l.s4 1934713408
        %v5870 = vunpack.c.0.s8 %v5869
        %v5871 = vlaneseq
        %v5872 = vshrl.u32 %v5871, 7
        %v5873 = vsub.s32 %v5870, %v5872
        %v5874 = vrot.slane %v5866, %v5873
        %v5876 = vunpack.c.l.s4 1934713408
        %v5877 = vunpack.c.0.s8 %v5876
        %v5878 = vlaneseq
        %v5879 = vshrl.u32 %v5878, 7
        %v5880 = vsub.s32 %v5877, %v5879
        %v5881 = vrot.slane %v5867, %v5880
        %v5882 = vcombine.low %v5849, %v5865
        %v5883 = vcombine.high %v5849, %v5865
        %v5885 = vunpack.c.l.s4 1934713408
        %v5886 = vunpack.c.0.s8 %v5885
        %v5887 = vlaneseq
        %v5888 = vshrl.u32 %v5887, 7
        %v5889 = vsub.s32 %v5886, %v5888
        %v5890 = vrot.slane %v5882, %v5889
        %v5892 = vunpack.c.l.s4 1934713408
        %v5893 = vunpack.c.0.s8 %v5892
        %v5894 = vlaneseq
        %v5895 = vshrl.u32 %v5894, 7
        %v5896 = vsub.s32 %v5893, %v5895
        %v5897 = vrot.slane %v5883, %v5896
        %v5898 = vcombine.high %v5874, 0.0
        %v5899 = vcombine.high %v5881, 0.0
        %v5900 = vcombine.high %v5890, 0.0
        %v5901 = vcombine.high %v5897, 0.0
        %v5902 = vcombine.low %v5874, %v5881
        %v5904 = vunpack.c.l.s4 1983009808
        %v5905 = vunpack.c.0.s8 %v5904
        %v5906 = vlaneseq
        %v5907 = vshrl.u32 %v5906, 7
        %v5908 = vsub.s32 %v5905, %v5907
        %v5909 = vrot.slane %v5902, %v5908
        %v5910 = vcombine.low %v5898, %v5899
        %v5912 = vunpack.c.l.s4 1983009808
        %v5913 = vunpack.c.0.s8 %v5912
        %v5914 = vlaneseq
        %v5915 = vshrl.u32 %v5914, 7
        %v5916 = vsub.s32 %v5913, %v5915
        %v5917 = vrot.slane %v5910, %v5916
        %v5918 = vcombine.low %v5890, %v5897
        %v5920 = vunpack.c.l.s4 1983009808
        %v5921 = vunpack.c.0.s8 %v5920
        %v5922 = vlaneseq
        %v5923 = vshrl.u32 %v5922, 7
        %v5924 = vsub.s32 %v5921, %v5923
        %v5925 = vrot.slane %v5918, %v5924
        %v5926 = vcombine.low %v5900, %v5901
        %v5928 = vunpack.c.l.s4 1983009808
        %v5929 = vunpack.c.0.s8 %v5928
        %v5930 = vlaneseq
        %v5931 = vshrl.u32 %v5930, 7
        %v5932 = vsub.s32 %v5929, %v5931
        %v5933 = vrot.slane %v5926, %v5932
        %v5934 = vcombine.low %v5909, %v5917
        %v5935 = vcombine.high %v5909, %v5917
        %v5937 = vunpack.c.l.s4 1934713408
        %v5938 = vunpack.c.0.s8 %v5937
        %v5939 = vlaneseq
        %v5940 = vshrl.u32 %v5939, 7
        %v5941 = vsub.s32 %v5938, %v5940
        %v5942 = vrot.slane %v5934, %v5941
        %v5944 = vunpack.c.l.s4 1934713408
        %v5945 = vunpack.c.0.s8 %v5944
        %v5946 = vlaneseq
        %v5947 = vshrl.u32 %v5946, 7
        %v5948 = vsub.s32 %v5945, %v5947
        %v5949 = vrot.slane %v5935, %v5948
        %v5950 = vcombine.low %v5925, %v5933
        %v5951 = vcombine.high %v5925, %v5933
        %v5953 = vunpack.c.l.s4 1934713408
        %v5954 = vunpack.c.0.s8 %v5953
        %v5955 = vlaneseq
        %v5956 = vshrl.u32 %v5955, 7
        %v5957 = vsub.s32 %v5954, %v5956
        %v5958 = vrot.slane %v5950, %v5957
        %v5960 = vunpack.c.l.s4 1934713408
        %v5961 = vunpack.c.0.s8 %v5960
        %v5962 = vlaneseq
        %v5963 = vshrl.u32 %v5962, 7
        %v5964 = vsub.s32 %v5961, %v5963
        %v5965 = vrot.slane %v5951, %v5964
        %v5966 = vcombine.low %v5942, %v5958
        %v5967 = vcombine.high %v5942, %v5958
        %v5968 = vcombine.low %v5949, %v5965
        %v5969 = vcombine.high %v5949, %v5965
        %v5970 = vpack.c.bf16 %v5966, %v5966
        %v5971 = vpack.c.bf16 %v5967, %v5967
        %v5972 = vpack.c.bf16 %v5968, %v5968
        %v5973 = vpack.c.bf16 %v5969, %v5969
        %v5975 = vsel %vm2107, %v5668, 0
        %v5978 = vsel %vm2107, %v5818, 0
        %5980 = vmatprep.subr.bf16.mxu0 0
        %5981 = vmatpush1.bf16.xpose.msra.mxu0 %v5978
        %5982 = vmatprep.subr.bf16.mxu0 0
        %5983 = vmatpush1.bf16.xpose.msra.mxu0 0
        %5984 = vmatprep.subr.bf16.mxu0 0
        %5985 = vmatpush1.bf16.xpose.msra.mxu0 0
        %5986 = vmatprep.subr.bf16.mxu0 0
        %5987 = vmatpush1.bf16.xpose.msra.mxu0 0
        %5988 = vmatprep.subr.bf16.mxu0 0
        %5989 = vmatpush1.bf16.xpose.msra.mxu0 0
        %5990 = vmatprep.subr.bf16.mxu0 0
        %5991 = vmatpush1.bf16.xpose.msra.mxu0 0
        %5992 = vmatprep.subr.bf16.mxu0 0
        %5993 = vmatpush1.bf16.xpose.msra.mxu0 0
        %5994 = vmatprep.subr.bf16.mxu0 0
        %5995 = vmatpush1.bf16.xpose.msra.mxu0 0
        %5996 = vmatprep.subr.bf16.mxu0 0
        %5997 = vmatpush1.bf16.xpose.msra.mxu0 0
        %5998 = vmatprep.subr.bf16.mxu0 0
        %5999 = vmatpush1.bf16.xpose.msra.mxu0 0
        %6000 = vmatprep.subr.bf16.mxu0 0
        %6001 = vmatpush1.bf16.xpose.msra.mxu0 0
        %6002 = vmatprep.subr.bf16.mxu0 0
        %6003 = vmatpush1.bf16.xpose.msra.mxu0 0
        %6004 = vmatprep.subr.bf16.mxu0 0
        %6005 = vmatpush1.bf16.xpose.msra.mxu0 0
        %6006 = vmatprep.subr.bf16.mxu0 0
        %6007 = vmatpush1.bf16.xpose.msra.mxu0 0
        %6008 = vmatprep.subr.bf16.mxu0 0
        %6009 = vmatpush1.bf16.xpose.msra.mxu0 0
        %6010 = vmatprep.subr.bf16.mxu0 0
        %6011 = vmatpush1.bf16.xpose.msra.mxu0 0
        %6012 = vmatprep.mubr.bf16.mxu0 0
        %6013 = vmatmul.mubr.bf16.gmra.mrb[0].mxu0 %v5975
        %v6014 = vpop.f32.mrb[0].mxu0
        %v6015 = vadd.f32 0.0, %v6014
        %v6016 = vpop.f32.mrb[0].mxu0
        %v6017 = vpop.f32.mrb[0].mxu0
        %v6018 = vpop.f32.mrb[0].mxu0
        %6019 = vdwg.mxu0
        %v6021 = vsel %vm2107, %v5669, 0
        %v6024 = vsel %vm2107, %v5819, 0
        %6026 = vmatprep.subr.bf16.mxu0 0
        %6027 = vmatpush1.bf16.xpose.msra.mxu0 %v6024
        %6028 = vmatprep.subr.bf16.mxu0 0
        %6029 = vmatpush1.bf16.xpose.msra.mxu0 0
        %6030 = vmatprep.subr.bf16.mxu0 0
        %6031 = vmatpush1.bf16.xpose.msra.mxu0 0
        %6032 = vmatprep.subr.bf16.mxu0 0
        %6033 = vmatpush1.bf16.xpose.msra.mxu0 0
        %6034 = vmatprep.subr.bf16.mxu0 0
        %6035 = vmatpush1.bf16.xpose.msra.mxu0 0
        %6036 = vmatprep.subr.bf16.mxu0 0
        %6037 = vmatpush1.bf16.xpose.msra.mxu0 0
        %6038 = vmatprep.subr.bf16.mxu0 0
        %6039 = vmatpush1.bf16.xpose.msra.mxu0 0
        %6040 = vmatprep.subr.bf16.mxu0 0
        %6041 = vmatpush1.bf16.xpose.msra.mxu0 0
        %6042 = vmatprep.subr.bf16.mxu0 0
        %6043 = vmatpush1.bf16.xpose.msra.mxu0 0
        %6044 = vmatprep.subr.bf16.mxu0 0
        %6045 = vmatpush1.bf16.xpose.msra.mxu0 0
        %6046 = vmatprep.subr.bf16.mxu0 0
        %6047 = vmatpush1.bf16.xpose.msra.mxu0 0
        %6048 = vmatprep.subr.bf16.mxu0 0
        %6049 = vmatpush1.bf16.xpose.msra.mxu0 0
        %6050 = vmatprep.subr.bf16.mxu0 0
        %6051 = vmatpush1.bf16.xpose.msra.mxu0 0
        %6052 = vmatprep.subr.bf16.mxu0 0
        %6053 = vmatpush1.bf16.xpose.msra.mxu0 0
        %6054 = vmatprep.subr.bf16.mxu0 0
        %6055 = vmatpush1.bf16.xpose.msra.mxu0 0
        %6056 = vmatprep.subr.bf16.mxu0 0
        %6057 = vmatpush1.bf16.xpose.msra.mxu0 0
        %6058 = vmatprep.mubr.bf16.mxu0 0
        %6059 = vmatmul.mubr.bf16.gmra.mrb[0].mxu0 %v6021
        %v6060 = vpop.f32.mrb[0].mxu0
        %v6061 = vadd.f32 0.0, %v6060
        %v6062 = vpop.f32.mrb[0].mxu0
        %v6063 = vpop.f32.mrb[0].mxu0
        %v6064 = vpop.f32.mrb[0].mxu0
        %6065 = vdwg.mxu0
        %v6067 = vsel %vm2107, %v5670, 0
        %v6070 = vsel %vm2107, %v5820, 0
        %6072 = vmatprep.subr.bf16.mxu0 0
        %6073 = vmatpush1.bf16.xpose.msra.mxu0 %v6070
        %6074 = vmatprep.subr.bf16.mxu0 0
        %6075 = vmatpush1.bf16.xpose.msra.mxu0 0
        %6076 = vmatprep.subr.bf16.mxu0 0
        %6077 = vmatpush1.bf16.xpose.msra.mxu0 0
        %6078 = vmatprep.subr.bf16.mxu0 0
        %6079 = vmatpush1.bf16.xpose.msra.mxu0 0
        %6080 = vmatprep.subr.bf16.mxu0 0
        %6081 = vmatpush1.bf16.xpose.msra.mxu0 0
        %6082 = vmatprep.subr.bf16.mxu0 0
        %6083 = vmatpush1.bf16.xpose.msra.mxu0 0
        %6084 = vmatprep.subr.bf16.mxu0 0
        %6085 = vmatpush1.bf16.xpose.msra.mxu0 0
        %6086 = vmatprep.subr.bf16.mxu0 0
        %6087 = vmatpush1.bf16.xpose.msra.mxu0 0
        %6088 = vmatprep.subr.bf16.mxu0 0
        %6089 = vmatpush1.bf16.xpose.msra.mxu0 0
        %6090 = vmatprep.subr.bf16.mxu0 0
        %6091 = vmatpush1.bf16.xpose.msra.mxu0 0
        %6092 = vmatprep.subr.bf16.mxu0 0
        %6093 = vmatpush1.bf16.xpose.msra.mxu0 0
        %6094 = vmatprep.subr.bf16.mxu0 0
        %6095 = vmatpush1.bf16.xpose.msra.mxu0 0
        %6096 = vmatprep.subr.bf16.mxu0 0
        %6097 = vmatpush1.bf16.xpose.msra.mxu0 0
        %6098 = vmatprep.subr.bf16.mxu0 0
        %6099 = vmatpush1.bf16.xpose.msra.mxu0 0
        %6100 = vmatprep.subr.bf16.mxu0 0
        %6101 = vmatpush1.bf16.xpose.msra.mxu0 0
        %6102 = vmatprep.subr.bf16.mxu0 0
        %6103 = vmatpush1.bf16.xpose.msra.mxu0 0
        %6104 = vmatprep.mubr.bf16.mxu0 0
        %6105 = vmatmul.mubr.bf16.gmra.mrb[0].mxu0 %v6067
        %v6106 = vpop.f32.mrb[0].mxu0
        %v6107 = vadd.f32 0.0, %v6106
        %v6108 = vpop.f32.mrb[0].mxu0
        %v6109 = vpop.f32.mrb[0].mxu0
        %v6110 = vpop.f32.mrb[0].mxu0
        %6111 = vdwg.mxu0
        %v6113 = vsel %vm2107, %v5671, 0
        %v6116 = vsel %vm2107, %v5821, 0
        %6118 = vmatprep.subr.bf16.mxu0 0
        %6119 = vmatpush1.bf16.xpose.msra.mxu0 %v6116
        %6120 = vmatprep.subr.bf16.mxu0 0
        %6121 = vmatpush1.bf16.xpose.msra.mxu0 0
        %6122 = vmatprep.subr.bf16.mxu0 0
        %6123 = vmatpush1.bf16.xpose.msra.mxu0 0
        %6124 = vmatprep.subr.bf16.mxu0 0
        %6125 = vmatpush1.bf16.xpose.msra.mxu0 0
        %6126 = vmatprep.subr.bf16.mxu0 0
        %6127 = vmatpush1.bf16.xpose.msra.mxu0 0
        %6128 = vmatprep.subr.bf16.mxu0 0
        %6129 = vmatpush1.bf16.xpose.msra.mxu0 0
        %6130 = vmatprep.subr.bf16.mxu0 0
        %6131 = vmatpush1.bf16.xpose.msra.mxu0 0
        %6132 = vmatprep.subr.bf16.mxu0 0
        %6133 = vmatpush1.bf16.xpose.msra.mxu0 0
        %6134 = vmatprep.subr.bf16.mxu0 0
        %6135 = vmatpush1.bf16.xpose.msra.mxu0 0
        %6136 = vmatprep.subr.bf16.mxu0 0
        %6137 = vmatpush1.bf16.xpose.msra.mxu0 0
        %6138 = vmatprep.subr.bf16.mxu0 0
        %6139 = vmatpush1.bf16.xpose.msra.mxu0 0
        %6140 = vmatprep.subr.bf16.mxu0 0
        %6141 = vmatpush1.bf16.xpose.msra.mxu0 0
        %6142 = vmatprep.subr.bf16.mxu0 0
        %6143 = vmatpush1.bf16.xpose.msra.mxu0 0
        %6144 = vmatprep.subr.bf16.mxu0 0
        %6145 = vmatpush1.bf16.xpose.msra.mxu0 0
        %6146 = vmatprep.subr.bf16.mxu0 0
        %6147 = vmatpush1.bf16.xpose.msra.mxu0 0
        %6148 = vmatprep.subr.bf16.mxu0 0
        %6149 = vmatpush1.bf16.xpose.msra.mxu0 0
        %6150 = vmatprep.mubr.bf16.mxu0 0
        %6151 = vmatmul.mubr.bf16.gmra.mrb[0].mxu0 %v6113
        %v6152 = vpop.f32.mrb[0].mxu0
        %v6153 = vadd.f32 0.0, %v6152
        %v6154 = vpop.f32.mrb[0].mxu0
        %v6155 = vpop.f32.mrb[0].mxu0
        %v6156 = vpop.f32.mrb[0].mxu0
        %6157 = vdwg.mxu0
        %v6158 = vsel %vm2107, %v6015, -inf
        %6159 = vmax.xlane.f32.xlu0 %v6158
        %v6160 = vpop.xlane.xlu0 %6159
        %v6161 = vsel %vm2107, %v6061, -inf
        %6162 = vmax.xlane.f32.xlu0 %v6161
        %v6163 = vpop.xlane.xlu0 %6162
        %v6164 = vsel %vm2107, %v6107, -inf
        %6165 = vmax.xlane.f32.xlu0 %v6164
        %v6166 = vpop.xlane.xlu0 %6165
        %v6167 = vsel %vm2107, %v6153, -inf
        %6168 = vmax.xlane.f32.xlu0 %v6167
        %v6169 = vpop.xlane.xlu0 %6168
        %v6170 = vsub.f32 %v6015, %v6160
        %v6171 = vsub.f32 %v6061, %v6163
        %v6172 = vsub.f32 %v6107, %v6166
        %v6173 = vsub.f32 %v6153, %v6169
        %v6174 = vmul.f32 %v6170, 1.442695
        %v6175 = vpow.pop %v6174
        %v6176 = vmul.f32 %v6171, 1.442695
        %v6177 = vpow.pop %v6176
        %v6178 = vmul.f32 %v6172, 1.442695
        %v6179 = vpow.pop %v6178
        %v6180 = vmul.f32 %v6173, 1.442695
        %v6181 = vpow.pop %v6180
        %v6182 = vsel %vm2107, %v6175, 0.0
        %6183 = vadd.xlane.f32.xlu0 %v6182
        %v6184 = vpop.xlane.xlu0 %6183
        %v6185 = vsel %vm2107, %v6177, 0.0
        %6186 = vadd.xlane.f32.xlu0 %v6185
        %v6187 = vpop.xlane.xlu0 %6186
        %v6188 = vsel %vm2107, %v6179, 0.0
        %6189 = vadd.xlane.f32.xlu0 %v6188
        %v6190 = vpop.xlane.xlu0 %6189
        %v6191 = vsel %vm2107, %v6181, 0.0
        %6192 = vadd.xlane.f32.xlu0 %v6191
        %v6193 = vpop.xlane.xlu0 %6192
        %v6194 = vrcp.pop %v6184
        %v6195 = vrcp.pop %v6187
        %v6196 = vrcp.pop %v6190
        %v6197 = vrcp.pop %v6193
        %v6198 = vmul.f32 %v6175, %v6194
        %v6199 = vmul.f32 %v6177, %v6195
        %v6200 = vmul.f32 %v6179, %v6196
        %v6201 = vmul.f32 %v6181, %v6197
        %v6202 = vpack.c.bf16 %v6198, %v6198
        %v6203 = vpack.c.bf16 %v6199, %v6199
        %v6204 = vpack.c.bf16 %v6200, %v6200
        %v6205 = vpack.c.bf16 %v6201, %v6201
        %v6207 = vsel %vm2107, %v6202, 0
        %v6210 = vsel %vm2343, %v5970, 0
        %6212 = vmatprep.subr.bf16.mxu0 0
        %6213 = vmatpush1.bf16.msra.mxu0 %v6210
        %6214 = vmatprep.subr.bf16.mxu0 0
        %6215 = vmatpush1.bf16.msra.mxu0 0
        %6216 = vmatprep.subr.bf16.mxu0 0
        %6217 = vmatpush1.bf16.msra.mxu0 0
        %6218 = vmatprep.subr.bf16.mxu0 0
        %6219 = vmatpush1.bf16.msra.mxu0 0
        %6220 = vmatprep.subr.bf16.mxu0 0
        %6221 = vmatpush1.bf16.msra.mxu0 0
        %6222 = vmatprep.subr.bf16.mxu0 0
        %6223 = vmatpush1.bf16.msra.mxu0 0
        %6224 = vmatprep.subr.bf16.mxu0 0
        %6225 = vmatpush1.bf16.msra.mxu0 0
        %6226 = vmatprep.subr.bf16.mxu0 0
        %6227 = vmatpush1.bf16.msra.mxu0 0
        %6228 = vmatprep.subr.bf16.mxu0 0
        %6229 = vmatpush1.bf16.msra.mxu0 0
        %6230 = vmatprep.subr.bf16.mxu0 0
        %6231 = vmatpush1.bf16.msra.mxu0 0
        %6232 = vmatprep.subr.bf16.mxu0 0
        %6233 = vmatpush1.bf16.msra.mxu0 0
        %6234 = vmatprep.subr.bf16.mxu0 0
        %6235 = vmatpush1.bf16.msra.mxu0 0
        %6236 = vmatprep.subr.bf16.mxu0 0
        %6237 = vmatpush1.bf16.msra.mxu0 0
        %6238 = vmatprep.subr.bf16.mxu0 0
        %6239 = vmatpush1.bf16.msra.mxu0 0
        %6240 = vmatprep.subr.bf16.mxu0 0
        %6241 = vmatpush1.bf16.msra.mxu0 0
        %6242 = vmatprep.subr.bf16.mxu0 0
        %6243 = vmatpush1.bf16.msra.mxu0 0
        %6244 = vmatprep.mubr.bf16.mxu0 0
        %6245 = vmatmul.mubr.bf16.gmra.mrb[0].mxu0 %v6207
        %v6246 = vpop.f32.mrb[0].mxu0
        %v6247 = vadd.f32 0.0, %v6246
        %v6248 = vpop.f32.mrb[0].mxu0
        %v6249 = vpop.f32.mrb[0].mxu0
        %v6250 = vpop.f32.mrb[0].mxu0
        %6251 = vdwg.mxu0
        %v6253 = vsel %vm2107, %v6203, 0
        %v6256 = vsel %vm2343, %v5971, 0
        %6258 = vmatprep.subr.bf16.mxu0 0
        %6259 = vmatpush1.bf16.msra.mxu0 %v6256
        %6260 = vmatprep.subr.bf16.mxu0 0
        %6261 = vmatpush1.bf16.msra.mxu0 0
        %6262 = vmatprep.subr.bf16.mxu0 0
        %6263 = vmatpush1.bf16.msra.mxu0 0
        %6264 = vmatprep.subr.bf16.mxu0 0
        %6265 = vmatpush1.bf16.msra.mxu0 0
        %6266 = vmatprep.subr.bf16.mxu0 0
        %6267 = vmatpush1.bf16.msra.mxu0 0
        %6268 = vmatprep.subr.bf16.mxu0 0
        %6269 = vmatpush1.bf16.msra.mxu0 0
        %6270 = vmatprep.subr.bf16.mxu0 0
        %6271 = vmatpush1.bf16.msra.mxu0 0
        %6272 = vmatprep.subr.bf16.mxu0 0
        %6273 = vmatpush1.bf16.msra.mxu0 0
        %6274 = vmatprep.subr.bf16.mxu0 0
        %6275 = vmatpush1.bf16.msra.mxu0 0
        %6276 = vmatprep.subr.bf16.mxu0 0
        %6277 = vmatpush1.bf16.msra.mxu0 0
        %6278 = vmatprep.subr.bf16.mxu0 0
        %6279 = vmatpush1.bf16.msra.mxu0 0
        %6280 = vmatprep.subr.bf16.mxu0 0
        %6281 = vmatpush1.bf16.msra.mxu0 0
        %6282 = vmatprep.subr.bf16.mxu0 0
        %6283 = vmatpush1.bf16.msra.mxu0 0
        %6284 = vmatprep.subr.bf16.mxu0 0
        %6285 = vmatpush1.bf16.msra.mxu0 0
        %6286 = vmatprep.subr.bf16.mxu0 0
        %6287 = vmatpush1.bf16.msra.mxu0 0
        %6288 = vmatprep.subr.bf16.mxu0 0
        %6289 = vmatpush1.bf16.msra.mxu0 0
        %6290 = vmatprep.mubr.bf16.mxu0 0
        %6291 = vmatmul.mubr.bf16.gmra.mrb[0].mxu0 %v6253
        %v6292 = vpop.f32.mrb[0].mxu0
        %v6293 = vadd.f32 0.0, %v6292
        %v6294 = vpop.f32.mrb[0].mxu0
        %v6295 = vpop.f32.mrb[0].mxu0
        %v6296 = vpop.f32.mrb[0].mxu0
        %6297 = vdwg.mxu0
        %v6299 = vsel %vm2107, %v6204, 0
        %v6302 = vsel %vm2343, %v5972, 0
        %6304 = vmatprep.subr.bf16.mxu0 0
        %6305 = vmatpush1.bf16.msra.mxu0 %v6302
        %6306 = vmatprep.subr.bf16.mxu0 0
        %6307 = vmatpush1.bf16.msra.mxu0 0
        %6308 = vmatprep.subr.bf16.mxu0 0
        %6309 = vmatpush1.bf16.msra.mxu0 0
        %6310 = vmatprep.subr.bf16.mxu0 0
        %6311 = vmatpush1.bf16.msra.mxu0 0
        %6312 = vmatprep.subr.bf16.mxu0 0
        %6313 = vmatpush1.bf16.msra.mxu0 0
        %6314 = vmatprep.subr.bf16.mxu0 0
        %6315 = vmatpush1.bf16.msra.mxu0 0
        %6316 = vmatprep.subr.bf16.mxu0 0
        %6317 = vmatpush1.bf16.msra.mxu0 0
        %6318 = vmatprep.subr.bf16.mxu0 0
        %6319 = vmatpush1.bf16.msra.mxu0 0
        %6320 = vmatprep.subr.bf16.mxu0 0
        %6321 = vmatpush1.bf16.msra.mxu0 0
        %6322 = vmatprep.subr.bf16.mxu0 0
        %6323 = vmatpush1.bf16.msra.mxu0 0
        %6324 = vmatprep.subr.bf16.mxu0 0
        %6325 = vmatpush1.bf16.msra.mxu0 0
        %6326 = vmatprep.subr.bf16.mxu0 0
        %6327 = vmatpush1.bf16.msra.mxu0 0
        %6328 = vmatprep.subr.bf16.mxu0 0
        %6329 = vmatpush1.bf16.msra.mxu0 0
        %6330 = vmatprep.subr.bf16.mxu0 0
        %6331 = vmatpush1.bf16.msra.mxu0 0
        %6332 = vmatprep.subr.bf16.mxu0 0
        %6333 = vmatpush1.bf16.msra.mxu0 0
        %6334 = vmatprep.subr.bf16.mxu0 0
        %6335 = vmatpush1.bf16.msra.mxu0 0
        %6336 = vmatprep.mubr.bf16.mxu0 0
        %6337 = vmatmul.mubr.bf16.gmra.mrb[0].mxu0 %v6299
        %v6338 = vpop.f32.mrb[0].mxu0
        %v6339 = vadd.f32 0.0, %v6338
        %v6340 = vpop.f32.mrb[0].mxu0
        %v6341 = vpop.f32.mrb[0].mxu0
        %v6342 = vpop.f32.mrb[0].mxu0
        %6343 = vdwg.mxu0
        %v6345 = vsel %vm2107, %v6205, 0
        %v6348 = vsel %vm2343, %v5973, 0
        %6350 = vmatprep.subr.bf16.mxu0 0
        %6351 = vmatpush1.bf16.msra.mxu0 %v6348
        %6352 = vmatprep.subr.bf16.mxu0 0
        %6353 = vmatpush1.bf16.msra.mxu0 0
        %6354 = vmatprep.subr.bf16.mxu0 0
        %6355 = vmatpush1.bf16.msra.mxu0 0
        %6356 = vmatprep.subr.bf16.mxu0 0
        %6357 = vmatpush1.bf16.msra.mxu0 0
        %6358 = vmatprep.subr.bf16.mxu0 0
        %6359 = vmatpush1.bf16.msra.mxu0 0
        %6360 = vmatprep.subr.bf16.mxu0 0
        %6361 = vmatpush1.bf16.msra.mxu0 0
        %6362 = vmatprep.subr.bf16.mxu0 0
        %6363 = vmatpush1.bf16.msra.mxu0 0
        %6364 = vmatprep.subr.bf16.mxu0 0
        %6365 = vmatpush1.bf16.msra.mxu0 0
        %6366 = vmatprep.subr.bf16.mxu0 0
        %6367 = vmatpush1.bf16.msra.mxu0 0
        %6368 = vmatprep.subr.bf16.mxu0 0
        %6369 = vmatpush1.bf16.msra.mxu0 0
        %6370 = vmatprep.subr.bf16.mxu0 0
        %6371 = vmatpush1.bf16.msra.mxu0 0
        %6372 = vmatprep.subr.bf16.mxu0 0
        %6373 = vmatpush1.bf16.msra.mxu0 0
        %6374 = vmatprep.subr.bf16.mxu0 0
        %6375 = vmatpush1.bf16.msra.mxu0 0
        %6376 = vmatprep.subr.bf16.mxu0 0
        %6377 = vmatpush1.bf16.msra.mxu0 0
        %6378 = vmatprep.subr.bf16.mxu0 0
        %6379 = vmatpush1.bf16.msra.mxu0 0
        %6380 = vmatprep.subr.bf16.mxu0 0
        %6381 = vmatpush1.bf16.msra.mxu0 0
        %6382 = vmatprep.mubr.bf16.mxu0 0
        %6383 = vmatmul.mubr.bf16.gmra.mrb[0].mxu0 %v6345
        %v6384 = vpop.f32.mrb[0].mxu0
        %v6385 = vadd.f32 0.0, %v6384
        %v6386 = vpop.f32.mrb[0].mxu0
        %v6387 = vpop.f32.mrb[0].mxu0
        %v6388 = vpop.f32.mrb[0].mxu0
        %6389 = vdwg.mxu0
        %v6390 = vcombine.low %v6247, %v6339
        %v6391 = vcombine.high %v6247, %v6339
        %v6393 = vunpack.c.l.s4 1983009808
        %v6394 = vunpack.c.0.s8 %v6393
        %v6395 = vlaneseq
        %v6396 = vshrl.u32 %v6395, 7
        %v6397 = vsub.s32 %v6394, %v6396
        %v6398 = vrot.slane %v6390, %v6397
        %v6400 = vunpack.c.l.s4 1983009808
        %v6401 = vunpack.c.0.s8 %v6400
        %v6402 = vlaneseq
        %v6403 = vshrl.u32 %v6402, 7
        %v6404 = vsub.s32 %v6401, %v6403
        %v6405 = vrot.slane %v6391, %v6404
        %v6406 = vcombine.low %v6293, %v6385
        %v6407 = vcombine.high %v6293, %v6385
        %v6409 = vunpack.c.l.s4 1983009808
        %v6410 = vunpack.c.0.s8 %v6409
        %v6411 = vlaneseq
        %v6412 = vshrl.u32 %v6411, 7
        %v6413 = vsub.s32 %v6410, %v6412
        %v6414 = vrot.slane %v6406, %v6413
        %v6416 = vunpack.c.l.s4 1983009808
        %v6417 = vunpack.c.0.s8 %v6416
        %v6418 = vlaneseq
        %v6419 = vshrl.u32 %v6418, 7
        %v6420 = vsub.s32 %v6417, %v6419
        %v6421 = vrot.slane %v6407, %v6420
        %v6422 = vcombine.low %v6398, %v6414
        %v6423 = vcombine.high %v6398, %v6414
        %v6425 = vunpack.c.l.s4 1934713408
        %v6426 = vunpack.c.0.s8 %v6425
        %v6427 = vlaneseq
        %v6428 = vshrl.u32 %v6427, 7
        %v6429 = vsub.s32 %v6426, %v6428
        %v6430 = vrot.slane %v6422, %v6429
        %v6432 = vunpack.c.l.s4 1934713408
        %v6433 = vunpack.c.0.s8 %v6432
        %v6434 = vlaneseq
        %v6435 = vshrl.u32 %v6434, 7
        %v6436 = vsub.s32 %v6433, %v6435
        %v6437 = vrot.slane %v6423, %v6436
        %v6438 = vcombine.low %v6405, %v6421
        %v6439 = vcombine.high %v6405, %v6421
        %v6441 = vunpack.c.l.s4 1934713408
        %v6442 = vunpack.c.0.s8 %v6441
        %v6443 = vlaneseq
        %v6444 = vshrl.u32 %v6443, 7
        %v6445 = vsub.s32 %v6442, %v6444
        %v6446 = vrot.slane %v6438, %v6445
        %v6448 = vunpack.c.l.s4 1934713408
        %v6449 = vunpack.c.0.s8 %v6448
        %v6450 = vlaneseq
        %v6451 = vshrl.u32 %v6450, 7
        %v6452 = vsub.s32 %v6449, %v6451
        %v6453 = vrot.slane %v6439, %v6452
        %v6454 = vcombine.high %v6430, 0.0
        %v6455 = vcombine.high %v6437, 0.0
        %v6456 = vcombine.high %v6446, 0.0
        %v6457 = vcombine.high %v6453, 0.0
        %v6458 = vcombine.low %v6430, %v6437
        %v6460 = vunpack.c.l.s4 1983009808
        %v6461 = vunpack.c.0.s8 %v6460
        %v6462 = vlaneseq
        %v6463 = vshrl.u32 %v6462, 7
        %v6464 = vsub.s32 %v6461, %v6463
        %v6465 = vrot.slane %v6458, %v6464
        %v6466 = vcombine.low %v6454, %v6455
        %v6468 = vunpack.c.l.s4 1983009808
        %v6469 = vunpack.c.0.s8 %v6468
        %v6470 = vlaneseq
        %v6471 = vshrl.u32 %v6470, 7
        %v6472 = vsub.s32 %v6469, %v6471
        %v6473 = vrot.slane %v6466, %v6472
        %v6474 = vcombine.low %v6446, %v6453
        %v6476 = vunpack.c.l.s4 1983009808
        %v6477 = vunpack.c.0.s8 %v6476
        %v6478 = vlaneseq
        %v6479 = vshrl.u32 %v6478, 7
        %v6480 = vsub.s32 %v6477, %v6479
        %v6481 = vrot.slane %v6474, %v6480
        %v6482 = vcombine.low %v6456, %v6457
        %v6484 = vunpack.c.l.s4 1983009808
        %v6485 = vunpack.c.0.s8 %v6484
        %v6486 = vlaneseq
        %v6487 = vshrl.u32 %v6486, 7
        %v6488 = vsub.s32 %v6485, %v6487
        %v6489 = vrot.slane %v6482, %v6488
        %v6490 = vcombine.low %v6465, %v6473
        %v6491 = vcombine.high %v6465, %v6473
        %v6493 = vunpack.c.l.s4 1934713408
        %v6494 = vunpack.c.0.s8 %v6493
        %v6495 = vlaneseq
        %v6496 = vshrl.u32 %v6495, 7
        %v6497 = vsub.s32 %v6494, %v6496
        %v6498 = vrot.slane %v6490, %v6497
        %v6500 = vunpack.c.l.s4 1934713408
        %v6501 = vunpack.c.0.s8 %v6500
        %v6502 = vlaneseq
        %v6503 = vshrl.u32 %v6502, 7
        %v6504 = vsub.s32 %v6501, %v6503
        %v6505 = vrot.slane %v6491, %v6504
        %v6506 = vcombine.low %v6481, %v6489
        %v6507 = vcombine.high %v6481, %v6489
        %v6509 = vunpack.c.l.s4 1934713408
        %v6510 = vunpack.c.0.s8 %v6509
        %v6511 = vlaneseq
        %v6512 = vshrl.u32 %v6511, 7
        %v6513 = vsub.s32 %v6510, %v6512
        %v6514 = vrot.slane %v6506, %v6513
        %v6516 = vunpack.c.l.s4 1934713408
        %v6517 = vunpack.c.0.s8 %v6516
        %v6518 = vlaneseq
        %v6519 = vshrl.u32 %v6518, 7
        %v6520 = vsub.s32 %v6517, %v6519
        %v6521 = vrot.slane %v6507, %v6520
        %v6522 = vcombine.low %v6498, %v6514
        %v6523 = vcombine.high %v6498, %v6514
        %v6524 = vcombine.low %v6505, %v6521
        %v6525 = vcombine.high %v6505, %v6521
        %6527 = vrot.lane.b32.xlu0 %v6523, 8
        %v6528 = vpop.permute.xlu0 %6527
        %6531 = vrot.lane.b32.xlu0 %v6524, 16
        %v6532 = vpop.permute.xlu0 %6531
        %6535 = vrot.lane.b32.xlu0 %v6525, 24
        %v6536 = vpop.permute.xlu0 %6535
        %v6538 = vsel %vm2107, %v6522, %v6528
        %v6539 = vsel %vm2674, %v6538, %v6532
        %v6540 = vsel %vm2676, %v6539, %v6536
        %v6541 = vpack.c.bf16 %v6540, %v6540
        %v6542 = vld [vmem:[%s65] sm:$0xf]
        %v6543 = vld [vmem:[%s65 + $0x4] sm:$0xf]
        %v6544 = vld [vmem:[%s65 + $0x8] sm:$0xf]
        %v6545 = vld [vmem:[%s65 + $0xc] sm:$0xf]
        %v6546 = vld [vmem:[#allocation31] sm:$0x1]
        %v6548 = vlaneseq
        %v6549 = vshrl.u32 %v6548, 7
        %v6550 = vsub.s32 0, %v6549
        %v6551 = vrot.slane %v6546, %v6550
        %v6557 = vunpack.c.l.b16 %v6542
        %v6558 = vunpack.c.l.b16 %v6543
        %v6559 = vunpack.c.l.b16 %v6544
        %v6560 = vunpack.c.l.b16 %v6545
        %v6561 = vpack.c.b16 %v6558, %v6557
        %v6562 = vpack.c.b16 %v6560, %v6559
        %v6566 = vsel %vm1609, %v6541, 0
        %6568 = vmatprep.subr.bf16.mxu0 0
        %6569 = vmatpush1.bf16.msra.mxu0 %v6561
        %6570 = vmatprep.subr.bf16.mxu0 0
        %6571 = vmatpush1.bf16.msra.mxu0 %v6562
        %6572 = vmatprep.subr.bf16.mxu0 0
        %6573 = vmatpush1.bf16.msra.mxu0 0
        %6574 = vmatprep.subr.bf16.mxu0 0
        %6575 = vmatpush1.bf16.msra.mxu0 0
        %6576 = vmatprep.subr.bf16.mxu0 0
        %6577 = vmatpush1.bf16.msra.mxu0 0
        %6578 = vmatprep.subr.bf16.mxu0 0
        %6579 = vmatpush1.bf16.msra.mxu0 0
        %6580 = vmatprep.subr.bf16.mxu0 0
        %6581 = vmatpush1.bf16.msra.mxu0 0
        %6582 = vmatprep.subr.bf16.mxu0 0
        %6583 = vmatpush1.bf16.msra.mxu0 0
        %6584 = vmatprep.subr.bf16.mxu0 0
        %6585 = vmatpush1.bf16.msra.mxu0 0
        %6586 = vmatprep.subr.bf16.mxu0 0
        %6587 = vmatpush1.bf16.msra.mxu0 0
        %6588 = vmatprep.subr.bf16.mxu0 0
        %6589 = vmatpush1.bf16.msra.mxu0 0
        %6590 = vmatprep.subr.bf16.mxu0 0
        %6591 = vmatpush1.bf16.msra.mxu0 0
        %6592 = vmatprep.subr.bf16.mxu0 0
        %6593 = vmatpush1.bf16.msra.mxu0 0
        %6594 = vmatprep.subr.bf16.mxu0 0
        %6595 = vmatpush1.bf16.msra.mxu0 0
        %6596 = vmatprep.subr.bf16.mxu0 0
        %6597 = vmatpush1.bf16.msra.mxu0 0
        %6598 = vmatprep.subr.bf16.mxu0 0
        %6599 = vmatpush1.bf16.msra.mxu0 0
        %6600 = vmatprep.mubr.bf16.mxu0 0
        %6601 = vmatmul.mubr.bf16.gmra.mrb[0].mxu0 %v6566
        %v6602 = vpop.f32.mrb[0].mxu0
        %v6603 = vadd.f32 %v6551, %v6602
        %v6604 = vpop.f32.mrb[0].mxu0
        %v6605 = vpop.f32.mrb[0].mxu0
        %v6606 = vpop.f32.mrb[0].mxu0
        %6607 = vdwg.mxu0
        %v6608 = vld [vmem:[#allocation33] sm:$0x1]
        %v6609 = vld [vmem:[%s71] sm:$0x1]
        %v6610 = vadd.f32 %v5391, %v6603
        %v6611 = vsel %vm1609, %v6610, 0.0
        %6612 = vadd.xlane.f32.xlu0 %v6611
        %v6613 = vpop.xlane.xlu0 %6612
        %v6614 = vmul.f32 %v6613, %v2751
        %v6615 = vsub.f32 %v6610, %v6614
        %v6616 = vmul.f32 %v6615, %v6615
        %v6617 = vsel %vm1609, %v6616, 0.0
        %6618 = vadd.xlane.f32.xlu0 %v6617
        %v6619 = vpop.xlane.xlu0 %6618
        %v6620 = vmul.f32 %v6619, %v2751
        %v6621 = vadd.f32 %v6620, 1e-05
        %v6622 = vrsqrt.pop %v6621
        %v6623 = vmul.f32 %v6615, %v6622
        %v6625 = vlaneseq
        %v6626 = vshrl.u32 %v6625, 7
        %v6627 = vsub.s32 0, %v6626
        %v6628 = vrot.slane %v6608, %v6627
        %v6630 = vmul.f32 %v6623, %v6628
        %v6632 = vlaneseq
        %v6633 = vshrl.u32 %v6632, 7
        %v6634 = vsub.s32 0, %v6633
        %v6635 = vrot.slane %v6609, %v6634
        %v6637 = vadd.f32 %v6630, %v6635
        %v6638 = vpack.c.bf16 %v6637, %v6637
        %v6639 = vld [vmem:[%s73] sm:$0xf]
        %v6640 = vld [vmem:[%s73 + $0x4] sm:$0xf]
        %v6641 = vld [vmem:[%s73 + $0x8] sm:$0xf]
        %v6642 = vld [vmem:[%s73 + $0xc] sm:$0xf]
        %v6643 = vld [vmem:[%s75] sm:$0x1]
        %v6645 = vlaneseq
        %v6646 = vshrl.u32 %v6645, 7
        %v6647 = vsub.s32 0, %v6646
        %v6648 = vrot.slane %v6643, %v6647
        %v6654 = vunpack.c.l.b16 %v6639
        %v6655 = vunpack.c.l.b16 %v6640
        %v6656 = vunpack.c.l.b16 %v6641
        %v6657 = vunpack.c.l.b16 %v6642
        %v6658 = vpack.c.b16 %v6655, %v6654
        %v6659 = vpack.c.b16 %v6657, %v6656
        %v6663 = vsel %vm1609, %v6638, 0
        %6665 = vmatprep.subr.bf16.mxu0 0
        %6666 = vmatpush1.bf16.msra.mxu0 %v6658
        %6667 = vmatprep.subr.bf16.mxu0 0
        %6668 = vmatpush1.bf16.msra.mxu0 %v6659
        %6669 = vmatprep.subr.bf16.mxu0 0
        %6670 = vmatpush1.bf16.msra.mxu0 0
        %6671 = vmatprep.subr.bf16.mxu0 0
        %6672 = vmatpush1.bf16.msra.mxu0 0
        %6673 = vmatprep.subr.bf16.mxu0 0
        %6674 = vmatpush1.bf16.msra.mxu0 0
        %6675 = vmatprep.subr.bf16.mxu0 0
        %6676 = vmatpush1.bf16.msra.mxu0 0
        %6677 = vmatprep.subr.bf16.mxu0 0
        %6678 = vmatpush1.bf16.msra.mxu0 0
        %6679 = vmatprep.subr.bf16.mxu0 0
        %6680 = vmatpush1.bf16.msra.mxu0 0
        %6681 = vmatprep.subr.bf16.mxu0 0
        %6682 = vmatpush1.bf16.msra.mxu0 0
        %6683 = vmatprep.subr.bf16.mxu0 0
        %6684 = vmatpush1.bf16.msra.mxu0 0
        %6685 = vmatprep.subr.bf16.mxu0 0
        %6686 = vmatpush1.bf16.msra.mxu0 0
        %6687 = vmatprep.subr.bf16.mxu0 0
        %6688 = vmatpush1.bf16.msra.mxu0 0
        %6689 = vmatprep.subr.bf16.mxu0 0
        %6690 = vmatpush1.bf16.msra.mxu0 0
        %6691 = vmatprep.subr.bf16.mxu0 0
        %6692 = vmatpush1.bf16.msra.mxu0 0
        %6693 = vmatprep.subr.bf16.mxu0 0
        %6694 = vmatpush1.bf16.msra.mxu0 0
        %6695 = vmatprep.subr.bf16.mxu0 0
        %6696 = vmatpush1.bf16.msra.mxu0 0
        %6697 = vmatprep.mubr.bf16.mxu0 0
        %6698 = vmatmul.mubr.bf16.gmra.mrb[0].mxu0 %v6663
        %v6699 = vpop.f32.mrb[0].mxu0
        %v6700 = vadd.f32 %v6648, %v6699
        %v6701 = vpop.f32.mrb[0].mxu0
        %v6702 = vpop.f32.mrb[0].mxu0
        %v6703 = vpop.f32.mrb[0].mxu0
        %6704 = vdwg.mxu0
        %v6705 = vmax.f32 %v6700, 0.0
        %v6706 = vpack.c.bf16 %v6705, %v6705
        %v6707 = vld [vmem:[%s77] sm:$0xf]
        %v6708 = vld [vmem:[%s77 + $0x4] sm:$0xf]
        %v6709 = vld [vmem:[%s77 + $0x8] sm:$0xf]
        %v6710 = vld [vmem:[%s77 + $0xc] sm:$0xf]
        %v6711 = vld [vmem:[%s77 + $0x10] sm:$0xf]
        %v6712 = vld [vmem:[%s77 + $0x14] sm:$0xf]
        %v6713 = vld [vmem:[%s77 + $0x18] sm:$0xf]
        %v6714 = vld [vmem:[%s77 + $0x1c] sm:$0xf]
        %v6715 = vld [vmem:[%s79] sm:$0x1]
        %v6717 = vlaneseq
        %v6718 = vshrl.u32 %v6717, 7
        %v6719 = vsub.s32 0, %v6718
        %v6720 = vrot.slane %v6715, %v6719
        %v6730 = vunpack.c.l.b16 %v6707
        %v6731 = vunpack.c.l.b16 %v6708
        %v6732 = vunpack.c.l.b16 %v6709
        %v6733 = vunpack.c.l.b16 %v6710
        %v6734 = vunpack.c.l.b16 %v6711
        %v6735 = vunpack.c.l.b16 %v6712
        %v6736 = vunpack.c.l.b16 %v6713
        %v6737 = vunpack.c.l.b16 %v6714
        %v6738 = vpack.c.b16 %v6731, %v6730
        %v6739 = vpack.c.b16 %v6733, %v6732
        %v6740 = vpack.c.b16 %v6735, %v6734
        %v6741 = vpack.c.b16 %v6737, %v6736
        %v6747 = vsel %vm4133, %v6706, 0
        %6749 = vmatprep.subr.bf16.mxu0 0
        %6750 = vmatpush1.bf16.msra.mxu0 %v6738
        %6751 = vmatprep.subr.bf16.mxu0 0
        %6752 = vmatpush1.bf16.msra.mxu0 %v6739
        %6753 = vmatprep.subr.bf16.mxu0 0
        %6754 = vmatpush1.bf16.msra.mxu0 %v6740
        %6755 = vmatprep.subr.bf16.mxu0 0
        %6756 = vmatpush1.bf16.msra.mxu0 %v6741
        %6757 = vmatprep.subr.bf16.mxu0 0
        %6758 = vmatpush1.bf16.msra.mxu0 0
        %6759 = vmatprep.subr.bf16.mxu0 0
        %6760 = vmatpush1.bf16.msra.mxu0 0
        %6761 = vmatprep.subr.bf16.mxu0 0
        %6762 = vmatpush1.bf16.msra.mxu0 0
        %6763 = vmatprep.subr.bf16.mxu0 0
        %6764 = vmatpush1.bf16.msra.mxu0 0
        %6765 = vmatprep.subr.bf16.mxu0 0
        %6766 = vmatpush1.bf16.msra.mxu0 0
        %6767 = vmatprep.subr.bf16.mxu0 0
        %6768 = vmatpush1.bf16.msra.mxu0 0
        %6769 = vmatprep.subr.bf16.mxu0 0
        %6770 = vmatpush1.bf16.msra.mxu0 0
        %6771 = vmatprep.subr.bf16.mxu0 0
        %6772 = vmatpush1.bf16.msra.mxu0 0
        %6773 = vmatprep.subr.bf16.mxu0 0
        %6774 = vmatpush1.bf16.msra.mxu0 0
        %6775 = vmatprep.subr.bf16.mxu0 0
        %6776 = vmatpush1.bf16.msra.mxu0 0
        %6777 = vmatprep.subr.bf16.mxu0 0
        %6778 = vmatpush1.bf16.msra.mxu0 0
        %6779 = vmatprep.subr.bf16.mxu0 0
        %6780 = vmatpush1.bf16.msra.mxu0 0
        %6781 = vmatprep.mubr.bf16.mxu0 0
        %6782 = vmatmul.mubr.bf16.gmra.mrb[0].mxu0 %v6747
        %v6783 = vpop.f32.mrb[0].mxu0
        %v6784 = vadd.f32 %v6720, %v6783
        %v6785 = vpop.f32.mrb[0].mxu0
        %v6786 = vpop.f32.mrb[0].mxu0
        %v6787 = vpop.f32.mrb[0].mxu0
        %6788 = vdwg.mxu0
        %v6789 = vld [vmem:[%s81] sm:$0x1]
        %v6790 = vld [vmem:[%s83] sm:$0x1]
        %v6791 = vadd.f32 %v6637, %v6784
        %v6792 = vsel %vm1609, %v6791, 0.0
        %6793 = vadd.xlane.f32.xlu0 %v6792
        %v6794 = vpop.xlane.xlu0 %6793
        %v6795 = vmul.f32 %v6794, %v2751
        %v6796 = vsub.f32 %v6791, %v6795
        %v6797 = vmul.f32 %v6796, %v6796
        %v6798 = vsel %vm1609, %v6797, 0.0
        %6799 = vadd.xlane.f32.xlu0 %v6798
        %v6800 = vpop.xlane.xlu0 %6799
        %v6801 = vmul.f32 %v6800, %v2751
        %v6802 = vadd.f32 %v6801, 1e-05
        %v6803 = vrsqrt.pop %v6802
        %v6804 = vmul.f32 %v6796, %v6803
        %v6806 = vlaneseq
        %v6807 = vshrl.u32 %v6806, 7
        %v6808 = vsub.s32 0, %v6807
        %v6809 = vrot.slane %v6789, %v6808
        %v6811 = vmul.f32 %v6804, %v6809
        %v6813 = vlaneseq
        %v6814 = vshrl.u32 %v6813, 7
        %v6815 = vsub.s32 0, %v6814
        %v6816 = vrot.slane %v6790, %v6815
        %v6818 = vadd.f32 %v6811, %v6816
        %v6819 = vpack.c.bf16 %v6818, %v6818
        %v6820 = vld [vmem:[%s85] sm:$0xf]
        %v6821 = vld [vmem:[%s85 + $0x4] sm:$0xf]
        %v6822 = vld [vmem:[%s85 + $0x8] sm:$0xf]
        %v6823 = vld [vmem:[%s85 + $0xc] sm:$0xf]
        %v6824 = vld [vmem:[%s87] sm:$0x1]
        %v6826 = vlaneseq
        %v6827 = vshrl.u32 %v6826, 7
        %v6828 = vsub.s32 0, %v6827
        %v6829 = vrot.slane %v6824, %v6828
        %v6835 = vunpack.c.l.b16 %v6820
        %v6836 = vunpack.c.l.b16 %v6821
        %v6837 = vunpack.c.l.b16 %v6822
        %v6838 = vunpack.c.l.b16 %v6823
        %v6839 = vpack.c.b16 %v6836, %v6835
        %v6840 = vpack.c.b16 %v6838, %v6837
        %v6844 = vsel %vm1609, %v6819, 0
        %6846 = vmatprep.subr.bf16.mxu0 0
        %6847 = vmatpush1.bf16.msra.mxu0 %v6839
        %6848 = vmatprep.subr.bf16.mxu0 0
        %6849 = vmatpush1.bf16.msra.mxu0 %v6840
        %6850 = vmatprep.subr.bf16.mxu0 0
        %6851 = vmatpush1.bf16.msra.mxu0 0
        %6852 = vmatprep.subr.bf16.mxu0 0
        %6853 = vmatpush1.bf16.msra.mxu0 0
        %6854 = vmatprep.subr.bf16.mxu0 0
        %6855 = vmatpush1.bf16.msra.mxu0 0
        %6856 = vmatprep.subr.bf16.mxu0 0
        %6857 = vmatpush1.bf16.msra.mxu0 0
        %6858 = vmatprep.subr.bf16.mxu0 0
        %6859 = vmatpush1.bf16.msra.mxu0 0
        %6860 = vmatprep.subr.bf16.mxu0 0
        %6861 = vmatpush1.bf16.msra.mxu0 0
        %6862 = vmatprep.subr.bf16.mxu0 0
        %6863 = vmatpush1.bf16.msra.mxu0 0
        %6864 = vmatprep.subr.bf16.mxu0 0
        %6865 = vmatpush1.bf16.msra.mxu0 0
        %6866 = vmatprep.subr.bf16.mxu0 0
        %6867 = vmatpush1.bf16.msra.mxu0 0
        %6868 = vmatprep.subr.bf16.mxu0 0
        %6869 = vmatpush1.bf16.msra.mxu0 0
        %6870 = vmatprep.subr.bf16.mxu0 0
        %6871 = vmatpush1.bf16.msra.mxu0 0
        %6872 = vmatprep.subr.bf16.mxu0 0
        %6873 = vmatpush1.bf16.msra.mxu0 0
        %6874 = vmatprep.subr.bf16.mxu0 0
        %6875 = vmatpush1.bf16.msra.mxu0 0
        %6876 = vmatprep.subr.bf16.mxu0 0
        %6877 = vmatpush1.bf16.msra.mxu0 0
        %6878 = vmatprep.mubr.bf16.mxu0 0
        %6879 = vmatmul.mubr.bf16.gmra.mrb[0].mxu0 %v6844
        %v6880 = vpop.f32.mrb[0].mxu0
        %v6881 = vadd.f32 %v6829, %v6880
        %v6882 = vpop.f32.mrb[0].mxu0
        %v6883 = vpop.f32.mrb[0].mxu0
        %v6884 = vpop.f32.mrb[0].mxu0
        %6885 = vdwg.mxu0
        %vm6886 = vcmask 15360
        %6887 = vst.msk [vmem:[%s1580] sm:$0xff] %vm6886, %v6881
        %p6888 = scmp.lt.s32.totalorder %s111, 1
        %s6889 = scalar_select %p6888, %s111, 1
        %s6890 = smul.addr %s6889, 8
        %s6891 = scalar_lea.vmem %s89, %s6890
        // Predicated region
        $region281: #{tpu_custom_call.1} parent=195 // pred_check
          %p6892 = pneg %p1058
        $region282: #{tpu_custom_call.1} parent=195 // pred_check_branch
          %6894 = sbr.rel (%p6892) target = $region284
        $region283: #{tpu_custom_call.1} parent=195 // pred_region
          _
        $region284: #{tpu_custom_call.1} parent=195 // pred_fallthru
          _
      $region196: #{tpu_custom_call.1} parent=5 // pred_fallthru
        _
      %p6895 = scmp.le.s32.totalorder 2, %s106
      // Predicated region
      $region285: #{tpu_custom_call.1} parent=5 // pred_check
        %p6896 = pneg %p6895
      $region286: #{tpu_custom_call.1} parent=5 // pred_check_branch
        %6898 = sbr.rel (%p6896) target = $region288
      $region287: #{tpu_custom_call.1} parent=5 // pred_region
        %s6899 = ssub.s32 %s106, 2
        // Predicated region
        $region289: #{tpu_custom_call.1} parent=287 // pred_check
          %p6900 = pneg %p1064
        $region290: #{tpu_custom_call.1} parent=287 // pred_check_branch
          %6902 = sbr.rel (%p6900) target = $region292
        $region291: #{tpu_custom_call.1} parent=287 // pred_region
          %p6903 = scmp.lt.s32.totalorder %s112, 1
          %s6904 = scalar_select %p6903, %s112, 1
          %s6905 = smul.addr %s6904, 8
          %s6906 = scalar_lea.vmem %s89, %s6905
        $region292: #{tpu_custom_call.1} parent=287 // pred_fallthru
          _
      $region288: #{tpu_custom_call.1} parent=5 // pred_fallthru
        _
    $region6: #{tpu_custom_call.1} parent=1 // loop_footer
      %s110 = sadd.s32 1, %s106
    $region7: #{tpu_custom_call.1} parent=1 // loop_footer_branch
      %105 = sbr.rel target = $region3
    $region8: #{tpu_custom_call.1} parent=1 // loop_exit
      _
    %6907 = vsyncpa [#allocation3], 1
    %s6908 = scalar_lea.sflag [#allocation3], 1
    %6909 = vsyncpa %s6908, 1
    %6910 = vsyncpa [#allocation5], 1
    %6911 = vsyncpa [#allocation8], 1
    %6912 = vsyncpa [#allocation11], 1
    %6913 = vsyncpa [#allocation14], 1
    %6914 = vsyncpa [#allocation17], 1
    %6915 = vsyncpa [#allocation20], 1
    %6916 = vsyncpa [#allocation23], 1
    %6917 = vsyncpa [#allocation26], 1
    %6918 = vsyncpa [#allocation29], 1
    %6919 = vsyncpa [#allocation32], 1

</llo_original>
